<compile_context>
chip_gen: v6e
topology: v6e:2x2x1
jax: 0.10.0
libtpu: 0.0.40
codegen_flags: <defaults>
</compile_context>

<pallas_src>
import functools

import jax
import jax.numpy as jnp
from jax import lax
from jax.experimental import pallas as pl
from jax.experimental.pallas import tpu as pltpu


# ----------------------------------------------------------------------------
# helpers
# ----------------------------------------------------------------------------
def _gelu(x):
    # TODO(synk): reference uses exact-erf GELU; tanh approximation keeps the
    # transcendental on the EUP (per perf review) with small numeric drift.
    return jax.nn.gelu(x, approximate=True)


def _rep_spec(shape):
    n = len(shape)
    return pl.BlockSpec(shape, lambda *_: (0,) * n)


def dft_cos_matrix(n):
    # Re(FFT(x))_k = sum_m x_m cos(2*pi*m*k/N)  (torch.fft.fft(...).to(float32)
    # keeps the real part).  The reference flattens to (B, T*Cin) before the FFT.
    idx = jnp.arange(n, dtype=jnp.float32)
    return jnp.cos(2.0 * jnp.pi * idx[:, None] * idx[None, :] / n)


def positional_encoding(max_len, d_model):
    position = jnp.arange(max_len, dtype=jnp.float32)[:, None]
    div_term = jnp.exp(jnp.arange(0, d_model, 2, dtype=jnp.float32)
                       * (-jnp.log(10000.0) / d_model))
    pe = jnp.zeros((max_len, 1, d_model), jnp.float32)
    pe = pe.at[:, 0, 0::2].set(jnp.sin(position * div_term))
    pe = pe.at[:, 0, 1::2].set(jnp.cos(position * div_term))
    return pe


# ----------------------------------------------------------------------------
# Kernel 1: input_fc + DilatedConvEncoder + multi_cnn mean
#   grid over chunks of (both-branch) sequences, rows = seqs * T on sublanes.
# ----------------------------------------------------------------------------
def _encoder_kernel(x_ref, w_in_ref, wpack_ref, bpack_ref, mask_ref, o_ref,
                    *, blocks, cnns, shifts, comp):
    f32, bf16 = jnp.float32, jnp.bfloat16
    rows = x_ref.shape[0]

    def shifted(h, s):
        # out[t] = h[t + s] within each sequence, zeros outside: XLU roll + mask.
        if s == 0:
            return h.astype(bf16)
        rolled = pltpu.roll(h, shift=(-s) % rows, axis=0)
        return (rolled * mask_ref[shifts.index(s)]).astype(bf16)

    def conv(h, w_start, tap_shifts, b_row):
        acc = None
        for k, s in enumerate(tap_shifts):
            part = jnp.dot(shifted(h, s), wpack_ref[w_start + k],
                           preferred_element_type=f32)
            acc = part if acc is None else acc + part
        return acc + bpack_ref[b_row:b_row + 1, :]          # bias added once

    # input_fc  (zero-padded to Cmax lanes; pad columns stay exactly zero)
    h = jnp.dot(x_ref[...].astype(bf16), w_in_ref[...],
                preferred_element_type=f32) + bpack_ref[0:1, :]

    # TS2Vec ConvBlock stack: residual; gelu -> conv1 -> gelu -> conv2; + res
    for (d, w1s, b1r, w2s, b2r, wpi, bpr) in blocks:
        if wpi >= 0:
            res = jnp.dot(h.astype(bf16), wpack_ref[wpi],
                          preferred_element_type=f32) + bpack_ref[bpr:bpr + 1, :]
        else:
            res = h
        a = conv(_gelu(h), w1s, (-d, 0, d), b1r)            # SamePadConv, pad=d
        a = conv(_gelu(a), w2s, (-d, 0, d), b2r)
        h = a + res

    # multi_cnn: causal conv (padding=k-1, last k-1 outputs dropped); mean.
    acc = None
    for (k, ws, br) in cnns:
        y = conv(h, ws, tuple(range(-(k - 1), 1)), br)
        acc = y if acc is None else acc + y
    o_ref[...] = (acc * (1.0 / len(cnns)))[:, :comp]


def _encoder_call(enc, x_rows, *, cfg, n_seq_blk, seq_len):
    total_rows = x_rows.shape[0]
    rows_blk = n_seq_blk * seq_len
    grid = total_rows // rows_blk
    cin = x_rows.shape[1]
    comp = cfg["comp"]
    shifts = cfg["shifts"]

    # Precomputed (trace-time constant) per-row validity masks for each shift.
    tloc = jnp.arange(rows_blk, dtype=jnp.int32) % seq_len
    if shifts:
        masks = jnp.stack(
            [((tloc + s >= 0) & (tloc + s < seq_len)).astype(jnp.float32)[:, None]
             for s in shifts], axis=0)
    else:
        masks = jnp.zeros((1, rows_blk, 1), jnp.float32)

    kern = functools.partial(_encoder_kernel, blocks=cfg["blocks"],
                             cnns=cfg["cnns"], shifts=shifts, comp=comp)
    return pl.pallas_call(
        kern,
        grid=(grid,),
        in_specs=[
            pl.BlockSpec((rows_blk, cin), lambda i: (i, 0)),
            _rep_spec(enc["w_in"].shape),
            _rep_spec(enc["wpack"].shape),
            _rep_spec(enc["bpack"].shape),
            _rep_spec(masks.shape),
        ],
        out_specs=pl.BlockSpec((rows_blk, comp), lambda i: (i, 0)),
        out_shape=jax.ShapeDtypeStruct((total_rows, comp), jnp.float32),
        compiler_params=pltpu.CompilerParams(
            dimension_semantics=("parallel",),
            vmem_limit_bytes=32 * 1024 * 1024),
    )(x_rows, enc["w_in"], enc["wpack"], enc["bpack"], masks)


# ----------------------------------------------------------------------------
# Kernel 2: Feature_Projection + deduped two-branch galerkin attention + tail
#   (project -> neural_operator surrogate -> q_h_project -> vhh -> ODE surrogate
#    -> output head), channel-major, per sequence (grid over batch).
# ----------------------------------------------------------------------------
def _attn_tail_kernel(qhT_ref, vh_ref, emb_ref, qr_ref, o1_ref,
                      wfpT_ref, bfp_ref, pq_ref, mlp_ref, wprojT_ref,
                      col_ref, p10_ref, scal_ref, out_ref,
                      *, heads, hdim, inv_norm):
    f32, bf16 = jnp.float32, jnp.bfloat16
    h_ = hdim
    qhT = qhT_ref[0]                                   # (H, T)   f32
    vh = vh_ref[0]                                     # (T, H)   f32
    emb = emb_ref[0]                                   # (500, H) bf16
    qrow = qr_ref[0]                                   # (1, T)   f32
    o1row = o1_ref[0]                                  # (1, T)   f32
    dn0 = (((0,), (0,)), ((), ()))                     # contract over axis 0

    # Feature_Projection: k_h = Wfp^T @ emb + bfp      -> (100, H)
    kfp = jnp.dot(wfpT_ref[...], emb, preferred_element_type=f32) + bfp_ref[...]

    # Shared Gram of the two (k == v) branches; galerkin 1/Tq and the 0.5
    # branch average folded into inv_norm.  No explicit transposes.
    kfp_b = kfp.astype(bf16)
    vh_b = vh.astype(bf16)
    gram = lax.dot_general(kfp_b, kfp_b, dn0, preferred_element_type=f32)
    gram = gram + lax.dot_general(vh_b, vh_b, dn0, preferred_element_type=f32)
    g_hat = (gram * inv_norm).astype(bf16)             # (H, H)

    # Head-batched attention operator:
    #   x_h^T = sum_h Q_h^T Ghat P_h^T q^T + b_o  with P_h^T / Q_h^T stacked
    #   (trace-time) into pq_ref -> two M=256 matmuls + heads small products.
    qhT_b = qhT.astype(bf16)
    at_stk = jnp.dot(pq_ref[0], qhT_b, preferred_element_type=f32)   # (hH, T)
    gq_stk = jnp.dot(pq_ref[1], g_hat, preferred_element_type=f32)   # (hH, H)
    xhT = None
    for h in range(heads):
        term = jnp.dot(gq_stk[h * h_:(h + 1) * h_, :].astype(bf16),
                       at_stk[h * h_:(h + 1) * h_, :].astype(bf16),
                       preferred_element_type=f32)
        xhT = term if xhT is None else xhT + term
    xhT = xhT + col_ref[:, 0:1]                          # + b_o   (H, T)

    # project: (10, T)
    xpT = jnp.dot(wprojT_ref[...], xhT.astype(bf16),
                  preferred_element_type=f32) + p10_ref[:, 1:2]

    # TODO(synk): `neural_operator` is an injected external module with no
    # reference implementation; deterministic linear surrogate with the same
    # call signature (x_h, queries[..., None]) -> (B, T, 1).
    x1row = (jnp.sum(xpT * p10_ref[:, 0:1], axis=0, keepdims=True)
             + scal_ref[:, 0:1] + qrow * scal_ref[:, 1:2])           # (1, T)

    # q_h_project -> transpose(1,2) -> [:, -1, :] == last projected channel
    resq = (jnp.sum(qhT * col_ref[:, 8:9], axis=0, keepdims=True)
            + scal_ref[:, 2:3])                                      # (1, T)
    dx = x1row + resq                                                # (1, T)

    # vhh_embedding_layer: Linear(1, H) == outer-product broadcast (VPU only)
    vhhT = col_ref[:, 1:2] * dx + col_ref[:, 2:3]                    # (H, T)

    # TODO(synk): ODENet (augmented neural ODE) source not provided; surrogate
    # is one explicit-Euler step of an MLP vector field (shape preserving).
    hmid = jax.nn.silu(jnp.dot(mlp_ref[0], vhhT.astype(bf16),
                               preferred_element_type=f32) + col_ref[:, 3:4])
    feats = vhhT + jnp.dot(mlp_ref[1], hmid.astype(bf16),
                           preferred_element_type=f32) + col_ref[:, 4:5]

    # output_layers: Linear -> GELU -> Linear -> GELU -> Linear (dropout=eval id)
    o = _gelu(jnp.dot(mlp_ref[2], feats.astype(bf16),
                      preferred_element_type=f32) + col_ref[:, 5:6])
    o = _gelu(jnp.dot(mlp_ref[3], o.astype(bf16),
                      preferred_element_type=f32) + col_ref[:, 6:7])
    out0 = jnp.sum(o * col_ref[:, 7:8], axis=0, keepdims=True) + scal_ref[:, 3:4]

    out_ref[0] = x1row + out0 + o1row                   # preds1, lane-dense (1, T)


def _attn_tail_call(att, q_hT, v_h, emb, queries, out1, *, heads, hdim, seq_len):
    batch = q_hT.shape[0]
    emb_len = emb.shape[1]
    q3 = queries.reshape(batch, 1, seq_len).astype(jnp.float32)
    o3 = out1.reshape(batch, 1, seq_len).astype(jnp.float32)
    kern = functools.partial(_attn_tail_kernel, heads=heads, hdim=hdim,
                             inv_norm=0.5 / seq_len)
    out = pl.pallas_call(
        kern,
        grid=(batch,),
        in_specs=[
            pl.BlockSpec((1, hdim, seq_len), lambda b: (b, 0, 0)),
            pl.BlockSpec((1, seq_len, hdim), lambda b: (b, 0, 0)),
            pl.BlockSpec((1, emb_len, hdim), lambda b: (b, 0, 0)),
            pl.BlockSpec((1, 1, seq_len), lambda b: (b, 0, 0)),
            pl.BlockSpec((1, 1, seq_len), lambda b: (b, 0, 0)),
            _rep_spec(att["wfpT"].shape),
            _rep_spec(att["bfp_col"].shape),
            _rep_spec(att["pq"].shape),
            _rep_spec(att["mlpT"].shape),
            _rep_spec(att["wprojT"].shape),
            _rep_spec(att["colpack"].shape),
            _rep_spec(att["p10"].shape),
            _rep_spec(att["scal"].shape),
        ],
        out_specs=pl.BlockSpec((1, 1, seq_len), lambda b: (b, 0, 0)),
        out_shape=jax.ShapeDtypeStruct((batch, 1, seq_len), jnp.float32),
        compiler_params=pltpu.CompilerParams(
            dimension_semantics=("parallel",),
            vmem_limit_bytes=32 * 1024 * 1024),
    )(q_hT, v_h, emb, q3, o3, att["wfpT"], att["bfp_col"], att["pq"], att["mlpT"],
      att["wprojT"], att["colpack"], att["p10"], att["scal"])
    return out.reshape(batch, seq_len)


# ----------------------------------------------------------------------------
# Parameter init (deterministic, synthetic) -- mirrors the reference layers.
# ----------------------------------------------------------------------------
def make_params(key, input_dim, hidden_dim, output_dim, rep_dim, depth, kernels,
                heads):
    comp = rep_dim // 2
    assert comp == hidden_dim, "LinearAttention requires rep_dim // 2 == hidden_dim"
    inner = heads * hidden_dim                         # dim_head = hidden_dim
    ks = iter(jax.random.split(key, 128))

    def nk():
        return next(ks)

    def lin(fan_in, fan_out):
        w = jax.random.normal(nk(), (fan_in, fan_out), jnp.float32) / (fan_in ** 0.5)
        b = jax.random.normal(nk(), (1, fan_out), jnp.float32) * 0.01
        return (w, b)

    def conv(cin, cout, k):
        w = jax.random.normal(nk(), (k, cin, cout), jnp.float32) / ((cin * k) ** 0.5)
        b = jax.random.normal(nk(), (1, cout), jnp.float32) * 0.01
        return (w, b)

    params = {}
    params["input_fc"] = lin(input_dim, hidden_dim)
    params["embedding"] = jax.random.normal(nk(), (500, hidden_dim), jnp.float32)
    params["feat_proj"] = lin(500, 100)

    channels = [hidden_dim] * depth + [rep_dim]
    blocks, in_ch = [], hidden_dim
    for i, out_ch in enumerate(channels):
        blk = {}
        blk["w1"], blk["b1"] = conv(in_ch, out_ch, 3)
        blk["w2"], blk["b2"] = conv(out_ch, out_ch, 3)
        if in_ch != out_ch or i == len(channels) - 1:
            blk["wp"], blk["bp"] = lin(in_ch, out_ch)   # 1x1 projector conv
        blocks.append(blk)
        in_ch = out_ch
    params["feature_extractor"] = blocks
    params["multi_cnn"] = [conv(rep_dim, comp, k) for k in kernels]

    attn = {}
    attn["wq"] = jax.random.normal(nk(), (hidden_dim, inner), jnp.float32) / (hidden_dim ** 0.5)
    attn["wk"] = jax.random.normal(nk(), (hidden_dim, inner), jnp.float32) / (hidden_dim ** 0.5)
    # to_v exists in the reference but is dead (values are projected with to_k).
    attn["wv"] = jax.random.normal(nk(), (hidden_dim, inner), jnp.float32) / (hidden_dim ** 0.5)
    attn["wo"], attn["bo"] = lin(inner, hidden_dim)
    params["attn"] = attn

    params["project"] = lin(hidden_dim, 10)
    params["q_h_project"] = lin(hidden_dim, 10)
    params["vhh"] = lin(1, hidden_dim)

    # neural_operator surrogate (linear map on the 10-dim features + query term)
    params["no_w"], params["no_b"] = lin(10, 1)
    params["no_wq"] = jax.random.normal(nk(), (1, 1), jnp.float32) * 0.1

    # ODENet surrogate (one explicit-Euler step of an MLP vector field)
    params["ode1"] = lin(hidden_dim, hidden_dim)
    params["ode2"] = lin(hidden_dim, hidden_dim)

    params["out_l1"] = lin(hidden_dim, hidden_dim)
    params["out_l2"] = lin(hidden_dim, hidden_dim)
    params["out_l3"] = lin(hidden_dim, output_dim)
    return params


# ----------------------------------------------------------------------------
# One-time inference prep: pack / pad / transpose / fold heads / cast to bf16.
# Runs eagerly (outside jit) so no per-forward convert ops remain.
# ----------------------------------------------------------------------------
def prepare_inference_params(params, *, input_dim, hidden_dim, rep_dim, kernels,
                             heads):
    f32, bf16 = jnp.float32, jnp.bfloat16
    hdim = hidden_dim
    comp = rep_dim // 2
    assert comp == hdim
    cmax = max(hidden_dim, rep_dim)

    def pad_w(w):
        return jnp.zeros((cmax, cmax), f32).at[: w.shape[0], : w.shape[1]].set(w)

    def pad_b(b):
        return jnp.zeros((cmax,), f32).at[: b.shape[1]].set(b[0])

    # ---- encoder pack (3 tensors) ----
    blocks = params["feature_extractor"]
    w_in, b_in = params["input_fc"]
    slabs, brows, block_meta = [], [pad_b(b_in)], []
    for i, blk in enumerate(blocks):
        d = 2 ** i
        w1s = len(slabs); slabs += [pad_w(blk["w1"][k]) for k in range(3)]
        b1r = len(brows); brows.append(pad_b(blk["b1"]))
        w2s = len(slabs); slabs += [pad_w(blk["w2"][k]) for k in range(3)]
        b2r = len(brows); brows.append(pad_b(blk["b2"]))
        if "wp" in blk:
            wpi = len(slabs); slabs.append(pad_w(blk["wp"]))
            bpr = len(brows); brows.append(pad_b(blk["bp"]))
        else:
            wpi, bpr = -1, -1
        block_meta.append((d, w1s, b1r, w2s, b2r, wpi, bpr))
    cnn_meta = []
    for (wc, bc), k in zip(params["multi_cnn"], kernels):
        ws = len(slabs); slabs += [pad_w(wc[j]) for j in range(int(k))]
        br = len(brows); brows.append(pad_b(bc))
        cnn_meta.append((int(k), ws, br))

    sset = set()
    for (d, *_r) in block_meta:
        sset.update({-d, d})
    for (k, *_r) in cnn_meta:
        sset.update({-j for j in range(1, k)})
    shifts = tuple(sorted(sset))

    enc = {
        "w_in": jnp.zeros((input_dim, cmax), f32).at[:, :hdim].set(w_in).astype(bf16),
        "wpack": jnp.stack(slabs).astype(bf16),
        "bpack": jnp.stack(brows).astype(f32),
    }

    # ---- attention + tail pack (all transposes / head folds done once) ----
    attn = params["attn"]
    wq, wk, wo, bo = attn["wq"], attn["wk"], attn["wo"], attn["bo"]
    pt_list, qt_list = [], []
    for h in range(heads):
        wq_h = wq[:, h * hdim:(h + 1) * hdim]
        wk_h = wk[:, h * hdim:(h + 1) * hdim]
        wo_h = wo[h * hdim:(h + 1) * hdim, :]
        pt_list.append(wk_h @ wq_h.T)                 # P_h^T = Wk_h Wq_h^T
        qt_list.append((wk_h @ wo_h).T)               # Q_h^T = (Wk_h Wo_h)^T
    pq = jnp.stack([jnp.concatenate(pt_list, axis=0),
                    jnp.concatenate(qt_list, axis=0)], axis=0)

    wfp, bfp = params["feat_proj"]
    wproj, bproj = params["project"]
    wqhp, bqhp = params["q_h_project"]
    wvhh, bvhh = params["vhh"]
    ode1_w, ode1_b = params["ode1"]
    ode2_w, ode2_b = params["ode2"]
    l1_w, l1_b = params["out_l1"]
    l2_w, l2_b = params["out_l2"]
    wo3, bo3 = params["out_l3"]
    no_w, no_b, no_wq = params["no_w"], params["no_b"], params["no_wq"]

    att = {
        "wfpT": wfp.T.astype(bf16),                                   # (100, 500)
        "bfp_col": bfp.reshape(-1, 1).astype(f32),                    # (100, 1)
        "pq": pq.astype(bf16),                                        # (2, heads*H, H)
        "mlpT": jnp.stack([ode1_w.T, ode2_w.T, l1_w.T, l2_w.T]).astype(bf16),
        "wprojT": wproj.T.astype(bf16),                               # (10, H)
        "colpack": jnp.stack(
            [bo[0], wvhh[0], bvhh[0], ode1_b[0], ode2_b[0], l1_b[0], l2_b[0],
             wo3[:, 0], wqhp[:, -1]], axis=1).astype(f32),            # (H, 9)
        "p10": jnp.stack([no_w[:, 0], bproj[0]], axis=1).astype(f32),  # (10, 2)
        "scal": jnp.stack([no_b[0, 0], no_wq[0, 0], bqhp[0, -1],
                           bo3[0, 0]]).reshape(1, 4).astype(f32),
    }

    prep = {"enc": enc, "attn": att,
            "embedding": params["embedding"].astype(f32)}
    cfg = {"hidden_dim": hdim, "comp": comp, "heads": heads,
           "blocks": tuple(block_meta), "cnns": tuple(cnn_meta),
           "shifts": shifts}
    return prep, cfg


# ----------------------------------------------------------------------------
# MANO1D forward
# ----------------------------------------------------------------------------
def mano1d_forward(prep, queries, keys, values, t, *, cfg):
    del t                                              # unused in the reference forward
    batch, cin, seq_len = values.shape
    hdim, comp, heads = cfg["hidden_dim"], cfg["comp"], cfg["heads"]

    x = jnp.swapaxes(values, 1, 2).astype(jnp.float32)       # (B, T, Cin)
    out1 = values[:, -1, :].astype(jnp.float32)              # (B, T) last CHANNEL (ref quirk)

    # Real part of torch.fft.fft over the flattened T*Cin axis (reference
    # semantics) as tiny f32 XLA glue, fused with the branch concat below.
    n = seq_len * cin
    xf = jnp.dot(x.reshape(batch, n), dft_cos_matrix(n),
                 precision=lax.Precision.HIGHEST)
    v = xf.reshape(batch, seq_len, cin)

    # Both branches share input_fc / encoder / multi_cnn weights: stack the
    # 2B sequences on the sublane axis and run the encoder kernel once.
    two_b = 2 * batch
    rows = jnp.concatenate([x, v], axis=0)                   # (2B, T, Cin)
    nseq = max(1, min(two_b, max(1, 128 // seq_len)))        # ~128 rows / block
    if -(-two_b // nseq) < 2 and two_b > 1:
        nseq = -(-two_b // 2)                                # >=2 steps (v7x megacore)
    npad = -(-two_b // nseq) * nseq
    if npad > two_b:
        rows = jnp.concatenate(
            [rows, jnp.zeros((npad - two_b, seq_len, cin), jnp.float32)], axis=0)
    x_rows = rows.reshape(npad * seq_len, cin)

    q_v = _encoder_call(prep["enc"], x_rows, cfg=cfg, n_seq_blk=nseq,
                        seq_len=seq_len)
    q_v = q_v[: two_b * seq_len].reshape(two_b, seq_len, comp)
    q_h, v_h = q_v[:batch], q_v[batch:]                      # (B, T, H) each

    # embedding + positional encoding (gather / elementwise glue in plain JAX;
    # reference adds pe[:batch], broadcasting over the 500 axis -- a quirk).
    emb = jnp.take(prep["embedding"], keys.astype(jnp.int32), axis=0) * (hdim ** 0.5)
    emb = (emb + positional_encoding(batch, hdim)[:batch]).astype(jnp.bfloat16)

    # fused Feature_Projection + galerkin attention + tail (channel-major).
    q_hT = jnp.swapaxes(q_h, 1, 2)                           # (B, H, T)
    preds = _attn_tail_call(prep["attn"], q_hT, v_h, emb, queries, out1,
                            heads=heads, hdim=hdim, seq_len=seq_len)
    return preds                                             # (B, T)


# ----------------------------------------------------------------------------
if __name__ == "__main__":
    B, input_dim, T = 2, 4, 16
    hidden_dim, rep_dim, depth = 32, 64, 2                   # rep_dim // 2 == hidden_dim
    output_dim = 1
    kernels = (1, 3)
    heads = 8

    key = jax.random.PRNGKey(0)
    kp, kq, kk, kv = jax.random.split(key, 4)
    params = make_params(kp, input_dim, hidden_dim, output_dim, rep_dim, depth,
                         kernels, heads)
    prep, cfg = prepare_inference_params(
        params, input_dim=input_dim, hidden_dim=hidden_dim, rep_dim=rep_dim,
        kernels=kernels, heads=heads)

    queries = jax.random.uniform(kq, (B, T), jnp.float32)           # neural_operator queries
    keys_in = jax.random.randint(kk, (B, 500), 0, 500)              # Feature_Projection needs seq=500
    values = jax.random.normal(kv, (B, input_dim, T), jnp.float32)  # (B, C=input_dim, T)
    t = jnp.zeros((B,), jnp.float32)

    fwd = jax.jit(functools.partial(mano1d_forward, cfg=cfg))
    preds = fwd(prep, queries, keys_in, values, t)
    preds = jax.block_until_ready(preds)
    assert preds.shape == (B, T) and preds.dtype == jnp.float32
    print("KERNEL_OK")
</pallas_src>

<mosaic_0001>
module attributes {stable_mosaic.version = 11 : i64} {
  func.func @_encoder_kernel(%arg0: i32, %arg1: memref<32x4xf32, #tpu.memory_space<vmem>>, %arg2: memref<4x64xbf16, #tpu.memory_space<vmem>>, %arg3: memref<23x64x64xbf16, #tpu.memory_space<vmem>>, %arg4: memref<10x64xf32, #tpu.memory_space<vmem>>, %arg5: memref<6x32x1xf32, #tpu.memory_space<vmem>>, %arg6: memref<32x32xf32, #tpu.memory_space<vmem>>) attributes {dimension_semantics = [#tpu.dimension_semantics<parallel>], iteration_bounds = array<i64: 2>, scalar_prefetch = 0 : i64, scratch_operands = 0 : i64, tpu.core_type = #tpu.core_type<tc>, window_params = [{transform_indices = @transform_0, window_bounds = array<i64: 32, 4>}, {pipeline_mode = #tpu.pipeline_mode<synchronous>, transform_indices = @transform_1, window_bounds = array<i64: 4, 64>}, {pipeline_mode = #tpu.pipeline_mode<synchronous>, transform_indices = @transform_2, window_bounds = array<i64: 23, 64, 64>}, {pipeline_mode = #tpu.pipeline_mode<synchronous>, transform_indices = @transform_3, window_bounds = array<i64: 10, 64>}, {pipeline_mode = #tpu.pipeline_mode<synchronous>, transform_indices = @transform_4, window_bounds = array<i64: 6, 32, 1>}, {transform_indices = @transform_5, window_bounds = array<i64: 32, 32>}]} {
    %c0 = arith.constant 0 : index
    %c0_0 = arith.constant 0 : index
    %0 = vector.load %arg1[%c0, %c0_0] : memref<32x4xf32, #tpu.memory_space<vmem>>, vector<32x4xf32>
    %1 = arith.truncf %0 : vector<32x4xf32> to vector<32x4xbf16>
    %c0_1 = arith.constant 0 : index
    %c0_2 = arith.constant 0 : index
    %2 = vector.load %arg2[%c0_1, %c0_2] : memref<4x64xbf16, #tpu.memory_space<vmem>>, vector<4x64xbf16>
    %cst = arith.constant dense<0.000000e+00> : vector<32x64xf32>
    %3 = tpu.matmul %1, %2, %cst {dimension_numbers = #tpu.dot_dimension_numbers<[1], [0], [0], [1], [0, 0, 1, 1], [], []>} : vector<32x4xbf16>, vector<4x64xbf16>, vector<32x64xf32> -> vector<32x64xf32>
    %c0_3 = arith.constant 0 : index
    %c0_4 = arith.constant 0 : index
    %4 = vector.load %arg4[%c0_3, %c0_4] : memref<10x64xf32, #tpu.memory_space<vmem>>, vector<1x64xf32>
    %5 = vector.broadcast %4 : vector<1x64xf32> to vector<32x64xf32>
    %6 = arith.addf %3, %5 : vector<32x64xf32>
    %7 = arith.mulf %6, %6 : vector<32x64xf32>
    %8 = arith.mulf %6, %7 : vector<32x64xf32>
    %cst_5 = arith.constant 4.471500e-02 : f32
    %9 = vector.broadcast %cst_5 : f32 to vector<32x64xf32>
    %10 = arith.mulf %9, %8 : vector<32x64xf32>
    %11 = arith.addf %6, %10 : vector<32x64xf32>
    %cst_6 = arith.constant 0.797884583 : f32
    %12 = vector.broadcast %cst_6 : f32 to vector<32x64xf32>
    %13 = arith.mulf %12, %11 : vector<32x64xf32>
    %14 = math.tanh %13 : vector<32x64xf32>
    %cst_7 = arith.constant 1.000000e+00 : f32
    %15 = vector.broadcast %cst_7 : f32 to vector<32x64xf32>
    %16 = arith.addf %15, %14 : vector<32x64xf32>
    %cst_8 = arith.constant 5.000000e-01 : f32
    %17 = vector.broadcast %cst_8 : f32 to vector<32x64xf32>
    %18 = arith.mulf %17, %16 : vector<32x64xf32>
    %19 = arith.mulf %6, %18 : vector<32x64xf32>
    %c1_i32 = arith.constant 1 : i32
    %20 = tpu.dynamic_rotate %19 by %c1_i32 dim 0 : vector<32x64xf32>, i32 -> vector<32x64xf32>
    %c2 = arith.constant 2 : index
    %c0_9 = arith.constant 0 : index
    %c0_10 = arith.constant 0 : index
    %21 = vector.load %arg5[%c2, %c0_9, %c0_10] : memref<6x32x1xf32, #tpu.memory_space<vmem>>, vector<1x32x1xf32>
    %22 = vector.shape_cast %21 : vector<1x32x1xf32> to vector<32x1xf32>
    %23 = vector.broadcast %22 : vector<32x1xf32> to vector<32x64xf32>
    %24 = arith.mulf %20, %23 : vector<32x64xf32>
    %25 = arith.truncf %24 : vector<32x64xf32> to vector<32x64xbf16>
    %c0_11 = arith.constant 0 : index
    %c0_12 = arith.constant 0 : index
    %c0_13 = arith.constant 0 : index
    %26 = vector.load %arg3[%c0_11, %c0_12, %c0_13] : memref<23x64x64xbf16, #tpu.memory_space<vmem>>, vector<1x64x64xbf16>
    %27 = vector.shape_cast %26 : vector<1x64x64xbf16> to vector<64x64xbf16>
    %cst_14 = arith.constant dense<0.000000e+00> : vector<32x64xf32>
    %28 = tpu.matmul %25, %27, %cst_14 {dimension_numbers = #tpu.dot_dimension_numbers<[1], [0], [0], [1], [0, 0, 1, 1], [], []>} : vector<32x64xbf16>, vector<64x64xbf16>, vector<32x64xf32> -> vector<32x64xf32>
    %29 = arith.truncf %19 : vector<32x64xf32> to vector<32x64xbf16>
    %c1 = arith.constant 1 : index
    %c0_15 = arith.constant 0 : index
    %c0_16 = arith.constant 0 : index
    %30 = vector.load %arg3[%c1, %c0_15, %c0_16] : memref<23x64x64xbf16, #tpu.memory_space<vmem>>, vector<1x64x64xbf16>
    %31 = vector.shape_cast %30 : vector<1x64x64xbf16> to vector<64x64xbf16>
    %cst_17 = arith.constant dense<0.000000e+00> : vector<32x64xf32>
    %32 = tpu.matmul %29, %31, %cst_17 {dimension_numbers = #tpu.dot_dimension_numbers<[1], [0], [0], [1], [0, 0, 1, 1], [], []>} : vector<32x64xbf16>, vector<64x64xbf16>, vector<32x64xf32> -> vector<32x64xf32>
    %33 = arith.addf %28, %32 : vector<32x64xf32>
    %c31_i32 = arith.constant 31 : i32
    %34 = tpu.dynamic_rotate %19 by %c31_i32 dim 0 : vector<32x64xf32>, i32 -> vector<32x64xf32>
    %c3 = arith.constant 3 : index
    %c0_18 = arith.constant 0 : index
    %c0_19 = arith.constant 0 : index
    %35 = vector.load %arg5[%c3, %c0_18, %c0_19] : memref<6x32x1xf32, #tpu.memory_space<vmem>>, vector<1x32x1xf32>
    %36 = vector.shape_cast %35 : vector<1x32x1xf32> to vector<32x1xf32>
    %37 = vector.broadcast %36 : vector<32x1xf32> to vector<32x64xf32>
    %38 = arith.mulf %34, %37 : vector<32x64xf32>
    %39 = arith.truncf %38 : vector<32x64xf32> to vector<32x64xbf16>
    %c2_20 = arith.constant 2 : index
    %c0_21 = arith.constant 0 : index
    %c0_22 = arith.constant 0 : index
    %40 = vector.load %arg3[%c2_20, %c0_21, %c0_22] : memref<23x64x64xbf16, #tpu.memory_space<vmem>>, vector<1x64x64xbf16>
    %41 = vector.shape_cast %40 : vector<1x64x64xbf16> to vector<64x64xbf16>
    %cst_23 = arith.constant dense<0.000000e+00> : vector<32x64xf32>
    %42 = tpu.matmul %39, %41, %cst_23 {dimension_numbers = #tpu.dot_dimension_numbers<[1], [0], [0], [1], [0, 0, 1, 1], [], []>} : vector<32x64xbf16>, vector<64x64xbf16>, vector<32x64xf32> -> vector<32x64xf32>
    %43 = arith.addf %33, %42 : vector<32x64xf32>
    %c1_24 = arith.constant 1 : index
    %c0_25 = arith.constant 0 : index
    %44 = vector.load %arg4[%c1_24, %c0_25] : memref<10x64xf32, #tpu.memory_space<vmem>>, vector<1x64xf32>
    %45 = vector.broadcast %44 : vector<1x64xf32> to vector<32x64xf32>
    %46 = arith.addf %43, %45 : vector<32x64xf32>
    %47 = arith.mulf %46, %46 : vector<32x64xf32>
    %48 = arith.mulf %46, %47 : vector<32x64xf32>
    %cst_26 = arith.constant 4.471500e-02 : f32
    %49 = vector.broadcast %cst_26 : f32 to vector<32x64xf32>
    %50 = arith.mulf %49, %48 : vector<32x64xf32>
    %51 = arith.addf %46, %50 : vector<32x64xf32>
    %cst_27 = arith.constant 0.797884583 : f32
    %52 = vector.broadcast %cst_27 : f32 to vector<32x64xf32>
    %53 = arith.mulf %52, %51 : vector<32x64xf32>
    %54 = math.tanh %53 : vector<32x64xf32>
    %cst_28 = arith.constant 1.000000e+00 : f32
    %55 = vector.broadcast %cst_28 : f32 to vector<32x64xf32>
    %56 = arith.addf %55, %54 : vector<32x64xf32>
    %cst_29 = arith.constant 5.000000e-01 : f32
    %57 = vector.broadcast %cst_29 : f32 to vector<32x64xf32>
    %58 = arith.mulf %57, %56 : vector<32x64xf32>
    %59 = arith.mulf %46, %58 : vector<32x64xf32>
    %c1_i32_30 = arith.constant 1 : i32
    %60 = tpu.dynamic_rotate %59 by %c1_i32_30 dim 0 : vector<32x64xf32>, i32 -> vector<32x64xf32>
    %c2_31 = arith.constant 2 : index
    %c0_32 = arith.constant 0 : index
    %c0_33 = arith.constant 0 : index
    %61 = vector.load %arg5[%c2_31, %c0_32, %c0_33] : memref<6x32x1xf32, #tpu.memory_space<vmem>>, vector<1x32x1xf32>
    %62 = vector.shape_cast %61 : vector<1x32x1xf32> to vector<32x1xf32>
    %63 = vector.broadcast %62 : vector<32x1xf32> to vector<32x64xf32>
    %64 = arith.mulf %60, %63 : vector<32x64xf32>
    %65 = arith.truncf %64 : vector<32x64xf32> to vector<32x64xbf16>
    %c3_34 = arith.constant 3 : index
    %c0_35 = arith.constant 0 : index
    %c0_36 = arith.constant 0 : index
    %66 = vector.load %arg3[%c3_34, %c0_35, %c0_36] : memref<23x64x64xbf16, #tpu.memory_space<vmem>>, vector<1x64x64xbf16>
    %67 = vector.shape_cast %66 : vector<1x64x64xbf16> to vector<64x64xbf16>
    %cst_37 = arith.constant dense<0.000000e+00> : vector<32x64xf32>
    %68 = tpu.matmul %65, %67, %cst_37 {dimension_numbers = #tpu.dot_dimension_numbers<[1], [0], [0], [1], [0, 0, 1, 1], [], []>} : vector<32x64xbf16>, vector<64x64xbf16>, vector<32x64xf32> -> vector<32x64xf32>
    %69 = arith.truncf %59 : vector<32x64xf32> to vector<32x64xbf16>
    %c4 = arith.constant 4 : index
    %c0_38 = arith.constant 0 : index
    %c0_39 = arith.constant 0 : index
    %70 = vector.load %arg3[%c4, %c0_38, %c0_39] : memref<23x64x64xbf16, #tpu.memory_space<vmem>>, vector<1x64x64xbf16>
    %71 = vector.shape_cast %70 : vector<1x64x64xbf16> to vector<64x64xbf16>
    %cst_40 = arith.constant dense<0.000000e+00> : vector<32x64xf32>
    %72 = tpu.matmul %69, %71, %cst_40 {dimension_numbers = #tpu.dot_dimension_numbers<[1], [0], [0], [1], [0, 0, 1, 1], [], []>} : vector<32x64xbf16>, vector<64x64xbf16>, vector<32x64xf32> -> vector<32x64xf32>
    %73 = arith.addf %68, %72 : vector<32x64xf32>
    %c31_i32_41 = arith.constant 31 : i32
    %74 = tpu.dynamic_rotate %59 by %c31_i32_41 dim 0 : vector<32x64xf32>, i32 -> vector<32x64xf32>
    %c3_42 = arith.constant 3 : index
    %c0_43 = arith.constant 0 : index
    %c0_44 = arith.constant 0 : index
    %75 = vector.load %arg5[%c3_42, %c0_43, %c0_44] : memref<6x32x1xf32, #tpu.memory_space<vmem>>, vector<1x32x1xf32>
    %76 = vector.shape_cast %75 : vector<1x32x1xf32> to vector<32x1xf32>
    %77 = vector.broadcast %76 : vector<32x1xf32> to vector<32x64xf32>
    %78 = arith.mulf %74, %77 : vector<32x64xf32>
    %79 = arith.truncf %78 : vector<32x64xf32> to vector<32x64xbf16>
    %c5 = arith.constant 5 : index
    %c0_45 = arith.constant 0 : index
    %c0_46 = arith.constant 0 : index
    %80 = vector.load %arg3[%c5, %c0_45, %c0_46] : memref<23x64x64xbf16, #tpu.memory_space<vmem>>, vector<1x64x64xbf16>
    %81 = vector.shape_cast %80 : vector<1x64x64xbf16> to vector<64x64xbf16>
    %cst_47 = arith.constant dense<0.000000e+00> : vector<32x64xf32>
    %82 = tpu.matmul %79, %81, %cst_47 {dimension_numbers = #tpu.dot_dimension_numbers<[1], [0], [0], [1], [0, 0, 1, 1], [], []>} : vector<32x64xbf16>, vector<64x64xbf16>, vector<32x64xf32> -> vector<32x64xf32>
    %83 = arith.addf %73, %82 : vector<32x64xf32>
    %c2_48 = arith.constant 2 : index
    %c0_49 = arith.constant 0 : index
    %84 = vector.load %arg4[%c2_48, %c0_49] : memref<10x64xf32, #tpu.memory_space<vmem>>, vector<1x64xf32>
    %85 = vector.broadcast %84 : vector<1x64xf32> to vector<32x64xf32>
    %86 = arith.addf %83, %85 : vector<32x64xf32>
    %87 = arith.addf %86, %6 : vector<32x64xf32>
    %88 = arith.mulf %87, %87 : vector<32x64xf32>
    %89 = arith.mulf %87, %88 : vector<32x64xf32>
    %cst_50 = arith.constant 4.471500e-02 : f32
    %90 = vector.broadcast %cst_50 : f32 to vector<32x64xf32>
    %91 = arith.mulf %90, %89 : vector<32x64xf32>
    %92 = arith.addf %87, %91 : vector<32x64xf32>
    %cst_51 = arith.constant 0.797884583 : f32
    %93 = vector.broadcast %cst_51 : f32 to vector<32x64xf32>
    %94 = arith.mulf %93, %92 : vector<32x64xf32>
    %95 = math.tanh %94 : vector<32x64xf32>
    %cst_52 = arith.constant 1.000000e+00 : f32
    %96 = vector.broadcast %cst_52 : f32 to vector<32x64xf32>
    %97 = arith.addf %96, %95 : vector<32x64xf32>
    %cst_53 = arith.constant 5.000000e-01 : f32
    %98 = vector.broadcast %cst_53 : f32 to vector<32x64xf32>
    %99 = arith.mulf %98, %97 : vector<32x64xf32>
    %100 = arith.mulf %87, %99 : vector<32x64xf32>
    %c2_i32 = arith.constant 2 : i32
    %101 = tpu.dynamic_rotate %100 by %c2_i32 dim 0 : vector<32x64xf32>, i32 -> vector<32x64xf32>
    %c1_54 = arith.constant 1 : index
    %c0_55 = arith.constant 0 : index
    %c0_56 = arith.constant 0 : index
    %102 = vector.load %arg5[%c1_54, %c0_55, %c0_56] : memref<6x32x1xf32, #tpu.memory_space<vmem>>, vector<1x32x1xf32>
    %103 = vector.shape_cast %102 : vector<1x32x1xf32> to vector<32x1xf32>
    %104 = vector.broadcast %103 : vector<32x1xf32> to vector<32x64xf32>
    %105 = arith.mulf %101, %104 : vector<32x64xf32>
    %106 = arith.truncf %105 : vector<32x64xf32> to vector<32x64xbf16>
    %c6 = arith.constant 6 : index
    %c0_57 = arith.constant 0 : index
    %c0_58 = arith.constant 0 : index
    %107 = vector.load %arg3[%c6, %c0_57, %c0_58] : memref<23x64x64xbf16, #tpu.memory_space<vmem>>, vector<1x64x64xbf16>
    %108 = vector.shape_cast %107 : vector<1x64x64xbf16> to vector<64x64xbf16>
    %cst_59 = arith.constant dense<0.000000e+00> : vector<32x64xf32>
    %109 = tpu.matmul %106, %108, %cst_59 {dimension_numbers = #tpu.dot_dimension_numbers<[1], [0], [0], [1], [0, 0, 1, 1], [], []>} : vector<32x64xbf16>, vector<64x64xbf16>, vector<32x64xf32> -> vector<32x64xf32>
    %110 = arith.truncf %100 : vector<32x64xf32> to vector<32x64xbf16>
    %c7 = arith.constant 7 : index
    %c0_60 = arith.constant 0 : index
    %c0_61 = arith.constant 0 : index
    %111 = vector.load %arg3[%c7, %c0_60, %c0_61] : memref<23x64x64xbf16, #tpu.memory_space<vmem>>, vector<1x64x64xbf16>
    %112 = vector.shape_cast %111 : vector<1x64x64xbf16> to vector<64x64xbf16>
    %cst_62 = arith.constant dense<0.000000e+00> : vector<32x64xf32>
    %113 = tpu.matmul %110, %112, %cst_62 {dimension_numbers = #tpu.dot_dimension_numbers<[1], [0], [0], [1], [0, 0, 1, 1], [], []>} : vector<32x64xbf16>, vector<64x64xbf16>, vector<32x64xf32> -> vector<32x64xf32>
    %114 = arith.addf %109, %113 : vector<32x64xf32>
    %c30_i32 = arith.constant 30 : i32
    %115 = tpu.dynamic_rotate %100 by %c30_i32 dim 0 : vector<32x64xf32>, i32 -> vector<32x64xf32>
    %c4_63 = arith.constant 4 : index
    %c0_64 = arith.constant 0 : index
    %c0_65 = arith.constant 0 : index
    %116 = vector.load %arg5[%c4_63, %c0_64, %c0_65] : memref<6x32x1xf32, #tpu.memory_space<vmem>>, vector<1x32x1xf32>
    %117 = vector.shape_cast %116 : vector<1x32x1xf32> to vector<32x1xf32>
    %118 = vector.broadcast %117 : vector<32x1xf32> to vector<32x64xf32>
    %119 = arith.mulf %115, %118 : vector<32x64xf32>
    %120 = arith.truncf %119 : vector<32x64xf32> to vector<32x64xbf16>
    %c8 = arith.constant 8 : index
    %c0_66 = arith.constant 0 : index
    %c0_67 = arith.constant 0 : index
    %121 = vector.load %arg3[%c8, %c0_66, %c0_67] : memref<23x64x64xbf16, #tpu.memory_space<vmem>>, vector<1x64x64xbf16>
    %122 = vector.shape_cast %121 : vector<1x64x64xbf16> to vector<64x64xbf16>
    %cst_68 = arith.constant dense<0.000000e+00> : vector<32x64xf32>
    %123 = tpu.matmul %120, %122, %cst_68 {dimension_numbers = #tpu.dot_dimension_numbers<[1], [0], [0], [1], [0, 0, 1, 1], [], []>} : vector<32x64xbf16>, vector<64x64xbf16>, vector<32x64xf32> -> vector<32x64xf32>
    %124 = arith.addf %114, %123 : vector<32x64xf32>
    %c3_69 = arith.constant 3 : index
    %c0_70 = arith.constant 0 : index
    %125 = vector.load %arg4[%c3_69, %c0_70] : memref<10x64xf32, #tpu.memory_space<vmem>>, vector<1x64xf32>
    %126 = vector.broadcast %125 : vector<1x64xf32> to vector<32x64xf32>
    %127 = arith.addf %124, %126 : vector<32x64xf32>
    %128 = arith.mulf %127, %127 : vector<32x64xf32>
    %129 = arith.mulf %127, %128 : vector<32x64xf32>
    %cst_71 = arith.constant 4.471500e-02 : f32
    %130 = vector.broadcast %cst_71 : f32 to vector<32x64xf32>
    %131 = arith.mulf %130, %129 : vector<32x64xf32>
    %132 = arith.addf %127, %131 : vector<32x64xf32>
    %cst_72 = arith.constant 0.797884583 : f32
    %133 = vector.broadcast %cst_72 : f32 to vector<32x64xf32>
    %134 = arith.mulf %133, %132 : vector<32x64xf32>
    %135 = math.tanh %134 : vector<32x64xf32>
    %cst_73 = arith.constant 1.000000e+00 : f32
    %136 = vector.broadcast %cst_73 : f32 to vector<32x64xf32>
    %137 = arith.addf %136, %135 : vector<32x64xf32>
    %cst_74 = arith.constant 5.000000e-01 : f32
    %138 = vector.broadcast %cst_74 : f32 to vector<32x64xf32>
    %139 = arith.mulf %138, %137 : vector<32x64xf32>
    %140 = arith.mulf %127, %139 : vector<32x64xf32>
    %c2_i32_75 = arith.constant 2 : i32
    %141 = tpu.dynamic_rotate %140 by %c2_i32_75 dim 0 : vector<32x64xf32>, i32 -> vector<32x64xf32>
    %c1_76 = arith.constant 1 : index
    %c0_77 = arith.constant 0 : index
    %c0_78 = arith.constant 0 : index
    %142 = vector.load %arg5[%c1_76, %c0_77, %c0_78] : memref<6x32x1xf32, #tpu.memory_space<vmem>>, vector<1x32x1xf32>
    %143 = vector.shape_cast %142 : vector<1x32x1xf32> to vector<32x1xf32>
    %144 = vector.broadcast %143 : vector<32x1xf32> to vector<32x64xf32>
    %145 = arith.mulf %141, %144 : vector<32x64xf32>
    %146 = arith.truncf %145 : vector<32x64xf32> to vector<32x64xbf16>
    %c9 = arith.constant 9 : index
    %c0_79 = arith.constant 0 : index
    %c0_80 = arith.constant 0 : index
    %147 = vector.load %arg3[%c9, %c0_79, %c0_80] : memref<23x64x64xbf16, #tpu.memory_space<vmem>>, vector<1x64x64xbf16>
    %148 = vector.shape_cast %147 : vector<1x64x64xbf16> to vector<64x64xbf16>
    %cst_81 = arith.constant dense<0.000000e+00> : vector<32x64xf32>
    %149 = tpu.matmul %146, %148, %cst_81 {dimension_numbers = #tpu.dot_dimension_numbers<[1], [0], [0], [1], [0, 0, 1, 1], [], []>} : vector<32x64xbf16>, vector<64x64xbf16>, vector<32x64xf32> -> vector<32x64xf32>
    %150 = arith.truncf %140 : vector<32x64xf32> to vector<32x64xbf16>
    %c10 = arith.constant 10 : index
    %c0_82 = arith.constant 0 : index
    %c0_83 = arith.constant 0 : index
    %151 = vector.load %arg3[%c10, %c0_82, %c0_83] : memref<23x64x64xbf16, #tpu.memory_space<vmem>>, vector<1x64x64xbf16>
    %152 = vector.shape_cast %151 : vector<1x64x64xbf16> to vector<64x64xbf16>
    %cst_84 = arith.constant dense<0.000000e+00> : vector<32x64xf32>
    %153 = tpu.matmul %150, %152, %cst_84 {dimension_numbers = #tpu.dot_dimension_numbers<[1], [0], [0], [1], [0, 0, 1, 1], [], []>} : vector<32x64xbf16>, vector<64x64xbf16>, vector<32x64xf32> -> vector<32x64xf32>
    %154 = arith.addf %149, %153 : vector<32x64xf32>
    %c30_i32_85 = arith.constant 30 : i32
    %155 = tpu.dynamic_rotate %140 by %c30_i32_85 dim 0 : vector<32x64xf32>, i32 -> vector<32x64xf32>
    %c4_86 = arith.constant 4 : index
    %c0_87 = arith.constant 0 : index
    %c0_88 = arith.constant 0 : index
    %156 = vector.load %arg5[%c4_86, %c0_87, %c0_88] : memref<6x32x1xf32, #tpu.memory_space<vmem>>, vector<1x32x1xf32>
    %157 = vector.shape_cast %156 : vector<1x32x1xf32> to vector<32x1xf32>
    %158 = vector.broadcast %157 : vector<32x1xf32> to vector<32x64xf32>
    %159 = arith.mulf %155, %158 : vector<32x64xf32>
    %160 = arith.truncf %159 : vector<32x64xf32> to vector<32x64xbf16>
    %c11 = arith.constant 11 : index
    %c0_89 = arith.constant 0 : index
    %c0_90 = arith.constant 0 : index
    %161 = vector.load %arg3[%c11, %c0_89, %c0_90] : memref<23x64x64xbf16, #tpu.memory_space<vmem>>, vector<1x64x64xbf16>
    %162 = vector.shape_cast %161 : vector<1x64x64xbf16> to vector<64x64xbf16>
    %cst_91 = arith.constant dense<0.000000e+00> : vector<32x64xf32>
    %163 = tpu.matmul %160, %162, %cst_91 {dimension_numbers = #tpu.dot_dimension_numbers<[1], [0], [0], [1], [0, 0, 1, 1], [], []>} : vector<32x64xbf16>, vector<64x64xbf16>, vector<32x64xf32> -> vector<32x64xf32>
    %164 = arith.addf %154, %163 : vector<32x64xf32>
    %c4_92 = arith.constant 4 : index
    %c0_93 = arith.constant 0 : index
    %165 = vector.load %arg4[%c4_92, %c0_93] : memref<10x64xf32, #tpu.memory_space<vmem>>, vector<1x64xf32>
    %166 = vector.broadcast %165 : vector<1x64xf32> to vector<32x64xf32>
    %167 = arith.addf %164, %166 : vector<32x64xf32>
    %168 = arith.addf %167, %87 : vector<32x64xf32>
    %169 = arith.truncf %168 : vector<32x64xf32> to vector<32x64xbf16>
    %c18 = arith.constant 18 : index
    %c0_94 = arith.constant 0 : index
    %c0_95 = arith.constant 0 : index
    %170 = vector.load %arg3[%c18, %c0_94, %c0_95] : memref<23x64x64xbf16, #tpu.memory_space<vmem>>, vector<1x64x64xbf16>
    %171 = vector.shape_cast %170 : vector<1x64x64xbf16> to vector<64x64xbf16>
    %cst_96 = arith.constant dense<0.000000e+00> : vector<32x64xf32>
    %172 = tpu.matmul %169, %171, %cst_96 {dimension_numbers = #tpu.dot_dimension_numbers<[1], [0], [0], [1], [0, 0, 1, 1], [], []>} : vector<32x64xbf16>, vector<64x64xbf16>, vector<32x64xf32> -> vector<32x64xf32>
    %c7_97 = arith.constant 7 : index
    %c0_98 = arith.constant 0 : index
    %173 = vector.load %arg4[%c7_97, %c0_98] : memref<10x64xf32, #tpu.memory_space<vmem>>, vector<1x64xf32>
    %174 = vector.broadcast %173 : vector<1x64xf32> to vector<32x64xf32>
    %175 = arith.addf %172, %174 : vector<32x64xf32>
    %176 = arith.mulf %168, %168 : vector<32x64xf32>
    %177 = arith.mulf %168, %176 : vector<32x64xf32>
    %cst_99 = arith.constant 4.471500e-02 : f32
    %178 = vector.broadcast %cst_99 : f32 to vector<32x64xf32>
    %179 = arith.mulf %178, %177 : vector<32x64xf32>
    %180 = arith.addf %168, %179 : vector<32x64xf32>
    %cst_100 = arith.constant 0.797884583 : f32
    %181 = vector.broadcast %cst_100 : f32 to vector<32x64xf32>
    %182 = arith.mulf %181, %180 : vector<32x64xf32>
    %183 = math.tanh %182 : vector<32x64xf32>
    %cst_101 = arith.constant 1.000000e+00 : f32
    %184 = vector.broadcast %cst_101 : f32 to vector<32x64xf32>
    %185 = arith.addf %184, %183 : vector<32x64xf32>
    %cst_102 = arith.constant 5.000000e-01 : f32
    %186 = vector.broadcast %cst_102 : f32 to vector<32x64xf32>
    %187 = arith.mulf %186, %185 : vector<32x64xf32>
    %188 = arith.mulf %168, %187 : vector<32x64xf32>
    %c4_i32 = arith.constant 4 : i32
    %189 = tpu.dynamic_rotate %188 by %c4_i32 dim 0 : vector<32x64xf32>, i32 -> vector<32x64xf32>
    %c0_103 = arith.constant 0 : index
    %c0_104 = arith.constant 0 : index
    %c0_105 = arith.constant 0 : index
    %190 = vector.load %arg5[%c0_103, %c0_104, %c0_105] : memref<6x32x1xf32, #tpu.memory_space<vmem>>, vector<1x32x1xf32>
    %191 = vector.shape_cast %190 : vector<1x32x1xf32> to vector<32x1xf32>
    %192 = vector.broadcast %191 : vector<32x1xf32> to vector<32x64xf32>
    %193 = arith.mulf %189, %192 : vector<32x64xf32>
    %194 = arith.truncf %193 : vector<32x64xf32> to vector<32x64xbf16>
    %c12 = arith.constant 12 : index
    %c0_106 = arith.constant 0 : index
    %c0_107 = arith.constant 0 : index
    %195 = vector.load %arg3[%c12, %c0_106, %c0_107] : memref<23x64x64xbf16, #tpu.memory_space<vmem>>, vector<1x64x64xbf16>
    %196 = vector.shape_cast %195 : vector<1x64x64xbf16> to vector<64x64xbf16>
    %cst_108 = arith.constant dense<0.000000e+00> : vector<32x64xf32>
    %197 = tpu.matmul %194, %196, %cst_108 {dimension_numbers = #tpu.dot_dimension_numbers<[1], [0], [0], [1], [0, 0, 1, 1], [], []>} : vector<32x64xbf16>, vector<64x64xbf16>, vector<32x64xf32> -> vector<32x64xf32>
    %198 = arith.truncf %188 : vector<32x64xf32> to vector<32x64xbf16>
    %c13 = arith.constant 13 : index
    %c0_109 = arith.constant 0 : index
    %c0_110 = arith.constant 0 : index
    %199 = vector.load %arg3[%c13, %c0_109, %c0_110] : memref<23x64x64xbf16, #tpu.memory_space<vmem>>, vector<1x64x64xbf16>
    %200 = vector.shape_cast %199 : vector<1x64x64xbf16> to vector<64x64xbf16>
    %cst_111 = arith.constant dense<0.000000e+00> : vector<32x64xf32>
    %201 = tpu.matmul %198, %200, %cst_111 {dimension_numbers = #tpu.dot_dimension_numbers<[1], [0], [0], [1], [0, 0, 1, 1], [], []>} : vector<32x64xbf16>, vector<64x64xbf16>, vector<32x64xf32> -> vector<32x64xf32>
    %202 = arith.addf %197, %201 : vector<32x64xf32>
    %c28_i32 = arith.constant 28 : i32
    %203 = tpu.dynamic_rotate %188 by %c28_i32 dim 0 : vector<32x64xf32>, i32 -> vector<32x64xf32>
    %c5_112 = arith.constant 5 : index
    %c0_113 = arith.constant 0 : index
    %c0_114 = arith.constant 0 : index
    %204 = vector.load %arg5[%c5_112, %c0_113, %c0_114] : memref<6x32x1xf32, #tpu.memory_space<vmem>>, vector<1x32x1xf32>
    %205 = vector.shape_cast %204 : vector<1x32x1xf32> to vector<32x1xf32>
    %206 = vector.broadcast %205 : vector<32x1xf32> to vector<32x64xf32>
    %207 = arith.mulf %203, %206 : vector<32x64xf32>
    %208 = arith.truncf %207 : vector<32x64xf32> to vector<32x64xbf16>
    %c14 = arith.constant 14 : index
    %c0_115 = arith.constant 0 : index
    %c0_116 = arith.constant 0 : index
    %209 = vector.load %arg3[%c14, %c0_115, %c0_116] : memref<23x64x64xbf16, #tpu.memory_space<vmem>>, vector<1x64x64xbf16>
    %210 = vector.shape_cast %209 : vector<1x64x64xbf16> to vector<64x64xbf16>
    %cst_117 = arith.constant dense<0.000000e+00> : vector<32x64xf32>
    %211 = tpu.matmul %208, %210, %cst_117 {dimension_numbers = #tpu.dot_dimension_numbers<[1], [0], [0], [1], [0, 0, 1, 1], [], []>} : vector<32x64xbf16>, vector<64x64xbf16>, vector<32x64xf32> -> vector<32x64xf32>
    %212 = arith.addf %202, %211 : vector<32x64xf32>
    %c5_118 = arith.constant 5 : index
    %c0_119 = arith.constant 0 : index
    %213 = vector.load %arg4[%c5_118, %c0_119] : memref<10x64xf32, #tpu.memory_space<vmem>>, vector<1x64xf32>
    %214 = vector.broadcast %213 : vector<1x64xf32> to vector<32x64xf32>
    %215 = arith.addf %212, %214 : vector<32x64xf32>
    %216 = arith.mulf %215, %215 : vector<32x64xf32>
    %217 = arith.mulf %215, %216 : vector<32x64xf32>
    %cst_120 = arith.constant 4.471500e-02 : f32
    %218 = vector.broadcast %cst_120 : f32 to vector<32x64xf32>
    %219 = arith.mulf %218, %217 : vector<32x64xf32>
    %220 = arith.addf %215, %219 : vector<32x64xf32>
    %cst_121 = arith.constant 0.797884583 : f32
    %221 = vector.broadcast %cst_121 : f32 to vector<32x64xf32>
    %222 = arith.mulf %221, %220 : vector<32x64xf32>
    %223 = math.tanh %222 : vector<32x64xf32>
    %cst_122 = arith.constant 1.000000e+00 : f32
    %224 = vector.broadcast %cst_122 : f32 to vector<32x64xf32>
    %225 = arith.addf %224, %223 : vector<32x64xf32>
    %cst_123 = arith.constant 5.000000e-01 : f32
    %226 = vector.broadcast %cst_123 : f32 to vector<32x64xf32>
    %227 = arith.mulf %226, %225 : vector<32x64xf32>
    %228 = arith.mulf %215, %227 : vector<32x64xf32>
    %c4_i32_124 = arith.constant 4 : i32
    %229 = tpu.dynamic_rotate %228 by %c4_i32_124 dim 0 : vector<32x64xf32>, i32 -> vector<32x64xf32>
    %c0_125 = arith.constant 0 : index
    %c0_126 = arith.constant 0 : index
    %c0_127 = arith.constant 0 : index
    %230 = vector.load %arg5[%c0_125, %c0_126, %c0_127] : memref<6x32x1xf32, #tpu.memory_space<vmem>>, vector<1x32x1xf32>
    %231 = vector.shape_cast %230 : vector<1x32x1xf32> to vector<32x1xf32>
    %232 = vector.broadcast %231 : vector<32x1xf32> to vector<32x64xf32>
    %233 = arith.mulf %229, %232 : vector<32x64xf32>
    %234 = arith.truncf %233 : vector<32x64xf32> to vector<32x64xbf16>
    %c15 = arith.constant 15 : index
    %c0_128 = arith.constant 0 : index
    %c0_129 = arith.constant 0 : index
    %235 = vector.load %arg3[%c15, %c0_128, %c0_129] : memref<23x64x64xbf16, #tpu.memory_space<vmem>>, vector<1x64x64xbf16>
    %236 = vector.shape_cast %235 : vector<1x64x64xbf16> to vector<64x64xbf16>
    %cst_130 = arith.constant dense<0.000000e+00> : vector<32x64xf32>
    %237 = tpu.matmul %234, %236, %cst_130 {dimension_numbers = #tpu.dot_dimension_numbers<[1], [0], [0], [1], [0, 0, 1, 1], [], []>} : vector<32x64xbf16>, vector<64x64xbf16>, vector<32x64xf32> -> vector<32x64xf32>
    %238 = arith.truncf %228 : vector<32x64xf32> to vector<32x64xbf16>
    %c16 = arith.constant 16 : index
    %c0_131 = arith.constant 0 : index
    %c0_132 = arith.constant 0 : index
    %239 = vector.load %arg3[%c16, %c0_131, %c0_132] : memref<23x64x64xbf16, #tpu.memory_space<vmem>>, vector<1x64x64xbf16>
    %240 = vector.shape_cast %239 : vector<1x64x64xbf16> to vector<64x64xbf16>
    %cst_133 = arith.constant dense<0.000000e+00> : vector<32x64xf32>
    %241 = tpu.matmul %238, %240, %cst_133 {dimension_numbers = #tpu.dot_dimension_numbers<[1], [0], [0], [1], [0, 0, 1, 1], [], []>} : vector<32x64xbf16>, vector<64x64xbf16>, vector<32x64xf32> -> vector<32x64xf32>
    %242 = arith.addf %237, %241 : vector<32x64xf32>
    %c28_i32_134 = arith.constant 28 : i32
    %243 = tpu.dynamic_rotate %228 by %c28_i32_134 dim 0 : vector<32x64xf32>, i32 -> vector<32x64xf32>
    %c5_135 = arith.constant 5 : index
    %c0_136 = arith.constant 0 : index
    %c0_137 = arith.constant 0 : index
    %244 = vector.load %arg5[%c5_135, %c0_136, %c0_137] : memref<6x32x1xf32, #tpu.memory_space<vmem>>, vector<1x32x1xf32>
    %245 = vector.shape_cast %244 : vector<1x32x1xf32> to vector<32x1xf32>
    %246 = vector.broadcast %245 : vector<32x1xf32> to vector<32x64xf32>
    %247 = arith.mulf %243, %246 : vector<32x64xf32>
    %248 = arith.truncf %247 : vector<32x64xf32> to vector<32x64xbf16>
    %c17 = arith.constant 17 : index
    %c0_138 = arith.constant 0 : index
    %c0_139 = arith.constant 0 : index
    %249 = vector.load %arg3[%c17, %c0_138, %c0_139] : memref<23x64x64xbf16, #tpu.memory_space<vmem>>, vector<1x64x64xbf16>
    %250 = vector.shape_cast %249 : vector<1x64x64xbf16> to vector<64x64xbf16>
    %cst_140 = arith.constant dense<0.000000e+00> : vector<32x64xf32>
    %251 = tpu.matmul %248, %250, %cst_140 {dimension_numbers = #tpu.dot_dimension_numbers<[1], [0], [0], [1], [0, 0, 1, 1], [], []>} : vector<32x64xbf16>, vector<64x64xbf16>, vector<32x64xf32> -> vector<32x64xf32>
    %252 = arith.addf %242, %251 : vector<32x64xf32>
    %c6_141 = arith.constant 6 : index
    %c0_142 = arith.constant 0 : index
    %253 = vector.load %arg4[%c6_141, %c0_142] : memref<10x64xf32, #tpu.memory_space<vmem>>, vector<1x64xf32>
    %254 = vector.broadcast %253 : vector<1x64xf32> to vector<32x64xf32>
    %255 = arith.addf %252, %254 : vector<32x64xf32>
    %256 = arith.addf %255, %175 : vector<32x64xf32>
    %257 = arith.truncf %256 : vector<32x64xf32> to vector<32x64xbf16>
    %c19 = arith.constant 19 : index
    %c0_143 = arith.constant 0 : index
    %c0_144 = arith.constant 0 : index
    %258 = vector.load %arg3[%c19, %c0_143, %c0_144] : memref<23x64x64xbf16, #tpu.memory_space<vmem>>, vector<1x64x64xbf16>
    %259 = vector.shape_cast %258 : vector<1x64x64xbf16> to vector<64x64xbf16>
    %cst_145 = arith.constant dense<0.000000e+00> : vector<32x64xf32>
    %260 = tpu.matmul %257, %259, %cst_145 {dimension_numbers = #tpu.dot_dimension_numbers<[1], [0], [0], [1], [0, 0, 1, 1], [], []>} : vector<32x64xbf16>, vector<64x64xbf16>, vector<32x64xf32> -> vector<32x64xf32>
    %c8_146 = arith.constant 8 : index
    %c0_147 = arith.constant 0 : index
    %261 = vector.load %arg4[%c8_146, %c0_147] : memref<10x64xf32, #tpu.memory_space<vmem>>, vector<1x64xf32>
    %262 = vector.broadcast %261 : vector<1x64xf32> to vector<32x64xf32>
    %263 = arith.addf %260, %262 : vector<32x64xf32>
    %c2_i32_148 = arith.constant 2 : i32
    %264 = tpu.dynamic_rotate %256 by %c2_i32_148 dim 0 : vector<32x64xf32>, i32 -> vector<32x64xf32>
    %c1_149 = arith.constant 1 : index
    %c0_150 = arith.constant 0 : index
    %c0_151 = arith.constant 0 : index
    %265 = vector.load %arg5[%c1_149, %c0_150, %c0_151] : memref<6x32x1xf32, #tpu.memory_space<vmem>>, vector<1x32x1xf32>
    %266 = vector.shape_cast %265 : vector<1x32x1xf32> to vector<32x1xf32>
    %267 = vector.broadcast %266 : vector<32x1xf32> to vector<32x64xf32>
    %268 = arith.mulf %264, %267 : vector<32x64xf32>
    %269 = arith.truncf %268 : vector<32x64xf32> to vector<32x64xbf16>
    %c20 = arith.constant 20 : index
    %c0_152 = arith.constant 0 : index
    %c0_153 = arith.constant 0 : index
    %270 = vector.load %arg3[%c20, %c0_152, %c0_153] : memref<23x64x64xbf16, #tpu.memory_space<vmem>>, vector<1x64x64xbf16>
    %271 = vector.shape_cast %270 : vector<1x64x64xbf16> to vector<64x64xbf16>
    %cst_154 = arith.constant dense<0.000000e+00> : vector<32x64xf32>
    %272 = tpu.matmul %269, %271, %cst_154 {dimension_numbers = #tpu.dot_dimension_numbers<[1], [0], [0], [1], [0, 0, 1, 1], [], []>} : vector<32x64xbf16>, vector<64x64xbf16>, vector<32x64xf32> -> vector<32x64xf32>
    %c1_i32_155 = arith.constant 1 : i32
    %273 = tpu.dynamic_rotate %256 by %c1_i32_155 dim 0 : vector<32x64xf32>, i32 -> vector<32x64xf32>
    %c2_156 = arith.constant 2 : index
    %c0_157 = arith.constant 0 : index
    %c0_158 = arith.constant 0 : index
    %274 = vector.load %arg5[%c2_156, %c0_157, %c0_158] : memref<6x32x1xf32, #tpu.memory_space<vmem>>, vector<1x32x1xf32>
    %275 = vector.shape_cast %274 : vector<1x32x1xf32> to vector<32x1xf32>
    %276 = vector.broadcast %275 : vector<32x1xf32> to vector<32x64xf32>
    %277 = arith.mulf %273, %276 : vector<32x64xf32>
    %278 = arith.truncf %277 : vector<32x64xf32> to vector<32x64xbf16>
    %c21 = arith.constant 21 : index
    %c0_159 = arith.constant 0 : index
    %c0_160 = arith.constant 0 : index
    %279 = vector.load %arg3[%c21, %c0_159, %c0_160] : memref<23x64x64xbf16, #tpu.memory_space<vmem>>, vector<1x64x64xbf16>
    %280 = vector.shape_cast %279 : vector<1x64x64xbf16> to vector<64x64xbf16>
    %cst_161 = arith.constant dense<0.000000e+00> : vector<32x64xf32>
    %281 = tpu.matmul %278, %280, %cst_161 {dimension_numbers = #tpu.dot_dimension_numbers<[1], [0], [0], [1], [0, 0, 1, 1], [], []>} : vector<32x64xbf16>, vector<64x64xbf16>, vector<32x64xf32> -> vector<32x64xf32>
    %282 = arith.addf %272, %281 : vector<32x64xf32>
    %283 = arith.truncf %256 : vector<32x64xf32> to vector<32x64xbf16>
    %c22 = arith.constant 22 : index
    %c0_162 = arith.constant 0 : index
    %c0_163 = arith.constant 0 : index
    %284 = vector.load %arg3[%c22, %c0_162, %c0_163] : memref<23x64x64xbf16, #tpu.memory_space<vmem>>, vector<1x64x64xbf16>
    %285 = vector.shape_cast %284 : vector<1x64x64xbf16> to vector<64x64xbf16>
    %cst_164 = arith.constant dense<0.000000e+00> : vector<32x64xf32>
    %286 = tpu.matmul %283, %285, %cst_164 {dimension_numbers = #tpu.dot_dimension_numbers<[1], [0], [0], [1], [0, 0, 1, 1], [], []>} : vector<32x64xbf16>, vector<64x64xbf16>, vector<32x64xf32> -> vector<32x64xf32>
    %287 = arith.addf %282, %286 : vector<32x64xf32>
    %c9_165 = arith.constant 9 : index
    %c0_166 = arith.constant 0 : index
    %288 = vector.load %arg4[%c9_165, %c0_166] : memref<10x64xf32, #tpu.memory_space<vmem>>, vector<1x64xf32>
    %289 = vector.broadcast %288 : vector<1x64xf32> to vector<32x64xf32>
    %290 = arith.addf %287, %289 : vector<32x64xf32>
    %291 = arith.addf %263, %290 : vector<32x64xf32>
    %cst_167 = arith.constant 5.000000e-01 : f32
    %292 = vector.broadcast %cst_167 : f32 to vector<32x64xf32>
    %293 = arith.mulf %291, %292 : vector<32x64xf32>
    %294 = vector.extract_strided_slice %293 {offsets = [0, 0], sizes = [32, 32], strides = [1, 1]} : vector<32x64xf32> to vector<32x32xf32>
    %c0_168 = arith.constant 0 : index
    %c0_169 = arith.constant 0 : index
    %295 = vector.load %arg6[%c0_168, %c0_169] : memref<32x32xf32, #tpu.memory_space<vmem>>, vector<32x32xf32>
    tpu.vector_store %arg6[%c0_168, %c0_169], %294 {strides = array<i32>} : memref<32x32xf32, #tpu.memory_space<vmem>>, vector<32x32xf32>,
    return
  }
  func.func @transform_0(%arg0: i32) -> (i32, i32) {
    %c0_i32 = arith.constant 0 : i32
    %c0_i32_0 = arith.constant 0 : i32
    return %arg0, %c0_i32 : i32, i32
  }
  func.func @transform_1(%arg0: i32) -> (i32, i32) {
    %c0_i32 = arith.constant 0 : i32
    %c0_i32_0 = arith.constant 0 : i32
    %c0_i32_1 = arith.constant 0 : i32
    return %c0_i32, %c0_i32_0 : i32, i32
  }
  func.func @transform_2(%arg0: i32) -> (i32, i32, i32) {
    %c0_i32 = arith.constant 0 : i32
    %c0_i32_0 = arith.constant 0 : i32
    %c0_i32_1 = arith.constant 0 : i32
    %c0_i32_2 = arith.constant 0 : i32
    return %c0_i32, %c0_i32_0, %c0_i32_1 : i32, i32, i32
  }
  func.func @transform_3(%arg0: i32) -> (i32, i32) {
    %c0_i32 = arith.constant 0 : i32
    %c0_i32_0 = arith.constant 0 : i32
    %c0_i32_1 = arith.constant 0 : i32
    return %c0_i32, %c0_i32_0 : i32, i32
  }
  func.func @transform_4(%arg0: i32) -> (i32, i32, i32) {
    %c0_i32 = arith.constant 0 : i32
    %c0_i32_0 = arith.constant 0 : i32
    %c0_i32_1 = arith.constant 0 : i32
    %c0_i32_2 = arith.constant 0 : i32
    return %c0_i32, %c0_i32_0, %c0_i32_1 : i32, i32, i32
  }
  func.func @transform_5(%arg0: i32) -> (i32, i32) {
    %c0_i32 = arith.constant 0 : i32
    %c0_i32_0 = arith.constant 0 : i32
    return %arg0, %c0_i32 : i32, i32
  }
}

module attributes {stable_mosaic.version = 11 : i64} {
  func.func @_attn_tail_kernel(%arg0: i32, %arg1: memref<1x32x16xf32, #tpu.memory_space<vmem>>, %arg2: memref<1x16x32xf32, #tpu.memory_space<vmem>>, %arg3: memref<1x500x32xbf16, #tpu.memory_space<vmem>>, %arg4: memref<1x1x16xf32, #tpu.memory_space<vmem>>, %arg5: memref<1x1x16xf32, #tpu.memory_space<vmem>>, %arg6: memref<100x500xbf16, #tpu.memory_space<vmem>>, %arg7: memref<100x1xf32, #tpu.memory_space<vmem>>, %arg8: memref<2x256x32xbf16, #tpu.memory_space<vmem>>, %arg9: memref<4x32x32xbf16, #tpu.memory_space<vmem>>, %arg10: memref<10x32xbf16, #tpu.memory_space<vmem>>, %arg11: memref<32x9xf32, #tpu.memory_space<vmem>>, %arg12: memref<10x2xf32, #tpu.memory_space<vmem>>, %arg13: memref<1x4xf32, #tpu.memory_space<vmem>>, %arg14: memref<1x1x16xf32, #tpu.memory_space<vmem>>) attributes {dimension_semantics = [#tpu.dimension_semantics<parallel>], iteration_bounds = array<i64: 2>, scalar_prefetch = 0 : i64, scratch_operands = 0 : i64, tpu.core_type = #tpu.core_type<tc>, window_params = [{transform_indices = @transform_0, window_bounds = array<i64: 1, 32, 16>}, {transform_indices = @transform_1, window_bounds = array<i64: 1, 16, 32>}, {transform_indices = @transform_2, window_bounds = array<i64: 1, 500, 32>}, {transform_indices = @transform_3, window_bounds = array<i64: 1, 1, 16>}, {transform_indices = @transform_4, window_bounds = array<i64: 1, 1, 16>}, {pipeline_mode = #tpu.pipeline_mode<synchronous>, transform_indices = @transform_5, window_bounds = array<i64: 100, 500>}, {pipeline_mode = #tpu.pipeline_mode<synchronous>, transform_indices = @transform_6, window_bounds = array<i64: 100, 1>}, {pipeline_mode = #tpu.pipeline_mode<synchronous>, transform_indices = @transform_7, window_bounds = array<i64: 2, 256, 32>}, {pipeline_mode = #tpu.pipeline_mode<synchronous>, transform_indices = @transform_8, window_bounds = array<i64: 4, 32, 32>}, {pipeline_mode = #tpu.pipeline_mode<synchronous>, transform_indices = @transform_9, window_bounds = array<i64: 10, 32>}, {pipeline_mode = #tpu.pipeline_mode<synchronous>, transform_indices = @transform_10, window_bounds = array<i64: 32, 9>}, {pipeline_mode = #tpu.pipeline_mode<synchronous>, transform_indices = @transform_11, window_bounds = array<i64: 10, 2>}, {pipeline_mode = #tpu.pipeline_mode<synchronous>, transform_indices = @transform_12, window_bounds = array<i64: 1, 4>}, {transform_indices = @transform_13, window_bounds = array<i64: 1, 1, 16>}]} {
    %c0 = arith.constant 0 : index
    %c0_0 = arith.constant 0 : index
    %c0_1 = arith.constant 0 : index
    %0 = vector.load %arg1[%c0, %c0_0, %c0_1] : memref<1x32x16xf32, #tpu.memory_space<vmem>>, vector<1x32x16xf32>
    %1 = vector.shape_cast %0 : vector<1x32x16xf32> to vector<32x16xf32>
    %c0_2 = arith.constant 0 : index
    %c0_3 = arith.constant 0 : index
    %c0_4 = arith.constant 0 : index
    %2 = vector.load %arg2[%c0_2, %c0_3, %c0_4] : memref<1x16x32xf32, #tpu.memory_space<vmem>>, vector<1x16x32xf32>
    %3 = vector.shape_cast %2 : vector<1x16x32xf32> to vector<16x32xf32>
    %c0_5 = arith.constant 0 : index
    %c0_6 = arith.constant 0 : index
    %c0_7 = arith.constant 0 : index
    %4 = vector.load %arg3[%c0_5, %c0_6, %c0_7] : memref<1x500x32xbf16, #tpu.memory_space<vmem>>, vector<1x500x32xbf16>
    %5 = vector.shape_cast %4 : vector<1x500x32xbf16> to vector<500x32xbf16>
    %c0_8 = arith.constant 0 : index
    %c0_9 = arith.constant 0 : index
    %c0_10 = arith.constant 0 : index
    %6 = vector.load %arg4[%c0_8, %c0_9, %c0_10] : memref<1x1x16xf32, #tpu.memory_space<vmem>>, vector<1x1x16xf32>
    %7 = vector.shape_cast %6 : vector<1x1x16xf32> to vector<1x16xf32>
    %c0_11 = arith.constant 0 : index
    %c0_12 = arith.constant 0 : index
    %c0_13 = arith.constant 0 : index
    %8 = vector.load %arg5[%c0_11, %c0_12, %c0_13] : memref<1x1x16xf32, #tpu.memory_space<vmem>>, vector<1x1x16xf32>
    %9 = vector.shape_cast %8 : vector<1x1x16xf32> to vector<1x16xf32>
    %c0_14 = arith.constant 0 : index
    %c0_15 = arith.constant 0 : index
    %10 = vector.load %arg6[%c0_14, %c0_15] : memref<100x500xbf16, #tpu.memory_space<vmem>>, vector<100x500xbf16>
    %cst = arith.constant dense<0.000000e+00> : vector<100x32xf32>
    %11 = tpu.matmul %10, %5, %cst {dimension_numbers = #tpu.dot_dimension_numbers<[1], [0], [0], [1], [0, 0, 1, 1], [], []>} : vector<100x500xbf16>, vector<500x32xbf16>, vector<100x32xf32> -> vector<100x32xf32>
    %c0_16 = arith.constant 0 : index
    %c0_17 = arith.constant 0 : index
    %12 = vector.load %arg7[%c0_16, %c0_17] : memref<100x1xf32, #tpu.memory_space<vmem>>, vector<100x1xf32>
    %13 = vector.broadcast %12 : vector<100x1xf32> to vector<100x32xf32>
    %14 = arith.addf %11, %13 : vector<100x32xf32>
    %15 = arith.truncf %14 : vector<100x32xf32> to vector<100x32xbf16>
    %16 = arith.truncf %3 : vector<16x32xf32> to vector<16x32xbf16>
    %cst_18 = arith.constant dense<0.000000e+00> : vector<32x32xf32>
    %17 = tpu.matmul %15, %15, %cst_18 {dimension_numbers = #tpu.dot_dimension_numbers<[0], [0], [1], [1], [0, 1, 1, 1], [], []>} : vector<100x32xbf16>, vector<100x32xbf16>, vector<32x32xf32> -> vector<32x32xf32>
    %cst_19 = arith.constant dense<0.000000e+00> : vector<32x32xf32>
    %18 = tpu.matmul %16, %16, %cst_19 {dimension_numbers = #tpu.dot_dimension_numbers<[0], [0], [1], [1], [0, 1, 1, 1], [], []>} : vector<16x32xbf16>, vector<16x32xbf16>, vector<32x32xf32> -> vector<32x32xf32>
    %19 = arith.addf %17, %18 : vector<32x32xf32>
    %cst_20 = arith.constant 3.125000e-02 : f32
    %20 = vector.broadcast %cst_20 : f32 to vector<32x32xf32>
    %21 = arith.mulf %19, %20 : vector<32x32xf32>
    %22 = arith.truncf %21 : vector<32x32xf32> to vector<32x32xbf16>
    %23 = arith.truncf %1 : vector<32x16xf32> to vector<32x16xbf16>
    %c0_21 = arith.constant 0 : index
    %c0_22 = arith.constant 0 : index
    %c0_23 = arith.constant 0 : index
    %24 = vector.load %arg8[%c0_21, %c0_22, %c0_23] : memref<2x256x32xbf16, #tpu.memory_space<vmem>>, vector<1x256x32xbf16>
    %25 = vector.shape_cast %24 : vector<1x256x32xbf16> to vector<256x32xbf16>
    %cst_24 = arith.constant dense<0.000000e+00> : vector<256x16xf32>
    %26 = tpu.matmul %25, %23, %cst_24 {dimension_numbers = #tpu.dot_dimension_numbers<[1], [0], [0], [1], [0, 0, 1, 1], [], []>} : vector<256x32xbf16>, vector<32x16xbf16>, vector<256x16xf32> -> vector<256x16xf32>
    %c1 = arith.constant 1 : index
    %c0_25 = arith.constant 0 : index
    %c0_26 = arith.constant 0 : index
    %27 = vector.load %arg8[%c1, %c0_25, %c0_26] : memref<2x256x32xbf16, #tpu.memory_space<vmem>>, vector<1x256x32xbf16>
    %28 = vector.shape_cast %27 : vector<1x256x32xbf16> to vector<256x32xbf16>
    %cst_27 = arith.constant dense<0.000000e+00> : vector<256x32xf32>
    %29 = tpu.matmul %28, %22, %cst_27 {dimension_numbers = #tpu.dot_dimension_numbers<[1], [0], [0], [1], [0, 0, 1, 1], [], []>} : vector<256x32xbf16>, vector<32x32xbf16>, vector<256x32xf32> -> vector<256x32xf32>
    %30 = vector.extract_strided_slice %29 {offsets = [0, 0], sizes = [32, 32], strides = [1, 1]} : vector<256x32xf32> to vector<32x32xf32>
    %31 = arith.truncf %30 : vector<32x32xf32> to vector<32x32xbf16>
    %32 = vector.extract_strided_slice %26 {offsets = [0, 0], sizes = [32, 16], strides = [1, 1]} : vector<256x16xf32> to vector<32x16xf32>
    %33 = arith.truncf %32 : vector<32x16xf32> to vector<32x16xbf16>
    %cst_28 = arith.constant dense<0.000000e+00> : vector<32x16xf32>
    %34 = tpu.matmul %31, %33, %cst_28 {dimension_numbers = #tpu.dot_dimension_numbers<[1], [0], [0], [1], [0, 0, 1, 1], [], []>} : vector<32x32xbf16>, vector<32x16xbf16>, vector<32x16xf32> -> vector<32x16xf32>
    %35 = vector.extract_strided_slice %29 {offsets = [32, 0], sizes = [32, 32], strides = [1, 1]} : vector<256x32xf32> to vector<32x32xf32>
    %36 = arith.truncf %35 : vector<32x32xf32> to vector<32x32xbf16>
    %37 = vector.extract_strided_slice %26 {offsets = [32, 0], sizes = [32, 16], strides = [1, 1]} : vector<256x16xf32> to vector<32x16xf32>
    %38 = arith.truncf %37 : vector<32x16xf32> to vector<32x16xbf16>
    %cst_29 = arith.constant dense<0.000000e+00> : vector<32x16xf32>
    %39 = tpu.matmul %36, %38, %cst_29 {dimension_numbers = #tpu.dot_dimension_numbers<[1], [0], [0], [1], [0, 0, 1, 1], [], []>} : vector<32x32xbf16>, vector<32x16xbf16>, vector<32x16xf32> -> vector<32x16xf32>
    %40 = arith.addf %34, %39 : vector<32x16xf32>
    %41 = vector.extract_strided_slice %29 {offsets = [64, 0], sizes = [32, 32], strides = [1, 1]} : vector<256x32xf32> to vector<32x32xf32>
    %42 = arith.truncf %41 : vector<32x32xf32> to vector<32x32xbf16>
    %43 = vector.extract_strided_slice %26 {offsets = [64, 0], sizes = [32, 16], strides = [1, 1]} : vector<256x16xf32> to vector<32x16xf32>
    %44 = arith.truncf %43 : vector<32x16xf32> to vector<32x16xbf16>
    %cst_30 = arith.constant dense<0.000000e+00> : vector<32x16xf32>
    %45 = tpu.matmul %42, %44, %cst_30 {dimension_numbers = #tpu.dot_dimension_numbers<[1], [0], [0], [1], [0, 0, 1, 1], [], []>} : vector<32x32xbf16>, vector<32x16xbf16>, vector<32x16xf32> -> vector<32x16xf32>
    %46 = arith.addf %40, %45 : vector<32x16xf32>
    %47 = vector.extract_strided_slice %29 {offsets = [96, 0], sizes = [32, 32], strides = [1, 1]} : vector<256x32xf32> to vector<32x32xf32>
    %48 = arith.truncf %47 : vector<32x32xf32> to vector<32x32xbf16>
    %49 = vector.extract_strided_slice %26 {offsets = [96, 0], sizes = [32, 16], strides = [1, 1]} : vector<256x16xf32> to vector<32x16xf32>
    %50 = arith.truncf %49 : vector<32x16xf32> to vector<32x16xbf16>
    %cst_31 = arith.constant dense<0.000000e+00> : vector<32x16xf32>
    %51 = tpu.matmul %48, %50, %cst_31 {dimension_numbers = #tpu.dot_dimension_numbers<[1], [0], [0], [1], [0, 0, 1, 1], [], []>} : vector<32x32xbf16>, vector<32x16xbf16>, vector<32x16xf32> -> vector<32x16xf32>
    %52 = arith.addf %46, %51 : vector<32x16xf32>
    %53 = vector.extract_strided_slice %29 {offsets = [128, 0], sizes = [32, 32], strides = [1, 1]} : vector<256x32xf32> to vector<32x32xf32>
    %54 = arith.truncf %53 : vector<32x32xf32> to vector<32x32xbf16>
    %55 = vector.extract_strided_slice %26 {offsets = [128, 0], sizes = [32, 16], strides = [1, 1]} : vector<256x16xf32> to vector<32x16xf32>
    %56 = arith.truncf %55 : vector<32x16xf32> to vector<32x16xbf16>
    %cst_32 = arith.constant dense<0.000000e+00> : vector<32x16xf32>
    %57 = tpu.matmul %54, %56, %cst_32 {dimension_numbers = #tpu.dot_dimension_numbers<[1], [0], [0], [1], [0, 0, 1, 1], [], []>} : vector<32x32xbf16>, vector<32x16xbf16>, vector<32x16xf32> -> vector<32x16xf32>
    %58 = arith.addf %52, %57 : vector<32x16xf32>
    %59 = vector.extract_strided_slice %29 {offsets = [160, 0], sizes = [32, 32], strides = [1, 1]} : vector<256x32xf32> to vector<32x32xf32>
    %60 = arith.truncf %59 : vector<32x32xf32> to vector<32x32xbf16>
    %61 = vector.extract_strided_slice %26 {offsets = [160, 0], sizes = [32, 16], strides = [1, 1]} : vector<256x16xf32> to vector<32x16xf32>
    %62 = arith.truncf %61 : vector<32x16xf32> to vector<32x16xbf16>
    %cst_33 = arith.constant dense<0.000000e+00> : vector<32x16xf32>
    %63 = tpu.matmul %60, %62, %cst_33 {dimension_numbers = #tpu.dot_dimension_numbers<[1], [0], [0], [1], [0, 0, 1, 1], [], []>} : vector<32x32xbf16>, vector<32x16xbf16>, vector<32x16xf32> -> vector<32x16xf32>
    %64 = arith.addf %58, %63 : vector<32x16xf32>
    %65 = vector.extract_strided_slice %29 {offsets = [192, 0], sizes = [32, 32], strides = [1, 1]} : vector<256x32xf32> to vector<32x32xf32>
    %66 = arith.truncf %65 : vector<32x32xf32> to vector<32x32xbf16>
    %67 = vector.extract_strided_slice %26 {offsets = [192, 0], sizes = [32, 16], strides = [1, 1]} : vector<256x16xf32> to vector<32x16xf32>
    %68 = arith.truncf %67 : vector<32x16xf32> to vector<32x16xbf16>
    %cst_34 = arith.constant dense<0.000000e+00> : vector<32x16xf32>
    %69 = tpu.matmul %66, %68, %cst_34 {dimension_numbers = #tpu.dot_dimension_numbers<[1], [0], [0], [1], [0, 0, 1, 1], [], []>} : vector<32x32xbf16>, vector<32x16xbf16>, vector<32x16xf32> -> vector<32x16xf32>
    %70 = arith.addf %64, %69 : vector<32x16xf32>
    %71 = vector.extract_strided_slice %29 {offsets = [224, 0], sizes = [32, 32], strides = [1, 1]} : vector<256x32xf32> to vector<32x32xf32>
    %72 = arith.truncf %71 : vector<32x32xf32> to vector<32x32xbf16>
    %73 = vector.extract_strided_slice %26 {offsets = [224, 0], sizes = [32, 16], strides = [1, 1]} : vector<256x16xf32> to vector<32x16xf32>
    %74 = arith.truncf %73 : vector<32x16xf32> to vector<32x16xbf16>
    %cst_35 = arith.constant dense<0.000000e+00> : vector<32x16xf32>
    %75 = tpu.matmul %72, %74, %cst_35 {dimension_numbers = #tpu.dot_dimension_numbers<[1], [0], [0], [1], [0, 0, 1, 1], [], []>} : vector<32x32xbf16>, vector<32x16xbf16>, vector<32x16xf32> -> vector<32x16xf32>
    %76 = arith.addf %70, %75 : vector<32x16xf32>
    %c0_36 = arith.constant 0 : index
    %c0_37 = arith.constant 0 : index
    %77 = vector.load %arg11[%c0_36, %c0_37] : memref<32x9xf32, #tpu.memory_space<vmem>>, vector<32x1xf32>
    %78 = vector.broadcast %77 : vector<32x1xf32> to vector<32x16xf32>
    %79 = arith.addf %76, %78 : vector<32x16xf32>
    %c0_38 = arith.constant 0 : index
    %c0_39 = arith.constant 0 : index
    %80 = vector.load %arg10[%c0_38, %c0_39] : memref<10x32xbf16, #tpu.memory_space<vmem>>, vector<10x32xbf16>
    %81 = arith.truncf %79 : vector<32x16xf32> to vector<32x16xbf16>
    %cst_40 = arith.constant dense<0.000000e+00> : vector<10x16xf32>
    %82 = tpu.matmul %80, %81, %cst_40 {dimension_numbers = #tpu.dot_dimension_numbers<[1], [0], [0], [1], [0, 0, 1, 1], [], []>} : vector<10x32xbf16>, vector<32x16xbf16>, vector<10x16xf32> -> vector<10x16xf32>
    %c0_41 = arith.constant 0 : index
    %c1_42 = arith.constant 1 : index
    %83 = vector.load %arg12[%c0_41, %c1_42] : memref<10x2xf32, #tpu.memory_space<vmem>>, vector<10x1xf32>
    %84 = vector.broadcast %83 : vector<10x1xf32> to vector<10x16xf32>
    %85 = arith.addf %82, %84 : vector<10x16xf32>
    %c0_43 = arith.constant 0 : index
    %c0_44 = arith.constant 0 : index
    %86 = vector.load %arg12[%c0_43, %c0_44] : memref<10x2xf32, #tpu.memory_space<vmem>>, vector<10x1xf32>
    %87 = vector.broadcast %86 : vector<10x1xf32> to vector<10x16xf32>
    %88 = arith.mulf %85, %87 : vector<10x16xf32>
    %cst_45 = arith.constant dense<0.000000e+00> : vector<16xf32>
    %89 = vector.multi_reduction <add>, %88, %cst_45 [0] : vector<10x16xf32> to vector<16xf32>
    %90 = vector.shape_cast %89 : vector<16xf32> to vector<1x16xf32>
    %c0_46 = arith.constant 0 : index
    %c0_47 = arith.constant 0 : index
    %91 = vector.load %arg13[%c0_46, %c0_47] : memref<1x4xf32, #tpu.memory_space<vmem>>, vector<1x1xf32>
    %92 = vector.broadcast %91 : vector<1x1xf32> to vector<1x16xf32>
    %93 = arith.addf %90, %92 : vector<1x16xf32>
    %c0_48 = arith.constant 0 : index
    %c1_49 = arith.constant 1 : index
    %94 = vector.load %arg13[%c0_48, %c1_49] : memref<1x4xf32, #tpu.memory_space<vmem>>, vector<1x1xf32>
    %95 = vector.broadcast %94 : vector<1x1xf32> to vector<1x16xf32>
    %96 = arith.mulf %7, %95 : vector<1x16xf32>
    %97 = arith.addf %93, %96 : vector<1x16xf32>
    %c0_50 = arith.constant 0 : index
    %c8 = arith.constant 8 : index
    %98 = vector.load %arg11[%c0_50, %c8] : memref<32x9xf32, #tpu.memory_space<vmem>>, vector<32x1xf32>
    %99 = vector.broadcast %98 : vector<32x1xf32> to vector<32x16xf32>
    %100 = arith.mulf %1, %99 : vector<32x16xf32>
    %cst_51 = arith.constant dense<0.000000e+00> : vector<16xf32>
    %101 = vector.multi_reduction <add>, %100, %cst_51 [0] : vector<32x16xf32> to vector<16xf32>
    %102 = vector.shape_cast %101 : vector<16xf32> to vector<1x16xf32>
    %c0_52 = arith.constant 0 : index
    %c2 = arith.constant 2 : index
    %103 = vector.load %arg13[%c0_52, %c2] : memref<1x4xf32, #tpu.memory_space<vmem>>, vector<1x1xf32>
    %104 = vector.broadcast %103 : vector<1x1xf32> to vector<1x16xf32>
    %105 = arith.addf %102, %104 : vector<1x16xf32>
    %106 = arith.addf %97, %105 : vector<1x16xf32>
    %c0_53 = arith.constant 0 : index
    %c1_54 = arith.constant 1 : index
    %107 = vector.load %arg11[%c0_53, %c1_54] : memref<32x9xf32, #tpu.memory_space<vmem>>, vector<32x1xf32>
    %108 = vector.broadcast %107 : vector<32x1xf32> to vector<32x16xf32>
    %109 = vector.broadcast %106 : vector<1x16xf32> to vector<32x16xf32>
    %110 = arith.mulf %108, %109 : vector<32x16xf32>
    %c0_55 = arith.constant 0 : index
    %c2_56 = arith.constant 2 : index
    %111 = vector.load %arg11[%c0_55, %c2_56] : memref<32x9xf32, #tpu.memory_space<vmem>>, vector<32x1xf32>
    %112 = vector.broadcast %111 : vector<32x1xf32> to vector<32x16xf32>
    %113 = arith.addf %110, %112 : vector<32x16xf32>
    %c0_57 = arith.constant 0 : index
    %c0_58 = arith.constant 0 : index
    %c0_59 = arith.constant 0 : index
    %114 = vector.load %arg9[%c0_57, %c0_58, %c0_59] : memref<4x32x32xbf16, #tpu.memory_space<vmem>>, vector<1x32x32xbf16>
    %115 = vector.shape_cast %114 : vector<1x32x32xbf16> to vector<32x32xbf16>
    %116 = arith.truncf %113 : vector<32x16xf32> to vector<32x16xbf16>
    %cst_60 = arith.constant dense<0.000000e+00> : vector<32x16xf32>
    %117 = tpu.matmul %115, %116, %cst_60 {dimension_numbers = #tpu.dot_dimension_numbers<[1], [0], [0], [1], [0, 0, 1, 1], [], []>} : vector<32x32xbf16>, vector<32x16xbf16>, vector<32x16xf32> -> vector<32x16xf32>
    %c0_61 = arith.constant 0 : index
    %c3 = arith.constant 3 : index
    %118 = vector.load %arg11[%c0_61, %c3] : memref<32x9xf32, #tpu.memory_space<vmem>>, vector<32x1xf32>
    %119 = vector.broadcast %118 : vector<32x1xf32> to vector<32x16xf32>
    %120 = arith.addf %117, %119 : vector<32x16xf32>
    %121 = arith.negf %120 : vector<32x16xf32>
    %122 = math.exp %121 : vector<32x16xf32>
    %cst_62 = arith.constant 1.000000e+00 : f32
    %123 = vector.broadcast %cst_62 : f32 to vector<32x16xf32>
    %124 = arith.addf %123, %122 : vector<32x16xf32>
    %125 = arith.divf %123, %124 : vector<32x16xf32>
    %126 = arith.mulf %120, %125 : vector<32x16xf32>
    %c1_63 = arith.constant 1 : index
    %c0_64 = arith.constant 0 : index
    %c0_65 = arith.constant 0 : index
    %127 = vector.load %arg9[%c1_63, %c0_64, %c0_65] : memref<4x32x32xbf16, #tpu.memory_space<vmem>>, vector<1x32x32xbf16>
    %128 = vector.shape_cast %127 : vector<1x32x32xbf16> to vector<32x32xbf16>
    %129 = arith.truncf %126 : vector<32x16xf32> to vector<32x16xbf16>
    %cst_66 = arith.constant dense<0.000000e+00> : vector<32x16xf32>
    %130 = tpu.matmul %128, %129, %cst_66 {dimension_numbers = #tpu.dot_dimension_numbers<[1], [0], [0], [1], [0, 0, 1, 1], [], []>} : vector<32x32xbf16>, vector<32x16xbf16>, vector<32x16xf32> -> vector<32x16xf32>
    %131 = arith.addf %113, %130 : vector<32x16xf32>
    %c0_67 = arith.constant 0 : index
    %c4 = arith.constant 4 : index
    %132 = vector.load %arg11[%c0_67, %c4] : memref<32x9xf32, #tpu.memory_space<vmem>>, vector<32x1xf32>
    %133 = vector.broadcast %132 : vector<32x1xf32> to vector<32x16xf32>
    %134 = arith.addf %131, %133 : vector<32x16xf32>
    %c2_68 = arith.constant 2 : index
    %c0_69 = arith.constant 0 : index
    %c0_70 = arith.constant 0 : index
    %135 = vector.load %arg9[%c2_68, %c0_69, %c0_70] : memref<4x32x32xbf16, #tpu.memory_space<vmem>>, vector<1x32x32xbf16>
    %136 = vector.shape_cast %135 : vector<1x32x32xbf16> to vector<32x32xbf16>
    %137 = arith.truncf %134 : vector<32x16xf32> to vector<32x16xbf16>
    %cst_71 = arith.constant dense<0.000000e+00> : vector<32x16xf32>
    %138 = tpu.matmul %136, %137, %cst_71 {dimension_numbers = #tpu.dot_dimension_numbers<[1], [0], [0], [1], [0, 0, 1, 1], [], []>} : vector<32x32xbf16>, vector<32x16xbf16>, vector<32x16xf32> -> vector<32x16xf32>
    %c0_72 = arith.constant 0 : index
    %c5 = arith.constant 5 : index
    %139 = vector.load %arg11[%c0_72, %c5] : memref<32x9xf32, #tpu.memory_space<vmem>>, vector<32x1xf32>
    %140 = vector.broadcast %139 : vector<32x1xf32> to vector<32x16xf32>
    %141 = arith.addf %138, %140 : vector<32x16xf32>
    %142 = arith.mulf %141, %141 : vector<32x16xf32>
    %143 = arith.mulf %141, %142 : vector<32x16xf32>
    %cst_73 = arith.constant 4.471500e-02 : f32
    %144 = vector.broadcast %cst_73 : f32 to vector<32x16xf32>
    %145 = arith.mulf %144, %143 : vector<32x16xf32>
    %146 = arith.addf %141, %145 : vector<32x16xf32>
    %cst_74 = arith.constant 0.797884583 : f32
    %147 = vector.broadcast %cst_74 : f32 to vector<32x16xf32>
    %148 = arith.mulf %147, %146 : vector<32x16xf32>
    %149 = math.tanh %148 : vector<32x16xf32>
    %cst_75 = arith.constant 1.000000e+00 : f32
    %150 = vector.broadcast %cst_75 : f32 to vector<32x16xf32>
    %151 = arith.addf %150, %149 : vector<32x16xf32>
    %cst_76 = arith.constant 5.000000e-01 : f32
    %152 = vector.broadcast %cst_76 : f32 to vector<32x16xf32>
    %153 = arith.mulf %152, %151 : vector<32x16xf32>
    %154 = arith.mulf %141, %153 : vector<32x16xf32>
    %c3_77 = arith.constant 3 : index
    %c0_78 = arith.constant 0 : index
    %c0_79 = arith.constant 0 : index
    %155 = vector.load %arg9[%c3_77, %c0_78, %c0_79] : memref<4x32x32xbf16, #tpu.memory_space<vmem>>, vector<1x32x32xbf16>
    %156 = vector.shape_cast %155 : vector<1x32x32xbf16> to vector<32x32xbf16>
    %157 = arith.truncf %154 : vector<32x16xf32> to vector<32x16xbf16>
    %cst_80 = arith.constant dense<0.000000e+00> : vector<32x16xf32>
    %158 = tpu.matmul %156, %157, %cst_80 {dimension_numbers = #tpu.dot_dimension_numbers<[1], [0], [0], [1], [0, 0, 1, 1], [], []>} : vector<32x32xbf16>, vector<32x16xbf16>, vector<32x16xf32> -> vector<32x16xf32>
    %c0_81 = arith.constant 0 : index
    %c6 = arith.constant 6 : index
    %159 = vector.load %arg11[%c0_81, %c6] : memref<32x9xf32, #tpu.memory_space<vmem>>, vector<32x1xf32>
    %160 = vector.broadcast %159 : vector<32x1xf32> to vector<32x16xf32>
    %161 = arith.addf %158, %160 : vector<32x16xf32>
    %162 = arith.mulf %161, %161 : vector<32x16xf32>
    %163 = arith.mulf %161, %162 : vector<32x16xf32>
    %cst_82 = arith.constant 4.471500e-02 : f32
    %164 = vector.broadcast %cst_82 : f32 to vector<32x16xf32>
    %165 = arith.mulf %164, %163 : vector<32x16xf32>
    %166 = arith.addf %161, %165 : vector<32x16xf32>
    %cst_83 = arith.constant 0.797884583 : f32
    %167 = vector.broadcast %cst_83 : f32 to vector<32x16xf32>
    %168 = arith.mulf %167, %166 : vector<32x16xf32>
    %169 = math.tanh %168 : vector<32x16xf32>
    %cst_84 = arith.constant 1.000000e+00 : f32
    %170 = vector.broadcast %cst_84 : f32 to vector<32x16xf32>
    %171 = arith.addf %170, %169 : vector<32x16xf32>
    %cst_85 = arith.constant 5.000000e-01 : f32
    %172 = vector.broadcast %cst_85 : f32 to vector<32x16xf32>
    %173 = arith.mulf %172, %171 : vector<32x16xf32>
    %174 = arith.mulf %161, %173 : vector<32x16xf32>
    %c0_86 = arith.constant 0 : index
    %c7 = arith.constant 7 : index
    %175 = vector.load %arg11[%c0_86, %c7] : memref<32x9xf32, #tpu.memory_space<vmem>>, vector<32x1xf32>
    %176 = vector.broadcast %175 : vector<32x1xf32> to vector<32x16xf32>
    %177 = arith.mulf %174, %176 : vector<32x16xf32>
    %cst_87 = arith.constant dense<0.000000e+00> : vector<16xf32>
    %178 = vector.multi_reduction <add>, %177, %cst_87 [0] : vector<32x16xf32> to vector<16xf32>
    %179 = vector.shape_cast %178 : vector<16xf32> to vector<1x16xf32>
    %c0_88 = arith.constant 0 : index
    %c3_89 = arith.constant 3 : index
    %180 = vector.load %arg13[%c0_88, %c3_89] : memref<1x4xf32, #tpu.memory_space<vmem>>, vector<1x1xf32>
    %181 = vector.broadcast %180 : vector<1x1xf32> to vector<1x16xf32>
    %182 = arith.addf %179, %181 : vector<1x16xf32>
    %183 = arith.addf %97, %182 : vector<1x16xf32>
    %184 = arith.addf %183, %9 : vector<1x16xf32>
    %c0_90 = arith.constant 0 : index
    %c0_91 = arith.constant 0 : index
    %c0_92 = arith.constant 0 : index
    %185 = vector.load %arg14[%c0_90, %c0_91, %c0_92] : memref<1x1x16xf32, #tpu.memory_space<vmem>>, vector<1x1x16xf32>
    %186 = vector.shape_cast %185 : vector<1x1x16xf32> to vector<1x16xf32>
    %187 = vector.shape_cast %184 : vector<1x16xf32> to vector<1x1x16xf32>
    tpu.vector_store %arg14[%c0_90, %c0_91, %c0_92], %187 {strides = array<i32>} : memref<1x1x16xf32, #tpu.memory_space<vmem>>, vector<1x1x16xf32>,
    return
  }
  func.func @transform_0(%arg0: i32) -> (i32, i32, i32) {
    %c0_i32 = arith.constant 0 : i32
    %c0_i32_0 = arith.constant 0 : i32
    %c0_i32_1 = arith.constant 0 : i32
    return %arg0, %c0_i32, %c0_i32_0 : i32, i32, i32
  }
  func.func @transform_1(%arg0: i32) -> (i32, i32, i32) {
    %c0_i32 = arith.constant 0 : i32
    %c0_i32_0 = arith.constant 0 : i32
    %c0_i32_1 = arith.constant 0 : i32
    return %arg0, %c0_i32, %c0_i32_0 : i32, i32, i32
  }
  func.func @transform_2(%arg0: i32) -> (i32, i32, i32) {
    %c0_i32 = arith.constant 0 : i32
    %c0_i32_0 = arith.constant 0 : i32
    %c0_i32_1 = arith.constant 0 : i32
    return %arg0, %c0_i32, %c0_i32_0 : i32, i32, i32
  }
  func.func @transform_3(%arg0: i32) -> (i32, i32, i32) {
    %c0_i32 = arith.constant 0 : i32
    %c0_i32_0 = arith.constant 0 : i32
    %c0_i32_1 = arith.constant 0 : i32
    return %arg0, %c0_i32, %c0_i32_0 : i32, i32, i32
  }
  func.func @transform_4(%arg0: i32) -> (i32, i32, i32) {
    %c0_i32 = arith.constant 0 : i32
    %c0_i32_0 = arith.constant 0 : i32
    %c0_i32_1 = arith.constant 0 : i32
    return %arg0, %c0_i32, %c0_i32_0 : i32, i32, i32
  }
  func.func @transform_5(%arg0: i32) -> (i32, i32) {
    %c0_i32 = arith.constant 0 : i32
    %c0_i32_0 = arith.constant 0 : i32
    %c0_i32_1 = arith.constant 0 : i32
    return %c0_i32, %c0_i32_0 : i32, i32
  }
  func.func @transform_6(%arg0: i32) -> (i32, i32) {
    %c0_i32 = arith.constant 0 : i32
    %c0_i32_0 = arith.constant 0 : i32
    %c0_i32_1 = arith.constant 0 : i32
    return %c0_i32, %c0_i32_0 : i32, i32
  }
  func.func @transform_7(%arg0: i32) -> (i32, i32, i32) {
    %c0_i32 = arith.constant 0 : i32
    %c0_i32_0 = arith.constant 0 : i32
    %c0_i32_1 = arith.constant 0 : i32
    %c0_i32_2 = arith.constant 0 : i32
    return %c0_i32, %c0_i32_0, %c0_i32_1 : i32, i32, i32
  }
  func.func @transform_8(%arg0: i32) -> (i32, i32, i32) {
    %c0_i32 = arith.constant 0 : i32
    %c0_i32_0 = arith.constant 0 : i32
    %c0_i32_1 = arith.constant 0 : i32
    %c0_i32_2 = arith.constant 0 : i32
    return %c0_i32, %c0_i32_0, %c0_i32_1 : i32, i32, i32
  }
  func.func @transform_9(%arg0: i32) -> (i32, i32) {
    %c0_i32 = arith.constant 0 : i32
    %c0_i32_0 = arith.constant 0 : i32
    %c0_i32_1 = arith.constant 0 : i32
    return %c0_i32, %c0_i32_0 : i32, i32
  }
  func.func @transform_10(%arg0: i32) -> (i32, i32) {
    %c0_i32 = arith.constant 0 : i32
    %c0_i32_0 = arith.constant 0 : i32
    %c0_i32_1 = arith.constant 0 : i32
    return %c0_i32, %c0_i32_0 : i32, i32
  }
  func.func @transform_11(%arg0: i32) -> (i32, i32) {
    %c0_i32 = arith.constant 0 : i32
    %c0_i32_0 = arith.constant 0 : i32
    %c0_i32_1 = arith.constant 0 : i32
    return %c0_i32, %c0_i32_0 : i32, i32
  }
  func.func @transform_12(%arg0: i32) -> (i32, i32) {
    %c0_i32 = arith.constant 0 : i32
    %c0_i32_0 = arith.constant 0 : i32
    %c0_i32_1 = arith.constant 0 : i32
    return %c0_i32, %c0_i32_0 : i32, i32
  }
  func.func @transform_13(%arg0: i32) -> (i32, i32, i32) {
    %c0_i32 = arith.constant 0 : i32
    %c0_i32_0 = arith.constant 0 : i32
    %c0_i32_1 = arith.constant 0 : i32
    return %arg0, %c0_i32, %c0_i32_0 : i32, i32, i32
  }
}

</mosaic_0001>

<llo_original>
// kernel: mano1d_forward.2
$region0: #{mano1d_forward.2}
  #allocation0 [shape = 'u32[]', space=smem, size = 0x4, offset = 0x4, fixed_abs, tag = 'smem constant byte address 0x4 - core index']
  #allocation1 [shape = 'u32[144,128]{1,0:T(1,128)}', space=vmem, size = 0x12000, scoped, tag = 'internal scratch']
  %s0 = inlined_call_operand.vmem [shape: f32[64,4], index: 0, kind: input, shape index: {}]
  %s1 = inlined_call_operand.vmem [shape: bf16[4,64], index: 1, kind: input, shape index: {}]
  %s2 = inlined_call_operand.hbm [shape: bf16[23,64,64], index: 2, kind: input, shape index: {}]
  %s3 = inlined_call_operand.vmem [shape: f32[10,64], index: 3, kind: input, shape index: {}]
  %s4 = inlined_call_operand.vmem [shape: f32[6,32,1], index: 4, kind: input, shape index: {}]
  %s5 = inlined_call_operand.vmem [shape: f32[64,32], index: 5, kind: output, shape index: {}]
  %s6 = sld [smem:[#allocation0]]
  $region57: #{mano1d_forward.2} parent=0
    _
  %s8 = ssub.s32 1, %s6
  %s9 = scalar_select 0, %s8, %s6
  $region1: #{mano1d_forward.2} parent=0
    #allocation2 [shape = 'u8[376832]{0}', space=vmem, size = 0x5c000, scoped, tag = 'input window, operand 2, single buffered']
    #allocation3 [shape = 's32[2]{0}', space=sflag, size = 0x8, scoped, tag = 'scoped memory for mano1d_forward.2']
    %10 = vsyncpa [#allocation3], 0
    loop: start=0, step=1, limit=4
    $region2: #{mano1d_forward.2} parent=1 // loop_pre_header
      _
    $region3: #{mano1d_forward.2} parent=1 // loop_header
      %s12 = sphi 0, %s16
      %p13 = scmp.ge.s32.totalorder %s12, 4
      %s22 = sphi 0, %s24
      %s25 = sphi 0, %s22
      %s26 = sphi 0, %s25
      %s42 = sphi 0, %s26
      %s46 = sphi 0, %s46
      %s48 = sphi 0, %s46
      %s49 = sphi 0, %s48
      %s63 = sphi 0, %s49
      %s67 = sphi 0, %s67
      %s69 = sphi 0, %s67
      %s70 = sphi 0, %s69
      %s84 = sphi 0, %s70
      %s88 = sphi 0, %s88
      %s90 = sphi 0, %s88
      %s91 = sphi 0, %s90
      %s105 = sphi 0, %s91
      %s109 = sphi 0, %s109
      %s111 = sphi 0, %s109
      %s112 = sphi 0, %s111
      %s126 = sphi 0, %s112
      %s132 = sphi 0, %s134
      %s135 = sphi 0, %s132
      %s136 = sphi 0, %s135
      %s152 = sphi 0, %s136
    $region4: #{mano1d_forward.2} parent=1 // loop_header_branch
      %15 = sbr.rel (%p13) target = $region8
    $region5: #{mano1d_forward.2} parent=1 // loop_body
      %s17 = ssub.s32 %s12, 1
      %s18 = ssub.s32 %s12, 2
      %s19 = sadd.s32 %s12, 1
      %s20 = ssub.s32 %s12, %s19
      %p21 = scmp.eq.s32.totalorder %s20, 0
      %s23 = sadd.s32 %s22, 1
      %s24 = scalar_select %p21, %s22, %s23
      %p27 = pneg %p21
      %p28 = scmp.eq.s32.totalorder %s12, 1
      %p29 = por %p27, %p28
      %p30 = scmp.ne.s32.totalorder %s22, %s25
      %p31 = scmp.eq.s32.totalorder %s12, 0
      %p32 = por %p30, %p31
      %p33 = scmp.ne.s32.totalorder %s22, %s25
      %p34 = scmp.eq.s32.totalorder %s17, 1
      %p35 = por %p33, %p34
      %p36 = scmp.ne.s32.totalorder %s25, %s26
      %p37 = scmp.eq.s32.totalorder %s17, 0
      %p38 = por %p36, %p37
      %p39 = scmp.ne.s32.totalorder %s25, %s26
      %p40 = scmp.eq.s32.totalorder %s18, 1
      %p41 = por %p39, %p40
      %p43 = scmp.ne.s32.totalorder %s26, %s42
      %p44 = scmp.eq.s32.totalorder %s18, 0
      %p45 = por %p43, %p44
      %s47 = sadd.s32 %s46, 1
      %p50 = scmp.eq.s32.totalorder %s12, 1
      %p51 = scmp.ne.s32.totalorder %s46, %s48
      %p52 = scmp.eq.s32.totalorder %s12, 0
      %p53 = por %p51, %p52
      %p54 = scmp.ne.s32.totalorder %s46, %s48
      %p55 = scmp.eq.s32.totalorder %s17, 1
      %p56 = por %p54, %p55
      %p57 = scmp.ne.s32.totalorder %s48, %s49
      %p58 = scmp.eq.s32.totalorder %s17, 0
      %p59 = por %p57, %p58
      %p60 = scmp.ne.s32.totalorder %s48, %s49
      %p61 = scmp.eq.s32.totalorder %s18, 1
      %p62 = por %p60, %p61
      %p64 = scmp.ne.s32.totalorder %s49, %s63
      %p65 = scmp.eq.s32.totalorder %s18, 0
      %p66 = por %p64, %p65
      %s68 = sadd.s32 %s67, 1
      %p71 = scmp.eq.s32.totalorder %s12, 1
      %p72 = scmp.ne.s32.totalorder %s67, %s69
      %p73 = scmp.eq.s32.totalorder %s12, 0
      %p74 = por %p72, %p73
      %p75 = scmp.ne.s32.totalorder %s67, %s69
      %p76 = scmp.eq.s32.totalorder %s17, 1
      %p77 = por %p75, %p76
      %p78 = scmp.ne.s32.totalorder %s69, %s70
      %p79 = scmp.eq.s32.totalorder %s17, 0
      %p80 = por %p78, %p79
      %p81 = scmp.ne.s32.totalorder %s69, %s70
      %p82 = scmp.eq.s32.totalorder %s18, 1
      %p83 = por %p81, %p82
      %p85 = scmp.ne.s32.totalorder %s70, %s84
      %p86 = scmp.eq.s32.totalorder %s18, 0
      %p87 = por %p85, %p86
      %s89 = sadd.s32 %s88, 1
      %p92 = scmp.eq.s32.totalorder %s12, 1
      %p93 = scmp.ne.s32.totalorder %s88, %s90
      %p94 = scmp.eq.s32.totalorder %s12, 0
      %p95 = por %p93, %p94
      %p96 = scmp.ne.s32.totalorder %s88, %s90
      %p97 = scmp.eq.s32.totalorder %s17, 1
      %p98 = por %p96, %p97
      %p99 = scmp.ne.s32.totalorder %s90, %s91
      %p100 = scmp.eq.s32.totalorder %s17, 0
      %p101 = por %p99, %p100
      %p102 = scmp.ne.s32.totalorder %s90, %s91
      %p103 = scmp.eq.s32.totalorder %s18, 1
      %p104 = por %p102, %p103
      %p106 = scmp.ne.s32.totalorder %s91, %s105
      %p107 = scmp.eq.s32.totalorder %s18, 0
      %p108 = por %p106, %p107
      %s110 = sadd.s32 %s109, 1
      %p113 = scmp.eq.s32.totalorder %s12, 1
      %p114 = scmp.ne.s32.totalorder %s109, %s111
      %p115 = scmp.eq.s32.totalorder %s12, 0
      %p116 = por %p114, %p115
      %p117 = scmp.ne.s32.totalorder %s109, %s111
      %p118 = scmp.eq.s32.totalorder %s17, 1
      %p119 = por %p117, %p118
      %p120 = scmp.ne.s32.totalorder %s111, %s112
      %p121 = scmp.eq.s32.totalorder %s17, 0
      %p122 = por %p120, %p121
      %p123 = scmp.ne.s32.totalorder %s111, %s112
      %p124 = scmp.eq.s32.totalorder %s18, 1
      %p125 = por %p123, %p124
      %p127 = scmp.ne.s32.totalorder %s112, %s126
      %p128 = scmp.eq.s32.totalorder %s18, 0
      %p129 = por %p127, %p128
      %s130 = ssub.s32 %s12, %s19
      %p131 = scmp.eq.s32.totalorder %s130, 0
      %s133 = sadd.s32 %s132, 1
      %s134 = scalar_select %p131, %s132, %s133
      %p137 = pneg %p131
      %p138 = scmp.eq.s32.totalorder %s12, 1
      %p139 = por %p137, %p138
      %p140 = scmp.ne.s32.totalorder %s132, %s135
      %p141 = scmp.eq.s32.totalorder %s12, 0
      %p142 = por %p140, %p141
      %p143 = scmp.ne.s32.totalorder %s132, %s135
      %p144 = scmp.eq.s32.totalorder %s17, 1
      %p145 = por %p143, %p144
      %p146 = scmp.ne.s32.totalorder %s135, %s136
      %p147 = scmp.eq.s32.totalorder %s17, 0
      %p148 = por %p146, %p147
      %p149 = scmp.ne.s32.totalorder %s135, %s136
      %p150 = scmp.eq.s32.totalorder %s18, 1
      %p151 = por %p149, %p150
      %p153 = scmp.ne.s32.totalorder %s136, %s152
      %p154 = scmp.eq.s32.totalorder %s18, 0
      %p155 = por %p153, %p154
      %p156 = scmp.le.s32.totalorder 1, %s12
      %p157 = scmp.lt.s32.totalorder %s12, 3
      %p158 = pnand %p156, %p157
      %p159 = pneg %p158
      // Predicated region
      $region9: #{mano1d_forward.2} parent=5 // pred_check
        _
      $region10: #{mano1d_forward.2} parent=5 // pred_check_branch
        %161 = sbr.rel (%p158) target = $region12
      $region11: #{mano1d_forward.2} parent=5 // pred_region
        %s162 = ssub.s32 %s12, 1
        // Predicated region
        $region13: #{mano1d_forward.2} parent=11 // pred_check
          %p163 = pneg %p59
        $region14: #{mano1d_forward.2} parent=11 // pred_check_branch
          %165 = sbr.rel (%p163) target = $region16
        $region15: #{mano1d_forward.2} parent=11 // pred_region
          _
        $region16: #{mano1d_forward.2} parent=11 // pred_fallthru
          _
        // Predicated region
        $region17: #{mano1d_forward.2} parent=11 // pred_check
          %p166 = pneg %p80
        $region18: #{mano1d_forward.2} parent=11 // pred_check_branch
          %168 = sbr.rel (%p166) target = $region20
        $region19: #{mano1d_forward.2} parent=11 // pred_region
          %s170 = ssub.s32 11776, 11776
          %171 = vsyncadd [#allocation3], %s170
          %s172 = sshll.u32 [#allocation2], 4
          %s173 = int_to_ptr.vmem [resolvable:$true] %s172
          %178 = dma.hbm_to_vmem [thread:$0]  %s2, 11776, %s173, [#allocation3], 64, 64, 4
        $region20: #{mano1d_forward.2} parent=11 // pred_fallthru
          _
        // Predicated region
        $region21: #{mano1d_forward.2} parent=11 // pred_check
          %p179 = pneg %p101
        $region22: #{mano1d_forward.2} parent=11 // pred_check_branch
          %181 = sbr.rel (%p179) target = $region24
        $region23: #{mano1d_forward.2} parent=11 // pred_region
          _
        $region24: #{mano1d_forward.2} parent=11 // pred_fallthru
          _
        // Predicated region
        $region25: #{mano1d_forward.2} parent=11 // pred_check
          %p182 = pneg %p122
        $region26: #{mano1d_forward.2} parent=11 // pred_check_branch
          %184 = sbr.rel (%p182) target = $region28
        $region27: #{mano1d_forward.2} parent=11 // pred_region
          _
        $region28: #{mano1d_forward.2} parent=11 // pred_fallthru
          _
      $region12: #{mano1d_forward.2} parent=5 // pred_fallthru
        _
      %p185 = scmp.lt.s32.totalorder %s12, 2
      // Predicated region
      $region29: #{mano1d_forward.2} parent=5 // pred_check
        %p186 = pneg %p185
      $region30: #{mano1d_forward.2} parent=5 // pred_check_branch
        %188 = sbr.rel (%p186) target = $region32
      $region31: #{mano1d_forward.2} parent=5 // pred_region
        // Predicated region
        $region33: #{mano1d_forward.2} parent=31 // pred_check
          %p189 = pneg %p32
        $region34: #{mano1d_forward.2} parent=31 // pred_check_branch
          %191 = sbr.rel (%p189) target = $region36
        $region35: #{mano1d_forward.2} parent=31 // pred_region
          %s192 = smul.u32 4, %s12
          %p193 = scmp.lt.s32.totalorder %s192, 7
          %s194 = scalar_select %p193, %s192, 7
          %s195 = smul.addr %s194, 8
          %s196 = scalar_lea.vmem %s0, %s195
          %s197 = smul.u32 4, %s12
        $region36: #{mano1d_forward.2} parent=31 // pred_fallthru
          _
      $region32: #{mano1d_forward.2} parent=5 // pred_fallthru
        _
      %p198 = scmp.le.s32.totalorder 1, %s12
      %p199 = scmp.lt.s32.totalorder %s12, 3
      %p200 = pnand %p198, %p199
      %p201 = pneg %p200
      // Predicated region
      $region37: #{mano1d_forward.2} parent=5 // pred_check
        _
      $region38: #{mano1d_forward.2} parent=5 // pred_check_branch
        %203 = sbr.rel (%p200) target = $region40
      $region39: #{mano1d_forward.2} parent=5 // pred_region
        %s204 = ssub.s32 %s12, 1
        // Predicated region
        $region41: #{mano1d_forward.2} parent=39 // pred_check
          %p205 = pneg %p80
        $region42: #{mano1d_forward.2} parent=39 // pred_check_branch
          %207 = sbr.rel (%p205) target = $region44
        $region43: #{mano1d_forward.2} parent=39 // pred_region
          %208 = dma.done [#allocation3], 11776
        $region44: #{mano1d_forward.2} parent=39 // pred_fallthru
          _
        %s209 = smul.u32 4, %s17
        %p210 = scmp.lt.s32.totalorder %s209, 7
        %s211 = scalar_select %p210, %s209, 7
        %s212 = smul.addr %s211, 8
        %s213 = scalar_lea.vmem %s0, %s212
        %p214 = pneg %p38
        %p215 = pneg %p35
        %p216 = pneg %p59
        %p217 = pneg %p56
        %p218 = pneg %p80
        %p219 = pneg %p77
        %p220 = pneg %p101
        %p221 = pneg %p98
        %p222 = pneg %p122
        %p223 = pneg %p119
        %p224 = pneg %p148
        %p225 = pneg %p145
        %s226 = smul.u32 4, %s17
        %p227 = scmp.lt.s32.totalorder %s226, 7
        %s228 = scalar_select %p227, %s226, 7
        %s229 = smul.addr %s228, 8
        %s230 = scalar_lea.vmem %s5, %s229
        %s231 = smul.u32 4, %s17
        %p232 = scmp.lt.s32.totalorder %s231, 7
        %s233 = scalar_select %p232, %s231, 7
        %s234 = smul.addr %s233, 8
        %s235 = scalar_lea.vmem %s0, %s234
        %s236 = smul.u32 4, %s17
        %s237 = smul.u32 4, %s17
        %p238 = scmp.lt.s32.totalorder %s237, 7
        %s239 = scalar_select %p238, %s237, 7
        %s240 = smul.addr %s239, 8
        %s241 = scalar_lea.vmem %s5, %s240
        %s242 = smul.u32 4, %s17
        %v244 = vld [vmem:[%s235] sm:$0xff]
        %v245 = vld [vmem:[%s235 + $0x8] sm:$0xff]
        %v246 = vld [vmem:[%s235 + $0x10] sm:$0xff]
        %v247 = vld [vmem:[%s235 + $0x18] sm:$0xff]
        %v248 = vpack.c.bf16 %v245, %v244
        %v249 = vpack.c.bf16 %v247, %v246
        %v250 = vld [vmem:[%s1] sm:$0x3]
        %v251 = vld [vmem:[%s3] sm:$0x1]
        %v252 = vlaneseq
        %v253 = vshrl.u32 %v252, 7
        %v254 = vsub.s32 0, %v253
        %v255 = vrot.slane %v251, %v254
        %vm256 = vcmask 31744
        %v258 = vsel %vm256, %v248, 0
        %v261 = vsel %vm256, %v249, 0
        %vm263 = vcmask 1041408
        %v265 = vsel %vm263, %v250, 0
        %267 = vmatprep.subr.bf16.mxu0 0
        %268 = vmatpush1.bf16.msra.mxu0 0
        %269 = vmatprep.subr.bf16.mxu0 0
        %270 = vmatpush1.bf16.msra.mxu0 0
        %271 = vmatprep.subr.bf16.mxu0 0
        %272 = vmatpush1.bf16.msra.mxu0 0
        %273 = vmatprep.subr.bf16.mxu0 0
        %274 = vmatpush1.bf16.msra.mxu0 0
        %275 = vmatprep.subr.bf16.mxu0 0
        %276 = vmatpush1.bf16.msra.mxu0 0
        %277 = vmatprep.subr.bf16.mxu0 0
        %278 = vmatpush1.bf16.msra.mxu0 0
        %279 = vmatprep.subr.bf16.mxu0 0
        %280 = vmatpush1.bf16.msra.mxu0 0
        %281 = vmatprep.subr.bf16.mxu0 0
        %282 = vmatpush1.bf16.msra.mxu0 %v265
        %283 = vmatprep.subr.bf16.mxu0 0
        %284 = vmatpush2.bf16.msra.mxu0 0
        %285 = vmatprep.subr.bf16.mxu0 0
        %286 = vmatpush2.bf16.msra.mxu0 0
        %287 = vmatprep.subr.bf16.mxu0 0
        %288 = vmatpush2.bf16.msra.mxu0 0
        %289 = vmatprep.subr.bf16.mxu0 0
        %290 = vmatpush2.bf16.msra.mxu0 0
        %291 = vmatprep.subr.bf16.mxu0 0
        %292 = vmatpush2.bf16.msra.mxu0 0
        %293 = vmatprep.subr.bf16.mxu0 0
        %294 = vmatpush2.bf16.msra.mxu0 0
        %295 = vmatprep.subr.bf16.mxu0 0
        %296 = vmatpush2.bf16.msra.mxu0 0
        %297 = vmatprep.subr.bf16.mxu0 0
        %298 = vmatpush2.bf16.msra.mxu0 0
        %299 = vmatprep.mubr.bf16.mxu0 0
        %300 = vmatmul.mubr.bf16.gmra.mxu0 %v258
        %v301 = vpop.f32.mrf.mxu0
        %v302 = vadd.f32 %v255, %v301
        %v303 = vpop.f32.mrf.mxu0
        %v304 = vpop.f32.mrf.mxu0
        %v305 = vadd.f32 %v255, %v304
        %v306 = vpop.f32.mrf.mxu0
        %307 = vmatprep.mubr.bf16.mxu0 0
        %308 = vmatmul.mubr.bf16.gmra.mxu0 %v261
        %v309 = vpop.f32.mrf.mxu0
        %v310 = vadd.f32 %v255, %v309
        %v311 = vpop.f32.mrf.mxu0
        %v312 = vpop.f32.mrf.mxu0
        %v313 = vadd.f32 %v255, %v312
        %v314 = vpop.f32.mrf.mxu0
        %315 = vdwg.mxu0
        %v316 = vmul.f32 %v302, %v302
        %v317 = vmul.f32 %v305, %v305
        %v318 = vmul.f32 %v310, %v310
        %v319 = vmul.f32 %v313, %v313
        %v320 = vmul.f32 %v302, %v316
        %v321 = vmul.f32 %v305, %v317
        %v322 = vmul.f32 %v310, %v318
        %v323 = vmul.f32 %v313, %v319
        %v324 = vmul.f32 %v320, 0.044715
        %v325 = vmul.f32 %v321, 0.044715
        %v326 = vmul.f32 %v322, 0.044715
        %v327 = vmul.f32 %v323, 0.044715
        %v328 = vadd.f32 %v302, %v324
        %v329 = vadd.f32 %v305, %v325
        %v330 = vadd.f32 %v310, %v326
        %v331 = vadd.f32 %v313, %v327
        %v332 = vmul.f32 %v328, 0.7978846
        %v333 = vmul.f32 %v329, 0.7978846
        %v334 = vmul.f32 %v330, 0.7978846
        %v335 = vmul.f32 %v331, 0.7978846
        %v336 = vtanh.pop %v332
        %v337 = vtanh.pop %v333
        %v338 = vtanh.pop %v334
        %v339 = vtanh.pop %v335
        %v340 = vadd.f32 %v336, 1.0
        %v341 = vadd.f32 %v337, 1.0
        %v342 = vadd.f32 %v338, 1.0
        %v343 = vadd.f32 %v339, 1.0
        %v344 = vmul.f32 %v340, 0.5
        %v345 = vmul.f32 %v341, 0.5
        %v346 = vmul.f32 %v342, 0.5
        %v347 = vmul.f32 %v343, 0.5
        %v348 = vmul.f32 %v302, %v344
        %v349 = vmul.f32 %v305, %v345
        %v350 = vmul.f32 %v310, %v346
        %v351 = vmul.f32 %v313, %v347
        %v352 = vrot.slane %v348, 7
        %v353 = vrot.slane %v349, 7
        %v354 = vrot.slane %v350, 7
        %v355 = vrot.slane %v351, 7
        %v356 = vlaneseq
        %v357 = vshrl.u32 %v356, 7
        %vm358 = vcmp.lt.s32.totalorder %v357, 1
        %v359 = vsel %vm358, %v354, %v355
        %v360 = vsel %vm358, %v353, %v354
        %v361 = vsel %vm358, %v352, %v353
        %v362 = vsel %vm358, %v355, %v352
        %s363 = scalar_lea.vmem %s4, 64
        %v364 = vld [vmem:[%s363] sm:$0xff]
        %v365 = vld [vmem:[%s363 + $0x8] sm:$0xff]
        %v366 = vld [vmem:[%s363 + $0x10] sm:$0xff]
        %v367 = vld [vmem:[%s363 + $0x18] sm:$0xff]
        %369 = vset.pattern.permute.xlu0 0
        %370 = vperm.xlu0 %369, %v364
        %v371 = vpop.permute.xlu0 %370
        %374 = vset.pattern.permute.xlu0 0
        %375 = vperm.xlu0 %374, %v365
        %v376 = vpop.permute.xlu0 %375
        %379 = vset.pattern.permute.xlu0 0
        %380 = vperm.xlu0 %379, %v366
        %v381 = vpop.permute.xlu0 %380
        %384 = vset.pattern.permute.xlu0 0
        %385 = vperm.xlu0 %384, %v367
        %v386 = vpop.permute.xlu0 %385
        %v388 = vmul.f32 %v362, %v371
        %v389 = vmul.f32 %v361, %v376
        %v390 = vmul.f32 %v360, %v381
        %v391 = vmul.f32 %v359, %v386
        %v392 = vpack.c.bf16 %v389, %v388
        %v393 = vpack.c.bf16 %v391, %v390
        %v394 = vld [vmem:[#allocation2] sm:$0xf]
        %v395 = vld [vmem:[#allocation2 + $0x4] sm:$0xf]
        %v396 = vld [vmem:[#allocation2 + $0x8] sm:$0xf]
        %v397 = vld [vmem:[#allocation2 + $0xc] sm:$0xf]
        %v398 = vld [vmem:[#allocation2 + $0x10] sm:$0xf]
        %v399 = vld [vmem:[#allocation2 + $0x14] sm:$0xf]
        %v400 = vld [vmem:[#allocation2 + $0x18] sm:$0xf]
        %v401 = vld [vmem:[#allocation2 + $0x1c] sm:$0xf]
        %v402 = vpack.c.bf16 %v349, %v348
        %v403 = vpack.c.bf16 %v351, %v350
        %s404 = scalar_lea.vmem [#allocation2], 32
        %v405 = vld [vmem:[%s404] sm:$0xf]
        %v406 = vld [vmem:[%s404 + $0x4] sm:$0xf]
        %v407 = vld [vmem:[%s404 + $0x8] sm:$0xf]
        %v408 = vld [vmem:[%s404 + $0xc] sm:$0xf]
        %v409 = vld [vmem:[%s404 + $0x10] sm:$0xf]
        %v410 = vld [vmem:[%s404 + $0x14] sm:$0xf]
        %v411 = vld [vmem:[%s404 + $0x18] sm:$0xf]
        %v412 = vld [vmem:[%s404 + $0x1c] sm:$0xf]
        %v421 = vunpack.c.l.b16 %v405
        %v422 = vunpack.c.l.b16 %v406
        %v423 = vunpack.c.l.b16 %v407
        %v424 = vunpack.c.l.b16 %v408
        %v425 = vunpack.c.l.b16 %v409
        %v426 = vunpack.c.l.b16 %v410
        %v427 = vunpack.c.l.b16 %v411
        %v428 = vunpack.c.l.b16 %v412
        %v429 = vpack.c.b16 %v422, %v421
        %v430 = vpack.c.b16 %v424, %v423
        %v431 = vpack.c.b16 %v426, %v425
        %v432 = vpack.c.b16 %v428, %v427
        %vm437 = vcmask 523264
        %v439 = vsel %vm437, %v402, 0
        %v442 = vsel %vm437, %v403, 0
        %444 = vmatprep.subr.bf16.mxu0 0
        %445 = vmatpush1.bf16.msra.mxu0 0
        %446 = vmatprep.subr.bf16.mxu0 0
        %447 = vmatpush1.bf16.msra.mxu0 0
        %448 = vmatprep.subr.bf16.mxu0 0
        %449 = vmatpush1.bf16.msra.mxu0 0
        %450 = vmatprep.subr.bf16.mxu0 0
        %451 = vmatpush1.bf16.msra.mxu0 0
        %452 = vmatprep.subr.bf16.mxu0 0
        %453 = vmatpush1.bf16.msra.mxu0 %v432
        %454 = vmatprep.subr.bf16.mxu0 0
        %455 = vmatpush1.bf16.msra.mxu0 %v431
        %456 = vmatprep.subr.bf16.mxu0 0
        %457 = vmatpush1.bf16.msra.mxu0 %v430
        %458 = vmatprep.subr.bf16.mxu0 0
        %459 = vmatpush1.bf16.msra.mxu0 %v429
        %460 = vmatprep.subr.bf16.mxu0 0
        %461 = vmatpush2.bf16.msra.mxu0 0
        %462 = vmatprep.subr.bf16.mxu0 0
        %463 = vmatpush2.bf16.msra.mxu0 0
        %464 = vmatprep.subr.bf16.mxu0 0
        %465 = vmatpush2.bf16.msra.mxu0 0
        %466 = vmatprep.subr.bf16.mxu0 0
        %467 = vmatpush2.bf16.msra.mxu0 0
        %468 = vmatprep.subr.bf16.mxu0 0
        %469 = vmatpush2.bf16.msra.mxu0 0
        %470 = vmatprep.subr.bf16.mxu0 0
        %471 = vmatpush2.bf16.msra.mxu0 0
        %472 = vmatprep.subr.bf16.mxu0 0
        %473 = vmatpush2.bf16.msra.mxu0 0
        %474 = vmatprep.subr.bf16.mxu0 0
        %475 = vmatpush2.bf16.msra.mxu0 0
        %476 = vmatprep.mubr.bf16.mxu0 0
        %477 = vmatmul.mubr.bf16.gmra.mxu0 %v439
        %v478 = vpop.f32.mrf.mxu0
        %v479 = vadd.f32 0.0, %v478
        %v480 = vpop.f32.mrf.mxu0
        %v481 = vpop.f32.mrf.mxu0
        %v482 = vadd.f32 0.0, %v481
        %v483 = vpop.f32.mrf.mxu0
        %484 = vmatprep.mubr.bf16.mxu0 0
        %485 = vmatmul.mubr.bf16.gmra.mxu0 %v442
        %v486 = vpop.f32.mrf.mxu0
        %v487 = vadd.f32 0.0, %v486
        %v488 = vpop.f32.mrf.mxu0
        %v489 = vpop.f32.mrf.mxu0
        %v490 = vadd.f32 0.0, %v489
        %v491 = vpop.f32.mrf.mxu0
        %492 = vdwg.mxu0
        %v501 = vunpack.c.l.b16 %v394
        %v502 = vunpack.c.l.b16 %v395
        %v503 = vunpack.c.l.b16 %v396
        %v504 = vunpack.c.l.b16 %v397
        %v505 = vunpack.c.l.b16 %v398
        %v506 = vunpack.c.l.b16 %v399
        %v507 = vunpack.c.l.b16 %v400
        %v508 = vunpack.c.l.b16 %v401
        %v509 = vpack.c.b16 %v502, %v501
        %v510 = vpack.c.b16 %v504, %v503
        %v511 = vpack.c.b16 %v506, %v505
        %v512 = vpack.c.b16 %v508, %v507
        %v518 = vsel %vm437, %v392, 0
        %v521 = vsel %vm437, %v393, 0
        %523 = vmatprep.subr.bf16.mxu0 0
        %524 = vmatpush1.bf16.msra.mxu0 0
        %525 = vmatprep.subr.bf16.mxu0 0
        %526 = vmatpush1.bf16.msra.mxu0 0
        %527 = vmatprep.subr.bf16.mxu0 0
        %528 = vmatpush1.bf16.msra.mxu0 0
        %529 = vmatprep.subr.bf16.mxu0 0
        %530 = vmatpush1.bf16.msra.mxu0 0
        %531 = vmatprep.subr.bf16.mxu0 0
        %532 = vmatpush1.bf16.msra.mxu0 %v512
        %533 = vmatprep.subr.bf16.mxu0 0
        %534 = vmatpush1.bf16.msra.mxu0 %v511
        %535 = vmatprep.subr.bf16.mxu0 0
        %536 = vmatpush1.bf16.msra.mxu0 %v510
        %537 = vmatprep.subr.bf16.mxu0 0
        %538 = vmatpush1.bf16.msra.mxu0 %v509
        %539 = vmatprep.subr.bf16.mxu0 0
        %540 = vmatpush2.bf16.msra.mxu0 0
        %541 = vmatprep.subr.bf16.mxu0 0
        %542 = vmatpush2.bf16.msra.mxu0 0
        %543 = vmatprep.subr.bf16.mxu0 0
        %544 = vmatpush2.bf16.msra.mxu0 0
        %545 = vmatprep.subr.bf16.mxu0 0
        %546 = vmatpush2.bf16.msra.mxu0 0
        %547 = vmatprep.subr.bf16.mxu0 0
        %548 = vmatpush2.bf16.msra.mxu0 0
        %549 = vmatprep.subr.bf16.mxu0 0
        %550 = vmatpush2.bf16.msra.mxu0 0
        %551 = vmatprep.subr.bf16.mxu0 0
        %552 = vmatpush2.bf16.msra.mxu0 0
        %553 = vmatprep.subr.bf16.mxu0 0
        %554 = vmatpush2.bf16.msra.mxu0 0
        %555 = vmatprep.mubr.bf16.mxu0 0
        %556 = vmatmul.mubr.bf16.gmra.mxu0 %v518
        %v557 = vpop.f32.mrf.mxu0
        %v558 = vadd.f32 %v479, %v557
        %v559 = vpop.f32.mrf.mxu0
        %v560 = vpop.f32.mrf.mxu0
        %v561 = vadd.f32 %v482, %v560
        %v562 = vpop.f32.mrf.mxu0
        %563 = vmatprep.mubr.bf16.mxu0 0
        %564 = vmatmul.mubr.bf16.gmra.mxu0 %v521
        %v565 = vpop.f32.mrf.mxu0
        %v566 = vadd.f32 %v487, %v565
        %v567 = vpop.f32.mrf.mxu0
        %v568 = vpop.f32.mrf.mxu0
        %v569 = vadd.f32 %v490, %v568
        %v570 = vpop.f32.mrf.mxu0
        %571 = vdwg.mxu0
        %v572 = vrot.slane %v348, 1
        %v573 = vrot.slane %v349, 1
        %v574 = vrot.slane %v350, 1
        %v575 = vrot.slane %v351, 1
        %vm576 = vcmp.lt.s32.totalorder %v357, 7
        %v577 = vsel %vm576, %v574, %v575
        %v578 = vsel %vm576, %v573, %v574
        %v579 = vsel %vm576, %v572, %v573
        %v580 = vsel %vm576, %v575, %v572
        %s581 = scalar_lea.vmem %s4, 96
        %v582 = vld [vmem:[%s581] sm:$0xff]
        %v583 = vld [vmem:[%s581 + $0x8] sm:$0xff]
        %v584 = vld [vmem:[%s581 + $0x10] sm:$0xff]
        %v585 = vld [vmem:[%s581 + $0x18] sm:$0xff]
        %587 = vset.pattern.permute.xlu0 0
        %588 = vperm.xlu0 %587, %v582
        %v589 = vpop.permute.xlu0 %588
        %592 = vset.pattern.permute.xlu0 0
        %593 = vperm.xlu0 %592, %v583
        %v594 = vpop.permute.xlu0 %593
        %597 = vset.pattern.permute.xlu0 0
        %598 = vperm.xlu0 %597, %v584
        %v599 = vpop.permute.xlu0 %598
        %602 = vset.pattern.permute.xlu0 0
        %603 = vperm.xlu0 %602, %v585
        %v604 = vpop.permute.xlu0 %603
        %v606 = vmul.f32 %v579, %v589
        %v607 = vmul.f32 %v578, %v594
        %v608 = vmul.f32 %v577, %v599
        %v609 = vmul.f32 %v580, %v604
        %v610 = vpack.c.bf16 %v607, %v606
        %v611 = vpack.c.bf16 %v609, %v608
        %s612 = scalar_lea.vmem [#allocation2], 64
        %v613 = vld [vmem:[%s612] sm:$0xf]
        %v614 = vld [vmem:[%s612 + $0x4] sm:$0xf]
        %v615 = vld [vmem:[%s612 + $0x8] sm:$0xf]
        %v616 = vld [vmem:[%s612 + $0xc] sm:$0xf]
        %v617 = vld [vmem:[%s612 + $0x10] sm:$0xf]
        %v618 = vld [vmem:[%s612 + $0x14] sm:$0xf]
        %v619 = vld [vmem:[%s612 + $0x18] sm:$0xf]
        %v620 = vld [vmem:[%s612 + $0x1c] sm:$0xf]
        %v629 = vunpack.c.l.b16 %v613
        %v630 = vunpack.c.l.b16 %v614
        %v631 = vunpack.c.l.b16 %v615
        %v632 = vunpack.c.l.b16 %v616
        %v633 = vunpack.c.l.b16 %v617
        %v634 = vunpack.c.l.b16 %v618
        %v635 = vunpack.c.l.b16 %v619
        %v636 = vunpack.c.l.b16 %v620
        %v637 = vpack.c.b16 %v630, %v629
        %v638 = vpack.c.b16 %v632, %v631
        %v639 = vpack.c.b16 %v634, %v633
        %v640 = vpack.c.b16 %v636, %v635
        %v646 = vsel %vm437, %v610, 0
        %v649 = vsel %vm437, %v611, 0
        %651 = vmatprep.subr.bf16.mxu0 0
        %652 = vmatpush1.bf16.msra.mxu0 0
        %653 = vmatprep.subr.bf16.mxu0 0
        %654 = vmatpush1.bf16.msra.mxu0 0
        %655 = vmatprep.subr.bf16.mxu0 0
        %656 = vmatpush1.bf16.msra.mxu0 0
        %657 = vmatprep.subr.bf16.mxu0 0
        %658 = vmatpush1.bf16.msra.mxu0 0
        %659 = vmatprep.subr.bf16.mxu0 0
        %660 = vmatpush1.bf16.msra.mxu0 %v640
        %661 = vmatprep.subr.bf16.mxu0 0
        %662 = vmatpush1.bf16.msra.mxu0 %v639
        %663 = vmatprep.subr.bf16.mxu0 0
        %664 = vmatpush1.bf16.msra.mxu0 %v638
        %665 = vmatprep.subr.bf16.mxu0 0
        %666 = vmatpush1.bf16.msra.mxu0 %v637
        %667 = vmatprep.subr.bf16.mxu0 0
        %668 = vmatpush2.bf16.msra.mxu0 0
        %669 = vmatprep.subr.bf16.mxu0 0
        %670 = vmatpush2.bf16.msra.mxu0 0
        %671 = vmatprep.subr.bf16.mxu0 0
        %672 = vmatpush2.bf16.msra.mxu0 0
        %673 = vmatprep.subr.bf16.mxu0 0
        %674 = vmatpush2.bf16.msra.mxu0 0
        %675 = vmatprep.subr.bf16.mxu0 0
        %676 = vmatpush2.bf16.msra.mxu0 0
        %677 = vmatprep.subr.bf16.mxu0 0
        %678 = vmatpush2.bf16.msra.mxu0 0
        %679 = vmatprep.subr.bf16.mxu0 0
        %680 = vmatpush2.bf16.msra.mxu0 0
        %681 = vmatprep.subr.bf16.mxu0 0
        %682 = vmatpush2.bf16.msra.mxu0 0
        %683 = vmatprep.mubr.bf16.mxu0 0
        %684 = vmatmul.mubr.bf16.gmra.mxu0 %v646
        %v685 = vpop.f32.mrf.mxu0
        %v686 = vadd.f32 0.0, %v685
        %v687 = vpop.f32.mrf.mxu0
        %v688 = vpop.f32.mrf.mxu0
        %v689 = vadd.f32 0.0, %v688
        %v690 = vpop.f32.mrf.mxu0
        %691 = vmatprep.mubr.bf16.mxu0 0
        %692 = vmatmul.mubr.bf16.gmra.mxu0 %v649
        %v693 = vpop.f32.mrf.mxu0
        %v694 = vadd.f32 0.0, %v693
        %v695 = vpop.f32.mrf.mxu0
        %v696 = vpop.f32.mrf.mxu0
        %v697 = vadd.f32 0.0, %v696
        %v698 = vpop.f32.mrf.mxu0
        %699 = vdwg.mxu0
        %v700 = vadd.f32 %v558, %v686
        %v701 = vadd.f32 %v561, %v689
        %v702 = vadd.f32 %v566, %v694
        %v703 = vadd.f32 %v569, %v697
        %v704 = vld [vmem:[%s3 + $0x1] sm:$0x1]
        %v705 = vlaneseq
        %v706 = vshrl.u32 %v705, 7
        %v707 = vsub.s32 0, %v706
        %v708 = vrot.slane %v704, %v707
        %v709 = vadd.f32 %v700, %v708
        %v710 = vadd.f32 %v701, %v708
        %v711 = vadd.f32 %v702, %v708
        %v712 = vadd.f32 %v703, %v708
        %v713 = vmul.f32 %v709, %v709
        %v714 = vmul.f32 %v710, %v710
        %v715 = vmul.f32 %v711, %v711
        %v716 = vmul.f32 %v712, %v712
        %v717 = vmul.f32 %v709, %v713
        %v718 = vmul.f32 %v710, %v714
        %v719 = vmul.f32 %v711, %v715
        %v720 = vmul.f32 %v712, %v716
        %v721 = vmul.f32 %v717, 0.044715
        %v722 = vmul.f32 %v718, 0.044715
        %v723 = vmul.f32 %v719, 0.044715
        %v724 = vmul.f32 %v720, 0.044715
        %v725 = vadd.f32 %v709, %v721
        %v726 = vadd.f32 %v710, %v722
        %v727 = vadd.f32 %v711, %v723
        %v728 = vadd.f32 %v712, %v724
        %v729 = vmul.f32 %v725, 0.7978846
        %v730 = vmul.f32 %v726, 0.7978846
        %v731 = vmul.f32 %v727, 0.7978846
        %v732 = vmul.f32 %v728, 0.7978846
        %v733 = vtanh.pop %v729
        %v734 = vtanh.pop %v730
        %v735 = vtanh.pop %v731
        %v736 = vtanh.pop %v732
        %v737 = vadd.f32 %v733, 1.0
        %v738 = vadd.f32 %v734, 1.0
        %v739 = vadd.f32 %v735, 1.0
        %v740 = vadd.f32 %v736, 1.0
        %v741 = vmul.f32 %v737, 0.5
        %v742 = vmul.f32 %v738, 0.5
        %v743 = vmul.f32 %v739, 0.5
        %v744 = vmul.f32 %v740, 0.5
        %v745 = vmul.f32 %v709, %v741
        %v746 = vmul.f32 %v710, %v742
        %v747 = vmul.f32 %v711, %v743
        %v748 = vmul.f32 %v712, %v744
        %v749 = vrot.slane %v745, 7
        %v750 = vrot.slane %v746, 7
        %v751 = vrot.slane %v747, 7
        %v752 = vrot.slane %v748, 7
        %v753 = vsel %vm358, %v751, %v752
        %v754 = vsel %vm358, %v750, %v751
        %v755 = vsel %vm358, %v749, %v750
        %v756 = vsel %vm358, %v752, %v749
        %v757 = vmul.f32 %v756, %v371
        %v758 = vmul.f32 %v755, %v376
        %v759 = vmul.f32 %v754, %v381
        %v760 = vmul.f32 %v753, %v386
        %v761 = vpack.c.bf16 %v758, %v757
        %v762 = vpack.c.bf16 %v760, %v759
        %s763 = scalar_lea.vmem [#allocation2], 96
        %v764 = vld [vmem:[%s763] sm:$0xf]
        %v765 = vld [vmem:[%s763 + $0x4] sm:$0xf]
        %v766 = vld [vmem:[%s763 + $0x8] sm:$0xf]
        %v767 = vld [vmem:[%s763 + $0xc] sm:$0xf]
        %v768 = vld [vmem:[%s763 + $0x10] sm:$0xf]
        %v769 = vld [vmem:[%s763 + $0x14] sm:$0xf]
        %v770 = vld [vmem:[%s763 + $0x18] sm:$0xf]
        %v771 = vld [vmem:[%s763 + $0x1c] sm:$0xf]
        %v772 = vpack.c.bf16 %v746, %v745
        %v773 = vpack.c.bf16 %v748, %v747
        %s774 = scalar_lea.vmem [#allocation2], 128
        %v775 = vld [vmem:[%s774] sm:$0xf]
        %v776 = vld [vmem:[%s774 + $0x4] sm:$0xf]
        %v777 = vld [vmem:[%s774 + $0x8] sm:$0xf]
        %v778 = vld [vmem:[%s774 + $0xc] sm:$0xf]
        %v779 = vld [vmem:[%s774 + $0x10] sm:$0xf]
        %v780 = vld [vmem:[%s774 + $0x14] sm:$0xf]
        %v781 = vld [vmem:[%s774 + $0x18] sm:$0xf]
        %v782 = vld [vmem:[%s774 + $0x1c] sm:$0xf]
        %v791 = vunpack.c.l.b16 %v775
        %v792 = vunpack.c.l.b16 %v776
        %v793 = vunpack.c.l.b16 %v777
        %v794 = vunpack.c.l.b16 %v778
        %v795 = vunpack.c.l.b16 %v779
        %v796 = vunpack.c.l.b16 %v780
        %v797 = vunpack.c.l.b16 %v781
        %v798 = vunpack.c.l.b16 %v782
        %v799 = vpack.c.b16 %v792, %v791
        %v800 = vpack.c.b16 %v794, %v793
        %v801 = vpack.c.b16 %v796, %v795
        %v802 = vpack.c.b16 %v798, %v797
        %v808 = vsel %vm437, %v772, 0
        %v811 = vsel %vm437, %v773, 0
        %813 = vmatprep.subr.bf16.mxu0 0
        %814 = vmatpush1.bf16.msra.mxu0 0
        %815 = vmatprep.subr.bf16.mxu0 0
        %816 = vmatpush1.bf16.msra.mxu0 0
        %817 = vmatprep.subr.bf16.mxu0 0
        %818 = vmatpush1.bf16.msra.mxu0 0
        %819 = vmatprep.subr.bf16.mxu0 0
        %820 = vmatpush1.bf16.msra.mxu0 0
        %821 = vmatprep.subr.bf16.mxu0 0
        %822 = vmatpush1.bf16.msra.mxu0 %v802
        %823 = vmatprep.subr.bf16.mxu0 0
        %824 = vmatpush1.bf16.msra.mxu0 %v801
        %825 = vmatprep.subr.bf16.mxu0 0
        %826 = vmatpush1.bf16.msra.mxu0 %v800
        %827 = vmatprep.subr.bf16.mxu0 0
        %828 = vmatpush1.bf16.msra.mxu0 %v799
        %829 = vmatprep.subr.bf16.mxu0 0
        %830 = vmatpush2.bf16.msra.mxu0 0
        %831 = vmatprep.subr.bf16.mxu0 0
        %832 = vmatpush2.bf16.msra.mxu0 0
        %833 = vmatprep.subr.bf16.mxu0 0
        %834 = vmatpush2.bf16.msra.mxu0 0
        %835 = vmatprep.subr.bf16.mxu0 0
        %836 = vmatpush2.bf16.msra.mxu0 0
        %837 = vmatprep.subr.bf16.mxu0 0
        %838 = vmatpush2.bf16.msra.mxu0 0
        %839 = vmatprep.subr.bf16.mxu0 0
        %840 = vmatpush2.bf16.msra.mxu0 0
        %841 = vmatprep.subr.bf16.mxu0 0
        %842 = vmatpush2.bf16.msra.mxu0 0
        %843 = vmatprep.subr.bf16.mxu0 0
        %844 = vmatpush2.bf16.msra.mxu0 0
        %845 = vmatprep.mubr.bf16.mxu0 0
        %846 = vmatmul.mubr.bf16.gmra.mxu0 %v808
        %v847 = vpop.f32.mrf.mxu0
        %v848 = vadd.f32 0.0, %v847
        %v849 = vpop.f32.mrf.mxu0
        %v850 = vpop.f32.mrf.mxu0
        %v851 = vadd.f32 0.0, %v850
        %v852 = vpop.f32.mrf.mxu0
        %853 = vmatprep.mubr.bf16.mxu0 0
        %854 = vmatmul.mubr.bf16.gmra.mxu0 %v811
        %v855 = vpop.f32.mrf.mxu0
        %v856 = vadd.f32 0.0, %v855
        %v857 = vpop.f32.mrf.mxu0
        %v858 = vpop.f32.mrf.mxu0
        %v859 = vadd.f32 0.0, %v858
        %v860 = vpop.f32.mrf.mxu0
        %861 = vdwg.mxu0
        %v870 = vunpack.c.l.b16 %v764
        %v871 = vunpack.c.l.b16 %v765
        %v872 = vunpack.c.l.b16 %v766
        %v873 = vunpack.c.l.b16 %v767
        %v874 = vunpack.c.l.b16 %v768
        %v875 = vunpack.c.l.b16 %v769
        %v876 = vunpack.c.l.b16 %v770
        %v877 = vunpack.c.l.b16 %v771
        %v878 = vpack.c.b16 %v871, %v870
        %v879 = vpack.c.b16 %v873, %v872
        %v880 = vpack.c.b16 %v875, %v874
        %v881 = vpack.c.b16 %v877, %v876
        %v887 = vsel %vm437, %v761, 0
        %v890 = vsel %vm437, %v762, 0
        %892 = vmatprep.subr.bf16.mxu0 0
        %893 = vmatpush1.bf16.msra.mxu0 0
        %894 = vmatprep.subr.bf16.mxu0 0
        %895 = vmatpush1.bf16.msra.mxu0 0
        %896 = vmatprep.subr.bf16.mxu0 0
        %897 = vmatpush1.bf16.msra.mxu0 0
        %898 = vmatprep.subr.bf16.mxu0 0
        %899 = vmatpush1.bf16.msra.mxu0 0
        %900 = vmatprep.subr.bf16.mxu0 0
        %901 = vmatpush1.bf16.msra.mxu0 %v881
        %902 = vmatprep.subr.bf16.mxu0 0
        %903 = vmatpush1.bf16.msra.mxu0 %v880
        %904 = vmatprep.subr.bf16.mxu0 0
        %905 = vmatpush1.bf16.msra.mxu0 %v879
        %906 = vmatprep.subr.bf16.mxu0 0
        %907 = vmatpush1.bf16.msra.mxu0 %v878
        %908 = vmatprep.subr.bf16.mxu0 0
        %909 = vmatpush2.bf16.msra.mxu0 0
        %910 = vmatprep.subr.bf16.mxu0 0
        %911 = vmatpush2.bf16.msra.mxu0 0
        %912 = vmatprep.subr.bf16.mxu0 0
        %913 = vmatpush2.bf16.msra.mxu0 0
        %914 = vmatprep.subr.bf16.mxu0 0
        %915 = vmatpush2.bf16.msra.mxu0 0
        %916 = vmatprep.subr.bf16.mxu0 0
        %917 = vmatpush2.bf16.msra.mxu0 0
        %918 = vmatprep.subr.bf16.mxu0 0
        %919 = vmatpush2.bf16.msra.mxu0 0
        %920 = vmatprep.subr.bf16.mxu0 0
        %921 = vmatpush2.bf16.msra.mxu0 0
        %922 = vmatprep.subr.bf16.mxu0 0
        %923 = vmatpush2.bf16.msra.mxu0 0
        %924 = vmatprep.mubr.bf16.mxu0 0
        %925 = vmatmul.mubr.bf16.gmra.mxu0 %v887
        %v926 = vpop.f32.mrf.mxu0
        %v927 = vadd.f32 %v848, %v926
        %v928 = vpop.f32.mrf.mxu0
        %v929 = vpop.f32.mrf.mxu0
        %v930 = vadd.f32 %v851, %v929
        %v931 = vpop.f32.mrf.mxu0
        %932 = vmatprep.mubr.bf16.mxu0 0
        %933 = vmatmul.mubr.bf16.gmra.mxu0 %v890
        %v934 = vpop.f32.mrf.mxu0
        %v935 = vadd.f32 %v856, %v934
        %v936 = vpop.f32.mrf.mxu0
        %v937 = vpop.f32.mrf.mxu0
        %v938 = vadd.f32 %v859, %v937
        %v939 = vpop.f32.mrf.mxu0
        %940 = vdwg.mxu0
        %v941 = vrot.slane %v745, 1
        %v942 = vrot.slane %v746, 1
        %v943 = vrot.slane %v747, 1
        %v944 = vrot.slane %v748, 1
        %v945 = vsel %vm576, %v943, %v944
        %v946 = vsel %vm576, %v942, %v943
        %v947 = vsel %vm576, %v941, %v942
        %v948 = vsel %vm576, %v944, %v941
        %v949 = vmul.f32 %v947, %v589
        %v950 = vmul.f32 %v946, %v594
        %v951 = vmul.f32 %v945, %v599
        %v952 = vmul.f32 %v948, %v604
        %v953 = vpack.c.bf16 %v950, %v949
        %v954 = vpack.c.bf16 %v952, %v951
        %s955 = scalar_lea.vmem [#allocation2], 160
        %v956 = vld [vmem:[%s955] sm:$0xf]
        %v957 = vld [vmem:[%s955 + $0x4] sm:$0xf]
        %v958 = vld [vmem:[%s955 + $0x8] sm:$0xf]
        %v959 = vld [vmem:[%s955 + $0xc] sm:$0xf]
        %v960 = vld [vmem:[%s955 + $0x10] sm:$0xf]
        %v961 = vld [vmem:[%s955 + $0x14] sm:$0xf]
        %v962 = vld [vmem:[%s955 + $0x18] sm:$0xf]
        %v963 = vld [vmem:[%s955 + $0x1c] sm:$0xf]
        %v972 = vunpack.c.l.b16 %v956
        %v973 = vunpack.c.l.b16 %v957
        %v974 = vunpack.c.l.b16 %v958
        %v975 = vunpack.c.l.b16 %v959
        %v976 = vunpack.c.l.b16 %v960
        %v977 = vunpack.c.l.b16 %v961
        %v978 = vunpack.c.l.b16 %v962
        %v979 = vunpack.c.l.b16 %v963
        %v980 = vpack.c.b16 %v973, %v972
        %v981 = vpack.c.b16 %v975, %v974
        %v982 = vpack.c.b16 %v977, %v976
        %v983 = vpack.c.b16 %v979, %v978
        %v989 = vsel %vm437, %v953, 0
        %v992 = vsel %vm437, %v954, 0
        %994 = vmatprep.subr.bf16.mxu0 0
        %995 = vmatpush1.bf16.msra.mxu0 0
        %996 = vmatprep.subr.bf16.mxu0 0
        %997 = vmatpush1.bf16.msra.mxu0 0
        %998 = vmatprep.subr.bf16.mxu0 0
        %999 = vmatpush1.bf16.msra.mxu0 0
        %1000 = vmatprep.subr.bf16.mxu0 0
        %1001 = vmatpush1.bf16.msra.mxu0 0
        %1002 = vmatprep.subr.bf16.mxu0 0
        %1003 = vmatpush1.bf16.msra.mxu0 %v983
        %1004 = vmatprep.subr.bf16.mxu0 0
        %1005 = vmatpush1.bf16.msra.mxu0 %v982
        %1006 = vmatprep.subr.bf16.mxu0 0
        %1007 = vmatpush1.bf16.msra.mxu0 %v981
        %1008 = vmatprep.subr.bf16.mxu0 0
        %1009 = vmatpush1.bf16.msra.mxu0 %v980
        %1010 = vmatprep.subr.bf16.mxu0 0
        %1011 = vmatpush2.bf16.msra.mxu0 0
        %1012 = vmatprep.subr.bf16.mxu0 0
        %1013 = vmatpush2.bf16.msra.mxu0 0
        %1014 = vmatprep.subr.bf16.mxu0 0
        %1015 = vmatpush2.bf16.msra.mxu0 0
        %1016 = vmatprep.subr.bf16.mxu0 0
        %1017 = vmatpush2.bf16.msra.mxu0 0
        %1018 = vmatprep.subr.bf16.mxu0 0
        %1019 = vmatpush2.bf16.msra.mxu0 0
        %1020 = vmatprep.subr.bf16.mxu0 0
        %1021 = vmatpush2.bf16.msra.mxu0 0
        %1022 = vmatprep.subr.bf16.mxu0 0
        %1023 = vmatpush2.bf16.msra.mxu0 0
        %1024 = vmatprep.subr.bf16.mxu0 0
        %1025 = vmatpush2.bf16.msra.mxu0 0
        %1026 = vmatprep.mubr.bf16.mxu0 0
        %1027 = vmatmul.mubr.bf16.gmra.mxu0 %v989
        %v1028 = vpop.f32.mrf.mxu0
        %v1029 = vadd.f32 0.0, %v1028
        %v1030 = vpop.f32.mrf.mxu0
        %v1031 = vpop.f32.mrf.mxu0
        %v1032 = vadd.f32 0.0, %v1031
        %v1033 = vpop.f32.mrf.mxu0
        %1034 = vmatprep.mubr.bf16.mxu0 0
        %1035 = vmatmul.mubr.bf16.gmra.mxu0 %v992
        %v1036 = vpop.f32.mrf.mxu0
        %v1037 = vadd.f32 0.0, %v1036
        %v1038 = vpop.f32.mrf.mxu0
        %v1039 = vpop.f32.mrf.mxu0
        %v1040 = vadd.f32 0.0, %v1039
        %v1041 = vpop.f32.mrf.mxu0
        %1042 = vdwg.mxu0
        %v1043 = vadd.f32 %v927, %v1029
        %v1044 = vadd.f32 %v930, %v1032
        %v1045 = vadd.f32 %v935, %v1037
        %v1046 = vadd.f32 %v938, %v1040
        %v1047 = vld [vmem:[%s3 + $0x2] sm:$0x1]
        %v1048 = vlaneseq
        %v1049 = vshrl.u32 %v1048, 7
        %v1050 = vsub.s32 0, %v1049
        %v1051 = vrot.slane %v1047, %v1050
        %v1052 = vadd.f32 %v1043, %v1051
        %v1053 = vadd.f32 %v1044, %v1051
        %v1054 = vadd.f32 %v1045, %v1051
        %v1055 = vadd.f32 %v1046, %v1051
        %v1056 = vadd.f32 %v1052, %v302
        %v1057 = vadd.f32 %v1053, %v305
        %v1058 = vadd.f32 %v1054, %v310
        %v1059 = vadd.f32 %v1055, %v313
        %v1060 = vmul.f32 %v1056, %v1056
        %v1061 = vmul.f32 %v1057, %v1057
        %v1062 = vmul.f32 %v1058, %v1058
        %v1063 = vmul.f32 %v1059, %v1059
        %v1064 = vmul.f32 %v1056, %v1060
        %v1065 = vmul.f32 %v1057, %v1061
        %v1066 = vmul.f32 %v1058, %v1062
        %v1067 = vmul.f32 %v1059, %v1063
        %v1068 = vmul.f32 %v1064, 0.044715
        %v1069 = vmul.f32 %v1065, 0.044715
        %v1070 = vmul.f32 %v1066, 0.044715
        %v1071 = vmul.f32 %v1067, 0.044715
        %v1072 = vadd.f32 %v1056, %v1068
        %v1073 = vadd.f32 %v1057, %v1069
        %v1074 = vadd.f32 %v1058, %v1070
        %v1075 = vadd.f32 %v1059, %v1071
        %v1076 = vmul.f32 %v1072, 0.7978846
        %v1077 = vmul.f32 %v1073, 0.7978846
        %v1078 = vmul.f32 %v1074, 0.7978846
        %v1079 = vmul.f32 %v1075, 0.7978846
        %v1080 = vtanh.pop %v1076
        %v1081 = vtanh.pop %v1077
        %v1082 = vtanh.pop %v1078
        %v1083 = vtanh.pop %v1079
        %v1084 = vadd.f32 %v1080, 1.0
        %v1085 = vadd.f32 %v1081, 1.0
        %v1086 = vadd.f32 %v1082, 1.0
        %v1087 = vadd.f32 %v1083, 1.0
        %v1088 = vmul.f32 %v1084, 0.5
        %v1089 = vmul.f32 %v1085, 0.5
        %v1090 = vmul.f32 %v1086, 0.5
        %v1091 = vmul.f32 %v1087, 0.5
        %v1092 = vmul.f32 %v1056, %v1088
        %v1093 = vmul.f32 %v1057, %v1089
        %v1094 = vmul.f32 %v1058, %v1090
        %v1095 = vmul.f32 %v1059, %v1091
        %v1096 = vrot.slane %v1092, 6
        %v1097 = vrot.slane %v1093, 6
        %v1098 = vrot.slane %v1094, 6
        %v1099 = vrot.slane %v1095, 6
        %vm1100 = vcmp.lt.s32.totalorder %v357, 2
        %v1101 = vsel %vm1100, %v1098, %v1099
        %v1102 = vsel %vm1100, %v1097, %v1098
        %v1103 = vsel %vm1100, %v1096, %v1097
        %v1104 = vsel %vm1100, %v1099, %v1096
        %s1105 = scalar_lea.vmem %s4, 32
        %v1106 = vld [vmem:[%s1105] sm:$0xff]
        %v1107 = vld [vmem:[%s1105 + $0x8] sm:$0xff]
        %v1108 = vld [vmem:[%s1105 + $0x10] sm:$0xff]
        %v1109 = vld [vmem:[%s1105 + $0x18] sm:$0xff]
        %1111 = vset.pattern.permute.xlu0 0
        %1112 = vperm.xlu0 %1111, %v1106
        %v1113 = vpop.permute.xlu0 %1112
        %1116 = vset.pattern.permute.xlu0 0
        %1117 = vperm.xlu0 %1116, %v1107
        %v1118 = vpop.permute.xlu0 %1117
        %1121 = vset.pattern.permute.xlu0 0
        %1122 = vperm.xlu0 %1121, %v1108
        %v1123 = vpop.permute.xlu0 %1122
        %1126 = vset.pattern.permute.xlu0 0
        %1127 = vperm.xlu0 %1126, %v1109
        %v1128 = vpop.permute.xlu0 %1127
        %v1130 = vmul.f32 %v1104, %v1113
        %v1131 = vmul.f32 %v1103, %v1118
        %v1132 = vmul.f32 %v1102, %v1123
        %v1133 = vmul.f32 %v1101, %v1128
        %v1134 = vpack.c.bf16 %v1131, %v1130
        %v1135 = vpack.c.bf16 %v1133, %v1132
        %s1136 = scalar_lea.vmem [#allocation2], 192
        %v1137 = vld [vmem:[%s1136] sm:$0xf]
        %v1138 = vld [vmem:[%s1136 + $0x4] sm:$0xf]
        %v1139 = vld [vmem:[%s1136 + $0x8] sm:$0xf]
        %v1140 = vld [vmem:[%s1136 + $0xc] sm:$0xf]
        %v1141 = vld [vmem:[%s1136 + $0x10] sm:$0xf]
        %v1142 = vld [vmem:[%s1136 + $0x14] sm:$0xf]
        %v1143 = vld [vmem:[%s1136 + $0x18] sm:$0xf]
        %v1144 = vld [vmem:[%s1136 + $0x1c] sm:$0xf]
        %v1145 = vpack.c.bf16 %v1093, %v1092
        %v1146 = vpack.c.bf16 %v1095, %v1094
        %s1147 = scalar_lea.vmem [#allocation2], 224
        %v1148 = vld [vmem:[%s1147] sm:$0xf]
        %v1149 = vld [vmem:[%s1147 + $0x4] sm:$0xf]
        %v1150 = vld [vmem:[%s1147 + $0x8] sm:$0xf]
        %v1151 = vld [vmem:[%s1147 + $0xc] sm:$0xf]
        %v1152 = vld [vmem:[%s1147 + $0x10] sm:$0xf]
        %v1153 = vld [vmem:[%s1147 + $0x14] sm:$0xf]
        %v1154 = vld [vmem:[%s1147 + $0x18] sm:$0xf]
        %v1155 = vld [vmem:[%s1147 + $0x1c] sm:$0xf]
        %v1164 = vunpack.c.l.b16 %v1148
        %v1165 = vunpack.c.l.b16 %v1149
        %v1166 = vunpack.c.l.b16 %v1150
        %v1167 = vunpack.c.l.b16 %v1151
        %v1168 = vunpack.c.l.b16 %v1152
        %v1169 = vunpack.c.l.b16 %v1153
        %v1170 = vunpack.c.l.b16 %v1154
        %v1171 = vunpack.c.l.b16 %v1155
        %v1172 = vpack.c.b16 %v1165, %v1164
        %v1173 = vpack.c.b16 %v1167, %v1166
        %v1174 = vpack.c.b16 %v1169, %v1168
        %v1175 = vpack.c.b16 %v1171, %v1170
        %v1181 = vsel %vm437, %v1145, 0
        %v1184 = vsel %vm437, %v1146, 0
        %1186 = vmatprep.subr.bf16.mxu0 0
        %1187 = vmatpush1.bf16.msra.mxu0 0
        %1188 = vmatprep.subr.bf16.mxu0 0
        %1189 = vmatpush1.bf16.msra.mxu0 0
        %1190 = vmatprep.subr.bf16.mxu0 0
        %1191 = vmatpush1.bf16.msra.mxu0 0
        %1192 = vmatprep.subr.bf16.mxu0 0
        %1193 = vmatpush1.bf16.msra.mxu0 0
        %1194 = vmatprep.subr.bf16.mxu0 0
        %1195 = vmatpush1.bf16.msra.mxu0 %v1175
        %1196 = vmatprep.subr.bf16.mxu0 0
        %1197 = vmatpush1.bf16.msra.mxu0 %v1174
        %1198 = vmatprep.subr.bf16.mxu0 0
        %1199 = vmatpush1.bf16.msra.mxu0 %v1173
        %1200 = vmatprep.subr.bf16.mxu0 0
        %1201 = vmatpush1.bf16.msra.mxu0 %v1172
        %1202 = vmatprep.subr.bf16.mxu0 0
        %1203 = vmatpush2.bf16.msra.mxu0 0
        %1204 = vmatprep.subr.bf16.mxu0 0
        %1205 = vmatpush2.bf16.msra.mxu0 0
        %1206 = vmatprep.subr.bf16.mxu0 0
        %1207 = vmatpush2.bf16.msra.mxu0 0
        %1208 = vmatprep.subr.bf16.mxu0 0
        %1209 = vmatpush2.bf16.msra.mxu0 0
        %1210 = vmatprep.subr.bf16.mxu0 0
        %1211 = vmatpush2.bf16.msra.mxu0 0
        %1212 = vmatprep.subr.bf16.mxu0 0
        %1213 = vmatpush2.bf16.msra.mxu0 0
        %1214 = vmatprep.subr.bf16.mxu0 0
        %1215 = vmatpush2.bf16.msra.mxu0 0
        %1216 = vmatprep.subr.bf16.mxu0 0
        %1217 = vmatpush2.bf16.msra.mxu0 0
        %1218 = vmatprep.mubr.bf16.mxu0 0
        %1219 = vmatmul.mubr.bf16.gmra.mxu0 %v1181
        %v1220 = vpop.f32.mrf.mxu0
        %v1221 = vadd.f32 0.0, %v1220
        %v1222 = vpop.f32.mrf.mxu0
        %v1223 = vpop.f32.mrf.mxu0
        %v1224 = vadd.f32 0.0, %v1223
        %v1225 = vpop.f32.mrf.mxu0
        %1226 = vmatprep.mubr.bf16.mxu0 0
        %1227 = vmatmul.mubr.bf16.gmra.mxu0 %v1184
        %v1228 = vpop.f32.mrf.mxu0
        %v1229 = vadd.f32 0.0, %v1228
        %v1230 = vpop.f32.mrf.mxu0
        %v1231 = vpop.f32.mrf.mxu0
        %v1232 = vadd.f32 0.0, %v1231
        %v1233 = vpop.f32.mrf.mxu0
        %1234 = vdwg.mxu0
        %v1243 = vunpack.c.l.b16 %v1137
        %v1244 = vunpack.c.l.b16 %v1138
        %v1245 = vunpack.c.l.b16 %v1139
        %v1246 = vunpack.c.l.b16 %v1140
        %v1247 = vunpack.c.l.b16 %v1141
        %v1248 = vunpack.c.l.b16 %v1142
        %v1249 = vunpack.c.l.b16 %v1143
        %v1250 = vunpack.c.l.b16 %v1144
        %v1251 = vpack.c.b16 %v1244, %v1243
        %v1252 = vpack.c.b16 %v1246, %v1245
        %v1253 = vpack.c.b16 %v1248, %v1247
        %v1254 = vpack.c.b16 %v1250, %v1249
        %v1260 = vsel %vm437, %v1134, 0
        %v1263 = vsel %vm437, %v1135, 0
        %1265 = vmatprep.subr.bf16.mxu0 0
        %1266 = vmatpush1.bf16.msra.mxu0 0
        %1267 = vmatprep.subr.bf16.mxu0 0
        %1268 = vmatpush1.bf16.msra.mxu0 0
        %1269 = vmatprep.subr.bf16.mxu0 0
        %1270 = vmatpush1.bf16.msra.mxu0 0
        %1271 = vmatprep.subr.bf16.mxu0 0
        %1272 = vmatpush1.bf16.msra.mxu0 0
        %1273 = vmatprep.subr.bf16.mxu0 0
        %1274 = vmatpush1.bf16.msra.mxu0 %v1254
        %1275 = vmatprep.subr.bf16.mxu0 0
        %1276 = vmatpush1.bf16.msra.mxu0 %v1253
        %1277 = vmatprep.subr.bf16.mxu0 0
        %1278 = vmatpush1.bf16.msra.mxu0 %v1252
        %1279 = vmatprep.subr.bf16.mxu0 0
        %1280 = vmatpush1.bf16.msra.mxu0 %v1251
        %1281 = vmatprep.subr.bf16.mxu0 0
        %1282 = vmatpush2.bf16.msra.mxu0 0
        %1283 = vmatprep.subr.bf16.mxu0 0
        %1284 = vmatpush2.bf16.msra.mxu0 0
        %1285 = vmatprep.subr.bf16.mxu0 0
        %1286 = vmatpush2.bf16.msra.mxu0 0
        %1287 = vmatprep.subr.bf16.mxu0 0
        %1288 = vmatpush2.bf16.msra.mxu0 0
        %1289 = vmatprep.subr.bf16.mxu0 0
        %1290 = vmatpush2.bf16.msra.mxu0 0
        %1291 = vmatprep.subr.bf16.mxu0 0
        %1292 = vmatpush2.bf16.msra.mxu0 0
        %1293 = vmatprep.subr.bf16.mxu0 0
        %1294 = vmatpush2.bf16.msra.mxu0 0
        %1295 = vmatprep.subr.bf16.mxu0 0
        %1296 = vmatpush2.bf16.msra.mxu0 0
        %1297 = vmatprep.mubr.bf16.mxu0 0
        %1298 = vmatmul.mubr.bf16.gmra.mxu0 %v1260
        %v1299 = vpop.f32.mrf.mxu0
        %v1300 = vadd.f32 %v1221, %v1299
        %v1301 = vpop.f32.mrf.mxu0
        %v1302 = vpop.f32.mrf.mxu0
        %v1303 = vadd.f32 %v1224, %v1302
        %v1304 = vpop.f32.mrf.mxu0
        %1305 = vmatprep.mubr.bf16.mxu0 0
        %1306 = vmatmul.mubr.bf16.gmra.mxu0 %v1263
        %v1307 = vpop.f32.mrf.mxu0
        %v1308 = vadd.f32 %v1229, %v1307
        %v1309 = vpop.f32.mrf.mxu0
        %v1310 = vpop.f32.mrf.mxu0
        %v1311 = vadd.f32 %v1232, %v1310
        %v1312 = vpop.f32.mrf.mxu0
        %1313 = vdwg.mxu0
        %v1314 = vrot.slane %v1092, 2
        %v1315 = vrot.slane %v1093, 2
        %v1316 = vrot.slane %v1094, 2
        %v1317 = vrot.slane %v1095, 2
        %vm1318 = vcmp.lt.s32.totalorder %v357, 6
        %v1319 = vsel %vm1318, %v1316, %v1317
        %v1320 = vsel %vm1318, %v1315, %v1316
        %v1321 = vsel %vm1318, %v1314, %v1315
        %v1322 = vsel %vm1318, %v1317, %v1314
        %s1323 = scalar_lea.vmem %s4, 128
        %v1324 = vld [vmem:[%s1323] sm:$0xff]
        %v1325 = vld [vmem:[%s1323 + $0x8] sm:$0xff]
        %v1326 = vld [vmem:[%s1323 + $0x10] sm:$0xff]
        %v1327 = vld [vmem:[%s1323 + $0x18] sm:$0xff]
        %1329 = vset.pattern.permute.xlu0 0
        %1330 = vperm.xlu0 %1329, %v1324
        %v1331 = vpop.permute.xlu0 %1330
        %1334 = vset.pattern.permute.xlu0 0
        %1335 = vperm.xlu0 %1334, %v1325
        %v1336 = vpop.permute.xlu0 %1335
        %1339 = vset.pattern.permute.xlu0 0
        %1340 = vperm.xlu0 %1339, %v1326
        %v1341 = vpop.permute.xlu0 %1340
        %1344 = vset.pattern.permute.xlu0 0
        %1345 = vperm.xlu0 %1344, %v1327
        %v1346 = vpop.permute.xlu0 %1345
        %v1348 = vmul.f32 %v1321, %v1331
        %v1349 = vmul.f32 %v1320, %v1336
        %v1350 = vmul.f32 %v1319, %v1341
        %v1351 = vmul.f32 %v1322, %v1346
        %v1352 = vpack.c.bf16 %v1349, %v1348
        %v1353 = vpack.c.bf16 %v1351, %v1350
        %s1354 = scalar_lea.vmem [#allocation2], 256
        %v1355 = vld [vmem:[%s1354] sm:$0xf]
        %v1356 = vld [vmem:[%s1354 + $0x4] sm:$0xf]
        %v1357 = vld [vmem:[%s1354 + $0x8] sm:$0xf]
        %v1358 = vld [vmem:[%s1354 + $0xc] sm:$0xf]
        %v1359 = vld [vmem:[%s1354 + $0x10] sm:$0xf]
        %v1360 = vld [vmem:[%s1354 + $0x14] sm:$0xf]
        %v1361 = vld [vmem:[%s1354 + $0x18] sm:$0xf]
        %v1362 = vld [vmem:[%s1354 + $0x1c] sm:$0xf]
        %v1371 = vunpack.c.l.b16 %v1355
        %v1372 = vunpack.c.l.b16 %v1356
        %v1373 = vunpack.c.l.b16 %v1357
        %v1374 = vunpack.c.l.b16 %v1358
        %v1375 = vunpack.c.l.b16 %v1359
        %v1376 = vunpack.c.l.b16 %v1360
        %v1377 = vunpack.c.l.b16 %v1361
        %v1378 = vunpack.c.l.b16 %v1362
        %v1379 = vpack.c.b16 %v1372, %v1371
        %v1380 = vpack.c.b16 %v1374, %v1373
        %v1381 = vpack.c.b16 %v1376, %v1375
        %v1382 = vpack.c.b16 %v1378, %v1377
        %v1388 = vsel %vm437, %v1352, 0
        %v1391 = vsel %vm437, %v1353, 0
        %1393 = vmatprep.subr.bf16.mxu0 0
        %1394 = vmatpush1.bf16.msra.mxu0 0
        %1395 = vmatprep.subr.bf16.mxu0 0
        %1396 = vmatpush1.bf16.msra.mxu0 0
        %1397 = vmatprep.subr.bf16.mxu0 0
        %1398 = vmatpush1.bf16.msra.mxu0 0
        %1399 = vmatprep.subr.bf16.mxu0 0
        %1400 = vmatpush1.bf16.msra.mxu0 0
        %1401 = vmatprep.subr.bf16.mxu0 0
        %1402 = vmatpush1.bf16.msra.mxu0 %v1382
        %1403 = vmatprep.subr.bf16.mxu0 0
        %1404 = vmatpush1.bf16.msra.mxu0 %v1381
        %1405 = vmatprep.subr.bf16.mxu0 0
        %1406 = vmatpush1.bf16.msra.mxu0 %v1380
        %1407 = vmatprep.subr.bf16.mxu0 0
        %1408 = vmatpush1.bf16.msra.mxu0 %v1379
        %1409 = vmatprep.subr.bf16.mxu0 0
        %1410 = vmatpush2.bf16.msra.mxu0 0
        %1411 = vmatprep.subr.bf16.mxu0 0
        %1412 = vmatpush2.bf16.msra.mxu0 0
        %1413 = vmatprep.subr.bf16.mxu0 0
        %1414 = vmatpush2.bf16.msra.mxu0 0
        %1415 = vmatprep.subr.bf16.mxu0 0
        %1416 = vmatpush2.bf16.msra.mxu0 0
        %1417 = vmatprep.subr.bf16.mxu0 0
        %1418 = vmatpush2.bf16.msra.mxu0 0
        %1419 = vmatprep.subr.bf16.mxu0 0
        %1420 = vmatpush2.bf16.msra.mxu0 0
        %1421 = vmatprep.subr.bf16.mxu0 0
        %1422 = vmatpush2.bf16.msra.mxu0 0
        %1423 = vmatprep.subr.bf16.mxu0 0
        %1424 = vmatpush2.bf16.msra.mxu0 0
        %1425 = vmatprep.mubr.bf16.mxu0 0
        %1426 = vmatmul.mubr.bf16.gmra.mxu0 %v1388
        %v1427 = vpop.f32.mrf.mxu0
        %v1428 = vadd.f32 0.0, %v1427
        %v1429 = vpop.f32.mrf.mxu0
        %v1430 = vpop.f32.mrf.mxu0
        %v1431 = vadd.f32 0.0, %v1430
        %v1432 = vpop.f32.mrf.mxu0
        %1433 = vmatprep.mubr.bf16.mxu0 0
        %1434 = vmatmul.mubr.bf16.gmra.mxu0 %v1391
        %v1435 = vpop.f32.mrf.mxu0
        %v1436 = vadd.f32 0.0, %v1435
        %v1437 = vpop.f32.mrf.mxu0
        %v1438 = vpop.f32.mrf.mxu0
        %v1439 = vadd.f32 0.0, %v1438
        %v1440 = vpop.f32.mrf.mxu0
        %1441 = vdwg.mxu0
        %v1442 = vadd.f32 %v1300, %v1428
        %v1443 = vadd.f32 %v1303, %v1431
        %v1444 = vadd.f32 %v1308, %v1436
        %v1445 = vadd.f32 %v1311, %v1439
        %v1446 = vld [vmem:[%s3 + $0x3] sm:$0x1]
        %v1447 = vlaneseq
        %v1448 = vshrl.u32 %v1447, 7
        %v1449 = vsub.s32 0, %v1448
        %v1450 = vrot.slane %v1446, %v1449
        %v1451 = vadd.f32 %v1442, %v1450
        %v1452 = vadd.f32 %v1443, %v1450
        %v1453 = vadd.f32 %v1444, %v1450
        %v1454 = vadd.f32 %v1445, %v1450
        %v1455 = vmul.f32 %v1451, %v1451
        %v1456 = vmul.f32 %v1452, %v1452
        %v1457 = vmul.f32 %v1453, %v1453
        %v1458 = vmul.f32 %v1454, %v1454
        %v1459 = vmul.f32 %v1451, %v1455
        %v1460 = vmul.f32 %v1452, %v1456
        %v1461 = vmul.f32 %v1453, %v1457
        %v1462 = vmul.f32 %v1454, %v1458
        %v1463 = vmul.f32 %v1459, 0.044715
        %v1464 = vmul.f32 %v1460, 0.044715
        %v1465 = vmul.f32 %v1461, 0.044715
        %v1466 = vmul.f32 %v1462, 0.044715
        %v1467 = vadd.f32 %v1451, %v1463
        %v1468 = vadd.f32 %v1452, %v1464
        %v1469 = vadd.f32 %v1453, %v1465
        %v1470 = vadd.f32 %v1454, %v1466
        %v1471 = vmul.f32 %v1467, 0.7978846
        %v1472 = vmul.f32 %v1468, 0.7978846
        %v1473 = vmul.f32 %v1469, 0.7978846
        %v1474 = vmul.f32 %v1470, 0.7978846
        %v1475 = vtanh.pop %v1471
        %v1476 = vtanh.pop %v1472
        %v1477 = vtanh.pop %v1473
        %v1478 = vtanh.pop %v1474
        %v1479 = vadd.f32 %v1475, 1.0
        %v1480 = vadd.f32 %v1476, 1.0
        %v1481 = vadd.f32 %v1477, 1.0
        %v1482 = vadd.f32 %v1478, 1.0
        %v1483 = vmul.f32 %v1479, 0.5
        %v1484 = vmul.f32 %v1480, 0.5
        %v1485 = vmul.f32 %v1481, 0.5
        %v1486 = vmul.f32 %v1482, 0.5
        %v1487 = vmul.f32 %v1451, %v1483
        %v1488 = vmul.f32 %v1452, %v1484
        %v1489 = vmul.f32 %v1453, %v1485
        %v1490 = vmul.f32 %v1454, %v1486
        %v1491 = vrot.slane %v1487, 6
        %v1492 = vrot.slane %v1488, 6
        %v1493 = vrot.slane %v1489, 6
        %v1494 = vrot.slane %v1490, 6
        %v1495 = vsel %vm1100, %v1493, %v1494
        %v1496 = vsel %vm1100, %v1492, %v1493
        %v1497 = vsel %vm1100, %v1491, %v1492
        %v1498 = vsel %vm1100, %v1494, %v1491
        %v1499 = vmul.f32 %v1498, %v1113
        %v1500 = vmul.f32 %v1497, %v1118
        %v1501 = vmul.f32 %v1496, %v1123
        %v1502 = vmul.f32 %v1495, %v1128
        %v1503 = vpack.c.bf16 %v1500, %v1499
        %v1504 = vpack.c.bf16 %v1502, %v1501
        %s1505 = scalar_lea.vmem [#allocation2], 288
        %v1506 = vld [vmem:[%s1505] sm:$0xf]
        %v1507 = vld [vmem:[%s1505 + $0x4] sm:$0xf]
        %v1508 = vld [vmem:[%s1505 + $0x8] sm:$0xf]
        %v1509 = vld [vmem:[%s1505 + $0xc] sm:$0xf]
        %v1510 = vld [vmem:[%s1505 + $0x10] sm:$0xf]
        %v1511 = vld [vmem:[%s1505 + $0x14] sm:$0xf]
        %v1512 = vld [vmem:[%s1505 + $0x18] sm:$0xf]
        %v1513 = vld [vmem:[%s1505 + $0x1c] sm:$0xf]
        %v1514 = vpack.c.bf16 %v1488, %v1487
        %v1515 = vpack.c.bf16 %v1490, %v1489
        %s1516 = scalar_lea.vmem [#allocation2], 320
        %v1517 = vld [vmem:[%s1516] sm:$0xf]
        %v1518 = vld [vmem:[%s1516 + $0x4] sm:$0xf]
        %v1519 = vld [vmem:[%s1516 + $0x8] sm:$0xf]
        %v1520 = vld [vmem:[%s1516 + $0xc] sm:$0xf]
        %v1521 = vld [vmem:[%s1516 + $0x10] sm:$0xf]
        %v1522 = vld [vmem:[%s1516 + $0x14] sm:$0xf]
        %v1523 = vld [vmem:[%s1516 + $0x18] sm:$0xf]
        %v1524 = vld [vmem:[%s1516 + $0x1c] sm:$0xf]
        %v1533 = vunpack.c.l.b16 %v1517
        %v1534 = vunpack.c.l.b16 %v1518
        %v1535 = vunpack.c.l.b16 %v1519
        %v1536 = vunpack.c.l.b16 %v1520
        %v1537 = vunpack.c.l.b16 %v1521
        %v1538 = vunpack.c.l.b16 %v1522
        %v1539 = vunpack.c.l.b16 %v1523
        %v1540 = vunpack.c.l.b16 %v1524
        %v1541 = vpack.c.b16 %v1534, %v1533
        %v1542 = vpack.c.b16 %v1536, %v1535
        %v1543 = vpack.c.b16 %v1538, %v1537
        %v1544 = vpack.c.b16 %v1540, %v1539
        %v1550 = vsel %vm437, %v1514, 0
        %v1553 = vsel %vm437, %v1515, 0
        %1555 = vmatprep.subr.bf16.mxu0 0
        %1556 = vmatpush1.bf16.msra.mxu0 0
        %1557 = vmatprep.subr.bf16.mxu0 0
        %1558 = vmatpush1.bf16.msra.mxu0 0
        %1559 = vmatprep.subr.bf16.mxu0 0
        %1560 = vmatpush1.bf16.msra.mxu0 0
        %1561 = vmatprep.subr.bf16.mxu0 0
        %1562 = vmatpush1.bf16.msra.mxu0 0
        %1563 = vmatprep.subr.bf16.mxu0 0
        %1564 = vmatpush1.bf16.msra.mxu0 %v1544
        %1565 = vmatprep.subr.bf16.mxu0 0
        %1566 = vmatpush1.bf16.msra.mxu0 %v1543
        %1567 = vmatprep.subr.bf16.mxu0 0
        %1568 = vmatpush1.bf16.msra.mxu0 %v1542
        %1569 = vmatprep.subr.bf16.mxu0 0
        %1570 = vmatpush1.bf16.msra.mxu0 %v1541
        %1571 = vmatprep.subr.bf16.mxu0 0
        %1572 = vmatpush2.bf16.msra.mxu0 0
        %1573 = vmatprep.subr.bf16.mxu0 0
        %1574 = vmatpush2.bf16.msra.mxu0 0
        %1575 = vmatprep.subr.bf16.mxu0 0
        %1576 = vmatpush2.bf16.msra.mxu0 0
        %1577 = vmatprep.subr.bf16.mxu0 0
        %1578 = vmatpush2.bf16.msra.mxu0 0
        %1579 = vmatprep.subr.bf16.mxu0 0
        %1580 = vmatpush2.bf16.msra.mxu0 0
        %1581 = vmatprep.subr.bf16.mxu0 0
        %1582 = vmatpush2.bf16.msra.mxu0 0
        %1583 = vmatprep.subr.bf16.mxu0 0
        %1584 = vmatpush2.bf16.msra.mxu0 0
        %1585 = vmatprep.subr.bf16.mxu0 0
        %1586 = vmatpush2.bf16.msra.mxu0 0
        %1587 = vmatprep.mubr.bf16.mxu0 0
        %1588 = vmatmul.mubr.bf16.gmra.mxu0 %v1550
        %v1589 = vpop.f32.mrf.mxu0
        %v1590 = vadd.f32 0.0, %v1589
        %v1591 = vpop.f32.mrf.mxu0
        %v1592 = vpop.f32.mrf.mxu0
        %v1593 = vadd.f32 0.0, %v1592
        %v1594 = vpop.f32.mrf.mxu0
        %1595 = vmatprep.mubr.bf16.mxu0 0
        %1596 = vmatmul.mubr.bf16.gmra.mxu0 %v1553
        %v1597 = vpop.f32.mrf.mxu0
        %v1598 = vadd.f32 0.0, %v1597
        %v1599 = vpop.f32.mrf.mxu0
        %v1600 = vpop.f32.mrf.mxu0
        %v1601 = vadd.f32 0.0, %v1600
        %v1602 = vpop.f32.mrf.mxu0
        %1603 = vdwg.mxu0
        %v1612 = vunpack.c.l.b16 %v1506
        %v1613 = vunpack.c.l.b16 %v1507
        %v1614 = vunpack.c.l.b16 %v1508
        %v1615 = vunpack.c.l.b16 %v1509
        %v1616 = vunpack.c.l.b16 %v1510
        %v1617 = vunpack.c.l.b16 %v1511
        %v1618 = vunpack.c.l.b16 %v1512
        %v1619 = vunpack.c.l.b16 %v1513
        %v1620 = vpack.c.b16 %v1613, %v1612
        %v1621 = vpack.c.b16 %v1615, %v1614
        %v1622 = vpack.c.b16 %v1617, %v1616
        %v1623 = vpack.c.b16 %v1619, %v1618
        %v1629 = vsel %vm437, %v1503, 0
        %v1632 = vsel %vm437, %v1504, 0
        %1634 = vmatprep.subr.bf16.mxu0 0
        %1635 = vmatpush1.bf16.msra.mxu0 0
        %1636 = vmatprep.subr.bf16.mxu0 0
        %1637 = vmatpush1.bf16.msra.mxu0 0
        %1638 = vmatprep.subr.bf16.mxu0 0
        %1639 = vmatpush1.bf16.msra.mxu0 0
        %1640 = vmatprep.subr.bf16.mxu0 0
        %1641 = vmatpush1.bf16.msra.mxu0 0
        %1642 = vmatprep.subr.bf16.mxu0 0
        %1643 = vmatpush1.bf16.msra.mxu0 %v1623
        %1644 = vmatprep.subr.bf16.mxu0 0
        %1645 = vmatpush1.bf16.msra.mxu0 %v1622
        %1646 = vmatprep.subr.bf16.mxu0 0
        %1647 = vmatpush1.bf16.msra.mxu0 %v1621
        %1648 = vmatprep.subr.bf16.mxu0 0
        %1649 = vmatpush1.bf16.msra.mxu0 %v1620
        %1650 = vmatprep.subr.bf16.mxu0 0
        %1651 = vmatpush2.bf16.msra.mxu0 0
        %1652 = vmatprep.subr.bf16.mxu0 0
        %1653 = vmatpush2.bf16.msra.mxu0 0
        %1654 = vmatprep.subr.bf16.mxu0 0
        %1655 = vmatpush2.bf16.msra.mxu0 0
        %1656 = vmatprep.subr.bf16.mxu0 0
        %1657 = vmatpush2.bf16.msra.mxu0 0
        %1658 = vmatprep.subr.bf16.mxu0 0
        %1659 = vmatpush2.bf16.msra.mxu0 0
        %1660 = vmatprep.subr.bf16.mxu0 0
        %1661 = vmatpush2.bf16.msra.mxu0 0
        %1662 = vmatprep.subr.bf16.mxu0 0
        %1663 = vmatpush2.bf16.msra.mxu0 0
        %1664 = vmatprep.subr.bf16.mxu0 0
        %1665 = vmatpush2.bf16.msra.mxu0 0
        %1666 = vmatprep.mubr.bf16.mxu0 0
        %1667 = vmatmul.mubr.bf16.gmra.mxu0 %v1629
        %v1668 = vpop.f32.mrf.mxu0
        %v1669 = vadd.f32 %v1590, %v1668
        %v1670 = vpop.f32.mrf.mxu0
        %v1671 = vpop.f32.mrf.mxu0
        %v1672 = vadd.f32 %v1593, %v1671
        %v1673 = vpop.f32.mrf.mxu0
        %1674 = vmatprep.mubr.bf16.mxu0 0
        %1675 = vmatmul.mubr.bf16.gmra.mxu0 %v1632
        %v1676 = vpop.f32.mrf.mxu0
        %v1677 = vadd.f32 %v1598, %v1676
        %v1678 = vpop.f32.mrf.mxu0
        %v1679 = vpop.f32.mrf.mxu0
        %v1680 = vadd.f32 %v1601, %v1679
        %v1681 = vpop.f32.mrf.mxu0
        %1682 = vdwg.mxu0
        %v1683 = vrot.slane %v1487, 2
        %v1684 = vrot.slane %v1488, 2
        %v1685 = vrot.slane %v1489, 2
        %v1686 = vrot.slane %v1490, 2
        %v1687 = vsel %vm1318, %v1685, %v1686
        %v1688 = vsel %vm1318, %v1684, %v1685
        %v1689 = vsel %vm1318, %v1683, %v1684
        %v1690 = vsel %vm1318, %v1686, %v1683
        %v1691 = vmul.f32 %v1689, %v1331
        %v1692 = vmul.f32 %v1688, %v1336
        %v1693 = vmul.f32 %v1687, %v1341
        %v1694 = vmul.f32 %v1690, %v1346
        %v1695 = vpack.c.bf16 %v1692, %v1691
        %v1696 = vpack.c.bf16 %v1694, %v1693
        %s1697 = scalar_lea.vmem [#allocation2], 352
        %v1698 = vld [vmem:[%s1697] sm:$0xf]
        %v1699 = vld [vmem:[%s1697 + $0x4] sm:$0xf]
        %v1700 = vld [vmem:[%s1697 + $0x8] sm:$0xf]
        %v1701 = vld [vmem:[%s1697 + $0xc] sm:$0xf]
        %v1702 = vld [vmem:[%s1697 + $0x10] sm:$0xf]
        %v1703 = vld [vmem:[%s1697 + $0x14] sm:$0xf]
        %v1704 = vld [vmem:[%s1697 + $0x18] sm:$0xf]
        %v1705 = vld [vmem:[%s1697 + $0x1c] sm:$0xf]
        %v1714 = vunpack.c.l.b16 %v1698
        %v1715 = vunpack.c.l.b16 %v1699
        %v1716 = vunpack.c.l.b16 %v1700
        %v1717 = vunpack.c.l.b16 %v1701
        %v1718 = vunpack.c.l.b16 %v1702
        %v1719 = vunpack.c.l.b16 %v1703
        %v1720 = vunpack.c.l.b16 %v1704
        %v1721 = vunpack.c.l.b16 %v1705
        %v1722 = vpack.c.b16 %v1715, %v1714
        %v1723 = vpack.c.b16 %v1717, %v1716
        %v1724 = vpack.c.b16 %v1719, %v1718
        %v1725 = vpack.c.b16 %v1721, %v1720
        %v1731 = vsel %vm437, %v1695, 0
        %v1734 = vsel %vm437, %v1696, 0
        %1736 = vmatprep.subr.bf16.mxu0 0
        %1737 = vmatpush1.bf16.msra.mxu0 0
        %1738 = vmatprep.subr.bf16.mxu0 0
        %1739 = vmatpush1.bf16.msra.mxu0 0
        %1740 = vmatprep.subr.bf16.mxu0 0
        %1741 = vmatpush1.bf16.msra.mxu0 0
        %1742 = vmatprep.subr.bf16.mxu0 0
        %1743 = vmatpush1.bf16.msra.mxu0 0
        %1744 = vmatprep.subr.bf16.mxu0 0
        %1745 = vmatpush1.bf16.msra.mxu0 %v1725
        %1746 = vmatprep.subr.bf16.mxu0 0
        %1747 = vmatpush1.bf16.msra.mxu0 %v1724
        %1748 = vmatprep.subr.bf16.mxu0 0
        %1749 = vmatpush1.bf16.msra.mxu0 %v1723
        %1750 = vmatprep.subr.bf16.mxu0 0
        %1751 = vmatpush1.bf16.msra.mxu0 %v1722
        %1752 = vmatprep.subr.bf16.mxu0 0
        %1753 = vmatpush2.bf16.msra.mxu0 0
        %1754 = vmatprep.subr.bf16.mxu0 0
        %1755 = vmatpush2.bf16.msra.mxu0 0
        %1756 = vmatprep.subr.bf16.mxu0 0
        %1757 = vmatpush2.bf16.msra.mxu0 0
        %1758 = vmatprep.subr.bf16.mxu0 0
        %1759 = vmatpush2.bf16.msra.mxu0 0
        %1760 = vmatprep.subr.bf16.mxu0 0
        %1761 = vmatpush2.bf16.msra.mxu0 0
        %1762 = vmatprep.subr.bf16.mxu0 0
        %1763 = vmatpush2.bf16.msra.mxu0 0
        %1764 = vmatprep.subr.bf16.mxu0 0
        %1765 = vmatpush2.bf16.msra.mxu0 0
        %1766 = vmatprep.subr.bf16.mxu0 0
        %1767 = vmatpush2.bf16.msra.mxu0 0
        %1768 = vmatprep.mubr.bf16.mxu0 0
        %1769 = vmatmul.mubr.bf16.gmra.mxu0 %v1731
        %v1770 = vpop.f32.mrf.mxu0
        %v1771 = vadd.f32 0.0, %v1770
        %v1772 = vpop.f32.mrf.mxu0
        %v1773 = vpop.f32.mrf.mxu0
        %v1774 = vadd.f32 0.0, %v1773
        %v1775 = vpop.f32.mrf.mxu0
        %1776 = vmatprep.mubr.bf16.mxu0 0
        %1777 = vmatmul.mubr.bf16.gmra.mxu0 %v1734
        %v1778 = vpop.f32.mrf.mxu0
        %v1779 = vadd.f32 0.0, %v1778
        %v1780 = vpop.f32.mrf.mxu0
        %v1781 = vpop.f32.mrf.mxu0
        %v1782 = vadd.f32 0.0, %v1781
        %v1783 = vpop.f32.mrf.mxu0
        %1784 = vdwg.mxu0
        %v1785 = vadd.f32 %v1669, %v1771
        %v1786 = vadd.f32 %v1672, %v1774
        %v1787 = vadd.f32 %v1677, %v1779
        %v1788 = vadd.f32 %v1680, %v1782
        %v1789 = vld [vmem:[%s3 + $0x4] sm:$0x1]
        %v1790 = vlaneseq
        %v1791 = vshrl.u32 %v1790, 7
        %v1792 = vsub.s32 0, %v1791
        %v1793 = vrot.slane %v1789, %v1792
        %v1794 = vadd.f32 %v1785, %v1793
        %v1795 = vadd.f32 %v1786, %v1793
        %v1796 = vadd.f32 %v1787, %v1793
        %v1797 = vadd.f32 %v1788, %v1793
        %v1798 = vadd.f32 %v1794, %v1056
        %v1799 = vadd.f32 %v1795, %v1057
        %v1800 = vadd.f32 %v1796, %v1058
        %v1801 = vadd.f32 %v1797, %v1059
        %v1802 = vpack.c.bf16 %v1799, %v1798
        %v1803 = vpack.c.bf16 %v1801, %v1800
        %s1804 = scalar_lea.vmem [#allocation2], 576
        %v1805 = vld [vmem:[%s1804] sm:$0xf]
        %v1806 = vld [vmem:[%s1804 + $0x4] sm:$0xf]
        %v1807 = vld [vmem:[%s1804 + $0x8] sm:$0xf]
        %v1808 = vld [vmem:[%s1804 + $0xc] sm:$0xf]
        %v1809 = vld [vmem:[%s1804 + $0x10] sm:$0xf]
        %v1810 = vld [vmem:[%s1804 + $0x14] sm:$0xf]
        %v1811 = vld [vmem:[%s1804 + $0x18] sm:$0xf]
        %v1812 = vld [vmem:[%s1804 + $0x1c] sm:$0xf]
        %v1813 = vld [vmem:[%s3 + $0x7] sm:$0x1]
        %v1814 = vlaneseq
        %v1815 = vshrl.u32 %v1814, 7
        %v1816 = vsub.s32 0, %v1815
        %v1817 = vrot.slane %v1813, %v1816
        %v1826 = vunpack.c.l.b16 %v1805
        %v1827 = vunpack.c.l.b16 %v1806
        %v1828 = vunpack.c.l.b16 %v1807
        %v1829 = vunpack.c.l.b16 %v1808
        %v1830 = vunpack.c.l.b16 %v1809
        %v1831 = vunpack.c.l.b16 %v1810
        %v1832 = vunpack.c.l.b16 %v1811
        %v1833 = vunpack.c.l.b16 %v1812
        %v1834 = vpack.c.b16 %v1827, %v1826
        %v1835 = vpack.c.b16 %v1829, %v1828
        %v1836 = vpack.c.b16 %v1831, %v1830
        %v1837 = vpack.c.b16 %v1833, %v1832
        %v1843 = vsel %vm437, %v1802, 0
        %v1846 = vsel %vm437, %v1803, 0
        %1848 = vmatprep.subr.bf16.mxu0 0
        %1849 = vmatpush1.bf16.msra.mxu0 0
        %1850 = vmatprep.subr.bf16.mxu0 0
        %1851 = vmatpush1.bf16.msra.mxu0 0
        %1852 = vmatprep.subr.bf16.mxu0 0
        %1853 = vmatpush1.bf16.msra.mxu0 0
        %1854 = vmatprep.subr.bf16.mxu0 0
        %1855 = vmatpush1.bf16.msra.mxu0 0
        %1856 = vmatprep.subr.bf16.mxu0 0
        %1857 = vmatpush1.bf16.msra.mxu0 %v1837
        %1858 = vmatprep.subr.bf16.mxu0 0
        %1859 = vmatpush1.bf16.msra.mxu0 %v1836
        %1860 = vmatprep.subr.bf16.mxu0 0
        %1861 = vmatpush1.bf16.msra.mxu0 %v1835
        %1862 = vmatprep.subr.bf16.mxu0 0
        %1863 = vmatpush1.bf16.msra.mxu0 %v1834
        %1864 = vmatprep.subr.bf16.mxu0 0
        %1865 = vmatpush2.bf16.msra.mxu0 0
        %1866 = vmatprep.subr.bf16.mxu0 0
        %1867 = vmatpush2.bf16.msra.mxu0 0
        %1868 = vmatprep.subr.bf16.mxu0 0
        %1869 = vmatpush2.bf16.msra.mxu0 0
        %1870 = vmatprep.subr.bf16.mxu0 0
        %1871 = vmatpush2.bf16.msra.mxu0 0
        %1872 = vmatprep.subr.bf16.mxu0 0
        %1873 = vmatpush2.bf16.msra.mxu0 0
        %1874 = vmatprep.subr.bf16.mxu0 0
        %1875 = vmatpush2.bf16.msra.mxu0 0
        %1876 = vmatprep.subr.bf16.mxu0 0
        %1877 = vmatpush2.bf16.msra.mxu0 0
        %1878 = vmatprep.subr.bf16.mxu0 0
        %1879 = vmatpush2.bf16.msra.mxu0 0
        %1880 = vmatprep.mubr.bf16.mxu0 0
        %1881 = vmatmul.mubr.bf16.gmra.mxu0 %v1843
        %v1882 = vpop.f32.mrf.mxu0
        %v1883 = vadd.f32 %v1817, %v1882
        %v1884 = vpop.f32.mrf.mxu0
        %v1885 = vpop.f32.mrf.mxu0
        %v1886 = vadd.f32 %v1817, %v1885
        %v1887 = vpop.f32.mrf.mxu0
        %1888 = vmatprep.mubr.bf16.mxu0 0
        %1889 = vmatmul.mubr.bf16.gmra.mxu0 %v1846
        %v1890 = vpop.f32.mrf.mxu0
        %v1891 = vadd.f32 %v1817, %v1890
        %v1892 = vpop.f32.mrf.mxu0
        %v1893 = vpop.f32.mrf.mxu0
        %v1894 = vadd.f32 %v1817, %v1893
        %v1895 = vpop.f32.mrf.mxu0
        %1896 = vdwg.mxu0
        %v1897 = vmul.f32 %v1798, %v1798
        %v1898 = vmul.f32 %v1799, %v1799
        %v1899 = vmul.f32 %v1800, %v1800
        %v1900 = vmul.f32 %v1801, %v1801
        %v1901 = vmul.f32 %v1798, %v1897
        %v1902 = vmul.f32 %v1799, %v1898
        %v1903 = vmul.f32 %v1800, %v1899
        %v1904 = vmul.f32 %v1801, %v1900
        %v1905 = vmul.f32 %v1901, 0.044715
        %v1906 = vmul.f32 %v1902, 0.044715
        %v1907 = vmul.f32 %v1903, 0.044715
        %v1908 = vmul.f32 %v1904, 0.044715
        %v1909 = vadd.f32 %v1798, %v1905
        %v1910 = vadd.f32 %v1799, %v1906
        %v1911 = vadd.f32 %v1800, %v1907
        %v1912 = vadd.f32 %v1801, %v1908
        %v1913 = vmul.f32 %v1909, 0.7978846
        %v1914 = vmul.f32 %v1910, 0.7978846
        %v1915 = vmul.f32 %v1911, 0.7978846
        %v1916 = vmul.f32 %v1912, 0.7978846
        %v1917 = vtanh.pop %v1913
        %v1918 = vtanh.pop %v1914
        %v1919 = vtanh.pop %v1915
        %v1920 = vtanh.pop %v1916
        %v1921 = vadd.f32 %v1917, 1.0
        %v1922 = vadd.f32 %v1918, 1.0
        %v1923 = vadd.f32 %v1919, 1.0
        %v1924 = vadd.f32 %v1920, 1.0
        %v1925 = vmul.f32 %v1921, 0.5
        %v1926 = vmul.f32 %v1922, 0.5
        %v1927 = vmul.f32 %v1923, 0.5
        %v1928 = vmul.f32 %v1924, 0.5
        %v1929 = vmul.f32 %v1798, %v1925
        %v1930 = vmul.f32 %v1799, %v1926
        %v1931 = vmul.f32 %v1800, %v1927
        %v1932 = vmul.f32 %v1801, %v1928
        %v1933 = vrot.slane %v1929, 4
        %v1934 = vrot.slane %v1930, 4
        %v1935 = vrot.slane %v1931, 4
        %v1936 = vrot.slane %v1932, 4
        %vm1937 = vcmp.lt.s32.totalorder %v357, 4
        %v1938 = vsel %vm1937, %v1935, %v1936
        %v1939 = vsel %vm1937, %v1934, %v1935
        %v1940 = vsel %vm1937, %v1933, %v1934
        %v1941 = vsel %vm1937, %v1936, %v1933
        %v1942 = vld [vmem:[%s4] sm:$0xff]
        %v1943 = vld [vmem:[%s4 + $0x8] sm:$0xff]
        %v1944 = vld [vmem:[%s4 + $0x10] sm:$0xff]
        %v1945 = vld [vmem:[%s4 + $0x18] sm:$0xff]
        %1947 = vset.pattern.permute.xlu0 0
        %1948 = vperm.xlu0 %1947, %v1942
        %v1949 = vpop.permute.xlu0 %1948
        %1952 = vset.pattern.permute.xlu0 0
        %1953 = vperm.xlu0 %1952, %v1943
        %v1954 = vpop.permute.xlu0 %1953
        %1957 = vset.pattern.permute.xlu0 0
        %1958 = vperm.xlu0 %1957, %v1944
        %v1959 = vpop.permute.xlu0 %1958
        %1962 = vset.pattern.permute.xlu0 0
        %1963 = vperm.xlu0 %1962, %v1945
        %v1964 = vpop.permute.xlu0 %1963
        %v1966 = vmul.f32 %v1941, %v1949
        %v1967 = vmul.f32 %v1940, %v1954
        %v1968 = vmul.f32 %v1939, %v1959
        %v1969 = vmul.f32 %v1938, %v1964
        %v1970 = vpack.c.bf16 %v1967, %v1966
        %v1971 = vpack.c.bf16 %v1969, %v1968
        %s1972 = scalar_lea.vmem [#allocation2], 384
        %v1973 = vld [vmem:[%s1972] sm:$0xf]
        %v1974 = vld [vmem:[%s1972 + $0x4] sm:$0xf]
        %v1975 = vld [vmem:[%s1972 + $0x8] sm:$0xf]
        %v1976 = vld [vmem:[%s1972 + $0xc] sm:$0xf]
        %v1977 = vld [vmem:[%s1972 + $0x10] sm:$0xf]
        %v1978 = vld [vmem:[%s1972 + $0x14] sm:$0xf]
        %v1979 = vld [vmem:[%s1972 + $0x18] sm:$0xf]
        %v1980 = vld [vmem:[%s1972 + $0x1c] sm:$0xf]
        %v1981 = vpack.c.bf16 %v1930, %v1929
        %v1982 = vpack.c.bf16 %v1932, %v1931
        %s1983 = scalar_lea.vmem [#allocation2], 416
        %v1984 = vld [vmem:[%s1983] sm:$0xf]
        %v1985 = vld [vmem:[%s1983 + $0x4] sm:$0xf]
        %v1986 = vld [vmem:[%s1983 + $0x8] sm:$0xf]
        %v1987 = vld [vmem:[%s1983 + $0xc] sm:$0xf]
        %v1988 = vld [vmem:[%s1983 + $0x10] sm:$0xf]
        %v1989 = vld [vmem:[%s1983 + $0x14] sm:$0xf]
        %v1990 = vld [vmem:[%s1983 + $0x18] sm:$0xf]
        %v1991 = vld [vmem:[%s1983 + $0x1c] sm:$0xf]
        %v2000 = vunpack.c.l.b16 %v1984
        %v2001 = vunpack.c.l.b16 %v1985
        %v2002 = vunpack.c.l.b16 %v1986
        %v2003 = vunpack.c.l.b16 %v1987
        %v2004 = vunpack.c.l.b16 %v1988
        %v2005 = vunpack.c.l.b16 %v1989
        %v2006 = vunpack.c.l.b16 %v1990
        %v2007 = vunpack.c.l.b16 %v1991
        %v2008 = vpack.c.b16 %v2001, %v2000
        %v2009 = vpack.c.b16 %v2003, %v2002
        %v2010 = vpack.c.b16 %v2005, %v2004
        %v2011 = vpack.c.b16 %v2007, %v2006
        %v2017 = vsel %vm437, %v1981, 0
        %v2020 = vsel %vm437, %v1982, 0
        %2022 = vmatprep.subr.bf16.mxu0 0
        %2023 = vmatpush1.bf16.msra.mxu0 0
        %2024 = vmatprep.subr.bf16.mxu0 0
        %2025 = vmatpush1.bf16.msra.mxu0 0
        %2026 = vmatprep.subr.bf16.mxu0 0
        %2027 = vmatpush1.bf16.msra.mxu0 0
        %2028 = vmatprep.subr.bf16.mxu0 0
        %2029 = vmatpush1.bf16.msra.mxu0 0
        %2030 = vmatprep.subr.bf16.mxu0 0
        %2031 = vmatpush1.bf16.msra.mxu0 %v2011
        %2032 = vmatprep.subr.bf16.mxu0 0
        %2033 = vmatpush1.bf16.msra.mxu0 %v2010
        %2034 = vmatprep.subr.bf16.mxu0 0
        %2035 = vmatpush1.bf16.msra.mxu0 %v2009
        %2036 = vmatprep.subr.bf16.mxu0 0
        %2037 = vmatpush1.bf16.msra.mxu0 %v2008
        %2038 = vmatprep.subr.bf16.mxu0 0
        %2039 = vmatpush2.bf16.msra.mxu0 0
        %2040 = vmatprep.subr.bf16.mxu0 0
        %2041 = vmatpush2.bf16.msra.mxu0 0
        %2042 = vmatprep.subr.bf16.mxu0 0
        %2043 = vmatpush2.bf16.msra.mxu0 0
        %2044 = vmatprep.subr.bf16.mxu0 0
        %2045 = vmatpush2.bf16.msra.mxu0 0
        %2046 = vmatprep.subr.bf16.mxu0 0
        %2047 = vmatpush2.bf16.msra.mxu0 0
        %2048 = vmatprep.subr.bf16.mxu0 0
        %2049 = vmatpush2.bf16.msra.mxu0 0
        %2050 = vmatprep.subr.bf16.mxu0 0
        %2051 = vmatpush2.bf16.msra.mxu0 0
        %2052 = vmatprep.subr.bf16.mxu0 0
        %2053 = vmatpush2.bf16.msra.mxu0 0
        %2054 = vmatprep.mubr.bf16.mxu0 0
        %2055 = vmatmul.mubr.bf16.gmra.mxu0 %v2017
        %v2056 = vpop.f32.mrf.mxu0
        %v2057 = vadd.f32 0.0, %v2056
        %v2058 = vpop.f32.mrf.mxu0
        %v2059 = vpop.f32.mrf.mxu0
        %v2060 = vadd.f32 0.0, %v2059
        %v2061 = vpop.f32.mrf.mxu0
        %2062 = vmatprep.mubr.bf16.mxu0 0
        %2063 = vmatmul.mubr.bf16.gmra.mxu0 %v2020
        %v2064 = vpop.f32.mrf.mxu0
        %v2065 = vadd.f32 0.0, %v2064
        %v2066 = vpop.f32.mrf.mxu0
        %v2067 = vpop.f32.mrf.mxu0
        %v2068 = vadd.f32 0.0, %v2067
        %v2069 = vpop.f32.mrf.mxu0
        %2070 = vdwg.mxu0
        %v2079 = vunpack.c.l.b16 %v1973
        %v2080 = vunpack.c.l.b16 %v1974
        %v2081 = vunpack.c.l.b16 %v1975
        %v2082 = vunpack.c.l.b16 %v1976
        %v2083 = vunpack.c.l.b16 %v1977
        %v2084 = vunpack.c.l.b16 %v1978
        %v2085 = vunpack.c.l.b16 %v1979
        %v2086 = vunpack.c.l.b16 %v1980
        %v2087 = vpack.c.b16 %v2080, %v2079
        %v2088 = vpack.c.b16 %v2082, %v2081
        %v2089 = vpack.c.b16 %v2084, %v2083
        %v2090 = vpack.c.b16 %v2086, %v2085
        %v2096 = vsel %vm437, %v1970, 0
        %v2099 = vsel %vm437, %v1971, 0
        %2101 = vmatprep.subr.bf16.mxu0 0
        %2102 = vmatpush1.bf16.msra.mxu0 0
        %2103 = vmatprep.subr.bf16.mxu0 0
        %2104 = vmatpush1.bf16.msra.mxu0 0
        %2105 = vmatprep.subr.bf16.mxu0 0
        %2106 = vmatpush1.bf16.msra.mxu0 0
        %2107 = vmatprep.subr.bf16.mxu0 0
        %2108 = vmatpush1.bf16.msra.mxu0 0
        %2109 = vmatprep.subr.bf16.mxu0 0
        %2110 = vmatpush1.bf16.msra.mxu0 %v2090
        %2111 = vmatprep.subr.bf16.mxu0 0
        %2112 = vmatpush1.bf16.msra.mxu0 %v2089
        %2113 = vmatprep.subr.bf16.mxu0 0
        %2114 = vmatpush1.bf16.msra.mxu0 %v2088
        %2115 = vmatprep.subr.bf16.mxu0 0
        %2116 = vmatpush1.bf16.msra.mxu0 %v2087
        %2117 = vmatprep.subr.bf16.mxu0 0
        %2118 = vmatpush2.bf16.msra.mxu0 0
        %2119 = vmatprep.subr.bf16.mxu0 0
        %2120 = vmatpush2.bf16.msra.mxu0 0
        %2121 = vmatprep.subr.bf16.mxu0 0
        %2122 = vmatpush2.bf16.msra.mxu0 0
        %2123 = vmatprep.subr.bf16.mxu0 0
        %2124 = vmatpush2.bf16.msra.mxu0 0
        %2125 = vmatprep.subr.bf16.mxu0 0
        %2126 = vmatpush2.bf16.msra.mxu0 0
        %2127 = vmatprep.subr.bf16.mxu0 0
        %2128 = vmatpush2.bf16.msra.mxu0 0
        %2129 = vmatprep.subr.bf16.mxu0 0
        %2130 = vmatpush2.bf16.msra.mxu0 0
        %2131 = vmatprep.subr.bf16.mxu0 0
        %2132 = vmatpush2.bf16.msra.mxu0 0
        %2133 = vmatprep.mubr.bf16.mxu0 0
        %2134 = vmatmul.mubr.bf16.gmra.mxu0 %v2096
        %v2135 = vpop.f32.mrf.mxu0
        %v2136 = vadd.f32 %v2057, %v2135
        %v2137 = vpop.f32.mrf.mxu0
        %v2138 = vpop.f32.mrf.mxu0
        %v2139 = vadd.f32 %v2060, %v2138
        %v2140 = vpop.f32.mrf.mxu0
        %2141 = vmatprep.mubr.bf16.mxu0 0
        %2142 = vmatmul.mubr.bf16.gmra.mxu0 %v2099
        %v2143 = vpop.f32.mrf.mxu0
        %v2144 = vadd.f32 %v2065, %v2143
        %v2145 = vpop.f32.mrf.mxu0
        %v2146 = vpop.f32.mrf.mxu0
        %v2147 = vadd.f32 %v2068, %v2146
        %v2148 = vpop.f32.mrf.mxu0
        %2149 = vdwg.mxu0
        %s2150 = scalar_lea.vmem %s4, 160
        %v2151 = vld [vmem:[%s2150] sm:$0xff]
        %v2152 = vld [vmem:[%s2150 + $0x8] sm:$0xff]
        %v2153 = vld [vmem:[%s2150 + $0x10] sm:$0xff]
        %v2154 = vld [vmem:[%s2150 + $0x18] sm:$0xff]
        %2156 = vset.pattern.permute.xlu0 0
        %2157 = vperm.xlu0 %2156, %v2151
        %v2158 = vpop.permute.xlu0 %2157
        %2161 = vset.pattern.permute.xlu0 0
        %2162 = vperm.xlu0 %2161, %v2152
        %v2163 = vpop.permute.xlu0 %2162
        %2166 = vset.pattern.permute.xlu0 0
        %2167 = vperm.xlu0 %2166, %v2153
        %v2168 = vpop.permute.xlu0 %2167
        %2171 = vset.pattern.permute.xlu0 0
        %2172 = vperm.xlu0 %2171, %v2154
        %v2173 = vpop.permute.xlu0 %2172
        %v2175 = vmul.f32 %v1940, %v2158
        %v2176 = vmul.f32 %v1939, %v2163
        %v2177 = vmul.f32 %v1938, %v2168
        %v2178 = vmul.f32 %v1941, %v2173
        %v2179 = vpack.c.bf16 %v2176, %v2175
        %v2180 = vpack.c.bf16 %v2178, %v2177
        %s2181 = scalar_lea.vmem [#allocation2], 448
        %v2182 = vld [vmem:[%s2181] sm:$0xf]
        %v2183 = vld [vmem:[%s2181 + $0x4] sm:$0xf]
        %v2184 = vld [vmem:[%s2181 + $0x8] sm:$0xf]
        %v2185 = vld [vmem:[%s2181 + $0xc] sm:$0xf]
        %v2186 = vld [vmem:[%s2181 + $0x10] sm:$0xf]
        %v2187 = vld [vmem:[%s2181 + $0x14] sm:$0xf]
        %v2188 = vld [vmem:[%s2181 + $0x18] sm:$0xf]
        %v2189 = vld [vmem:[%s2181 + $0x1c] sm:$0xf]
        %v2198 = vunpack.c.l.b16 %v2182
        %v2199 = vunpack.c.l.b16 %v2183
        %v2200 = vunpack.c.l.b16 %v2184
        %v2201 = vunpack.c.l.b16 %v2185
        %v2202 = vunpack.c.l.b16 %v2186
        %v2203 = vunpack.c.l.b16 %v2187
        %v2204 = vunpack.c.l.b16 %v2188
        %v2205 = vunpack.c.l.b16 %v2189
        %v2206 = vpack.c.b16 %v2199, %v2198
        %v2207 = vpack.c.b16 %v2201, %v2200
        %v2208 = vpack.c.b16 %v2203, %v2202
        %v2209 = vpack.c.b16 %v2205, %v2204
        %v2215 = vsel %vm437, %v2179, 0
        %v2218 = vsel %vm437, %v2180, 0
        %2220 = vmatprep.subr.bf16.mxu0 0
        %2221 = vmatpush1.bf16.msra.mxu0 0
        %2222 = vmatprep.subr.bf16.mxu0 0
        %2223 = vmatpush1.bf16.msra.mxu0 0
        %2224 = vmatprep.subr.bf16.mxu0 0
        %2225 = vmatpush1.bf16.msra.mxu0 0
        %2226 = vmatprep.subr.bf16.mxu0 0
        %2227 = vmatpush1.bf16.msra.mxu0 0
        %2228 = vmatprep.subr.bf16.mxu0 0
        %2229 = vmatpush1.bf16.msra.mxu0 %v2209
        %2230 = vmatprep.subr.bf16.mxu0 0
        %2231 = vmatpush1.bf16.msra.mxu0 %v2208
        %2232 = vmatprep.subr.bf16.mxu0 0
        %2233 = vmatpush1.bf16.msra.mxu0 %v2207
        %2234 = vmatprep.subr.bf16.mxu0 0
        %2235 = vmatpush1.bf16.msra.mxu0 %v2206
        %2236 = vmatprep.subr.bf16.mxu0 0
        %2237 = vmatpush2.bf16.msra.mxu0 0
        %2238 = vmatprep.subr.bf16.mxu0 0
        %2239 = vmatpush2.bf16.msra.mxu0 0
        %2240 = vmatprep.subr.bf16.mxu0 0
        %2241 = vmatpush2.bf16.msra.mxu0 0
        %2242 = vmatprep.subr.bf16.mxu0 0
        %2243 = vmatpush2.bf16.msra.mxu0 0
        %2244 = vmatprep.subr.bf16.mxu0 0
        %2245 = vmatpush2.bf16.msra.mxu0 0
        %2246 = vmatprep.subr.bf16.mxu0 0
        %2247 = vmatpush2.bf16.msra.mxu0 0
        %2248 = vmatprep.subr.bf16.mxu0 0
        %2249 = vmatpush2.bf16.msra.mxu0 0
        %2250 = vmatprep.subr.bf16.mxu0 0
        %2251 = vmatpush2.bf16.msra.mxu0 0
        %2252 = vmatprep.mubr.bf16.mxu0 0
        %2253 = vmatmul.mubr.bf16.gmra.mxu0 %v2215
        %v2254 = vpop.f32.mrf.mxu0
        %v2255 = vadd.f32 0.0, %v2254
        %v2256 = vpop.f32.mrf.mxu0
        %v2257 = vpop.f32.mrf.mxu0
        %v2258 = vadd.f32 0.0, %v2257
        %v2259 = vpop.f32.mrf.mxu0
        %2260 = vmatprep.mubr.bf16.mxu0 0
        %2261 = vmatmul.mubr.bf16.gmra.mxu0 %v2218
        %v2262 = vpop.f32.mrf.mxu0
        %v2263 = vadd.f32 0.0, %v2262
        %v2264 = vpop.f32.mrf.mxu0
        %v2265 = vpop.f32.mrf.mxu0
        %v2266 = vadd.f32 0.0, %v2265
        %v2267 = vpop.f32.mrf.mxu0
        %2268 = vdwg.mxu0
        %v2269 = vadd.f32 %v2136, %v2255
        %v2270 = vadd.f32 %v2139, %v2258
        %v2271 = vadd.f32 %v2144, %v2263
        %v2272 = vadd.f32 %v2147, %v2266
        %v2273 = vld [vmem:[%s3 + $0x5] sm:$0x1]
        %v2274 = vlaneseq
        %v2275 = vshrl.u32 %v2274, 7
        %v2276 = vsub.s32 0, %v2275
        %v2277 = vrot.slane %v2273, %v2276
        %v2278 = vadd.f32 %v2269, %v2277
        %v2279 = vadd.f32 %v2270, %v2277
        %v2280 = vadd.f32 %v2271, %v2277
        %v2281 = vadd.f32 %v2272, %v2277
        %v2282 = vmul.f32 %v2278, %v2278
        %v2283 = vmul.f32 %v2279, %v2279
        %v2284 = vmul.f32 %v2280, %v2280
        %v2285 = vmul.f32 %v2281, %v2281
        %v2286 = vmul.f32 %v2278, %v2282
        %v2287 = vmul.f32 %v2279, %v2283
        %v2288 = vmul.f32 %v2280, %v2284
        %v2289 = vmul.f32 %v2281, %v2285
        %v2290 = vmul.f32 %v2286, 0.044715
        %v2291 = vmul.f32 %v2287, 0.044715
        %v2292 = vmul.f32 %v2288, 0.044715
        %v2293 = vmul.f32 %v2289, 0.044715
        %v2294 = vadd.f32 %v2278, %v2290
        %v2295 = vadd.f32 %v2279, %v2291
        %v2296 = vadd.f32 %v2280, %v2292
        %v2297 = vadd.f32 %v2281, %v2293
        %v2298 = vmul.f32 %v2294, 0.7978846
        %v2299 = vmul.f32 %v2295, 0.7978846
        %v2300 = vmul.f32 %v2296, 0.7978846
        %v2301 = vmul.f32 %v2297, 0.7978846
        %v2302 = vtanh.pop %v2298
        %v2303 = vtanh.pop %v2299
        %v2304 = vtanh.pop %v2300
        %v2305 = vtanh.pop %v2301
        %v2306 = vadd.f32 %v2302, 1.0
        %v2307 = vadd.f32 %v2303, 1.0
        %v2308 = vadd.f32 %v2304, 1.0
        %v2309 = vadd.f32 %v2305, 1.0
        %v2310 = vmul.f32 %v2306, 0.5
        %v2311 = vmul.f32 %v2307, 0.5
        %v2312 = vmul.f32 %v2308, 0.5
        %v2313 = vmul.f32 %v2309, 0.5
        %v2314 = vmul.f32 %v2278, %v2310
        %v2315 = vmul.f32 %v2279, %v2311
        %v2316 = vmul.f32 %v2280, %v2312
        %v2317 = vmul.f32 %v2281, %v2313
        %v2318 = vrot.slane %v2314, 4
        %v2319 = vrot.slane %v2315, 4
        %v2320 = vrot.slane %v2316, 4
        %v2321 = vrot.slane %v2317, 4
        %v2322 = vsel %vm1937, %v2320, %v2321
        %v2323 = vsel %vm1937, %v2319, %v2320
        %v2324 = vsel %vm1937, %v2318, %v2319
        %v2325 = vsel %vm1937, %v2321, %v2318
        %v2326 = vmul.f32 %v2325, %v1949
        %v2327 = vmul.f32 %v2324, %v1954
        %v2328 = vmul.f32 %v2323, %v1959
        %v2329 = vmul.f32 %v2322, %v1964
        %v2330 = vpack.c.bf16 %v2327, %v2326
        %v2331 = vpack.c.bf16 %v2329, %v2328
        %s2332 = scalar_lea.vmem [#allocation2], 480
        %v2333 = vld [vmem:[%s2332] sm:$0xf]
        %v2334 = vld [vmem:[%s2332 + $0x4] sm:$0xf]
        %v2335 = vld [vmem:[%s2332 + $0x8] sm:$0xf]
        %v2336 = vld [vmem:[%s2332 + $0xc] sm:$0xf]
        %v2337 = vld [vmem:[%s2332 + $0x10] sm:$0xf]
        %v2338 = vld [vmem:[%s2332 + $0x14] sm:$0xf]
        %v2339 = vld [vmem:[%s2332 + $0x18] sm:$0xf]
        %v2340 = vld [vmem:[%s2332 + $0x1c] sm:$0xf]
        %v2341 = vpack.c.bf16 %v2315, %v2314
        %v2342 = vpack.c.bf16 %v2317, %v2316
        %s2343 = scalar_lea.vmem [#allocation2], 512
        %v2344 = vld [vmem:[%s2343] sm:$0xf]
        %v2345 = vld [vmem:[%s2343 + $0x4] sm:$0xf]
        %v2346 = vld [vmem:[%s2343 + $0x8] sm:$0xf]
        %v2347 = vld [vmem:[%s2343 + $0xc] sm:$0xf]
        %v2348 = vld [vmem:[%s2343 + $0x10] sm:$0xf]
        %v2349 = vld [vmem:[%s2343 + $0x14] sm:$0xf]
        %v2350 = vld [vmem:[%s2343 + $0x18] sm:$0xf]
        %v2351 = vld [vmem:[%s2343 + $0x1c] sm:$0xf]
        %v2360 = vunpack.c.l.b16 %v2344
        %v2361 = vunpack.c.l.b16 %v2345
        %v2362 = vunpack.c.l.b16 %v2346
        %v2363 = vunpack.c.l.b16 %v2347
        %v2364 = vunpack.c.l.b16 %v2348
        %v2365 = vunpack.c.l.b16 %v2349
        %v2366 = vunpack.c.l.b16 %v2350
        %v2367 = vunpack.c.l.b16 %v2351
        %v2368 = vpack.c.b16 %v2361, %v2360
        %v2369 = vpack.c.b16 %v2363, %v2362
        %v2370 = vpack.c.b16 %v2365, %v2364
        %v2371 = vpack.c.b16 %v2367, %v2366
        %v2377 = vsel %vm437, %v2341, 0
        %v2380 = vsel %vm437, %v2342, 0
        %2382 = vmatprep.subr.bf16.mxu0 0
        %2383 = vmatpush1.bf16.msra.mxu0 0
        %2384 = vmatprep.subr.bf16.mxu0 0
        %2385 = vmatpush1.bf16.msra.mxu0 0
        %2386 = vmatprep.subr.bf16.mxu0 0
        %2387 = vmatpush1.bf16.msra.mxu0 0
        %2388 = vmatprep.subr.bf16.mxu0 0
        %2389 = vmatpush1.bf16.msra.mxu0 0
        %2390 = vmatprep.subr.bf16.mxu0 0
        %2391 = vmatpush1.bf16.msra.mxu0 %v2371
        %2392 = vmatprep.subr.bf16.mxu0 0
        %2393 = vmatpush1.bf16.msra.mxu0 %v2370
        %2394 = vmatprep.subr.bf16.mxu0 0
        %2395 = vmatpush1.bf16.msra.mxu0 %v2369
        %2396 = vmatprep.subr.bf16.mxu0 0
        %2397 = vmatpush1.bf16.msra.mxu0 %v2368
        %2398 = vmatprep.subr.bf16.mxu0 0
        %2399 = vmatpush2.bf16.msra.mxu0 0
        %2400 = vmatprep.subr.bf16.mxu0 0
        %2401 = vmatpush2.bf16.msra.mxu0 0
        %2402 = vmatprep.subr.bf16.mxu0 0
        %2403 = vmatpush2.bf16.msra.mxu0 0
        %2404 = vmatprep.subr.bf16.mxu0 0
        %2405 = vmatpush2.bf16.msra.mxu0 0
        %2406 = vmatprep.subr.bf16.mxu0 0
        %2407 = vmatpush2.bf16.msra.mxu0 0
        %2408 = vmatprep.subr.bf16.mxu0 0
        %2409 = vmatpush2.bf16.msra.mxu0 0
        %2410 = vmatprep.subr.bf16.mxu0 0
        %2411 = vmatpush2.bf16.msra.mxu0 0
        %2412 = vmatprep.subr.bf16.mxu0 0
        %2413 = vmatpush2.bf16.msra.mxu0 0
        %2414 = vmatprep.mubr.bf16.mxu0 0
        %2415 = vmatmul.mubr.bf16.gmra.mxu0 %v2377
        %v2416 = vpop.f32.mrf.mxu0
        %v2417 = vadd.f32 0.0, %v2416
        %v2418 = vpop.f32.mrf.mxu0
        %v2419 = vpop.f32.mrf.mxu0
        %v2420 = vadd.f32 0.0, %v2419
        %v2421 = vpop.f32.mrf.mxu0
        %2422 = vmatprep.mubr.bf16.mxu0 0
        %2423 = vmatmul.mubr.bf16.gmra.mxu0 %v2380
        %v2424 = vpop.f32.mrf.mxu0
        %v2425 = vadd.f32 0.0, %v2424
        %v2426 = vpop.f32.mrf.mxu0
        %v2427 = vpop.f32.mrf.mxu0
        %v2428 = vadd.f32 0.0, %v2427
        %v2429 = vpop.f32.mrf.mxu0
        %2430 = vdwg.mxu0
        %v2439 = vunpack.c.l.b16 %v2333
        %v2440 = vunpack.c.l.b16 %v2334
        %v2441 = vunpack.c.l.b16 %v2335
        %v2442 = vunpack.c.l.b16 %v2336
        %v2443 = vunpack.c.l.b16 %v2337
        %v2444 = vunpack.c.l.b16 %v2338
        %v2445 = vunpack.c.l.b16 %v2339
        %v2446 = vunpack.c.l.b16 %v2340
        %v2447 = vpack.c.b16 %v2440, %v2439
        %v2448 = vpack.c.b16 %v2442, %v2441
        %v2449 = vpack.c.b16 %v2444, %v2443
        %v2450 = vpack.c.b16 %v2446, %v2445
        %v2456 = vsel %vm437, %v2330, 0
        %v2459 = vsel %vm437, %v2331, 0
        %2461 = vmatprep.subr.bf16.mxu0 0
        %2462 = vmatpush1.bf16.msra.mxu0 0
        %2463 = vmatprep.subr.bf16.mxu0 0
        %2464 = vmatpush1.bf16.msra.mxu0 0
        %2465 = vmatprep.subr.bf16.mxu0 0
        %2466 = vmatpush1.bf16.msra.mxu0 0
        %2467 = vmatprep.subr.bf16.mxu0 0
        %2468 = vmatpush1.bf16.msra.mxu0 0
        %2469 = vmatprep.subr.bf16.mxu0 0
        %2470 = vmatpush1.bf16.msra.mxu0 %v2450
        %2471 = vmatprep.subr.bf16.mxu0 0
        %2472 = vmatpush1.bf16.msra.mxu0 %v2449
        %2473 = vmatprep.subr.bf16.mxu0 0
        %2474 = vmatpush1.bf16.msra.mxu0 %v2448
        %2475 = vmatprep.subr.bf16.mxu0 0
        %2476 = vmatpush1.bf16.msra.mxu0 %v2447
        %2477 = vmatprep.subr.bf16.mxu0 0
        %2478 = vmatpush2.bf16.msra.mxu0 0
        %2479 = vmatprep.subr.bf16.mxu0 0
        %2480 = vmatpush2.bf16.msra.mxu0 0
        %2481 = vmatprep.subr.bf16.mxu0 0
        %2482 = vmatpush2.bf16.msra.mxu0 0
        %2483 = vmatprep.subr.bf16.mxu0 0
        %2484 = vmatpush2.bf16.msra.mxu0 0
        %2485 = vmatprep.subr.bf16.mxu0 0
        %2486 = vmatpush2.bf16.msra.mxu0 0
        %2487 = vmatprep.subr.bf16.mxu0 0
        %2488 = vmatpush2.bf16.msra.mxu0 0
        %2489 = vmatprep.subr.bf16.mxu0 0
        %2490 = vmatpush2.bf16.msra.mxu0 0
        %2491 = vmatprep.subr.bf16.mxu0 0
        %2492 = vmatpush2.bf16.msra.mxu0 0
        %2493 = vmatprep.mubr.bf16.mxu0 0
        %2494 = vmatmul.mubr.bf16.gmra.mxu0 %v2456
        %v2495 = vpop.f32.mrf.mxu0
        %v2496 = vadd.f32 %v2417, %v2495
        %v2497 = vpop.f32.mrf.mxu0
        %v2498 = vpop.f32.mrf.mxu0
        %v2499 = vadd.f32 %v2420, %v2498
        %v2500 = vpop.f32.mrf.mxu0
        %2501 = vmatprep.mubr.bf16.mxu0 0
        %2502 = vmatmul.mubr.bf16.gmra.mxu0 %v2459
        %v2503 = vpop.f32.mrf.mxu0
        %v2504 = vadd.f32 %v2425, %v2503
        %v2505 = vpop.f32.mrf.mxu0
        %v2506 = vpop.f32.mrf.mxu0
        %v2507 = vadd.f32 %v2428, %v2506
        %v2508 = vpop.f32.mrf.mxu0
        %2509 = vdwg.mxu0
        %v2510 = vmul.f32 %v2324, %v2158
        %v2511 = vmul.f32 %v2323, %v2163
        %v2512 = vmul.f32 %v2322, %v2168
        %v2513 = vmul.f32 %v2325, %v2173
        %v2514 = vpack.c.bf16 %v2511, %v2510
        %v2515 = vpack.c.bf16 %v2513, %v2512
        %s2516 = scalar_lea.vmem [#allocation2], 544
        %v2517 = vld [vmem:[%s2516] sm:$0xf]
        %v2518 = vld [vmem:[%s2516 + $0x4] sm:$0xf]
        %v2519 = vld [vmem:[%s2516 + $0x8] sm:$0xf]
        %v2520 = vld [vmem:[%s2516 + $0xc] sm:$0xf]
        %v2521 = vld [vmem:[%s2516 + $0x10] sm:$0xf]
        %v2522 = vld [vmem:[%s2516 + $0x14] sm:$0xf]
        %v2523 = vld [vmem:[%s2516 + $0x18] sm:$0xf]
        %v2524 = vld [vmem:[%s2516 + $0x1c] sm:$0xf]
        %v2533 = vunpack.c.l.b16 %v2517
        %v2534 = vunpack.c.l.b16 %v2518
        %v2535 = vunpack.c.l.b16 %v2519
        %v2536 = vunpack.c.l.b16 %v2520
        %v2537 = vunpack.c.l.b16 %v2521
        %v2538 = vunpack.c.l.b16 %v2522
        %v2539 = vunpack.c.l.b16 %v2523
        %v2540 = vunpack.c.l.b16 %v2524
        %v2541 = vpack.c.b16 %v2534, %v2533
        %v2542 = vpack.c.b16 %v2536, %v2535
        %v2543 = vpack.c.b16 %v2538, %v2537
        %v2544 = vpack.c.b16 %v2540, %v2539
        %v2550 = vsel %vm437, %v2514, 0
        %v2553 = vsel %vm437, %v2515, 0
        %2555 = vmatprep.subr.bf16.mxu0 0
        %2556 = vmatpush1.bf16.msra.mxu0 0
        %2557 = vmatprep.subr.bf16.mxu0 0
        %2558 = vmatpush1.bf16.msra.mxu0 0
        %2559 = vmatprep.subr.bf16.mxu0 0
        %2560 = vmatpush1.bf16.msra.mxu0 0
        %2561 = vmatprep.subr.bf16.mxu0 0
        %2562 = vmatpush1.bf16.msra.mxu0 0
        %2563 = vmatprep.subr.bf16.mxu0 0
        %2564 = vmatpush1.bf16.msra.mxu0 %v2544
        %2565 = vmatprep.subr.bf16.mxu0 0
        %2566 = vmatpush1.bf16.msra.mxu0 %v2543
        %2567 = vmatprep.subr.bf16.mxu0 0
        %2568 = vmatpush1.bf16.msra.mxu0 %v2542
        %2569 = vmatprep.subr.bf16.mxu0 0
        %2570 = vmatpush1.bf16.msra.mxu0 %v2541
        %2571 = vmatprep.subr.bf16.mxu0 0
        %2572 = vmatpush2.bf16.msra.mxu0 0
        %2573 = vmatprep.subr.bf16.mxu0 0
        %2574 = vmatpush2.bf16.msra.mxu0 0
        %2575 = vmatprep.subr.bf16.mxu0 0
        %2576 = vmatpush2.bf16.msra.mxu0 0
        %2577 = vmatprep.subr.bf16.mxu0 0
        %2578 = vmatpush2.bf16.msra.mxu0 0
        %2579 = vmatprep.subr.bf16.mxu0 0
        %2580 = vmatpush2.bf16.msra.mxu0 0
        %2581 = vmatprep.subr.bf16.mxu0 0
        %2582 = vmatpush2.bf16.msra.mxu0 0
        %2583 = vmatprep.subr.bf16.mxu0 0
        %2584 = vmatpush2.bf16.msra.mxu0 0
        %2585 = vmatprep.subr.bf16.mxu0 0
        %2586 = vmatpush2.bf16.msra.mxu0 0
        %2587 = vmatprep.mubr.bf16.mxu0 0
        %2588 = vmatmul.mubr.bf16.gmra.mxu0 %v2550
        %v2589 = vpop.f32.mrf.mxu0
        %v2590 = vadd.f32 0.0, %v2589
        %v2591 = vpop.f32.mrf.mxu0
        %v2592 = vpop.f32.mrf.mxu0
        %v2593 = vadd.f32 0.0, %v2592
        %v2594 = vpop.f32.mrf.mxu0
        %2595 = vmatprep.mubr.bf16.mxu0 0
        %2596 = vmatmul.mubr.bf16.gmra.mxu0 %v2553
        %v2597 = vpop.f32.mrf.mxu0
        %v2598 = vadd.f32 0.0, %v2597
        %v2599 = vpop.f32.mrf.mxu0
        %v2600 = vpop.f32.mrf.mxu0
        %v2601 = vadd.f32 0.0, %v2600
        %v2602 = vpop.f32.mrf.mxu0
        %2603 = vdwg.mxu0
        %v2604 = vadd.f32 %v2496, %v2590
        %v2605 = vadd.f32 %v2499, %v2593
        %v2606 = vadd.f32 %v2504, %v2598
        %v2607 = vadd.f32 %v2507, %v2601
        %v2608 = vld [vmem:[%s3 + $0x6] sm:$0x1]
        %v2609 = vlaneseq
        %v2610 = vshrl.u32 %v2609, 7
        %v2611 = vsub.s32 0, %v2610
        %v2612 = vrot.slane %v2608, %v2611
        %v2613 = vadd.f32 %v2604, %v2612
        %v2614 = vadd.f32 %v2605, %v2612
        %v2615 = vadd.f32 %v2606, %v2612
        %v2616 = vadd.f32 %v2607, %v2612
        %v2617 = vadd.f32 %v2613, %v1883
        %v2618 = vadd.f32 %v2614, %v1886
        %v2619 = vadd.f32 %v2615, %v1891
        %v2620 = vadd.f32 %v2616, %v1894
        %v2621 = vpack.c.bf16 %v2618, %v2617
        %v2622 = vpack.c.bf16 %v2620, %v2619
        %s2623 = scalar_lea.vmem [#allocation2], 608
        %v2624 = vld [vmem:[%s2623] sm:$0xf]
        %v2625 = vld [vmem:[%s2623 + $0x4] sm:$0xf]
        %v2626 = vld [vmem:[%s2623 + $0x8] sm:$0xf]
        %v2627 = vld [vmem:[%s2623 + $0xc] sm:$0xf]
        %v2628 = vld [vmem:[%s2623 + $0x10] sm:$0xf]
        %v2629 = vld [vmem:[%s2623 + $0x14] sm:$0xf]
        %v2630 = vld [vmem:[%s2623 + $0x18] sm:$0xf]
        %v2631 = vld [vmem:[%s2623 + $0x1c] sm:$0xf]
        %v2632 = vld [vmem:[%s3 + $0x8] sm:$0x1]
        %v2633 = vlaneseq
        %v2634 = vshrl.u32 %v2633, 7
        %v2635 = vsub.s32 0, %v2634
        %v2636 = vrot.slane %v2632, %v2635
        %v2645 = vunpack.c.l.b16 %v2624
        %v2646 = vunpack.c.l.b16 %v2625
        %v2647 = vunpack.c.l.b16 %v2626
        %v2648 = vunpack.c.l.b16 %v2627
        %v2649 = vunpack.c.l.b16 %v2628
        %v2650 = vunpack.c.l.b16 %v2629
        %v2651 = vunpack.c.l.b16 %v2630
        %v2652 = vunpack.c.l.b16 %v2631
        %v2653 = vpack.c.b16 %v2646, %v2645
        %v2654 = vpack.c.b16 %v2648, %v2647
        %v2655 = vpack.c.b16 %v2650, %v2649
        %v2656 = vpack.c.b16 %v2652, %v2651
        %v2662 = vsel %vm437, %v2621, 0
        %v2665 = vsel %vm437, %v2622, 0
        %2667 = vmatprep.subr.bf16.mxu0 0
        %2668 = vmatpush1.bf16.msra.mxu0 0
        %2669 = vmatprep.subr.bf16.mxu0 0
        %2670 = vmatpush1.bf16.msra.mxu0 0
        %2671 = vmatprep.subr.bf16.mxu0 0
        %2672 = vmatpush1.bf16.msra.mxu0 0
        %2673 = vmatprep.subr.bf16.mxu0 0
        %2674 = vmatpush1.bf16.msra.mxu0 0
        %2675 = vmatprep.subr.bf16.mxu0 0
        %2676 = vmatpush1.bf16.msra.mxu0 %v2656
        %2677 = vmatprep.subr.bf16.mxu0 0
        %2678 = vmatpush1.bf16.msra.mxu0 %v2655
        %2679 = vmatprep.subr.bf16.mxu0 0
        %2680 = vmatpush1.bf16.msra.mxu0 %v2654
        %2681 = vmatprep.subr.bf16.mxu0 0
        %2682 = vmatpush1.bf16.msra.mxu0 %v2653
        %2683 = vmatprep.subr.bf16.mxu0 0
        %2684 = vmatpush2.bf16.msra.mxu0 0
        %2685 = vmatprep.subr.bf16.mxu0 0
        %2686 = vmatpush2.bf16.msra.mxu0 0
        %2687 = vmatprep.subr.bf16.mxu0 0
        %2688 = vmatpush2.bf16.msra.mxu0 0
        %2689 = vmatprep.subr.bf16.mxu0 0
        %2690 = vmatpush2.bf16.msra.mxu0 0
        %2691 = vmatprep.subr.bf16.mxu0 0
        %2692 = vmatpush2.bf16.msra.mxu0 0
        %2693 = vmatprep.subr.bf16.mxu0 0
        %2694 = vmatpush2.bf16.msra.mxu0 0
        %2695 = vmatprep.subr.bf16.mxu0 0
        %2696 = vmatpush2.bf16.msra.mxu0 0
        %2697 = vmatprep.subr.bf16.mxu0 0
        %2698 = vmatpush2.bf16.msra.mxu0 0
        %2699 = vmatprep.mubr.bf16.mxu0 0
        %2700 = vmatmul.mubr.bf16.gmra.mxu0 %v2662
        %v2701 = vpop.f32.mrf.mxu0
        %v2702 = vadd.f32 %v2636, %v2701
        %v2703 = vpop.f32.mrf.mxu0
        %v2704 = vpop.f32.mrf.mxu0
        %v2705 = vadd.f32 %v2636, %v2704
        %v2706 = vpop.f32.mrf.mxu0
        %2707 = vmatprep.mubr.bf16.mxu0 0
        %2708 = vmatmul.mubr.bf16.gmra.mxu0 %v2665
        %v2709 = vpop.f32.mrf.mxu0
        %v2710 = vadd.f32 %v2636, %v2709
        %v2711 = vpop.f32.mrf.mxu0
        %v2712 = vpop.f32.mrf.mxu0
        %v2713 = vadd.f32 %v2636, %v2712
        %v2714 = vpop.f32.mrf.mxu0
        %2715 = vdwg.mxu0
        %v2716 = vrot.slane %v2617, 6
        %v2717 = vrot.slane %v2618, 6
        %v2718 = vrot.slane %v2619, 6
        %v2719 = vrot.slane %v2620, 6
        %v2720 = vsel %vm1100, %v2718, %v2719
        %v2721 = vsel %vm1100, %v2717, %v2718
        %v2722 = vsel %vm1100, %v2716, %v2717
        %v2723 = vsel %vm1100, %v2719, %v2716
        %v2724 = vmul.f32 %v2723, %v1113
        %v2725 = vmul.f32 %v2722, %v1118
        %v2726 = vmul.f32 %v2721, %v1123
        %v2727 = vmul.f32 %v2720, %v1128
        %v2728 = vpack.c.bf16 %v2725, %v2724
        %v2729 = vpack.c.bf16 %v2727, %v2726
        %s2730 = scalar_lea.vmem [#allocation2], 640
        %v2731 = vld [vmem:[%s2730] sm:$0xf]
        %v2732 = vld [vmem:[%s2730 + $0x4] sm:$0xf]
        %v2733 = vld [vmem:[%s2730 + $0x8] sm:$0xf]
        %v2734 = vld [vmem:[%s2730 + $0xc] sm:$0xf]
        %v2735 = vld [vmem:[%s2730 + $0x10] sm:$0xf]
        %v2736 = vld [vmem:[%s2730 + $0x14] sm:$0xf]
        %v2737 = vld [vmem:[%s2730 + $0x18] sm:$0xf]
        %v2738 = vld [vmem:[%s2730 + $0x1c] sm:$0xf]
        %v2739 = vrot.slane %v2617, 7
        %v2740 = vrot.slane %v2618, 7
        %v2741 = vrot.slane %v2619, 7
        %v2742 = vrot.slane %v2620, 7
        %v2743 = vsel %vm358, %v2741, %v2742
        %v2744 = vsel %vm358, %v2740, %v2741
        %v2745 = vsel %vm358, %v2739, %v2740
        %v2746 = vsel %vm358, %v2742, %v2739
        %v2747 = vmul.f32 %v2746, %v371
        %v2748 = vmul.f32 %v2745, %v376
        %v2749 = vmul.f32 %v2744, %v381
        %v2750 = vmul.f32 %v2743, %v386
        %v2751 = vpack.c.bf16 %v2748, %v2747
        %v2752 = vpack.c.bf16 %v2750, %v2749
        %s2753 = scalar_lea.vmem [#allocation2], 672
        %v2754 = vld [vmem:[%s2753] sm:$0xf]
        %v2755 = vld [vmem:[%s2753 + $0x4] sm:$0xf]
        %v2756 = vld [vmem:[%s2753 + $0x8] sm:$0xf]
        %v2757 = vld [vmem:[%s2753 + $0xc] sm:$0xf]
        %v2758 = vld [vmem:[%s2753 + $0x10] sm:$0xf]
        %v2759 = vld [vmem:[%s2753 + $0x14] sm:$0xf]
        %v2760 = vld [vmem:[%s2753 + $0x18] sm:$0xf]
        %v2761 = vld [vmem:[%s2753 + $0x1c] sm:$0xf]
        %v2770 = vunpack.c.l.b16 %v2754
        %v2771 = vunpack.c.l.b16 %v2755
        %v2772 = vunpack.c.l.b16 %v2756
        %v2773 = vunpack.c.l.b16 %v2757
        %v2774 = vunpack.c.l.b16 %v2758
        %v2775 = vunpack.c.l.b16 %v2759
        %v2776 = vunpack.c.l.b16 %v2760
        %v2777 = vunpack.c.l.b16 %v2761
        %v2778 = vpack.c.b16 %v2771, %v2770
        %v2779 = vpack.c.b16 %v2773, %v2772
        %v2780 = vpack.c.b16 %v2775, %v2774
        %v2781 = vpack.c.b16 %v2777, %v2776
        %v2787 = vsel %vm437, %v2751, 0
        %v2790 = vsel %vm437, %v2752, 0
        %2792 = vmatprep.subr.bf16.mxu0 0
        %2793 = vmatpush1.bf16.msra.mxu0 0
        %2794 = vmatprep.subr.bf16.mxu0 0
        %2795 = vmatpush1.bf16.msra.mxu0 0
        %2796 = vmatprep.subr.bf16.mxu0 0
        %2797 = vmatpush1.bf16.msra.mxu0 0
        %2798 = vmatprep.subr.bf16.mxu0 0
        %2799 = vmatpush1.bf16.msra.mxu0 0
        %2800 = vmatprep.subr.bf16.mxu0 0
        %2801 = vmatpush1.bf16.msra.mxu0 %v2781
        %2802 = vmatprep.subr.bf16.mxu0 0
        %2803 = vmatpush1.bf16.msra.mxu0 %v2780
        %2804 = vmatprep.subr.bf16.mxu0 0
        %2805 = vmatpush1.bf16.msra.mxu0 %v2779
        %2806 = vmatprep.subr.bf16.mxu0 0
        %2807 = vmatpush1.bf16.msra.mxu0 %v2778
        %2808 = vmatprep.subr.bf16.mxu0 0
        %2809 = vmatpush2.bf16.msra.mxu0 0
        %2810 = vmatprep.subr.bf16.mxu0 0
        %2811 = vmatpush2.bf16.msra.mxu0 0
        %2812 = vmatprep.subr.bf16.mxu0 0
        %2813 = vmatpush2.bf16.msra.mxu0 0
        %2814 = vmatprep.subr.bf16.mxu0 0
        %2815 = vmatpush2.bf16.msra.mxu0 0
        %2816 = vmatprep.subr.bf16.mxu0 0
        %2817 = vmatpush2.bf16.msra.mxu0 0
        %2818 = vmatprep.subr.bf16.mxu0 0
        %2819 = vmatpush2.bf16.msra.mxu0 0
        %2820 = vmatprep.subr.bf16.mxu0 0
        %2821 = vmatpush2.bf16.msra.mxu0 0
        %2822 = vmatprep.subr.bf16.mxu0 0
        %2823 = vmatpush2.bf16.msra.mxu0 0
        %2824 = vmatprep.mubr.bf16.mxu0 0
        %2825 = vmatmul.mubr.bf16.gmra.mxu0 %v2787
        %v2826 = vpop.f32.mrf.mxu0
        %v2827 = vadd.f32 0.0, %v2826
        %v2828 = vpop.f32.mrf.mxu0
        %v2829 = vpop.f32.mrf.mxu0
        %v2830 = vadd.f32 0.0, %v2829
        %v2831 = vpop.f32.mrf.mxu0
        %2832 = vmatprep.mubr.bf16.mxu0 0
        %2833 = vmatmul.mubr.bf16.gmra.mxu0 %v2790
        %v2834 = vpop.f32.mrf.mxu0
        %v2835 = vadd.f32 0.0, %v2834
        %v2836 = vpop.f32.mrf.mxu0
        %v2837 = vpop.f32.mrf.mxu0
        %v2838 = vadd.f32 0.0, %v2837
        %v2839 = vpop.f32.mrf.mxu0
        %2840 = vdwg.mxu0
        %v2849 = vunpack.c.l.b16 %v2731
        %v2850 = vunpack.c.l.b16 %v2732
        %v2851 = vunpack.c.l.b16 %v2733
        %v2852 = vunpack.c.l.b16 %v2734
        %v2853 = vunpack.c.l.b16 %v2735
        %v2854 = vunpack.c.l.b16 %v2736
        %v2855 = vunpack.c.l.b16 %v2737
        %v2856 = vunpack.c.l.b16 %v2738
        %v2857 = vpack.c.b16 %v2850, %v2849
        %v2858 = vpack.c.b16 %v2852, %v2851
        %v2859 = vpack.c.b16 %v2854, %v2853
        %v2860 = vpack.c.b16 %v2856, %v2855
        %v2866 = vsel %vm437, %v2728, 0
        %v2869 = vsel %vm437, %v2729, 0
        %2871 = vmatprep.subr.bf16.mxu0 0
        %2872 = vmatpush1.bf16.msra.mxu0 0
        %2873 = vmatprep.subr.bf16.mxu0 0
        %2874 = vmatpush1.bf16.msra.mxu0 0
        %2875 = vmatprep.subr.bf16.mxu0 0
        %2876 = vmatpush1.bf16.msra.mxu0 0
        %2877 = vmatprep.subr.bf16.mxu0 0
        %2878 = vmatpush1.bf16.msra.mxu0 0
        %2879 = vmatprep.subr.bf16.mxu0 0
        %2880 = vmatpush1.bf16.msra.mxu0 %v2860
        %2881 = vmatprep.subr.bf16.mxu0 0
        %2882 = vmatpush1.bf16.msra.mxu0 %v2859
        %2883 = vmatprep.subr.bf16.mxu0 0
        %2884 = vmatpush1.bf16.msra.mxu0 %v2858
        %2885 = vmatprep.subr.bf16.mxu0 0
        %2886 = vmatpush1.bf16.msra.mxu0 %v2857
        %2887 = vmatprep.subr.bf16.mxu0 0
        %2888 = vmatpush2.bf16.msra.mxu0 0
        %2889 = vmatprep.subr.bf16.mxu0 0
        %2890 = vmatpush2.bf16.msra.mxu0 0
        %2891 = vmatprep.subr.bf16.mxu0 0
        %2892 = vmatpush2.bf16.msra.mxu0 0
        %2893 = vmatprep.subr.bf16.mxu0 0
        %2894 = vmatpush2.bf16.msra.mxu0 0
        %2895 = vmatprep.subr.bf16.mxu0 0
        %2896 = vmatpush2.bf16.msra.mxu0 0
        %2897 = vmatprep.subr.bf16.mxu0 0
        %2898 = vmatpush2.bf16.msra.mxu0 0
        %2899 = vmatprep.subr.bf16.mxu0 0
        %2900 = vmatpush2.bf16.msra.mxu0 0
        %2901 = vmatprep.subr.bf16.mxu0 0
        %2902 = vmatpush2.bf16.msra.mxu0 0
        %2903 = vmatprep.mubr.bf16.mxu0 0
        %2904 = vmatmul.mubr.bf16.gmra.mxu0 %v2866
        %v2905 = vpop.f32.mrf.mxu0
        %v2906 = vadd.f32 %v2827, %v2905
        %v2907 = vpop.f32.mrf.mxu0
        %v2908 = vpop.f32.mrf.mxu0
        %v2909 = vadd.f32 %v2830, %v2908
        %v2910 = vpop.f32.mrf.mxu0
        %2911 = vmatprep.mubr.bf16.mxu0 0
        %2912 = vmatmul.mubr.bf16.gmra.mxu0 %v2869
        %v2913 = vpop.f32.mrf.mxu0
        %v2914 = vadd.f32 %v2835, %v2913
        %v2915 = vpop.f32.mrf.mxu0
        %v2916 = vpop.f32.mrf.mxu0
        %v2917 = vadd.f32 %v2838, %v2916
        %v2918 = vpop.f32.mrf.mxu0
        %2919 = vdwg.mxu0
        %s2920 = scalar_lea.vmem [#allocation2], 704
        %v2921 = vld [vmem:[%s2920] sm:$0xf]
        %v2922 = vld [vmem:[%s2920 + $0x4] sm:$0xf]
        %v2923 = vld [vmem:[%s2920 + $0x8] sm:$0xf]
        %v2924 = vld [vmem:[%s2920 + $0xc] sm:$0xf]
        %v2925 = vld [vmem:[%s2920 + $0x10] sm:$0xf]
        %v2926 = vld [vmem:[%s2920 + $0x14] sm:$0xf]
        %v2927 = vld [vmem:[%s2920 + $0x18] sm:$0xf]
        %v2928 = vld [vmem:[%s2920 + $0x1c] sm:$0xf]
        %v2937 = vunpack.c.l.b16 %v2921
        %v2938 = vunpack.c.l.b16 %v2922
        %v2939 = vunpack.c.l.b16 %v2923
        %v2940 = vunpack.c.l.b16 %v2924
        %v2941 = vunpack.c.l.b16 %v2925
        %v2942 = vunpack.c.l.b16 %v2926
        %v2943 = vunpack.c.l.b16 %v2927
        %v2944 = vunpack.c.l.b16 %v2928
        %v2945 = vpack.c.b16 %v2938, %v2937
        %v2946 = vpack.c.b16 %v2940, %v2939
        %v2947 = vpack.c.b16 %v2942, %v2941
        %v2948 = vpack.c.b16 %v2944, %v2943
        %2953 = vmatprep.subr.bf16.mxu0 0
        %2954 = vmatpush1.bf16.msra.mxu0 0
        %2955 = vmatprep.subr.bf16.mxu0 0
        %2956 = vmatpush1.bf16.msra.mxu0 0
        %2957 = vmatprep.subr.bf16.mxu0 0
        %2958 = vmatpush1.bf16.msra.mxu0 0
        %2959 = vmatprep.subr.bf16.mxu0 0
        %2960 = vmatpush1.bf16.msra.mxu0 0
        %2961 = vmatprep.subr.bf16.mxu0 0
        %2962 = vmatpush1.bf16.msra.mxu0 %v2948
        %2963 = vmatprep.subr.bf16.mxu0 0
        %2964 = vmatpush1.bf16.msra.mxu0 %v2947
        %2965 = vmatprep.subr.bf16.mxu0 0
        %2966 = vmatpush1.bf16.msra.mxu0 %v2946
        %2967 = vmatprep.subr.bf16.mxu0 0
        %2968 = vmatpush1.bf16.msra.mxu0 %v2945
        %2969 = vmatprep.subr.bf16.mxu0 0
        %2970 = vmatpush2.bf16.msra.mxu0 0
        %2971 = vmatprep.subr.bf16.mxu0 0
        %2972 = vmatpush2.bf16.msra.mxu0 0
        %2973 = vmatprep.subr.bf16.mxu0 0
        %2974 = vmatpush2.bf16.msra.mxu0 0
        %2975 = vmatprep.subr.bf16.mxu0 0
        %2976 = vmatpush2.bf16.msra.mxu0 0
        %2977 = vmatprep.subr.bf16.mxu0 0
        %2978 = vmatpush2.bf16.msra.mxu0 0
        %2979 = vmatprep.subr.bf16.mxu0 0
        %2980 = vmatpush2.bf16.msra.mxu0 0
        %2981 = vmatprep.subr.bf16.mxu0 0
        %2982 = vmatpush2.bf16.msra.mxu0 0
        %2983 = vmatprep.subr.bf16.mxu0 0
        %2984 = vmatpush2.bf16.msra.mxu0 0
        %2985 = vmatprep.mubr.bf16.mxu0 0
        %2986 = vmatmul.mubr.bf16.gmra.mxu0 %v2662
        %v2987 = vpop.f32.mrf.mxu0
        %v2988 = vadd.f32 0.0, %v2987
        %v2989 = vpop.f32.mrf.mxu0
        %v2990 = vpop.f32.mrf.mxu0
        %v2991 = vadd.f32 0.0, %v2990
        %v2992 = vpop.f32.mrf.mxu0
        %2993 = vmatprep.mubr.bf16.mxu0 0
        %2994 = vmatmul.mubr.bf16.gmra.mxu0 %v2665
        %v2995 = vpop.f32.mrf.mxu0
        %v2996 = vadd.f32 0.0, %v2995
        %v2997 = vpop.f32.mrf.mxu0
        %v2998 = vpop.f32.mrf.mxu0
        %v2999 = vadd.f32 0.0, %v2998
        %v3000 = vpop.f32.mrf.mxu0
        %3001 = vdwg.mxu0
        %v3002 = vadd.f32 %v2906, %v2988
        %v3003 = vadd.f32 %v2909, %v2991
        %v3004 = vadd.f32 %v2914, %v2996
        %v3005 = vadd.f32 %v2917, %v2999
        %v3006 = vld [vmem:[%s3 + $0x9] sm:$0x1]
        %v3007 = vlaneseq
        %v3008 = vshrl.u32 %v3007, 7
        %v3009 = vsub.s32 0, %v3008
        %v3010 = vrot.slane %v3006, %v3009
        %v3011 = vadd.f32 %v3002, %v3010
        %v3012 = vadd.f32 %v3003, %v3010
        %v3013 = vadd.f32 %v3004, %v3010
        %v3014 = vadd.f32 %v3005, %v3010
        %v3015 = vadd.f32 %v2702, %v3011
        %v3016 = vadd.f32 %v2705, %v3012
        %v3017 = vadd.f32 %v2710, %v3013
        %v3018 = vadd.f32 %v2713, %v3014
        %v3019 = vmul.f32 %v3015, 0.5
        %v3020 = vmul.f32 %v3016, 0.5
        %v3021 = vmul.f32 %v3017, 0.5
        %v3022 = vmul.f32 %v3018, 0.5
        %vm3023 = vcmask 261120
        %3024 = vst.msk [vmem:[%s241] sm:$0xff] %vm3023, %v3019
        %3025 = vst.msk [vmem:[%s241 + $0x8] sm:$0xff] %vm3023, %v3020
        %3026 = vst.msk [vmem:[%s241 + $0x10] sm:$0xff] %vm3023, %v3021
        %3027 = vst.msk [vmem:[%s241 + $0x18] sm:$0xff] %vm3023, %v3022
        %s3028 = smul.u32 4, %s17
        %p3029 = scmp.lt.s32.totalorder %s3028, 7
        %s3030 = scalar_select %p3029, %s3028, 7
        %s3031 = smul.addr %s3030, 8
        %s3032 = scalar_lea.vmem %s5, %s3031
        // Predicated region
        $region45: #{mano1d_forward.2} parent=39 // pred_check
          %p3033 = pneg %p145
        $region46: #{mano1d_forward.2} parent=39 // pred_check_branch
          %3035 = sbr.rel (%p3033) target = $region48
        $region47: #{mano1d_forward.2} parent=39 // pred_region
          %s3036 = smul.u32 4, %s17
        $region48: #{mano1d_forward.2} parent=39 // pred_fallthru
          _
      $region40: #{mano1d_forward.2} parent=5 // pred_fallthru
        _
      %p3037 = scmp.le.s32.totalorder 2, %s12
      // Predicated region
      $region49: #{mano1d_forward.2} parent=5 // pred_check
        %p3038 = pneg %p3037
      $region50: #{mano1d_forward.2} parent=5 // pred_check_branch
        %3040 = sbr.rel (%p3038) target = $region52
      $region51: #{mano1d_forward.2} parent=5 // pred_region
        %s3041 = ssub.s32 %s12, 2
        // Predicated region
        $region53: #{mano1d_forward.2} parent=51 // pred_check
          %p3042 = pneg %p151
        $region54: #{mano1d_forward.2} parent=51 // pred_check_branch
          %3044 = sbr.rel (%p3042) target = $region56
        $region55: #{mano1d_forward.2} parent=51 // pred_region
          %s3045 = smul.u32 4, %s18
          %p3046 = scmp.lt.s32.totalorder %s3045, 7
          %s3047 = scalar_select %p3046, %s3045, 7
          %s3048 = smul.addr %s3047, 8
          %s3049 = scalar_lea.vmem %s5, %s3048
        $region56: #{mano1d_forward.2} parent=51 // pred_fallthru
          _
      $region52: #{mano1d_forward.2} parent=5 // pred_fallthru
        _
    $region6: #{mano1d_forward.2} parent=1 // loop_footer
      %s16 = sadd.s32 1, %s12
    $region7: #{mano1d_forward.2} parent=1 // loop_footer_branch
      %11 = sbr.rel target = $region3
    $region8: #{mano1d_forward.2} parent=1 // loop_exit
      _
    %3050 = vsyncpa [#allocation3], 1
    %s3051 = scalar_lea.sflag [#allocation3], 1
    %3052 = vsyncpa %s3051, 1

// kernel: mano1d_forward.3
$region0: #{mano1d_forward.3}
  #allocation0 [shape = 'u32[]', space=smem, size = 0x4, offset = 0x4, fixed_abs, tag = 'smem constant byte address 0x4 - core index']
  #allocation1 [shape = 'u32[144,128]{1,0:T(1,128)}', space=vmem, size = 0x12000, scoped, tag = 'internal scratch']
  %s0 = inlined_call_operand.vmem [shape: f32[2,32,16], index: 0, kind: input, shape index: {}]
  %s1 = inlined_call_operand.vmem [shape: f32[2,16,32], index: 1, kind: input, shape index: {}]
  %s2 = inlined_call_operand.vmem [shape: bf16[2,500,32], index: 2, kind: input, shape index: {}]
  %s3 = inlined_call_operand.vmem [shape: f32[2,1,16], index: 3, kind: input, shape index: {}]
  %s4 = inlined_call_operand.vmem [shape: f32[2,1,16], index: 4, kind: input, shape index: {}]
  %s5 = inlined_call_operand.vmem [shape: bf16[100,500], index: 5, kind: input, shape index: {}]
  %s6 = inlined_call_operand.vmem [shape: f32[100,1], index: 6, kind: input, shape index: {}]
  %s7 = inlined_call_operand.vmem [shape: bf16[2,256,32], index: 7, kind: input, shape index: {}]
  %s8 = inlined_call_operand.vmem [shape: bf16[4,32,32], index: 8, kind: input, shape index: {}]
  %s9 = inlined_call_operand.vmem [shape: bf16[10,32], index: 9, kind: input, shape index: {}]
  %s10 = inlined_call_operand.vmem [shape: f32[32,9], index: 10, kind: input, shape index: {}]
  %s11 = inlined_call_operand.vmem [shape: f32[10,2], index: 11, kind: input, shape index: {}]
  %s12 = inlined_call_operand.vmem [shape: f32[1,4], index: 12, kind: input, shape index: {}]
  %s13 = inlined_call_operand.hbm [shape: f32[2,1,16], index: 13, kind: output, shape index: {}]
  %s14 = sld [smem:[#allocation0]]
  $region85: #{mano1d_forward.3} parent=0
    _
  %s16 = ssub.s32 1, %s14
  %s17 = scalar_select 0, %s16, %s14
  $region1: #{mano1d_forward.3} parent=0
    #allocation2 [shape = 'u8[1024]{0}', space=vmem, size = 0x400, scoped, tag = 'output window, operand 0']
    #allocation3 [shape = 's32[2]{0}', space=sflag, size = 0x8, scoped, tag = 'scoped memory for mano1d_forward.3']
    %18 = vsyncpa [#allocation3], 0
    %s19 = scalar_lea.sflag [#allocation3], 1
    %20 = vsyncpa %s19, 0
    loop: start=0, step=1, limit=4
    $region2: #{mano1d_forward.3} parent=1 // loop_pre_header
      _
    $region3: #{mano1d_forward.3} parent=1 // loop_header
      %s22 = sphi 0, %s26
      %p23 = scmp.ge.s32.totalorder %s22, 4
      %s32 = sphi 0, %s34
      %s35 = sphi 0, %s32
      %s36 = sphi 0, %s35
      %s52 = sphi 0, %s36
      %s58 = sphi 0, %s60
      %s61 = sphi 0, %s58
      %s62 = sphi 0, %s61
      %s78 = sphi 0, %s62
      %s84 = sphi 0, %s86
      %s87 = sphi 0, %s84
      %s88 = sphi 0, %s87
      %s104 = sphi 0, %s88
      %s110 = sphi 0, %s112
      %s113 = sphi 0, %s110
      %s114 = sphi 0, %s113
      %s130 = sphi 0, %s114
      %s136 = sphi 0, %s138
      %s139 = sphi 0, %s136
      %s140 = sphi 0, %s139
      %s156 = sphi 0, %s140
      %s160 = sphi 0, %s160
      %s162 = sphi 0, %s160
      %s163 = sphi 0, %s162
      %s177 = sphi 0, %s163
      %s181 = sphi 0, %s181
      %s183 = sphi 0, %s181
      %s184 = sphi 0, %s183
      %s198 = sphi 0, %s184
      %s202 = sphi 0, %s202
      %s204 = sphi 0, %s202
      %s205 = sphi 0, %s204
      %s219 = sphi 0, %s205
      %s223 = sphi 0, %s223
      %s225 = sphi 0, %s223
      %s226 = sphi 0, %s225
      %s240 = sphi 0, %s226
      %s244 = sphi 0, %s244
      %s246 = sphi 0, %s244
      %s247 = sphi 0, %s246
      %s261 = sphi 0, %s247
      %s265 = sphi 0, %s265
      %s267 = sphi 0, %s265
      %s268 = sphi 0, %s267
      %s282 = sphi 0, %s268
      %s286 = sphi 0, %s286
      %s288 = sphi 0, %s286
      %s289 = sphi 0, %s288
      %s303 = sphi 0, %s289
      %s307 = sphi 0, %s307
      %s309 = sphi 0, %s307
      %s310 = sphi 0, %s309
      %s324 = sphi 0, %s310
      %s330 = sphi 0, %s332
      %s333 = sphi 0, %s330
      %s334 = sphi 0, %s333
      %s350 = sphi 0, %s334
    $region4: #{mano1d_forward.3} parent=1 // loop_header_branch
      %25 = sbr.rel (%p23) target = $region8
    $region5: #{mano1d_forward.3} parent=1 // loop_body
      %s27 = ssub.s32 %s22, 1
      %s28 = ssub.s32 %s22, 2
      %s29 = sadd.s32 %s22, 1
      %s30 = ssub.s32 %s22, %s29
      %p31 = scmp.eq.s32.totalorder %s30, 0
      %s33 = sadd.s32 %s32, 1
      %s34 = scalar_select %p31, %s32, %s33
      %p37 = pneg %p31
      %p38 = scmp.eq.s32.totalorder %s22, 1
      %p39 = por %p37, %p38
      %p40 = scmp.ne.s32.totalorder %s32, %s35
      %p41 = scmp.eq.s32.totalorder %s22, 0
      %p42 = por %p40, %p41
      %p43 = scmp.ne.s32.totalorder %s32, %s35
      %p44 = scmp.eq.s32.totalorder %s27, 1
      %p45 = por %p43, %p44
      %p46 = scmp.ne.s32.totalorder %s35, %s36
      %p47 = scmp.eq.s32.totalorder %s27, 0
      %p48 = por %p46, %p47
      %p49 = scmp.ne.s32.totalorder %s35, %s36
      %p50 = scmp.eq.s32.totalorder %s28, 1
      %p51 = por %p49, %p50
      %p53 = scmp.ne.s32.totalorder %s36, %s52
      %p54 = scmp.eq.s32.totalorder %s28, 0
      %p55 = por %p53, %p54
      %s56 = ssub.s32 %s22, %s29
      %p57 = scmp.eq.s32.totalorder %s56, 0
      %s59 = sadd.s32 %s58, 1
      %s60 = scalar_select %p57, %s58, %s59
      %p63 = pneg %p57
      %p64 = scmp.eq.s32.totalorder %s22, 1
      %p65 = por %p63, %p64
      %p66 = scmp.ne.s32.totalorder %s58, %s61
      %p67 = scmp.eq.s32.totalorder %s22, 0
      %p68 = por %p66, %p67
      %p69 = scmp.ne.s32.totalorder %s58, %s61
      %p70 = scmp.eq.s32.totalorder %s27, 1
      %p71 = por %p69, %p70
      %p72 = scmp.ne.s32.totalorder %s61, %s62
      %p73 = scmp.eq.s32.totalorder %s27, 0
      %p74 = por %p72, %p73
      %p75 = scmp.ne.s32.totalorder %s61, %s62
      %p76 = scmp.eq.s32.totalorder %s28, 1
      %p77 = por %p75, %p76
      %p79 = scmp.ne.s32.totalorder %s62, %s78
      %p80 = scmp.eq.s32.totalorder %s28, 0
      %p81 = por %p79, %p80
      %s82 = ssub.s32 %s22, %s29
      %p83 = scmp.eq.s32.totalorder %s82, 0
      %s85 = sadd.s32 %s84, 1
      %s86 = scalar_select %p83, %s84, %s85
      %p89 = pneg %p83
      %p90 = scmp.eq.s32.totalorder %s22, 1
      %p91 = por %p89, %p90
      %p92 = scmp.ne.s32.totalorder %s84, %s87
      %p93 = scmp.eq.s32.totalorder %s22, 0
      %p94 = por %p92, %p93
      %p95 = scmp.ne.s32.totalorder %s84, %s87
      %p96 = scmp.eq.s32.totalorder %s27, 1
      %p97 = por %p95, %p96
      %p98 = scmp.ne.s32.totalorder %s87, %s88
      %p99 = scmp.eq.s32.totalorder %s27, 0
      %p100 = por %p98, %p99
      %p101 = scmp.ne.s32.totalorder %s87, %s88
      %p102 = scmp.eq.s32.totalorder %s28, 1
      %p103 = por %p101, %p102
      %p105 = scmp.ne.s32.totalorder %s88, %s104
      %p106 = scmp.eq.s32.totalorder %s28, 0
      %p107 = por %p105, %p106
      %s108 = ssub.s32 %s22, %s29
      %p109 = scmp.eq.s32.totalorder %s108, 0
      %s111 = sadd.s32 %s110, 1
      %s112 = scalar_select %p109, %s110, %s111
      %p115 = pneg %p109
      %p116 = scmp.eq.s32.totalorder %s22, 1
      %p117 = por %p115, %p116
      %p118 = scmp.ne.s32.totalorder %s110, %s113
      %p119 = scmp.eq.s32.totalorder %s22, 0
      %p120 = por %p118, %p119
      %p121 = scmp.ne.s32.totalorder %s110, %s113
      %p122 = scmp.eq.s32.totalorder %s27, 1
      %p123 = por %p121, %p122
      %p124 = scmp.ne.s32.totalorder %s113, %s114
      %p125 = scmp.eq.s32.totalorder %s27, 0
      %p126 = por %p124, %p125
      %p127 = scmp.ne.s32.totalorder %s113, %s114
      %p128 = scmp.eq.s32.totalorder %s28, 1
      %p129 = por %p127, %p128
      %p131 = scmp.ne.s32.totalorder %s114, %s130
      %p132 = scmp.eq.s32.totalorder %s28, 0
      %p133 = por %p131, %p132
      %s134 = ssub.s32 %s22, %s29
      %p135 = scmp.eq.s32.totalorder %s134, 0
      %s137 = sadd.s32 %s136, 1
      %s138 = scalar_select %p135, %s136, %s137
      %p141 = pneg %p135
      %p142 = scmp.eq.s32.totalorder %s22, 1
      %p143 = por %p141, %p142
      %p144 = scmp.ne.s32.totalorder %s136, %s139
      %p145 = scmp.eq.s32.totalorder %s22, 0
      %p146 = por %p144, %p145
      %p147 = scmp.ne.s32.totalorder %s136, %s139
      %p148 = scmp.eq.s32.totalorder %s27, 1
      %p149 = por %p147, %p148
      %p150 = scmp.ne.s32.totalorder %s139, %s140
      %p151 = scmp.eq.s32.totalorder %s27, 0
      %p152 = por %p150, %p151
      %p153 = scmp.ne.s32.totalorder %s139, %s140
      %p154 = scmp.eq.s32.totalorder %s28, 1
      %p155 = por %p153, %p154
      %p157 = scmp.ne.s32.totalorder %s140, %s156
      %p158 = scmp.eq.s32.totalorder %s28, 0
      %p159 = por %p157, %p158
      %s161 = sadd.s32 %s160, 1
      %p164 = scmp.eq.s32.totalorder %s22, 1
      %p165 = scmp.ne.s32.totalorder %s160, %s162
      %p166 = scmp.eq.s32.totalorder %s22, 0
      %p167 = por %p165, %p166
      %p168 = scmp.ne.s32.totalorder %s160, %s162
      %p169 = scmp.eq.s32.totalorder %s27, 1
      %p170 = por %p168, %p169
      %p171 = scmp.ne.s32.totalorder %s162, %s163
      %p172 = scmp.eq.s32.totalorder %s27, 0
      %p173 = por %p171, %p172
      %p174 = scmp.ne.s32.totalorder %s162, %s163
      %p175 = scmp.eq.s32.totalorder %s28, 1
      %p176 = por %p174, %p175
      %p178 = scmp.ne.s32.totalorder %s163, %s177
      %p179 = scmp.eq.s32.totalorder %s28, 0
      %p180 = por %p178, %p179
      %s182 = sadd.s32 %s181, 1
      %p185 = scmp.eq.s32.totalorder %s22, 1
      %p186 = scmp.ne.s32.totalorder %s181, %s183
      %p187 = scmp.eq.s32.totalorder %s22, 0
      %p188 = por %p186, %p187
      %p189 = scmp.ne.s32.totalorder %s181, %s183
      %p190 = scmp.eq.s32.totalorder %s27, 1
      %p191 = por %p189, %p190
      %p192 = scmp.ne.s32.totalorder %s183, %s184
      %p193 = scmp.eq.s32.totalorder %s27, 0
      %p194 = por %p192, %p193
      %p195 = scmp.ne.s32.totalorder %s183, %s184
      %p196 = scmp.eq.s32.totalorder %s28, 1
      %p197 = por %p195, %p196
      %p199 = scmp.ne.s32.totalorder %s184, %s198
      %p200 = scmp.eq.s32.totalorder %s28, 0
      %p201 = por %p199, %p200
      %s203 = sadd.s32 %s202, 1
      %p206 = scmp.eq.s32.totalorder %s22, 1
      %p207 = scmp.ne.s32.totalorder %s202, %s204
      %p208 = scmp.eq.s32.totalorder %s22, 0
      %p209 = por %p207, %p208
      %p210 = scmp.ne.s32.totalorder %s202, %s204
      %p211 = scmp.eq.s32.totalorder %s27, 1
      %p212 = por %p210, %p211
      %p213 = scmp.ne.s32.totalorder %s204, %s205
      %p214 = scmp.eq.s32.totalorder %s27, 0
      %p215 = por %p213, %p214
      %p216 = scmp.ne.s32.totalorder %s204, %s205
      %p217 = scmp.eq.s32.totalorder %s28, 1
      %p218 = por %p216, %p217
      %p220 = scmp.ne.s32.totalorder %s205, %s219
      %p221 = scmp.eq.s32.totalorder %s28, 0
      %p222 = por %p220, %p221
      %s224 = sadd.s32 %s223, 1
      %p227 = scmp.eq.s32.totalorder %s22, 1
      %p228 = scmp.ne.s32.totalorder %s223, %s225
      %p229 = scmp.eq.s32.totalorder %s22, 0
      %p230 = por %p228, %p229
      %p231 = scmp.ne.s32.totalorder %s223, %s225
      %p232 = scmp.eq.s32.totalorder %s27, 1
      %p233 = por %p231, %p232
      %p234 = scmp.ne.s32.totalorder %s225, %s226
      %p235 = scmp.eq.s32.totalorder %s27, 0
      %p236 = por %p234, %p235
      %p237 = scmp.ne.s32.totalorder %s225, %s226
      %p238 = scmp.eq.s32.totalorder %s28, 1
      %p239 = por %p237, %p238
      %p241 = scmp.ne.s32.totalorder %s226, %s240
      %p242 = scmp.eq.s32.totalorder %s28, 0
      %p243 = por %p241, %p242
      %s245 = sadd.s32 %s244, 1
      %p248 = scmp.eq.s32.totalorder %s22, 1
      %p249 = scmp.ne.s32.totalorder %s244, %s246
      %p250 = scmp.eq.s32.totalorder %s22, 0
      %p251 = por %p249, %p250
      %p252 = scmp.ne.s32.totalorder %s244, %s246
      %p253 = scmp.eq.s32.totalorder %s27, 1
      %p254 = por %p252, %p253
      %p255 = scmp.ne.s32.totalorder %s246, %s247
      %p256 = scmp.eq.s32.totalorder %s27, 0
      %p257 = por %p255, %p256
      %p258 = scmp.ne.s32.totalorder %s246, %s247
      %p259 = scmp.eq.s32.totalorder %s28, 1
      %p260 = por %p258, %p259
      %p262 = scmp.ne.s32.totalorder %s247, %s261
      %p263 = scmp.eq.s32.totalorder %s28, 0
      %p264 = por %p262, %p263
      %s266 = sadd.s32 %s265, 1
      %p269 = scmp.eq.s32.totalorder %s22, 1
      %p270 = scmp.ne.s32.totalorder %s265, %s267
      %p271 = scmp.eq.s32.totalorder %s22, 0
      %p272 = por %p270, %p271
      %p273 = scmp.ne.s32.totalorder %s265, %s267
      %p274 = scmp.eq.s32.totalorder %s27, 1
      %p275 = por %p273, %p274
      %p276 = scmp.ne.s32.totalorder %s267, %s268
      %p277 = scmp.eq.s32.totalorder %s27, 0
      %p278 = por %p276, %p277
      %p279 = scmp.ne.s32.totalorder %s267, %s268
      %p280 = scmp.eq.s32.totalorder %s28, 1
      %p281 = por %p279, %p280
      %p283 = scmp.ne.s32.totalorder %s268, %s282
      %p284 = scmp.eq.s32.totalorder %s28, 0
      %p285 = por %p283, %p284
      %s287 = sadd.s32 %s286, 1
      %p290 = scmp.eq.s32.totalorder %s22, 1
      %p291 = scmp.ne.s32.totalorder %s286, %s288
      %p292 = scmp.eq.s32.totalorder %s22, 0
      %p293 = por %p291, %p292
      %p294 = scmp.ne.s32.totalorder %s286, %s288
      %p295 = scmp.eq.s32.totalorder %s27, 1
      %p296 = por %p294, %p295
      %p297 = scmp.ne.s32.totalorder %s288, %s289
      %p298 = scmp.eq.s32.totalorder %s27, 0
      %p299 = por %p297, %p298
      %p300 = scmp.ne.s32.totalorder %s288, %s289
      %p301 = scmp.eq.s32.totalorder %s28, 1
      %p302 = por %p300, %p301
      %p304 = scmp.ne.s32.totalorder %s289, %s303
      %p305 = scmp.eq.s32.totalorder %s28, 0
      %p306 = por %p304, %p305
      %s308 = sadd.s32 %s307, 1
      %p311 = scmp.eq.s32.totalorder %s22, 1
      %p312 = scmp.ne.s32.totalorder %s307, %s309
      %p313 = scmp.eq.s32.totalorder %s22, 0
      %p314 = por %p312, %p313
      %p315 = scmp.ne.s32.totalorder %s307, %s309
      %p316 = scmp.eq.s32.totalorder %s27, 1
      %p317 = por %p315, %p316
      %p318 = scmp.ne.s32.totalorder %s309, %s310
      %p319 = scmp.eq.s32.totalorder %s27, 0
      %p320 = por %p318, %p319
      %p321 = scmp.ne.s32.totalorder %s309, %s310
      %p322 = scmp.eq.s32.totalorder %s28, 1
      %p323 = por %p321, %p322
      %p325 = scmp.ne.s32.totalorder %s310, %s324
      %p326 = scmp.eq.s32.totalorder %s28, 0
      %p327 = por %p325, %p326
      %s328 = ssub.s32 %s22, %s29
      %p329 = scmp.eq.s32.totalorder %s328, 0
      %s331 = sadd.s32 %s330, 1
      %s332 = scalar_select %p329, %s330, %s331
      %p335 = pneg %p329
      %p336 = scmp.eq.s32.totalorder %s22, 1
      %p337 = por %p335, %p336
      %p338 = scmp.ne.s32.totalorder %s330, %s333
      %p339 = scmp.eq.s32.totalorder %s22, 0
      %p340 = por %p338, %p339
      %p341 = scmp.ne.s32.totalorder %s330, %s333
      %p342 = scmp.eq.s32.totalorder %s27, 1
      %p343 = por %p341, %p342
      %p344 = scmp.ne.s32.totalorder %s333, %s334
      %p345 = scmp.eq.s32.totalorder %s27, 0
      %p346 = por %p344, %p345
      %p347 = scmp.ne.s32.totalorder %s333, %s334
      %p348 = scmp.eq.s32.totalorder %s28, 1
      %p349 = por %p347, %p348
      %p351 = scmp.ne.s32.totalorder %s334, %s350
      %p352 = scmp.eq.s32.totalorder %s28, 0
      %p353 = por %p351, %p352
      %p354 = scmp.le.s32.totalorder 1, %s22
      %p355 = scmp.lt.s32.totalorder %s22, 3
      %p356 = pnand %p354, %p355
      %p357 = pneg %p356
      // Predicated region
      $region9: #{mano1d_forward.3} parent=5 // pred_check
        _
      $region10: #{mano1d_forward.3} parent=5 // pred_check_branch
        %359 = sbr.rel (%p356) target = $region12
      $region11: #{mano1d_forward.3} parent=5 // pred_region
        %s360 = ssub.s32 %s22, 1
        // Predicated region
        $region13: #{mano1d_forward.3} parent=11 // pred_check
          %p361 = pneg %p173
        $region14: #{mano1d_forward.3} parent=11 // pred_check_branch
          %363 = sbr.rel (%p361) target = $region16
        $region15: #{mano1d_forward.3} parent=11 // pred_region
          _
        $region16: #{mano1d_forward.3} parent=11 // pred_fallthru
          _
        // Predicated region
        $region17: #{mano1d_forward.3} parent=11 // pred_check
          %p364 = pneg %p194
        $region18: #{mano1d_forward.3} parent=11 // pred_check_branch
          %366 = sbr.rel (%p364) target = $region20
        $region19: #{mano1d_forward.3} parent=11 // pred_region
          _
        $region20: #{mano1d_forward.3} parent=11 // pred_fallthru
          _
        // Predicated region
        $region21: #{mano1d_forward.3} parent=11 // pred_check
          %p367 = pneg %p215
        $region22: #{mano1d_forward.3} parent=11 // pred_check_branch
          %369 = sbr.rel (%p367) target = $region24
        $region23: #{mano1d_forward.3} parent=11 // pred_region
          _
        $region24: #{mano1d_forward.3} parent=11 // pred_fallthru
          _
        // Predicated region
        $region25: #{mano1d_forward.3} parent=11 // pred_check
          %p370 = pneg %p236
        $region26: #{mano1d_forward.3} parent=11 // pred_check_branch
          %372 = sbr.rel (%p370) target = $region28
        $region27: #{mano1d_forward.3} parent=11 // pred_region
          _
        $region28: #{mano1d_forward.3} parent=11 // pred_fallthru
          _
        // Predicated region
        $region29: #{mano1d_forward.3} parent=11 // pred_check
          %p373 = pneg %p257
        $region30: #{mano1d_forward.3} parent=11 // pred_check_branch
          %375 = sbr.rel (%p373) target = $region32
        $region31: #{mano1d_forward.3} parent=11 // pred_region
          _
        $region32: #{mano1d_forward.3} parent=11 // pred_fallthru
          _
        // Predicated region
        $region33: #{mano1d_forward.3} parent=11 // pred_check
          %p376 = pneg %p278
        $region34: #{mano1d_forward.3} parent=11 // pred_check_branch
          %378 = sbr.rel (%p376) target = $region36
        $region35: #{mano1d_forward.3} parent=11 // pred_region
          _
        $region36: #{mano1d_forward.3} parent=11 // pred_fallthru
          _
        // Predicated region
        $region37: #{mano1d_forward.3} parent=11 // pred_check
          %p379 = pneg %p299
        $region38: #{mano1d_forward.3} parent=11 // pred_check_branch
          %381 = sbr.rel (%p379) target = $region40
        $region39: #{mano1d_forward.3} parent=11 // pred_region
          _
        $region40: #{mano1d_forward.3} parent=11 // pred_fallthru
          _
        // Predicated region
        $region41: #{mano1d_forward.3} parent=11 // pred_check
          %p382 = pneg %p320
        $region42: #{mano1d_forward.3} parent=11 // pred_check_branch
          %384 = sbr.rel (%p382) target = $region44
        $region43: #{mano1d_forward.3} parent=11 // pred_region
          _
        $region44: #{mano1d_forward.3} parent=11 // pred_fallthru
          _
      $region12: #{mano1d_forward.3} parent=5 // pred_fallthru
        _
      %p385 = scmp.lt.s32.totalorder %s22, 2
      // Predicated region
      $region45: #{mano1d_forward.3} parent=5 // pred_check
        %p386 = pneg %p385
      $region46: #{mano1d_forward.3} parent=5 // pred_check_branch
        %388 = sbr.rel (%p386) target = $region48
      $region47: #{mano1d_forward.3} parent=5 // pred_region
        // Predicated region
        $region49: #{mano1d_forward.3} parent=47 // pred_check
          %p389 = pneg %p42
        $region50: #{mano1d_forward.3} parent=47 // pred_check_branch
          %391 = sbr.rel (%p389) target = $region52
        $region51: #{mano1d_forward.3} parent=47 // pred_region
          %p392 = scmp.lt.s32.totalorder %s22, 1
          %s393 = scalar_select %p392, %s22, 1
          %s394 = smul.addr %s393, 4
          %s395 = smul.addr %s394, 8
          %s396 = scalar_lea.vmem %s0, %s395
        $region52: #{mano1d_forward.3} parent=47 // pred_fallthru
          _
        // Predicated region
        $region53: #{mano1d_forward.3} parent=47 // pred_check
          %p397 = pneg %p68
        $region54: #{mano1d_forward.3} parent=47 // pred_check_branch
          %399 = sbr.rel (%p397) target = $region56
        $region55: #{mano1d_forward.3} parent=47 // pred_region
          %p400 = scmp.lt.s32.totalorder %s22, 1
          %s401 = scalar_select %p400, %s22, 1
          %s402 = smul.addr %s401, 2
          %s403 = smul.addr %s402, 8
          %s404 = scalar_lea.vmem %s1, %s403
        $region56: #{mano1d_forward.3} parent=47 // pred_fallthru
          _
        // Predicated region
        $region57: #{mano1d_forward.3} parent=47 // pred_check
          %p405 = pneg %p94
        $region58: #{mano1d_forward.3} parent=47 // pred_check_branch
          %407 = sbr.rel (%p405) target = $region60
        $region59: #{mano1d_forward.3} parent=47 // pred_region
          %p408 = scmp.lt.s32.totalorder %s22, 1
          %s409 = scalar_select %p408, %s22, 1
          %s410 = smul.addr %s409, 63
          %s411 = smul.addr %s410, 4
          %s412 = scalar_lea.vmem %s2, %s411
        $region60: #{mano1d_forward.3} parent=47 // pred_fallthru
          _
        // Predicated region
        $region61: #{mano1d_forward.3} parent=47 // pred_check
          %p413 = pneg %p120
        $region62: #{mano1d_forward.3} parent=47 // pred_check_branch
          %415 = sbr.rel (%p413) target = $region64
        $region63: #{mano1d_forward.3} parent=47 // pred_region
          %p416 = scmp.lt.s32.totalorder %s22, 1
          %s417 = scalar_select %p416, %s22, 1
          %s418 = scalar_lea.vmem %s3, %s417
        $region64: #{mano1d_forward.3} parent=47 // pred_fallthru
          _
        // Predicated region
        $region65: #{mano1d_forward.3} parent=47 // pred_check
          %p419 = pneg %p146
        $region66: #{mano1d_forward.3} parent=47 // pred_check_branch
          %421 = sbr.rel (%p419) target = $region68
        $region67: #{mano1d_forward.3} parent=47 // pred_region
          %p422 = scmp.lt.s32.totalorder %s22, 1
          %s423 = scalar_select %p422, %s22, 1
          %s424 = scalar_lea.vmem %s4, %s423
        $region68: #{mano1d_forward.3} parent=47 // pred_fallthru
          _
      $region48: #{mano1d_forward.3} parent=5 // pred_fallthru
        _
      %p425 = scmp.le.s32.totalorder 1, %s22
      %p426 = scmp.lt.s32.totalorder %s22, 3
      %p427 = pnand %p425, %p426
      %p428 = pneg %p427
      // Predicated region
      $region69: #{mano1d_forward.3} parent=5 // pred_check
        _
      $region70: #{mano1d_forward.3} parent=5 // pred_check_branch
        %430 = sbr.rel (%p427) target = $region72
      $region71: #{mano1d_forward.3} parent=5 // pred_region
        %s431 = ssub.s32 %s22, 1
        %p432 = scmp.lt.s32.totalorder %s27, 1
        %s433 = scalar_select %p432, %s27, 1
        %s434 = smul.addr %s433, 4
        %s435 = smul.addr %s434, 8
        %s436 = scalar_lea.vmem %s0, %s435
        %p437 = pneg %p48
        %p438 = pneg %p45
        %p439 = scmp.lt.s32.totalorder %s27, 1
        %s440 = scalar_select %p439, %s27, 1
        %s441 = smul.addr %s440, 2
        %s442 = smul.addr %s441, 8
        %s443 = scalar_lea.vmem %s1, %s442
        %p444 = pneg %p74
        %p445 = pneg %p71
        %p446 = scmp.lt.s32.totalorder %s27, 1
        %s447 = scalar_select %p446, %s27, 1
        %s448 = smul.addr %s447, 63
        %s449 = smul.addr %s448, 4
        %s450 = scalar_lea.vmem %s2, %s449
        %p451 = pneg %p100
        %p452 = pneg %p97
        %p453 = scmp.lt.s32.totalorder %s27, 1
        %s454 = scalar_select %p453, %s27, 1
        %s455 = scalar_lea.vmem %s3, %s454
        %p456 = pneg %p126
        %p457 = pneg %p123
        %p458 = scmp.lt.s32.totalorder %s27, 1
        %s459 = scalar_select %p458, %s27, 1
        %s460 = scalar_lea.vmem %s4, %s459
        %p461 = pneg %p152
        %p462 = pneg %p149
        %p463 = pneg %p173
        %p464 = pneg %p170
        %p465 = pneg %p194
        %p466 = pneg %p191
        %p467 = pneg %p215
        %p468 = pneg %p212
        %p469 = pneg %p236
        %p470 = pneg %p233
        %p471 = pneg %p257
        %p472 = pneg %p254
        %p473 = pneg %p278
        %p474 = pneg %p275
        %p475 = pneg %p299
        %p476 = pneg %p296
        %p477 = pneg %p320
        %p478 = pneg %p317
        %p479 = pneg %p346
        %p480 = pneg %p343
        %s481 = sand.u32 %s333, 1
        %s482 = scalar_lea.sflag [#allocation3], %s481
        %s483 = sand.u32 %s333, 1
        %s484 = scalar_lea.vmem [#allocation2], %s483
        %p485 = scmp.lt.s32.totalorder %s27, 1
        %s486 = scalar_select %p485, %s27, 1
        %s487 = smul.addr %s486, 4
        %s488 = smul.addr %s487, 8
        %s489 = scalar_lea.vmem %s0, %s488
        %p490 = scmp.lt.s32.totalorder %s27, 1
        %s491 = scalar_select %p490, %s27, 1
        %s492 = smul.addr %s491, 2
        %s493 = smul.addr %s492, 8
        %s494 = scalar_lea.vmem %s1, %s493
        %p495 = scmp.lt.s32.totalorder %s27, 1
        %s496 = scalar_select %p495, %s27, 1
        %s497 = smul.addr %s496, 63
        %s498 = smul.addr %s497, 4
        %s499 = scalar_lea.vmem %s2, %s498
        %p500 = scmp.lt.s32.totalorder %s27, 1
        %s501 = scalar_select %p500, %s27, 1
        %s502 = scalar_lea.vmem %s3, %s501
        %p503 = scmp.lt.s32.totalorder %s27, 1
        %s504 = scalar_select %p503, %s27, 1
        %s505 = scalar_lea.vmem %s4, %s504
        %v507 = vld [vmem:[%s489] sm:$0xff]
        %v508 = vld [vmem:[%s489 + $0x8] sm:$0xff]
        %v509 = vld [vmem:[%s489 + $0x10] sm:$0xff]
        %v510 = vld [vmem:[%s489 + $0x18] sm:$0xff]
        %v511 = vld [vmem:[%s494] sm:$0xff]
        %v512 = vld [vmem:[%s494 + $0x8] sm:$0xff]
        %v513 = vld [vmem:[%s499] sm:$0xf]
        %v514 = vld [vmem:[%s499 + $0x4] sm:$0xf]
        %v515 = vld [vmem:[%s499 + $0x8] sm:$0xf]
        %v516 = vld [vmem:[%s499 + $0xc] sm:$0xf]
        %v517 = vld [vmem:[%s499 + $0x10] sm:$0xf]
        %v518 = vld [vmem:[%s499 + $0x14] sm:$0xf]
        %v519 = vld [vmem:[%s499 + $0x18] sm:$0xf]
        %v520 = vld [vmem:[%s499 + $0x1c] sm:$0xf]
        %v521 = vld [vmem:[%s499 + $0x20] sm:$0xf]
        %v522 = vld [vmem:[%s499 + $0x24] sm:$0xf]
        %v523 = vld [vmem:[%s499 + $0x28] sm:$0xf]
        %v524 = vld [vmem:[%s499 + $0x2c] sm:$0xf]
        %v525 = vld [vmem:[%s499 + $0x30] sm:$0xf]
        %v526 = vld [vmem:[%s499 + $0x34] sm:$0xf]
        %v527 = vld [vmem:[%s499 + $0x38] sm:$0xf]
        %v528 = vld [vmem:[%s499 + $0x3c] sm:$0xf]
        %v529 = vld [vmem:[%s499 + $0x40] sm:$0xf]
        %v530 = vld [vmem:[%s499 + $0x44] sm:$0xf]
        %v531 = vld [vmem:[%s499 + $0x48] sm:$0xf]
        %v532 = vld [vmem:[%s499 + $0x4c] sm:$0xf]
        %v533 = vld [vmem:[%s499 + $0x50] sm:$0xf]
        %v534 = vld [vmem:[%s499 + $0x54] sm:$0xf]
        %v535 = vld [vmem:[%s499 + $0x58] sm:$0xf]
        %v536 = vld [vmem:[%s499 + $0x5c] sm:$0xf]
        %v537 = vld [vmem:[%s499 + $0x60] sm:$0xf]
        %v538 = vld [vmem:[%s499 + $0x64] sm:$0xf]
        %v539 = vld [vmem:[%s499 + $0x68] sm:$0xf]
        %v540 = vld [vmem:[%s499 + $0x6c] sm:$0xf]
        %v541 = vld [vmem:[%s499 + $0x70] sm:$0xf]
        %v542 = vld [vmem:[%s499 + $0x74] sm:$0xf]
        %v543 = vld [vmem:[%s499 + $0x78] sm:$0xf]
        %v544 = vld [vmem:[%s499 + $0x7c] sm:$0xf]
        %v545 = vld [vmem:[%s499 + $0x80] sm:$0xf]
        %v546 = vld [vmem:[%s499 + $0x84] sm:$0xf]
        %v547 = vld [vmem:[%s499 + $0x88] sm:$0xf]
        %v548 = vld [vmem:[%s499 + $0x8c] sm:$0xf]
        %v549 = vld [vmem:[%s499 + $0x90] sm:$0xf]
        %v550 = vld [vmem:[%s499 + $0x94] sm:$0xf]
        %v551 = vld [vmem:[%s499 + $0x98] sm:$0xf]
        %v552 = vld [vmem:[%s499 + $0x9c] sm:$0xf]
        %v553 = vld [vmem:[%s499 + $0xa0] sm:$0xf]
        %v554 = vld [vmem:[%s499 + $0xa4] sm:$0xf]
        %v555 = vld [vmem:[%s499 + $0xa8] sm:$0xf]
        %v556 = vld [vmem:[%s499 + $0xac] sm:$0xf]
        %v557 = vld [vmem:[%s499 + $0xb0] sm:$0xf]
        %v558 = vld [vmem:[%s499 + $0xb4] sm:$0xf]
        %v559 = vld [vmem:[%s499 + $0xb8] sm:$0xf]
        %v560 = vld [vmem:[%s499 + $0xbc] sm:$0xf]
        %v561 = vld [vmem:[%s499 + $0xc0] sm:$0xf]
        %v562 = vld [vmem:[%s499 + $0xc4] sm:$0xf]
        %v563 = vld [vmem:[%s499 + $0xc8] sm:$0xf]
        %v564 = vld [vmem:[%s499 + $0xcc] sm:$0xf]
        %v565 = vld [vmem:[%s499 + $0xd0] sm:$0xf]
        %v566 = vld [vmem:[%s499 + $0xd4] sm:$0xf]
        %v567 = vld [vmem:[%s499 + $0xd8] sm:$0xf]
        %v568 = vld [vmem:[%s499 + $0xdc] sm:$0xf]
        %v569 = vld [vmem:[%s499 + $0xe0] sm:$0xf]
        %v570 = vld [vmem:[%s499 + $0xe4] sm:$0xf]
        %v571 = vld [vmem:[%s499 + $0xe8] sm:$0xf]
        %v572 = vld [vmem:[%s499 + $0xec] sm:$0xf]
        %v573 = vld [vmem:[%s499 + $0xf0] sm:$0xf]
        %v574 = vld [vmem:[%s499 + $0xf4] sm:$0xf]
        %v575 = vld [vmem:[%s499 + $0xf8] sm:$0x3]
        %v576 = vld [vmem:[%s502] sm:$0x1]
        %v577 = vld [vmem:[%s505] sm:$0x1]
        %v578 = vld [vmem:[%s5] sm:$0xff]
        %v579 = vld [vmem:[%s5 + $0x8] sm:$0xff]
        %v580 = vld [vmem:[%s5 + $0x10] sm:$0xff]
        %v581 = vld [vmem:[%s5 + $0x18] sm:$0xff]
        %v582 = vld [vmem:[%s5 + $0x20] sm:$0xff]
        %v583 = vld [vmem:[%s5 + $0x28] sm:$0xff]
        %v584 = vld [vmem:[%s5 + $0x30] sm:$0xff]
        %v585 = vld [vmem:[%s5 + $0x38] sm:$0xff]
        %v586 = vld [vmem:[%s5 + $0x40] sm:$0xff]
        %v587 = vld [vmem:[%s5 + $0x48] sm:$0xff]
        %v588 = vld [vmem:[%s5 + $0x50] sm:$0xff]
        %v589 = vld [vmem:[%s5 + $0x58] sm:$0xff]
        %v590 = vld [vmem:[%s5 + $0x60] sm:$0xff]
        %v591 = vld [vmem:[%s5 + $0x68] sm:$0xff]
        %v592 = vld [vmem:[%s5 + $0x70] sm:$0xff]
        %v593 = vld [vmem:[%s5 + $0x78] sm:$0xff]
        %v594 = vld [vmem:[%s5 + $0x80] sm:$0xff]
        %v595 = vld [vmem:[%s5 + $0x88] sm:$0xff]
        %v596 = vld [vmem:[%s5 + $0x90] sm:$0xff]
        %v597 = vld [vmem:[%s5 + $0x98] sm:$0xff]
        %v598 = vld [vmem:[%s5 + $0xa0] sm:$0xff]
        %v599 = vld [vmem:[%s5 + $0xa8] sm:$0xff]
        %v600 = vld [vmem:[%s5 + $0xb0] sm:$0xff]
        %v601 = vld [vmem:[%s5 + $0xb8] sm:$0xff]
        %v602 = vld [vmem:[%s5 + $0xc0] sm:$0x33]
        %v603 = vld [vmem:[%s5 + $0xc8] sm:$0x33]
        %v604 = vld [vmem:[%s6] sm:$0xff]
        %v605 = vld [vmem:[%s6 + $0x8] sm:$0xff]
        %v606 = vld [vmem:[%s6 + $0x10] sm:$0xff]
        %v607 = vld [vmem:[%s6 + $0x18] sm:$0xff]
        %v608 = vld [vmem:[%s6 + $0x20] sm:$0xff]
        %v609 = vld [vmem:[%s6 + $0x28] sm:$0xff]
        %v610 = vld [vmem:[%s6 + $0x30] sm:$0xff]
        %v611 = vld [vmem:[%s6 + $0x38] sm:$0xff]
        %v612 = vld [vmem:[%s6 + $0x40] sm:$0xff]
        %v613 = vld [vmem:[%s6 + $0x48] sm:$0xff]
        %v614 = vld [vmem:[%s6 + $0x50] sm:$0xff]
        %v615 = vld [vmem:[%s6 + $0x58] sm:$0xff]
        %v616 = vld [vmem:[%s6 + $0x60] sm:$0xf]
        %618 = vset.pattern.permute.xlu0 0
        %619 = vperm.xlu0 %618, %v604
        %v620 = vpop.permute.xlu0 %619
        %623 = vset.pattern.permute.xlu0 0
        %624 = vperm.xlu0 %623, %v605
        %v625 = vpop.permute.xlu0 %624
        %628 = vset.pattern.permute.xlu0 0
        %629 = vperm.xlu0 %628, %v606
        %v630 = vpop.permute.xlu0 %629
        %633 = vset.pattern.permute.xlu0 0
        %634 = vperm.xlu0 %633, %v607
        %v635 = vpop.permute.xlu0 %634
        %638 = vset.pattern.permute.xlu0 0
        %639 = vperm.xlu0 %638, %v608
        %v640 = vpop.permute.xlu0 %639
        %643 = vset.pattern.permute.xlu0 0
        %644 = vperm.xlu0 %643, %v609
        %v645 = vpop.permute.xlu0 %644
        %648 = vset.pattern.permute.xlu0 0
        %649 = vperm.xlu0 %648, %v610
        %v650 = vpop.permute.xlu0 %649
        %653 = vset.pattern.permute.xlu0 0
        %654 = vperm.xlu0 %653, %v611
        %v655 = vpop.permute.xlu0 %654
        %658 = vset.pattern.permute.xlu0 0
        %659 = vperm.xlu0 %658, %v612
        %v660 = vpop.permute.xlu0 %659
        %663 = vset.pattern.permute.xlu0 0
        %664 = vperm.xlu0 %663, %v613
        %v665 = vpop.permute.xlu0 %664
        %668 = vset.pattern.permute.xlu0 0
        %669 = vperm.xlu0 %668, %v614
        %v670 = vpop.permute.xlu0 %669
        %673 = vset.pattern.permute.xlu0 0
        %674 = vperm.xlu0 %673, %v615
        %v675 = vpop.permute.xlu0 %674
        %678 = vset.pattern.permute.xlu0 0
        %679 = vperm.xlu0 %678, %v616
        %v680 = vpop.permute.xlu0 %679
        %v708 = vunpack.c.l.b16 %v578
        %v709 = vunpack.c.h.b16 %v578
        %v710 = vunpack.c.l.b16 %v579
        %v711 = vunpack.c.h.b16 %v579
        %v712 = vunpack.c.l.b16 %v580
        %v713 = vunpack.c.h.b16 %v580
        %v714 = vunpack.c.l.b16 %v581
        %v715 = vunpack.c.h.b16 %v581
        %v716 = vunpack.c.l.b16 %v582
        %v717 = vunpack.c.h.b16 %v582
        %v718 = vunpack.c.l.b16 %v583
        %v719 = vunpack.c.h.b16 %v583
        %v720 = vunpack.c.l.b16 %v584
        %v721 = vunpack.c.h.b16 %v584
        %v722 = vunpack.c.l.b16 %v585
        %v723 = vunpack.c.h.b16 %v585
        %v724 = vunpack.c.l.b16 %v586
        %v725 = vunpack.c.h.b16 %v586
        %v726 = vunpack.c.l.b16 %v587
        %v727 = vunpack.c.h.b16 %v587
        %v728 = vunpack.c.l.b16 %v588
        %v729 = vunpack.c.h.b16 %v588
        %v730 = vunpack.c.l.b16 %v589
        %v731 = vunpack.c.h.b16 %v589
        %v732 = vunpack.c.l.b16 %v590
        %v733 = vunpack.c.h.b16 %v590
        %v734 = vunpack.c.l.b16 %v591
        %v735 = vunpack.c.h.b16 %v591
        %v736 = vunpack.c.l.b16 %v592
        %v737 = vunpack.c.h.b16 %v592
        %v738 = vunpack.c.l.b16 %v593
        %v739 = vunpack.c.h.b16 %v593
        %v740 = vunpack.c.l.b16 %v594
        %v741 = vunpack.c.h.b16 %v594
        %v742 = vunpack.c.l.b16 %v595
        %v743 = vunpack.c.h.b16 %v595
        %v744 = vunpack.c.l.b16 %v596
        %v745 = vunpack.c.h.b16 %v596
        %v746 = vunpack.c.l.b16 %v597
        %v747 = vunpack.c.h.b16 %v597
        %v748 = vunpack.c.l.b16 %v598
        %v749 = vunpack.c.h.b16 %v598
        %v750 = vunpack.c.l.b16 %v599
        %v751 = vunpack.c.h.b16 %v599
        %v752 = vunpack.c.l.b16 %v600
        %v753 = vunpack.c.h.b16 %v600
        %v754 = vunpack.c.l.b16 %v601
        %v755 = vunpack.c.h.b16 %v601
        %v756 = vunpack.c.l.b16 %v602
        %v757 = vunpack.c.h.b16 %v602
        %v758 = vunpack.c.l.b16 %v603
        %v759 = vunpack.c.h.b16 %v603
        %v760 = vpack.c.b16 %v712, %v708
        %v761 = vpack.c.b16 %v713, %v709
        %v762 = vpack.c.b16 %v714, %v710
        %v763 = vpack.c.b16 %v715, %v711
        %v764 = vpack.c.b16 %v720, %v716
        %v765 = vpack.c.b16 %v721, %v717
        %v766 = vpack.c.b16 %v722, %v718
        %v767 = vpack.c.b16 %v723, %v719
        %v768 = vpack.c.b16 %v728, %v724
        %v769 = vpack.c.b16 %v729, %v725
        %v770 = vpack.c.b16 %v730, %v726
        %v771 = vpack.c.b16 %v731, %v727
        %v772 = vpack.c.b16 %v736, %v732
        %v773 = vpack.c.b16 %v737, %v733
        %v774 = vpack.c.b16 %v738, %v734
        %v775 = vpack.c.b16 %v739, %v735
        %v776 = vpack.c.b16 %v744, %v740
        %v777 = vpack.c.b16 %v745, %v741
        %v778 = vpack.c.b16 %v746, %v742
        %v779 = vpack.c.b16 %v747, %v743
        %v780 = vpack.c.b16 %v752, %v748
        %v781 = vpack.c.b16 %v753, %v749
        %v782 = vpack.c.b16 %v754, %v750
        %v783 = vpack.c.b16 %v755, %v751
        %v784 = vpack.c.b16 %v756, %v756
        %v785 = vpack.c.b16 %v757, %v757
        %v786 = vpack.c.b16 %v758, %v758
        %v787 = vpack.c.b16 %v759, %v759
        %v872 = vunpack.c.l.b16 %v513
        %v873 = vunpack.c.l.b16 %v514
        %v874 = vunpack.c.l.b16 %v515
        %v875 = vunpack.c.l.b16 %v516
        %v876 = vunpack.c.l.b16 %v517
        %v877 = vunpack.c.l.b16 %v518
        %v878 = vunpack.c.l.b16 %v519
        %v879 = vunpack.c.l.b16 %v520
        %v880 = vunpack.c.l.b16 %v521
        %v881 = vunpack.c.l.b16 %v522
        %v882 = vunpack.c.l.b16 %v523
        %v883 = vunpack.c.l.b16 %v524
        %v884 = vunpack.c.l.b16 %v525
        %v885 = vunpack.c.l.b16 %v526
        %v886 = vunpack.c.l.b16 %v527
        %v887 = vunpack.c.l.b16 %v528
        %v888 = vunpack.c.l.b16 %v529
        %v889 = vunpack.c.l.b16 %v530
        %v890 = vunpack.c.l.b16 %v531
        %v891 = vunpack.c.l.b16 %v532
        %v892 = vunpack.c.l.b16 %v533
        %v893 = vunpack.c.l.b16 %v534
        %v894 = vunpack.c.l.b16 %v535
        %v895 = vunpack.c.l.b16 %v536
        %v896 = vunpack.c.l.b16 %v537
        %v897 = vunpack.c.l.b16 %v538
        %v898 = vunpack.c.l.b16 %v539
        %v899 = vunpack.c.l.b16 %v540
        %v900 = vunpack.c.l.b16 %v541
        %v901 = vunpack.c.l.b16 %v542
        %v902 = vunpack.c.l.b16 %v543
        %v903 = vunpack.c.l.b16 %v544
        %v904 = vunpack.c.l.b16 %v545
        %v905 = vunpack.c.l.b16 %v546
        %v906 = vunpack.c.l.b16 %v547
        %v907 = vunpack.c.l.b16 %v548
        %v908 = vunpack.c.l.b16 %v549
        %v909 = vunpack.c.l.b16 %v550
        %v910 = vunpack.c.l.b16 %v551
        %v911 = vunpack.c.l.b16 %v552
        %v912 = vunpack.c.l.b16 %v553
        %v913 = vunpack.c.l.b16 %v554
        %v914 = vunpack.c.l.b16 %v555
        %v915 = vunpack.c.l.b16 %v556
        %v916 = vunpack.c.l.b16 %v557
        %v917 = vunpack.c.l.b16 %v558
        %v918 = vunpack.c.l.b16 %v559
        %v919 = vunpack.c.l.b16 %v560
        %v920 = vunpack.c.l.b16 %v561
        %v921 = vunpack.c.l.b16 %v562
        %v922 = vunpack.c.l.b16 %v563
        %v923 = vunpack.c.l.b16 %v564
        %v924 = vunpack.c.l.b16 %v565
        %v925 = vunpack.c.l.b16 %v566
        %v926 = vunpack.c.l.b16 %v567
        %v927 = vunpack.c.l.b16 %v568
        %v928 = vunpack.c.l.b16 %v569
        %v929 = vunpack.c.l.b16 %v570
        %v930 = vunpack.c.l.b16 %v571
        %v931 = vunpack.c.l.b16 %v572
        %v932 = vunpack.c.l.b16 %v573
        %v933 = vunpack.c.l.b16 %v574
        %v934 = vunpack.c.l.b16 %v575
        %v935 = vpack.c.b16 %v873, %v872
        %v936 = vpack.c.b16 %v875, %v874
        %v937 = vpack.c.b16 %v877, %v876
        %v938 = vpack.c.b16 %v879, %v878
        %v939 = vpack.c.b16 %v881, %v880
        %v940 = vpack.c.b16 %v883, %v882
        %v941 = vpack.c.b16 %v885, %v884
        %v942 = vpack.c.b16 %v887, %v886
        %v943 = vpack.c.b16 %v889, %v888
        %v944 = vpack.c.b16 %v891, %v890
        %v945 = vpack.c.b16 %v893, %v892
        %v946 = vpack.c.b16 %v895, %v894
        %v947 = vpack.c.b16 %v897, %v896
        %v948 = vpack.c.b16 %v899, %v898
        %v949 = vpack.c.b16 %v901, %v900
        %v950 = vpack.c.b16 %v903, %v902
        %v951 = vpack.c.b16 %v905, %v904
        %v952 = vpack.c.b16 %v907, %v906
        %v953 = vpack.c.b16 %v909, %v908
        %v954 = vpack.c.b16 %v911, %v910
        %v955 = vpack.c.b16 %v913, %v912
        %v956 = vpack.c.b16 %v915, %v914
        %v957 = vpack.c.b16 %v917, %v916
        %v958 = vpack.c.b16 %v919, %v918
        %v959 = vpack.c.b16 %v921, %v920
        %v960 = vpack.c.b16 %v923, %v922
        %v961 = vpack.c.b16 %v925, %v924
        %v962 = vpack.c.b16 %v927, %v926
        %v963 = vpack.c.b16 %v929, %v928
        %v964 = vpack.c.b16 %v931, %v930
        %v965 = vpack.c.b16 %v933, %v932
        %v966 = vpack.c.b16 %v934, %v934
        %vm998 = vcmask 949248
        %v1000 = vsel %vm998, %v763, 0
        %v1003 = vsel %vm998, %v767, 0
        %v1006 = vsel %vm998, %v771, 0
        %v1009 = vsel %vm998, %v775, 0
        %v1012 = vsel %vm998, %v779, 0
        %v1015 = vsel %vm998, %v783, 0
        %v1018 = vsel %vm998, %v787, 0
        %vm1020 = vcmask 1041408
        %v1022 = vsel %vm1020, %v966, 0
        %1024 = vmatprep.subr.bf16.mxu0 0
        %1025 = vmatpush1.bf16.msra.mxu0 %v942
        %1026 = vmatprep.subr.bf16.mxu0 0
        %1027 = vmatpush1.bf16.msra.mxu0 %v941
        %1028 = vmatprep.subr.bf16.mxu0 0
        %1029 = vmatpush1.bf16.msra.mxu0 %v940
        %1030 = vmatprep.subr.bf16.mxu0 0
        %1031 = vmatpush1.bf16.msra.mxu0 %v939
        %1032 = vmatprep.subr.bf16.mxu0 0
        %1033 = vmatpush1.bf16.msra.mxu0 %v938
        %1034 = vmatprep.subr.bf16.mxu0 0
        %1035 = vmatpush1.bf16.msra.mxu0 %v937
        %1036 = vmatprep.subr.bf16.mxu0 0
        %1037 = vmatpush1.bf16.msra.mxu0 %v936
        %1038 = vmatprep.subr.bf16.mxu0 0
        %1039 = vmatpush1.bf16.msra.mxu0 %v935
        %1040 = vmatprep.subr.bf16.mxu0 0
        %1041 = vmatpush2.bf16.msra.mxu0 %v950
        %1042 = vmatprep.subr.bf16.mxu0 0
        %1043 = vmatpush2.bf16.msra.mxu0 %v949
        %1044 = vmatprep.subr.bf16.mxu0 0
        %1045 = vmatpush2.bf16.msra.mxu0 %v948
        %1046 = vmatprep.subr.bf16.mxu0 0
        %1047 = vmatpush2.bf16.msra.mxu0 %v947
        %1048 = vmatprep.subr.bf16.mxu0 0
        %1049 = vmatpush2.bf16.msra.mxu0 %v946
        %1050 = vmatprep.subr.bf16.mxu0 0
        %1051 = vmatpush2.bf16.msra.mxu0 %v945
        %1052 = vmatprep.subr.bf16.mxu0 0
        %1053 = vmatpush2.bf16.msra.mxu0 %v944
        %1054 = vmatprep.subr.bf16.mxu0 0
        %1055 = vmatpush2.bf16.msra.mxu0 %v943
        %1056 = vmatprep.mubr.bf16.mxu0 %v761
        %1057 = vmatmul.mubr.bf16.gmra.mxu0 %v760
        %v1058 = vpop.f32.mrf.mxu0
        %v1059 = vadd.f32 %v620, %v1058
        %v1060 = vpop.f32.mrf.mxu0
        %v1061 = vpop.f32.mrf.mxu0
        %v1062 = vadd.f32 %v625, %v1061
        %v1063 = vpop.f32.mrf.mxu0
        %1064 = vmatprep.mubr.bf16.mxu0 %v765
        %1065 = vmatmul.mubr.bf16.gmra.mxu0 %v764
        %v1066 = vpop.f32.mrf.mxu0
        %v1067 = vadd.f32 %v630, %v1066
        %v1068 = vpop.f32.mrf.mxu0
        %v1069 = vpop.f32.mrf.mxu0
        %v1070 = vadd.f32 %v635, %v1069
        %v1071 = vpop.f32.mrf.mxu0
        %1072 = vmatprep.mubr.bf16.mxu0 %v769
        %1073 = vmatmul.mubr.bf16.gmra.mxu0 %v768
        %v1074 = vpop.f32.mrf.mxu0
        %v1075 = vadd.f32 %v640, %v1074
        %v1076 = vpop.f32.mrf.mxu0
        %v1077 = vpop.f32.mrf.mxu0
        %v1078 = vadd.f32 %v645, %v1077
        %v1079 = vpop.f32.mrf.mxu0
        %1080 = vmatprep.mubr.bf16.mxu0 %v773
        %1081 = vmatmul.mubr.bf16.gmra.mxu0 %v772
        %v1082 = vpop.f32.mrf.mxu0
        %v1083 = vadd.f32 %v650, %v1082
        %v1084 = vpop.f32.mrf.mxu0
        %v1085 = vpop.f32.mrf.mxu0
        %v1086 = vadd.f32 %v655, %v1085
        %v1087 = vpop.f32.mrf.mxu0
        %1088 = vmatprep.mubr.bf16.mxu0 %v777
        %1089 = vmatmul.mubr.bf16.gmra.mxu0 %v776
        %v1090 = vpop.f32.mrf.mxu0
        %v1091 = vadd.f32 %v660, %v1090
        %v1092 = vpop.f32.mrf.mxu0
        %v1093 = vpop.f32.mrf.mxu0
        %v1094 = vadd.f32 %v665, %v1093
        %v1095 = vpop.f32.mrf.mxu0
        %1096 = vmatprep.mubr.bf16.mxu0 %v781
        %1097 = vmatmul.mubr.bf16.gmra.mxu0 %v780
        %v1098 = vpop.f32.mrf.mxu0
        %v1099 = vadd.f32 %v670, %v1098
        %v1100 = vpop.f32.mrf.mxu0
        %v1101 = vpop.f32.mrf.mxu0
        %v1102 = vadd.f32 %v675, %v1101
        %v1103 = vpop.f32.mrf.mxu0
        %1104 = vmatprep.mubr.bf16.mxu0 %v785
        %1105 = vmatmul.mubr.bf16.gmra.mxu0 %v784
        %v1106 = vpop.f32.mrf.mxu0
        %v1107 = vadd.f32 %v680, %v1106
        %v1108 = vpop.f32.mrf.mxu0
        %v1109 = vpop.f32.mrf.mxu0
        %v1110 = vpop.f32.mrf.mxu0
        %1111 = vdwg.mxu0
        %1112 = vmatprep.subr.bf16.mxu0 0
        %1113 = vmatpush1.bf16.msra.mxu0 %v958
        %1114 = vmatprep.subr.bf16.mxu0 0
        %1115 = vmatpush1.bf16.msra.mxu0 %v957
        %1116 = vmatprep.subr.bf16.mxu0 0
        %1117 = vmatpush1.bf16.msra.mxu0 %v956
        %1118 = vmatprep.subr.bf16.mxu0 0
        %1119 = vmatpush1.bf16.msra.mxu0 %v955
        %1120 = vmatprep.subr.bf16.mxu0 0
        %1121 = vmatpush1.bf16.msra.mxu0 %v954
        %1122 = vmatprep.subr.bf16.mxu0 0
        %1123 = vmatpush1.bf16.msra.mxu0 %v953
        %1124 = vmatprep.subr.bf16.mxu0 0
        %1125 = vmatpush1.bf16.msra.mxu0 %v952
        %1126 = vmatprep.subr.bf16.mxu0 0
        %1127 = vmatpush1.bf16.msra.mxu0 %v951
        %1128 = vmatprep.subr.bf16.mxu0 0
        %1129 = vmatpush2.bf16.msra.mxu0 %v1022
        %1130 = vmatprep.subr.bf16.mxu0 0
        %1131 = vmatpush2.bf16.msra.mxu0 %v965
        %1132 = vmatprep.subr.bf16.mxu0 0
        %1133 = vmatpush2.bf16.msra.mxu0 %v964
        %1134 = vmatprep.subr.bf16.mxu0 0
        %1135 = vmatpush2.bf16.msra.mxu0 %v963
        %1136 = vmatprep.subr.bf16.mxu0 0
        %1137 = vmatpush2.bf16.msra.mxu0 %v962
        %1138 = vmatprep.subr.bf16.mxu0 0
        %1139 = vmatpush2.bf16.msra.mxu0 %v961
        %1140 = vmatprep.subr.bf16.mxu0 0
        %1141 = vmatpush2.bf16.msra.mxu0 %v960
        %1142 = vmatprep.subr.bf16.mxu0 0
        %1143 = vmatpush2.bf16.msra.mxu0 %v959
        %1144 = vmatprep.mubr.bf16.mxu0 %v1000
        %1145 = vmatmul.mubr.bf16.gmra.mxu0 %v762
        %v1146 = vpop.f32.mrf.mxu0
        %v1147 = vadd.f32 %v1059, %v1146
        %v1148 = vpop.f32.mrf.mxu0
        %v1149 = vpop.f32.mrf.mxu0
        %v1150 = vadd.f32 %v1062, %v1149
        %v1151 = vpop.f32.mrf.mxu0
        %1152 = vmatprep.mubr.bf16.mxu0 %v1003
        %1153 = vmatmul.mubr.bf16.gmra.mxu0 %v766
        %v1154 = vpop.f32.mrf.mxu0
        %v1155 = vadd.f32 %v1067, %v1154
        %v1156 = vpop.f32.mrf.mxu0
        %v1157 = vpop.f32.mrf.mxu0
        %v1158 = vadd.f32 %v1070, %v1157
        %v1159 = vpop.f32.mrf.mxu0
        %1160 = vmatprep.mubr.bf16.mxu0 %v1006
        %1161 = vmatmul.mubr.bf16.gmra.mxu0 %v770
        %v1162 = vpop.f32.mrf.mxu0
        %v1163 = vadd.f32 %v1075, %v1162
        %v1164 = vpop.f32.mrf.mxu0
        %v1165 = vpop.f32.mrf.mxu0
        %v1166 = vadd.f32 %v1078, %v1165
        %v1167 = vpop.f32.mrf.mxu0
        %1168 = vmatprep.mubr.bf16.mxu0 %v1009
        %1169 = vmatmul.mubr.bf16.gmra.mxu0 %v774
        %v1170 = vpop.f32.mrf.mxu0
        %v1171 = vadd.f32 %v1083, %v1170
        %v1172 = vpop.f32.mrf.mxu0
        %v1173 = vpop.f32.mrf.mxu0
        %v1174 = vadd.f32 %v1086, %v1173
        %v1175 = vpop.f32.mrf.mxu0
        %1176 = vmatprep.mubr.bf16.mxu0 %v1012
        %1177 = vmatmul.mubr.bf16.gmra.mxu0 %v778
        %v1178 = vpop.f32.mrf.mxu0
        %v1179 = vadd.f32 %v1091, %v1178
        %v1180 = vpop.f32.mrf.mxu0
        %v1181 = vpop.f32.mrf.mxu0
        %v1182 = vadd.f32 %v1094, %v1181
        %v1183 = vpop.f32.mrf.mxu0
        %1184 = vmatprep.mubr.bf16.mxu0 %v1015
        %1185 = vmatmul.mubr.bf16.gmra.mxu0 %v782
        %v1186 = vpop.f32.mrf.mxu0
        %v1187 = vadd.f32 %v1099, %v1186
        %v1188 = vpop.f32.mrf.mxu0
        %v1189 = vpop.f32.mrf.mxu0
        %v1190 = vadd.f32 %v1102, %v1189
        %v1191 = vpop.f32.mrf.mxu0
        %1192 = vmatprep.mubr.bf16.mxu0 %v1018
        %1193 = vmatmul.mubr.bf16.gmra.mxu0 %v786
        %v1194 = vpop.f32.mrf.mxu0
        %v1195 = vadd.f32 %v1107, %v1194
        %v1196 = vpop.f32.mrf.mxu0
        %v1197 = vpop.f32.mrf.mxu0
        %v1198 = vpop.f32.mrf.mxu0
        %1199 = vdwg.mxu0
        %v1200 = vpack.c.bf16 %v1150, %v1147
        %v1201 = vpack.c.bf16 %v1158, %v1155
        %v1202 = vpack.c.bf16 %v1166, %v1163
        %v1203 = vpack.c.bf16 %v1174, %v1171
        %v1204 = vpack.c.bf16 %v1182, %v1179
        %v1205 = vpack.c.bf16 %v1190, %v1187
        %v1206 = vpack.c.bf16 %v1195, %v1195
        %v1207 = vpack.c.bf16 %v512, %v511
        %1208 = vxpose.xlu0.c.b16.start [1/8] %v1207, 128
        %1209 = vxpose.xlu0.c.b16.cont [2/8] 0, 128
        %1210 = vxpose.xlu0.c.b16.cont [3/8] 0, 128
        %1211 = vxpose.xlu0.c.b16.cont [4/8] 0, 128
        %1212 = vxpose.xlu0.c.b16.cont [5/8] 0, 128
        %1213 = vxpose.xlu0.c.b16.cont [6/8] 0, 128
        %1214 = vxpose.xlu0.c.b16.cont [7/8] 0, 128
        %1215 = vxpose.xlu0.c.b16.end [8/8] 0, 128
        %v1216 = vpop.trf.xlu0
        %v1217 = vpop.trf.xlu0
        %v1218 = vpop.trf.xlu0
        %v1219 = vpop.trf.xlu0
        %v1220 = vpop.trf.xlu0
        %v1221 = vpop.trf.xlu0
        %v1222 = vpop.trf.xlu0
        %v1223 = vpop.trf.xlu0
        %vm1224 = vcmask 130048
        %v1226 = vsel %vm1224, %v1216, 0
        %v1229 = vsel %vm1224, %v1217, 0
        %1231 = vmatprep.subr.bf16.mxu0 0
        %1232 = vmatpush1.bf16.msra.mxu0 0
        %1233 = vmatprep.subr.bf16.mxu0 0
        %1234 = vmatpush1.bf16.msra.mxu0 0
        %1235 = vmatprep.subr.bf16.mxu0 0
        %1236 = vmatpush1.bf16.msra.mxu0 0
        %1237 = vmatprep.subr.bf16.mxu0 0
        %1238 = vmatpush1.bf16.msra.mxu0 0
        %1239 = vmatprep.subr.bf16.mxu0 0
        %1240 = vmatpush1.bf16.msra.mxu0 0
        %1241 = vmatprep.subr.bf16.mxu0 0
        %1242 = vmatpush1.bf16.msra.mxu0 0
        %1243 = vmatprep.subr.bf16.mxu0 0
        %1244 = vmatpush1.bf16.msra.mxu0 0
        %1245 = vmatprep.subr.bf16.mxu0 0
        %1246 = vmatpush1.bf16.msra.mxu0 %v1207
        %1247 = vmatprep.subr.bf16.mxu0 0
        %1248 = vmatpush2.bf16.msra.mxu0 0
        %1249 = vmatprep.subr.bf16.mxu0 0
        %1250 = vmatpush2.bf16.msra.mxu0 0
        %1251 = vmatprep.subr.bf16.mxu0 0
        %1252 = vmatpush2.bf16.msra.mxu0 0
        %1253 = vmatprep.subr.bf16.mxu0 0
        %1254 = vmatpush2.bf16.msra.mxu0 0
        %1255 = vmatprep.subr.bf16.mxu0 0
        %1256 = vmatpush2.bf16.msra.mxu0 0
        %1257 = vmatprep.subr.bf16.mxu0 0
        %1258 = vmatpush2.bf16.msra.mxu0 0
        %1259 = vmatprep.subr.bf16.mxu0 0
        %1260 = vmatpush2.bf16.msra.mxu0 0
        %1261 = vmatprep.subr.bf16.mxu0 0
        %1262 = vmatpush2.bf16.msra.mxu0 0
        %1263 = vmatprep.mubr.bf16.mxu0 0
        %1264 = vmatmul.mubr.bf16.gmra.mxu0 %v1226
        %v1265 = vpop.f32.mrf.mxu0
        %v1266 = vadd.f32 0.0, %v1265
        %v1267 = vpop.f32.mrf.mxu0
        %v1268 = vpop.f32.mrf.mxu0
        %v1269 = vadd.f32 0.0, %v1268
        %v1270 = vpop.f32.mrf.mxu0
        %1271 = vmatprep.mubr.bf16.mxu0 0
        %1272 = vmatmul.mubr.bf16.gmra.mxu0 %v1229
        %v1273 = vpop.f32.mrf.mxu0
        %v1274 = vadd.f32 0.0, %v1273
        %v1275 = vpop.f32.mrf.mxu0
        %v1276 = vpop.f32.mrf.mxu0
        %v1277 = vadd.f32 0.0, %v1276
        %v1278 = vpop.f32.mrf.mxu0
        %1279 = vdwg.mxu0
        %1280 = vxpose.xlu0.c.b16.start [1/8] %v1200, 128
        %1281 = vxpose.xlu0.c.b16.cont [2/8] %v1201, 128
        %1282 = vxpose.xlu0.c.b16.cont [3/8] %v1202, 128
        %1283 = vxpose.xlu0.c.b16.cont [4/8] %v1203, 128
        %1284 = vxpose.xlu0.c.b16.cont [5/8] %v1204, 128
        %1285 = vxpose.xlu0.c.b16.cont [6/8] %v1205, 128
        %1286 = vxpose.xlu0.c.b16.cont [7/8] %v1206, 128
        %1287 = vxpose.xlu0.c.b16.end [8/8] 0, 128
        %v1288 = vpop.trf.xlu0
        %v1289 = vpop.trf.xlu0
        %v1290 = vpop.trf.xlu0
        %v1291 = vpop.trf.xlu0
        %v1292 = vpop.trf.xlu0
        %v1293 = vpop.trf.xlu0
        %v1294 = vpop.trf.xlu0
        %v1295 = vpop.trf.xlu0
        %vm1296 = vcmask 818176
        %v1298 = vsel %vm1296, %v1288, 0
        %v1301 = vsel %vm1296, %v1289, 0
        %v1304 = vsel %vm1020, %v1206, 0
        %1306 = vmatprep.subr.bf16.mxu0 0
        %1307 = vmatpush1.bf16.msra.mxu0 0
        %1308 = vmatprep.subr.bf16.mxu0 0
        %1309 = vmatpush1.bf16.msra.mxu0 %v1304
        %1310 = vmatprep.subr.bf16.mxu0 0
        %1311 = vmatpush1.bf16.msra.mxu0 %v1205
        %1312 = vmatprep.subr.bf16.mxu0 0
        %1313 = vmatpush1.bf16.msra.mxu0 %v1204
        %1314 = vmatprep.subr.bf16.mxu0 0
        %1315 = vmatpush1.bf16.msra.mxu0 %v1203
        %1316 = vmatprep.subr.bf16.mxu0 0
        %1317 = vmatpush1.bf16.msra.mxu0 %v1202
        %1318 = vmatprep.subr.bf16.mxu0 0
        %1319 = vmatpush1.bf16.msra.mxu0 %v1201
        %1320 = vmatprep.subr.bf16.mxu0 0
        %1321 = vmatpush1.bf16.msra.mxu0 %v1200
        %1322 = vmatprep.subr.bf16.mxu0 0
        %1323 = vmatpush2.bf16.msra.mxu0 0
        %1324 = vmatprep.subr.bf16.mxu0 0
        %1325 = vmatpush2.bf16.msra.mxu0 0
        %1326 = vmatprep.subr.bf16.mxu0 0
        %1327 = vmatpush2.bf16.msra.mxu0 0
        %1328 = vmatprep.subr.bf16.mxu0 0
        %1329 = vmatpush2.bf16.msra.mxu0 0
        %1330 = vmatprep.subr.bf16.mxu0 0
        %1331 = vmatpush2.bf16.msra.mxu0 0
        %1332 = vmatprep.subr.bf16.mxu0 0
        %1333 = vmatpush2.bf16.msra.mxu0 0
        %1334 = vmatprep.subr.bf16.mxu0 0
        %1335 = vmatpush2.bf16.msra.mxu0 0
        %1336 = vmatprep.subr.bf16.mxu0 0
        %1337 = vmatpush2.bf16.msra.mxu0 0
        %1338 = vmatprep.mubr.bf16.mxu0 0
        %1339 = vmatmul.mubr.bf16.gmra.mxu0 %v1298
        %v1340 = vpop.f32.mrf.mxu0
        %v1341 = vadd.f32 %v1266, %v1340
        %v1342 = vpop.f32.mrf.mxu0
        %v1343 = vpop.f32.mrf.mxu0
        %v1344 = vadd.f32 %v1269, %v1343
        %v1345 = vpop.f32.mrf.mxu0
        %1346 = vmatprep.mubr.bf16.mxu0 0
        %1347 = vmatmul.mubr.bf16.gmra.mxu0 %v1301
        %v1348 = vpop.f32.mrf.mxu0
        %v1349 = vadd.f32 %v1274, %v1348
        %v1350 = vpop.f32.mrf.mxu0
        %v1351 = vpop.f32.mrf.mxu0
        %v1352 = vadd.f32 %v1277, %v1351
        %v1353 = vpop.f32.mrf.mxu0
        %1354 = vdwg.mxu0
        %v1355 = vmul.f32 %v1341, 0.03125
        %v1356 = vmul.f32 %v1344, 0.03125
        %v1357 = vmul.f32 %v1349, 0.03125
        %v1358 = vmul.f32 %v1352, 0.03125
        %v1359 = vpack.c.bf16 %v1356, %v1355
        %v1360 = vpack.c.bf16 %v1358, %v1357
        %v1361 = vpack.c.bf16 %v508, %v507
        %v1362 = vpack.c.bf16 %v510, %v509
        %v1363 = vld [vmem:[%s7] sm:$0xf]
        %v1364 = vld [vmem:[%s7 + $0x4] sm:$0xf]
        %v1365 = vld [vmem:[%s7 + $0x8] sm:$0xf]
        %v1366 = vld [vmem:[%s7 + $0xc] sm:$0xf]
        %v1367 = vld [vmem:[%s7 + $0x10] sm:$0xf]
        %v1368 = vld [vmem:[%s7 + $0x14] sm:$0xf]
        %v1369 = vld [vmem:[%s7 + $0x18] sm:$0xf]
        %v1370 = vld [vmem:[%s7 + $0x1c] sm:$0xf]
        %v1371 = vld [vmem:[%s7 + $0x20] sm:$0xf]
        %v1372 = vld [vmem:[%s7 + $0x24] sm:$0xf]
        %v1373 = vld [vmem:[%s7 + $0x28] sm:$0xf]
        %v1374 = vld [vmem:[%s7 + $0x2c] sm:$0xf]
        %v1375 = vld [vmem:[%s7 + $0x30] sm:$0xf]
        %v1376 = vld [vmem:[%s7 + $0x34] sm:$0xf]
        %v1377 = vld [vmem:[%s7 + $0x38] sm:$0xf]
        %v1378 = vld [vmem:[%s7 + $0x3c] sm:$0xf]
        %v1379 = vld [vmem:[%s7 + $0x40] sm:$0xf]
        %v1380 = vld [vmem:[%s7 + $0x44] sm:$0xf]
        %v1381 = vld [vmem:[%s7 + $0x48] sm:$0xf]
        %v1382 = vld [vmem:[%s7 + $0x4c] sm:$0xf]
        %v1383 = vld [vmem:[%s7 + $0x50] sm:$0xf]
        %v1384 = vld [vmem:[%s7 + $0x54] sm:$0xf]
        %v1385 = vld [vmem:[%s7 + $0x58] sm:$0xf]
        %v1386 = vld [vmem:[%s7 + $0x5c] sm:$0xf]
        %v1387 = vld [vmem:[%s7 + $0x60] sm:$0xf]
        %v1388 = vld [vmem:[%s7 + $0x64] sm:$0xf]
        %v1389 = vld [vmem:[%s7 + $0x68] sm:$0xf]
        %v1390 = vld [vmem:[%s7 + $0x6c] sm:$0xf]
        %v1391 = vld [vmem:[%s7 + $0x70] sm:$0xf]
        %v1392 = vld [vmem:[%s7 + $0x74] sm:$0xf]
        %v1393 = vld [vmem:[%s7 + $0x78] sm:$0xf]
        %v1394 = vld [vmem:[%s7 + $0x7c] sm:$0xf]
        %v1427 = vunpack.c.l.b16 %v1363
        %v1428 = vunpack.c.l.b16 %v1364
        %v1429 = vunpack.c.l.b16 %v1365
        %v1430 = vunpack.c.l.b16 %v1366
        %v1431 = vunpack.c.l.b16 %v1367
        %v1432 = vunpack.c.l.b16 %v1368
        %v1433 = vunpack.c.l.b16 %v1369
        %v1434 = vunpack.c.l.b16 %v1370
        %v1435 = vunpack.c.l.b16 %v1371
        %v1436 = vunpack.c.l.b16 %v1372
        %v1437 = vunpack.c.l.b16 %v1373
        %v1438 = vunpack.c.l.b16 %v1374
        %v1439 = vunpack.c.l.b16 %v1375
        %v1440 = vunpack.c.l.b16 %v1376
        %v1441 = vunpack.c.l.b16 %v1377
        %v1442 = vunpack.c.l.b16 %v1378
        %v1443 = vunpack.c.l.b16 %v1379
        %v1444 = vunpack.c.l.b16 %v1380
        %v1445 = vunpack.c.l.b16 %v1381
        %v1446 = vunpack.c.l.b16 %v1382
        %v1447 = vunpack.c.l.b16 %v1383
        %v1448 = vunpack.c.l.b16 %v1384
        %v1449 = vunpack.c.l.b16 %v1385
        %v1450 = vunpack.c.l.b16 %v1386
        %v1451 = vunpack.c.l.b16 %v1387
        %v1452 = vunpack.c.l.b16 %v1388
        %v1453 = vunpack.c.l.b16 %v1389
        %v1454 = vunpack.c.l.b16 %v1390
        %v1455 = vunpack.c.l.b16 %v1391
        %v1456 = vunpack.c.l.b16 %v1392
        %v1457 = vunpack.c.l.b16 %v1393
        %v1458 = vunpack.c.l.b16 %v1394
        %v1459 = vpack.c.b16 %v1428, %v1427
        %v1460 = vpack.c.b16 %v1430, %v1429
        %v1461 = vpack.c.b16 %v1432, %v1431
        %v1462 = vpack.c.b16 %v1434, %v1433
        %v1463 = vpack.c.b16 %v1436, %v1435
        %v1464 = vpack.c.b16 %v1438, %v1437
        %v1465 = vpack.c.b16 %v1440, %v1439
        %v1466 = vpack.c.b16 %v1442, %v1441
        %v1467 = vpack.c.b16 %v1444, %v1443
        %v1468 = vpack.c.b16 %v1446, %v1445
        %v1469 = vpack.c.b16 %v1448, %v1447
        %v1470 = vpack.c.b16 %v1450, %v1449
        %v1471 = vpack.c.b16 %v1452, %v1451
        %v1472 = vpack.c.b16 %v1454, %v1453
        %v1473 = vpack.c.b16 %v1456, %v1455
        %v1474 = vpack.c.b16 %v1458, %v1457
        %vm1475 = vcmask 261120
        %v1477 = vsel %vm1475, %v1459, 0
        %v1480 = vsel %vm1475, %v1460, 0
        %v1483 = vsel %vm1475, %v1461, 0
        %v1486 = vsel %vm1475, %v1462, 0
        %v1489 = vsel %vm1475, %v1463, 0
        %v1492 = vsel %vm1475, %v1464, 0
        %v1495 = vsel %vm1475, %v1465, 0
        %v1498 = vsel %vm1475, %v1466, 0
        %v1501 = vsel %vm1475, %v1467, 0
        %v1504 = vsel %vm1475, %v1468, 0
        %v1507 = vsel %vm1475, %v1469, 0
        %v1510 = vsel %vm1475, %v1470, 0
        %v1513 = vsel %vm1475, %v1471, 0
        %v1516 = vsel %vm1475, %v1472, 0
        %v1519 = vsel %vm1475, %v1473, 0
        %v1522 = vsel %vm1475, %v1474, 0
        %1524 = vmatprep.subr.bf16.mxu0 0
        %1525 = vmatpush1.bf16.msra.mxu0 0
        %1526 = vmatprep.subr.bf16.mxu0 0
        %1527 = vmatpush1.bf16.msra.mxu0 0
        %1528 = vmatprep.subr.bf16.mxu0 0
        %1529 = vmatpush1.bf16.msra.mxu0 0
        %1530 = vmatprep.subr.bf16.mxu0 0
        %1531 = vmatpush1.bf16.msra.mxu0 0
        %1532 = vmatprep.subr.bf16.mxu0 0
        %1533 = vmatpush1.bf16.msra.mxu0 0
        %1534 = vmatprep.subr.bf16.mxu0 0
        %1535 = vmatpush1.bf16.msra.mxu0 0
        %1536 = vmatprep.subr.bf16.mxu0 0
        %1537 = vmatpush1.bf16.msra.mxu0 %v1362
        %1538 = vmatprep.subr.bf16.mxu0 0
        %1539 = vmatpush1.bf16.msra.mxu0 %v1361
        %1540 = vmatprep.subr.bf16.mxu0 0
        %1541 = vmatpush2.bf16.msra.mxu0 0
        %1542 = vmatprep.subr.bf16.mxu0 0
        %1543 = vmatpush2.bf16.msra.mxu0 0
        %1544 = vmatprep.subr.bf16.mxu0 0
        %1545 = vmatpush2.bf16.msra.mxu0 0
        %1546 = vmatprep.subr.bf16.mxu0 0
        %1547 = vmatpush2.bf16.msra.mxu0 0
        %1548 = vmatprep.subr.bf16.mxu0 0
        %1549 = vmatpush2.bf16.msra.mxu0 0
        %1550 = vmatprep.subr.bf16.mxu0 0
        %1551 = vmatpush2.bf16.msra.mxu0 0
        %1552 = vmatprep.subr.bf16.mxu0 0
        %1553 = vmatpush2.bf16.msra.mxu0 0
        %1554 = vmatprep.subr.bf16.mxu0 0
        %1555 = vmatpush2.bf16.msra.mxu0 0
        %1556 = vmatprep.mubr.bf16.mxu0 0
        %1557 = vmatmul.mubr.bf16.gmra.mxu0 %v1477
        %v1558 = vpop.f32.mrf.mxu0
        %v1559 = vadd.f32 0.0, %v1558
        %v1560 = vpop.f32.mrf.mxu0
        %v1561 = vpop.f32.mrf.mxu0
        %v1562 = vadd.f32 0.0, %v1561
        %v1563 = vpop.f32.mrf.mxu0
        %1564 = vmatprep.mubr.bf16.mxu0 0
        %1565 = vmatmul.mubr.bf16.gmra.mxu0 %v1480
        %v1566 = vpop.f32.mrf.mxu0
        %v1567 = vadd.f32 0.0, %v1566
        %v1568 = vpop.f32.mrf.mxu0
        %v1569 = vpop.f32.mrf.mxu0
        %v1570 = vadd.f32 0.0, %v1569
        %v1571 = vpop.f32.mrf.mxu0
        %1572 = vmatprep.mubr.bf16.mxu0 0
        %1573 = vmatmul.mubr.bf16.gmra.mxu0 %v1483
        %v1574 = vpop.f32.mrf.mxu0
        %v1575 = vadd.f32 0.0, %v1574
        %v1576 = vpop.f32.mrf.mxu0
        %v1577 = vpop.f32.mrf.mxu0
        %v1578 = vadd.f32 0.0, %v1577
        %v1579 = vpop.f32.mrf.mxu0
        %1580 = vmatprep.mubr.bf16.mxu0 0
        %1581 = vmatmul.mubr.bf16.gmra.mxu0 %v1486
        %v1582 = vpop.f32.mrf.mxu0
        %v1583 = vadd.f32 0.0, %v1582
        %v1584 = vpop.f32.mrf.mxu0
        %v1585 = vpop.f32.mrf.mxu0
        %v1586 = vadd.f32 0.0, %v1585
        %v1587 = vpop.f32.mrf.mxu0
        %1588 = vmatprep.mubr.bf16.mxu0 0
        %1589 = vmatmul.mubr.bf16.gmra.mxu0 %v1489
        %v1590 = vpop.f32.mrf.mxu0
        %v1591 = vadd.f32 0.0, %v1590
        %v1592 = vpop.f32.mrf.mxu0
        %v1593 = vpop.f32.mrf.mxu0
        %v1594 = vadd.f32 0.0, %v1593
        %v1595 = vpop.f32.mrf.mxu0
        %1596 = vmatprep.mubr.bf16.mxu0 0
        %1597 = vmatmul.mubr.bf16.gmra.mxu0 %v1492
        %v1598 = vpop.f32.mrf.mxu0
        %v1599 = vadd.f32 0.0, %v1598
        %v1600 = vpop.f32.mrf.mxu0
        %v1601 = vpop.f32.mrf.mxu0
        %v1602 = vadd.f32 0.0, %v1601
        %v1603 = vpop.f32.mrf.mxu0
        %1604 = vmatprep.mubr.bf16.mxu0 0
        %1605 = vmatmul.mubr.bf16.gmra.mxu0 %v1495
        %v1606 = vpop.f32.mrf.mxu0
        %v1607 = vadd.f32 0.0, %v1606
        %v1608 = vpop.f32.mrf.mxu0
        %v1609 = vpop.f32.mrf.mxu0
        %v1610 = vadd.f32 0.0, %v1609
        %v1611 = vpop.f32.mrf.mxu0
        %1612 = vmatprep.mubr.bf16.mxu0 0
        %1613 = vmatmul.mubr.bf16.gmra.mxu0 %v1498
        %v1614 = vpop.f32.mrf.mxu0
        %v1615 = vadd.f32 0.0, %v1614
        %v1616 = vpop.f32.mrf.mxu0
        %v1617 = vpop.f32.mrf.mxu0
        %v1618 = vadd.f32 0.0, %v1617
        %v1619 = vpop.f32.mrf.mxu0
        %1620 = vmatprep.mubr.bf16.mxu0 0
        %1621 = vmatmul.mubr.bf16.gmra.mxu0 %v1501
        %v1622 = vpop.f32.mrf.mxu0
        %v1623 = vadd.f32 0.0, %v1622
        %v1624 = vpop.f32.mrf.mxu0
        %v1625 = vpop.f32.mrf.mxu0
        %v1626 = vadd.f32 0.0, %v1625
        %v1627 = vpop.f32.mrf.mxu0
        %1628 = vmatprep.mubr.bf16.mxu0 0
        %1629 = vmatmul.mubr.bf16.gmra.mxu0 %v1504
        %v1630 = vpop.f32.mrf.mxu0
        %v1631 = vadd.f32 0.0, %v1630
        %v1632 = vpop.f32.mrf.mxu0
        %v1633 = vpop.f32.mrf.mxu0
        %v1634 = vadd.f32 0.0, %v1633
        %v1635 = vpop.f32.mrf.mxu0
        %1636 = vmatprep.mubr.bf16.mxu0 0
        %1637 = vmatmul.mubr.bf16.gmra.mxu0 %v1507
        %v1638 = vpop.f32.mrf.mxu0
        %v1639 = vadd.f32 0.0, %v1638
        %v1640 = vpop.f32.mrf.mxu0
        %v1641 = vpop.f32.mrf.mxu0
        %v1642 = vadd.f32 0.0, %v1641
        %v1643 = vpop.f32.mrf.mxu0
        %1644 = vmatprep.mubr.bf16.mxu0 0
        %1645 = vmatmul.mubr.bf16.gmra.mxu0 %v1510
        %v1646 = vpop.f32.mrf.mxu0
        %v1647 = vadd.f32 0.0, %v1646
        %v1648 = vpop.f32.mrf.mxu0
        %v1649 = vpop.f32.mrf.mxu0
        %v1650 = vadd.f32 0.0, %v1649
        %v1651 = vpop.f32.mrf.mxu0
        %1652 = vmatprep.mubr.bf16.mxu0 0
        %1653 = vmatmul.mubr.bf16.gmra.mxu0 %v1513
        %v1654 = vpop.f32.mrf.mxu0
        %v1655 = vadd.f32 0.0, %v1654
        %v1656 = vpop.f32.mrf.mxu0
        %v1657 = vpop.f32.mrf.mxu0
        %v1658 = vadd.f32 0.0, %v1657
        %v1659 = vpop.f32.mrf.mxu0
        %1660 = vmatprep.mubr.bf16.mxu0 0
        %1661 = vmatmul.mubr.bf16.gmra.mxu0 %v1516
        %v1662 = vpop.f32.mrf.mxu0
        %v1663 = vadd.f32 0.0, %v1662
        %v1664 = vpop.f32.mrf.mxu0
        %v1665 = vpop.f32.mrf.mxu0
        %v1666 = vadd.f32 0.0, %v1665
        %v1667 = vpop.f32.mrf.mxu0
        %1668 = vmatprep.mubr.bf16.mxu0 0
        %1669 = vmatmul.mubr.bf16.gmra.mxu0 %v1519
        %v1670 = vpop.f32.mrf.mxu0
        %v1671 = vadd.f32 0.0, %v1670
        %v1672 = vpop.f32.mrf.mxu0
        %v1673 = vpop.f32.mrf.mxu0
        %v1674 = vadd.f32 0.0, %v1673
        %v1675 = vpop.f32.mrf.mxu0
        %1676 = vmatprep.mubr.bf16.mxu0 0
        %1677 = vmatmul.mubr.bf16.gmra.mxu0 %v1522
        %v1678 = vpop.f32.mrf.mxu0
        %v1679 = vadd.f32 0.0, %v1678
        %v1680 = vpop.f32.mrf.mxu0
        %v1681 = vpop.f32.mrf.mxu0
        %v1682 = vadd.f32 0.0, %v1681
        %v1683 = vpop.f32.mrf.mxu0
        %1684 = vdwg.mxu0
        %s1685 = scalar_lea.vmem %s7, 128
        %v1686 = vld [vmem:[%s1685] sm:$0xf]
        %v1687 = vld [vmem:[%s1685 + $0x4] sm:$0xf]
        %v1688 = vld [vmem:[%s1685 + $0x8] sm:$0xf]
        %v1689 = vld [vmem:[%s1685 + $0xc] sm:$0xf]
        %v1690 = vld [vmem:[%s1685 + $0x10] sm:$0xf]
        %v1691 = vld [vmem:[%s1685 + $0x14] sm:$0xf]
        %v1692 = vld [vmem:[%s1685 + $0x18] sm:$0xf]
        %v1693 = vld [vmem:[%s1685 + $0x1c] sm:$0xf]
        %v1694 = vld [vmem:[%s1685 + $0x20] sm:$0xf]
        %v1695 = vld [vmem:[%s1685 + $0x24] sm:$0xf]
        %v1696 = vld [vmem:[%s1685 + $0x28] sm:$0xf]
        %v1697 = vld [vmem:[%s1685 + $0x2c] sm:$0xf]
        %v1698 = vld [vmem:[%s1685 + $0x30] sm:$0xf]
        %v1699 = vld [vmem:[%s1685 + $0x34] sm:$0xf]
        %v1700 = vld [vmem:[%s1685 + $0x38] sm:$0xf]
        %v1701 = vld [vmem:[%s1685 + $0x3c] sm:$0xf]
        %v1702 = vld [vmem:[%s1685 + $0x40] sm:$0xf]
        %v1703 = vld [vmem:[%s1685 + $0x44] sm:$0xf]
        %v1704 = vld [vmem:[%s1685 + $0x48] sm:$0xf]
        %v1705 = vld [vmem:[%s1685 + $0x4c] sm:$0xf]
        %v1706 = vld [vmem:[%s1685 + $0x50] sm:$0xf]
        %v1707 = vld [vmem:[%s1685 + $0x54] sm:$0xf]
        %v1708 = vld [vmem:[%s1685 + $0x58] sm:$0xf]
        %v1709 = vld [vmem:[%s1685 + $0x5c] sm:$0xf]
        %v1710 = vld [vmem:[%s1685 + $0x60] sm:$0xf]
        %v1711 = vld [vmem:[%s1685 + $0x64] sm:$0xf]
        %v1712 = vld [vmem:[%s1685 + $0x68] sm:$0xf]
        %v1713 = vld [vmem:[%s1685 + $0x6c] sm:$0xf]
        %v1714 = vld [vmem:[%s1685 + $0x70] sm:$0xf]
        %v1715 = vld [vmem:[%s1685 + $0x74] sm:$0xf]
        %v1716 = vld [vmem:[%s1685 + $0x78] sm:$0xf]
        %v1717 = vld [vmem:[%s1685 + $0x7c] sm:$0xf]
        %v1750 = vunpack.c.l.b16 %v1686
        %v1751 = vunpack.c.l.b16 %v1687
        %v1752 = vunpack.c.l.b16 %v1688
        %v1753 = vunpack.c.l.b16 %v1689
        %v1754 = vunpack.c.l.b16 %v1690
        %v1755 = vunpack.c.l.b16 %v1691
        %v1756 = vunpack.c.l.b16 %v1692
        %v1757 = vunpack.c.l.b16 %v1693
        %v1758 = vunpack.c.l.b16 %v1694
        %v1759 = vunpack.c.l.b16 %v1695
        %v1760 = vunpack.c.l.b16 %v1696
        %v1761 = vunpack.c.l.b16 %v1697
        %v1762 = vunpack.c.l.b16 %v1698
        %v1763 = vunpack.c.l.b16 %v1699
        %v1764 = vunpack.c.l.b16 %v1700
        %v1765 = vunpack.c.l.b16 %v1701
        %v1766 = vunpack.c.l.b16 %v1702
        %v1767 = vunpack.c.l.b16 %v1703
        %v1768 = vunpack.c.l.b16 %v1704
        %v1769 = vunpack.c.l.b16 %v1705
        %v1770 = vunpack.c.l.b16 %v1706
        %v1771 = vunpack.c.l.b16 %v1707
        %v1772 = vunpack.c.l.b16 %v1708
        %v1773 = vunpack.c.l.b16 %v1709
        %v1774 = vunpack.c.l.b16 %v1710
        %v1775 = vunpack.c.l.b16 %v1711
        %v1776 = vunpack.c.l.b16 %v1712
        %v1777 = vunpack.c.l.b16 %v1713
        %v1778 = vunpack.c.l.b16 %v1714
        %v1779 = vunpack.c.l.b16 %v1715
        %v1780 = vunpack.c.l.b16 %v1716
        %v1781 = vunpack.c.l.b16 %v1717
        %v1782 = vpack.c.b16 %v1751, %v1750
        %v1783 = vpack.c.b16 %v1753, %v1752
        %v1784 = vpack.c.b16 %v1755, %v1754
        %v1785 = vpack.c.b16 %v1757, %v1756
        %v1786 = vpack.c.b16 %v1759, %v1758
        %v1787 = vpack.c.b16 %v1761, %v1760
        %v1788 = vpack.c.b16 %v1763, %v1762
        %v1789 = vpack.c.b16 %v1765, %v1764
        %v1790 = vpack.c.b16 %v1767, %v1766
        %v1791 = vpack.c.b16 %v1769, %v1768
        %v1792 = vpack.c.b16 %v1771, %v1770
        %v1793 = vpack.c.b16 %v1773, %v1772
        %v1794 = vpack.c.b16 %v1775, %v1774
        %v1795 = vpack.c.b16 %v1777, %v1776
        %v1796 = vpack.c.b16 %v1779, %v1778
        %v1797 = vpack.c.b16 %v1781, %v1780
        %v1799 = vsel %vm1475, %v1782, 0
        %v1802 = vsel %vm1475, %v1783, 0
        %v1805 = vsel %vm1475, %v1784, 0
        %v1808 = vsel %vm1475, %v1785, 0
        %v1811 = vsel %vm1475, %v1786, 0
        %v1814 = vsel %vm1475, %v1787, 0
        %v1817 = vsel %vm1475, %v1788, 0
        %v1820 = vsel %vm1475, %v1789, 0
        %v1823 = vsel %vm1475, %v1790, 0
        %v1826 = vsel %vm1475, %v1791, 0
        %v1829 = vsel %vm1475, %v1792, 0
        %v1832 = vsel %vm1475, %v1793, 0
        %v1835 = vsel %vm1475, %v1794, 0
        %v1838 = vsel %vm1475, %v1795, 0
        %v1841 = vsel %vm1475, %v1796, 0
        %v1844 = vsel %vm1475, %v1797, 0
        %1846 = vmatprep.subr.bf16.mxu0 0
        %1847 = vmatpush1.bf16.msra.mxu0 0
        %1848 = vmatprep.subr.bf16.mxu0 0
        %1849 = vmatpush1.bf16.msra.mxu0 0
        %1850 = vmatprep.subr.bf16.mxu0 0
        %1851 = vmatpush1.bf16.msra.mxu0 0
        %1852 = vmatprep.subr.bf16.mxu0 0
        %1853 = vmatpush1.bf16.msra.mxu0 0
        %1854 = vmatprep.subr.bf16.mxu0 0
        %1855 = vmatpush1.bf16.msra.mxu0 0
        %1856 = vmatprep.subr.bf16.mxu0 0
        %1857 = vmatpush1.bf16.msra.mxu0 0
        %1858 = vmatprep.subr.bf16.mxu0 0
        %1859 = vmatpush1.bf16.msra.mxu0 %v1360
        %1860 = vmatprep.subr.bf16.mxu0 0
        %1861 = vmatpush1.bf16.msra.mxu0 %v1359
        %1862 = vmatprep.subr.bf16.mxu0 0
        %1863 = vmatpush2.bf16.msra.mxu0 0
        %1864 = vmatprep.subr.bf16.mxu0 0
        %1865 = vmatpush2.bf16.msra.mxu0 0
        %1866 = vmatprep.subr.bf16.mxu0 0
        %1867 = vmatpush2.bf16.msra.mxu0 0
        %1868 = vmatprep.subr.bf16.mxu0 0
        %1869 = vmatpush2.bf16.msra.mxu0 0
        %1870 = vmatprep.subr.bf16.mxu0 0
        %1871 = vmatpush2.bf16.msra.mxu0 0
        %1872 = vmatprep.subr.bf16.mxu0 0
        %1873 = vmatpush2.bf16.msra.mxu0 0
        %1874 = vmatprep.subr.bf16.mxu0 0
        %1875 = vmatpush2.bf16.msra.mxu0 0
        %1876 = vmatprep.subr.bf16.mxu0 0
        %1877 = vmatpush2.bf16.msra.mxu0 0
        %1878 = vmatprep.mubr.bf16.mxu0 0
        %1879 = vmatmul.mubr.bf16.gmra.mxu0 %v1799
        %v1880 = vpop.f32.mrf.mxu0
        %v1881 = vadd.f32 0.0, %v1880
        %v1882 = vpop.f32.mrf.mxu0
        %v1883 = vpop.f32.mrf.mxu0
        %v1884 = vadd.f32 0.0, %v1883
        %v1885 = vpop.f32.mrf.mxu0
        %1886 = vmatprep.mubr.bf16.mxu0 0
        %1887 = vmatmul.mubr.bf16.gmra.mxu0 %v1802
        %v1888 = vpop.f32.mrf.mxu0
        %v1889 = vadd.f32 0.0, %v1888
        %v1890 = vpop.f32.mrf.mxu0
        %v1891 = vpop.f32.mrf.mxu0
        %v1892 = vadd.f32 0.0, %v1891
        %v1893 = vpop.f32.mrf.mxu0
        %1894 = vmatprep.mubr.bf16.mxu0 0
        %1895 = vmatmul.mubr.bf16.gmra.mxu0 %v1805
        %v1896 = vpop.f32.mrf.mxu0
        %v1897 = vadd.f32 0.0, %v1896
        %v1898 = vpop.f32.mrf.mxu0
        %v1899 = vpop.f32.mrf.mxu0
        %v1900 = vadd.f32 0.0, %v1899
        %v1901 = vpop.f32.mrf.mxu0
        %1902 = vmatprep.mubr.bf16.mxu0 0
        %1903 = vmatmul.mubr.bf16.gmra.mxu0 %v1808
        %v1904 = vpop.f32.mrf.mxu0
        %v1905 = vadd.f32 0.0, %v1904
        %v1906 = vpop.f32.mrf.mxu0
        %v1907 = vpop.f32.mrf.mxu0
        %v1908 = vadd.f32 0.0, %v1907
        %v1909 = vpop.f32.mrf.mxu0
        %1910 = vmatprep.mubr.bf16.mxu0 0
        %1911 = vmatmul.mubr.bf16.gmra.mxu0 %v1811
        %v1912 = vpop.f32.mrf.mxu0
        %v1913 = vadd.f32 0.0, %v1912
        %v1914 = vpop.f32.mrf.mxu0
        %v1915 = vpop.f32.mrf.mxu0
        %v1916 = vadd.f32 0.0, %v1915
        %v1917 = vpop.f32.mrf.mxu0
        %1918 = vmatprep.mubr.bf16.mxu0 0
        %1919 = vmatmul.mubr.bf16.gmra.mxu0 %v1814
        %v1920 = vpop.f32.mrf.mxu0
        %v1921 = vadd.f32 0.0, %v1920
        %v1922 = vpop.f32.mrf.mxu0
        %v1923 = vpop.f32.mrf.mxu0
        %v1924 = vadd.f32 0.0, %v1923
        %v1925 = vpop.f32.mrf.mxu0
        %1926 = vmatprep.mubr.bf16.mxu0 0
        %1927 = vmatmul.mubr.bf16.gmra.mxu0 %v1817
        %v1928 = vpop.f32.mrf.mxu0
        %v1929 = vadd.f32 0.0, %v1928
        %v1930 = vpop.f32.mrf.mxu0
        %v1931 = vpop.f32.mrf.mxu0
        %v1932 = vadd.f32 0.0, %v1931
        %v1933 = vpop.f32.mrf.mxu0
        %1934 = vmatprep.mubr.bf16.mxu0 0
        %1935 = vmatmul.mubr.bf16.gmra.mxu0 %v1820
        %v1936 = vpop.f32.mrf.mxu0
        %v1937 = vadd.f32 0.0, %v1936
        %v1938 = vpop.f32.mrf.mxu0
        %v1939 = vpop.f32.mrf.mxu0
        %v1940 = vadd.f32 0.0, %v1939
        %v1941 = vpop.f32.mrf.mxu0
        %1942 = vmatprep.mubr.bf16.mxu0 0
        %1943 = vmatmul.mubr.bf16.gmra.mxu0 %v1823
        %v1944 = vpop.f32.mrf.mxu0
        %v1945 = vadd.f32 0.0, %v1944
        %v1946 = vpop.f32.mrf.mxu0
        %v1947 = vpop.f32.mrf.mxu0
        %v1948 = vadd.f32 0.0, %v1947
        %v1949 = vpop.f32.mrf.mxu0
        %1950 = vmatprep.mubr.bf16.mxu0 0
        %1951 = vmatmul.mubr.bf16.gmra.mxu0 %v1826
        %v1952 = vpop.f32.mrf.mxu0
        %v1953 = vadd.f32 0.0, %v1952
        %v1954 = vpop.f32.mrf.mxu0
        %v1955 = vpop.f32.mrf.mxu0
        %v1956 = vadd.f32 0.0, %v1955
        %v1957 = vpop.f32.mrf.mxu0
        %1958 = vmatprep.mubr.bf16.mxu0 0
        %1959 = vmatmul.mubr.bf16.gmra.mxu0 %v1829
        %v1960 = vpop.f32.mrf.mxu0
        %v1961 = vadd.f32 0.0, %v1960
        %v1962 = vpop.f32.mrf.mxu0
        %v1963 = vpop.f32.mrf.mxu0
        %v1964 = vadd.f32 0.0, %v1963
        %v1965 = vpop.f32.mrf.mxu0
        %1966 = vmatprep.mubr.bf16.mxu0 0
        %1967 = vmatmul.mubr.bf16.gmra.mxu0 %v1832
        %v1968 = vpop.f32.mrf.mxu0
        %v1969 = vadd.f32 0.0, %v1968
        %v1970 = vpop.f32.mrf.mxu0
        %v1971 = vpop.f32.mrf.mxu0
        %v1972 = vadd.f32 0.0, %v1971
        %v1973 = vpop.f32.mrf.mxu0
        %1974 = vmatprep.mubr.bf16.mxu0 0
        %1975 = vmatmul.mubr.bf16.gmra.mxu0 %v1835
        %v1976 = vpop.f32.mrf.mxu0
        %v1977 = vadd.f32 0.0, %v1976
        %v1978 = vpop.f32.mrf.mxu0
        %v1979 = vpop.f32.mrf.mxu0
        %v1980 = vadd.f32 0.0, %v1979
        %v1981 = vpop.f32.mrf.mxu0
        %1982 = vmatprep.mubr.bf16.mxu0 0
        %1983 = vmatmul.mubr.bf16.gmra.mxu0 %v1838
        %v1984 = vpop.f32.mrf.mxu0
        %v1985 = vadd.f32 0.0, %v1984
        %v1986 = vpop.f32.mrf.mxu0
        %v1987 = vpop.f32.mrf.mxu0
        %v1988 = vadd.f32 0.0, %v1987
        %v1989 = vpop.f32.mrf.mxu0
        %1990 = vmatprep.mubr.bf16.mxu0 0
        %1991 = vmatmul.mubr.bf16.gmra.mxu0 %v1841
        %v1992 = vpop.f32.mrf.mxu0
        %v1993 = vadd.f32 0.0, %v1992
        %v1994 = vpop.f32.mrf.mxu0
        %v1995 = vpop.f32.mrf.mxu0
        %v1996 = vadd.f32 0.0, %v1995
        %v1997 = vpop.f32.mrf.mxu0
        %1998 = vmatprep.mubr.bf16.mxu0 0
        %1999 = vmatmul.mubr.bf16.gmra.mxu0 %v1844
        %v2000 = vpop.f32.mrf.mxu0
        %v2001 = vadd.f32 0.0, %v2000
        %v2002 = vpop.f32.mrf.mxu0
        %v2003 = vpop.f32.mrf.mxu0
        %v2004 = vadd.f32 0.0, %v2003
        %v2005 = vpop.f32.mrf.mxu0
        %2006 = vdwg.mxu0
        %v2007 = vpack.c.bf16 %v1884, %v1881
        %v2008 = vpack.c.bf16 %v1892, %v1889
        %v2009 = vpack.c.bf16 %v1562, %v1559
        %v2010 = vpack.c.bf16 %v1570, %v1567
        %v2011 = vpack.c.bf16 %v1900, %v1897
        %v2012 = vpack.c.bf16 %v1908, %v1905
        %v2013 = vpack.c.bf16 %v1578, %v1575
        %v2014 = vpack.c.bf16 %v1586, %v1583
        %v2016 = vsel %vm1475, %v2011, 0
        %v2019 = vsel %vm1475, %v2012, 0
        %2021 = vmatprep.subr.bf16.mxu0 0
        %2022 = vmatpush1.bf16.msra.mxu0 0
        %2023 = vmatprep.subr.bf16.mxu0 0
        %2024 = vmatpush1.bf16.msra.mxu0 0
        %2025 = vmatprep.subr.bf16.mxu0 0
        %2026 = vmatpush1.bf16.msra.mxu0 0
        %2027 = vmatprep.subr.bf16.mxu0 0
        %2028 = vmatpush1.bf16.msra.mxu0 0
        %2029 = vmatprep.subr.bf16.mxu0 0
        %2030 = vmatpush1.bf16.msra.mxu0 0
        %2031 = vmatprep.subr.bf16.mxu0 0
        %2032 = vmatpush1.bf16.msra.mxu0 0
        %2033 = vmatprep.subr.bf16.mxu0 0
        %2034 = vmatpush1.bf16.msra.mxu0 %v2014
        %2035 = vmatprep.subr.bf16.mxu0 0
        %2036 = vmatpush1.bf16.msra.mxu0 %v2013
        %2037 = vmatprep.subr.bf16.mxu0 0
        %2038 = vmatpush2.bf16.msra.mxu0 0
        %2039 = vmatprep.subr.bf16.mxu0 0
        %2040 = vmatpush2.bf16.msra.mxu0 0
        %2041 = vmatprep.subr.bf16.mxu0 0
        %2042 = vmatpush2.bf16.msra.mxu0 0
        %2043 = vmatprep.subr.bf16.mxu0 0
        %2044 = vmatpush2.bf16.msra.mxu0 0
        %2045 = vmatprep.subr.bf16.mxu0 0
        %2046 = vmatpush2.bf16.msra.mxu0 0
        %2047 = vmatprep.subr.bf16.mxu0 0
        %2048 = vmatpush2.bf16.msra.mxu0 0
        %2049 = vmatprep.subr.bf16.mxu0 0
        %2050 = vmatpush2.bf16.msra.mxu0 0
        %2051 = vmatprep.subr.bf16.mxu0 0
        %2052 = vmatpush2.bf16.msra.mxu0 0
        %2053 = vmatprep.mubr.bf16.mxu0 0
        %2054 = vmatmul.mubr.bf16.gmra.mxu0 %v2016
        %v2055 = vpop.f32.mrf.mxu0
        %v2056 = vadd.f32 0.0, %v2055
        %v2057 = vpop.f32.mrf.mxu0
        %v2058 = vpop.f32.mrf.mxu0
        %v2059 = vadd.f32 0.0, %v2058
        %v2060 = vpop.f32.mrf.mxu0
        %2061 = vmatprep.mubr.bf16.mxu0 0
        %2062 = vmatmul.mubr.bf16.gmra.mxu0 %v2019
        %v2063 = vpop.f32.mrf.mxu0
        %v2064 = vadd.f32 0.0, %v2063
        %v2065 = vpop.f32.mrf.mxu0
        %v2066 = vpop.f32.mrf.mxu0
        %v2067 = vadd.f32 0.0, %v2066
        %v2068 = vpop.f32.mrf.mxu0
        %2069 = vdwg.mxu0
        %v2071 = vsel %vm1475, %v2007, 0
        %v2074 = vsel %vm1475, %v2008, 0
        %2076 = vmatprep.subr.bf16.mxu0 0
        %2077 = vmatpush1.bf16.msra.mxu0 0
        %2078 = vmatprep.subr.bf16.mxu0 0
        %2079 = vmatpush1.bf16.msra.mxu0 0
        %2080 = vmatprep.subr.bf16.mxu0 0
        %2081 = vmatpush1.bf16.msra.mxu0 0
        %2082 = vmatprep.subr.bf16.mxu0 0
        %2083 = vmatpush1.bf16.msra.mxu0 0
        %2084 = vmatprep.subr.bf16.mxu0 0
        %2085 = vmatpush1.bf16.msra.mxu0 0
        %2086 = vmatprep.subr.bf16.mxu0 0
        %2087 = vmatpush1.bf16.msra.mxu0 0
        %2088 = vmatprep.subr.bf16.mxu0 0
        %2089 = vmatpush1.bf16.msra.mxu0 %v2010
        %2090 = vmatprep.subr.bf16.mxu0 0
        %2091 = vmatpush1.bf16.msra.mxu0 %v2009
        %2092 = vmatprep.subr.bf16.mxu0 0
        %2093 = vmatpush2.bf16.msra.mxu0 0
        %2094 = vmatprep.subr.bf16.mxu0 0
        %2095 = vmatpush2.bf16.msra.mxu0 0
        %2096 = vmatprep.subr.bf16.mxu0 0
        %2097 = vmatpush2.bf16.msra.mxu0 0
        %2098 = vmatprep.subr.bf16.mxu0 0
        %2099 = vmatpush2.bf16.msra.mxu0 0
        %2100 = vmatprep.subr.bf16.mxu0 0
        %2101 = vmatpush2.bf16.msra.mxu0 0
        %2102 = vmatprep.subr.bf16.mxu0 0
        %2103 = vmatpush2.bf16.msra.mxu0 0
        %2104 = vmatprep.subr.bf16.mxu0 0
        %2105 = vmatpush2.bf16.msra.mxu0 0
        %2106 = vmatprep.subr.bf16.mxu0 0
        %2107 = vmatpush2.bf16.msra.mxu0 0
        %2108 = vmatprep.mubr.bf16.mxu0 0
        %2109 = vmatmul.mubr.bf16.gmra.mxu0 %v2071
        %v2110 = vpop.f32.mrf.mxu0
        %v2111 = vadd.f32 %v2056, %v2110
        %v2112 = vpop.f32.mrf.mxu0
        %v2113 = vpop.f32.mrf.mxu0
        %v2114 = vadd.f32 %v2059, %v2113
        %v2115 = vpop.f32.mrf.mxu0
        %2116 = vmatprep.mubr.bf16.mxu0 0
        %2117 = vmatmul.mubr.bf16.gmra.mxu0 %v2074
        %v2118 = vpop.f32.mrf.mxu0
        %v2119 = vadd.f32 %v2064, %v2118
        %v2120 = vpop.f32.mrf.mxu0
        %v2121 = vpop.f32.mrf.mxu0
        %v2122 = vadd.f32 %v2067, %v2121
        %v2123 = vpop.f32.mrf.mxu0
        %2124 = vdwg.mxu0
        %v2125 = vpack.c.bf16 %v1916, %v1913
        %v2126 = vpack.c.bf16 %v1924, %v1921
        %v2127 = vpack.c.bf16 %v1594, %v1591
        %v2128 = vpack.c.bf16 %v1602, %v1599
        %v2130 = vsel %vm1475, %v2125, 0
        %v2133 = vsel %vm1475, %v2126, 0
        %2135 = vmatprep.subr.bf16.mxu0 0
        %2136 = vmatpush1.bf16.msra.mxu0 0
        %2137 = vmatprep.subr.bf16.mxu0 0
        %2138 = vmatpush1.bf16.msra.mxu0 0
        %2139 = vmatprep.subr.bf16.mxu0 0
        %2140 = vmatpush1.bf16.msra.mxu0 0
        %2141 = vmatprep.subr.bf16.mxu0 0
        %2142 = vmatpush1.bf16.msra.mxu0 0
        %2143 = vmatprep.subr.bf16.mxu0 0
        %2144 = vmatpush1.bf16.msra.mxu0 0
        %2145 = vmatprep.subr.bf16.mxu0 0
        %2146 = vmatpush1.bf16.msra.mxu0 0
        %2147 = vmatprep.subr.bf16.mxu0 0
        %2148 = vmatpush1.bf16.msra.mxu0 %v2128
        %2149 = vmatprep.subr.bf16.mxu0 0
        %2150 = vmatpush1.bf16.msra.mxu0 %v2127
        %2151 = vmatprep.subr.bf16.mxu0 0
        %2152 = vmatpush2.bf16.msra.mxu0 0
        %2153 = vmatprep.subr.bf16.mxu0 0
        %2154 = vmatpush2.bf16.msra.mxu0 0
        %2155 = vmatprep.subr.bf16.mxu0 0
        %2156 = vmatpush2.bf16.msra.mxu0 0
        %2157 = vmatprep.subr.bf16.mxu0 0
        %2158 = vmatpush2.bf16.msra.mxu0 0
        %2159 = vmatprep.subr.bf16.mxu0 0
        %2160 = vmatpush2.bf16.msra.mxu0 0
        %2161 = vmatprep.subr.bf16.mxu0 0
        %2162 = vmatpush2.bf16.msra.mxu0 0
        %2163 = vmatprep.subr.bf16.mxu0 0
        %2164 = vmatpush2.bf16.msra.mxu0 0
        %2165 = vmatprep.subr.bf16.mxu0 0
        %2166 = vmatpush2.bf16.msra.mxu0 0
        %2167 = vmatprep.mubr.bf16.mxu0 0
        %2168 = vmatmul.mubr.bf16.gmra.mxu0 %v2130
        %v2169 = vpop.f32.mrf.mxu0
        %v2170 = vadd.f32 0.0, %v2169
        %v2171 = vpop.f32.mrf.mxu0
        %v2172 = vpop.f32.mrf.mxu0
        %v2173 = vadd.f32 0.0, %v2172
        %v2174 = vpop.f32.mrf.mxu0
        %2175 = vmatprep.mubr.bf16.mxu0 0
        %2176 = vmatmul.mubr.bf16.gmra.mxu0 %v2133
        %v2177 = vpop.f32.mrf.mxu0
        %v2178 = vadd.f32 0.0, %v2177
        %v2179 = vpop.f32.mrf.mxu0
        %v2180 = vpop.f32.mrf.mxu0
        %v2181 = vadd.f32 0.0, %v2180
        %v2182 = vpop.f32.mrf.mxu0
        %2183 = vdwg.mxu0
        %v2184 = vadd.f32 %v2111, %v2170
        %v2185 = vadd.f32 %v2114, %v2173
        %v2186 = vadd.f32 %v2119, %v2178
        %v2187 = vadd.f32 %v2122, %v2181
        %v2188 = vpack.c.bf16 %v1932, %v1929
        %v2189 = vpack.c.bf16 %v1940, %v1937
        %v2190 = vpack.c.bf16 %v1610, %v1607
        %v2191 = vpack.c.bf16 %v1618, %v1615
        %v2193 = vsel %vm1475, %v2188, 0
        %v2196 = vsel %vm1475, %v2189, 0
        %2198 = vmatprep.subr.bf16.mxu0 0
        %2199 = vmatpush1.bf16.msra.mxu0 0
        %2200 = vmatprep.subr.bf16.mxu0 0
        %2201 = vmatpush1.bf16.msra.mxu0 0
        %2202 = vmatprep.subr.bf16.mxu0 0
        %2203 = vmatpush1.bf16.msra.mxu0 0
        %2204 = vmatprep.subr.bf16.mxu0 0
        %2205 = vmatpush1.bf16.msra.mxu0 0
        %2206 = vmatprep.subr.bf16.mxu0 0
        %2207 = vmatpush1.bf16.msra.mxu0 0
        %2208 = vmatprep.subr.bf16.mxu0 0
        %2209 = vmatpush1.bf16.msra.mxu0 0
        %2210 = vmatprep.subr.bf16.mxu0 0
        %2211 = vmatpush1.bf16.msra.mxu0 %v2191
        %2212 = vmatprep.subr.bf16.mxu0 0
        %2213 = vmatpush1.bf16.msra.mxu0 %v2190
        %2214 = vmatprep.subr.bf16.mxu0 0
        %2215 = vmatpush2.bf16.msra.mxu0 0
        %2216 = vmatprep.subr.bf16.mxu0 0
        %2217 = vmatpush2.bf16.msra.mxu0 0
        %2218 = vmatprep.subr.bf16.mxu0 0
        %2219 = vmatpush2.bf16.msra.mxu0 0
        %2220 = vmatprep.subr.bf16.mxu0 0
        %2221 = vmatpush2.bf16.msra.mxu0 0
        %2222 = vmatprep.subr.bf16.mxu0 0
        %2223 = vmatpush2.bf16.msra.mxu0 0
        %2224 = vmatprep.subr.bf16.mxu0 0
        %2225 = vmatpush2.bf16.msra.mxu0 0
        %2226 = vmatprep.subr.bf16.mxu0 0
        %2227 = vmatpush2.bf16.msra.mxu0 0
        %2228 = vmatprep.subr.bf16.mxu0 0
        %2229 = vmatpush2.bf16.msra.mxu0 0
        %2230 = vmatprep.mubr.bf16.mxu0 0
        %2231 = vmatmul.mubr.bf16.gmra.mxu0 %v2193
        %v2232 = vpop.f32.mrf.mxu0
        %v2233 = vadd.f32 0.0, %v2232
        %v2234 = vpop.f32.mrf.mxu0
        %v2235 = vpop.f32.mrf.mxu0
        %v2236 = vadd.f32 0.0, %v2235
        %v2237 = vpop.f32.mrf.mxu0
        %2238 = vmatprep.mubr.bf16.mxu0 0
        %2239 = vmatmul.mubr.bf16.gmra.mxu0 %v2196
        %v2240 = vpop.f32.mrf.mxu0
        %v2241 = vadd.f32 0.0, %v2240
        %v2242 = vpop.f32.mrf.mxu0
        %v2243 = vpop.f32.mrf.mxu0
        %v2244 = vadd.f32 0.0, %v2243
        %v2245 = vpop.f32.mrf.mxu0
        %2246 = vdwg.mxu0
        %v2247 = vadd.f32 %v2184, %v2233
        %v2248 = vadd.f32 %v2185, %v2236
        %v2249 = vadd.f32 %v2186, %v2241
        %v2250 = vadd.f32 %v2187, %v2244
        %v2251 = vpack.c.bf16 %v1948, %v1945
        %v2252 = vpack.c.bf16 %v1956, %v1953
        %v2253 = vpack.c.bf16 %v1626, %v1623
        %v2254 = vpack.c.bf16 %v1634, %v1631
        %v2256 = vsel %vm1475, %v2251, 0
        %v2259 = vsel %vm1475, %v2252, 0
        %2261 = vmatprep.subr.bf16.mxu0 0
        %2262 = vmatpush1.bf16.msra.mxu0 0
        %2263 = vmatprep.subr.bf16.mxu0 0
        %2264 = vmatpush1.bf16.msra.mxu0 0
        %2265 = vmatprep.subr.bf16.mxu0 0
        %2266 = vmatpush1.bf16.msra.mxu0 0
        %2267 = vmatprep.subr.bf16.mxu0 0
        %2268 = vmatpush1.bf16.msra.mxu0 0
        %2269 = vmatprep.subr.bf16.mxu0 0
        %2270 = vmatpush1.bf16.msra.mxu0 0
        %2271 = vmatprep.subr.bf16.mxu0 0
        %2272 = vmatpush1.bf16.msra.mxu0 0
        %2273 = vmatprep.subr.bf16.mxu0 0
        %2274 = vmatpush1.bf16.msra.mxu0 %v2254
        %2275 = vmatprep.subr.bf16.mxu0 0
        %2276 = vmatpush1.bf16.msra.mxu0 %v2253
        %2277 = vmatprep.subr.bf16.mxu0 0
        %2278 = vmatpush2.bf16.msra.mxu0 0
        %2279 = vmatprep.subr.bf16.mxu0 0
        %2280 = vmatpush2.bf16.msra.mxu0 0
        %2281 = vmatprep.subr.bf16.mxu0 0
        %2282 = vmatpush2.bf16.msra.mxu0 0
        %2283 = vmatprep.subr.bf16.mxu0 0
        %2284 = vmatpush2.bf16.msra.mxu0 0
        %2285 = vmatprep.subr.bf16.mxu0 0
        %2286 = vmatpush2.bf16.msra.mxu0 0
        %2287 = vmatprep.subr.bf16.mxu0 0
        %2288 = vmatpush2.bf16.msra.mxu0 0
        %2289 = vmatprep.subr.bf16.mxu0 0
        %2290 = vmatpush2.bf16.msra.mxu0 0
        %2291 = vmatprep.subr.bf16.mxu0 0
        %2292 = vmatpush2.bf16.msra.mxu0 0
        %2293 = vmatprep.mubr.bf16.mxu0 0
        %2294 = vmatmul.mubr.bf16.gmra.mxu0 %v2256
        %v2295 = vpop.f32.mrf.mxu0
        %v2296 = vadd.f32 0.0, %v2295
        %v2297 = vpop.f32.mrf.mxu0
        %v2298 = vpop.f32.mrf.mxu0
        %v2299 = vadd.f32 0.0, %v2298
        %v2300 = vpop.f32.mrf.mxu0
        %2301 = vmatprep.mubr.bf16.mxu0 0
        %2302 = vmatmul.mubr.bf16.gmra.mxu0 %v2259
        %v2303 = vpop.f32.mrf.mxu0
        %v2304 = vadd.f32 0.0, %v2303
        %v2305 = vpop.f32.mrf.mxu0
        %v2306 = vpop.f32.mrf.mxu0
        %v2307 = vadd.f32 0.0, %v2306
        %v2308 = vpop.f32.mrf.mxu0
        %2309 = vdwg.mxu0
        %v2310 = vadd.f32 %v2247, %v2296
        %v2311 = vadd.f32 %v2248, %v2299
        %v2312 = vadd.f32 %v2249, %v2304
        %v2313 = vadd.f32 %v2250, %v2307
        %v2314 = vpack.c.bf16 %v1964, %v1961
        %v2315 = vpack.c.bf16 %v1972, %v1969
        %v2316 = vpack.c.bf16 %v1642, %v1639
        %v2317 = vpack.c.bf16 %v1650, %v1647
        %v2319 = vsel %vm1475, %v2314, 0
        %v2322 = vsel %vm1475, %v2315, 0
        %2324 = vmatprep.subr.bf16.mxu0 0
        %2325 = vmatpush1.bf16.msra.mxu0 0
        %2326 = vmatprep.subr.bf16.mxu0 0
        %2327 = vmatpush1.bf16.msra.mxu0 0
        %2328 = vmatprep.subr.bf16.mxu0 0
        %2329 = vmatpush1.bf16.msra.mxu0 0
        %2330 = vmatprep.subr.bf16.mxu0 0
        %2331 = vmatpush1.bf16.msra.mxu0 0
        %2332 = vmatprep.subr.bf16.mxu0 0
        %2333 = vmatpush1.bf16.msra.mxu0 0
        %2334 = vmatprep.subr.bf16.mxu0 0
        %2335 = vmatpush1.bf16.msra.mxu0 0
        %2336 = vmatprep.subr.bf16.mxu0 0
        %2337 = vmatpush1.bf16.msra.mxu0 %v2317
        %2338 = vmatprep.subr.bf16.mxu0 0
        %2339 = vmatpush1.bf16.msra.mxu0 %v2316
        %2340 = vmatprep.subr.bf16.mxu0 0
        %2341 = vmatpush2.bf16.msra.mxu0 0
        %2342 = vmatprep.subr.bf16.mxu0 0
        %2343 = vmatpush2.bf16.msra.mxu0 0
        %2344 = vmatprep.subr.bf16.mxu0 0
        %2345 = vmatpush2.bf16.msra.mxu0 0
        %2346 = vmatprep.subr.bf16.mxu0 0
        %2347 = vmatpush2.bf16.msra.mxu0 0
        %2348 = vmatprep.subr.bf16.mxu0 0
        %2349 = vmatpush2.bf16.msra.mxu0 0
        %2350 = vmatprep.subr.bf16.mxu0 0
        %2351 = vmatpush2.bf16.msra.mxu0 0
        %2352 = vmatprep.subr.bf16.mxu0 0
        %2353 = vmatpush2.bf16.msra.mxu0 0
        %2354 = vmatprep.subr.bf16.mxu0 0
        %2355 = vmatpush2.bf16.msra.mxu0 0
        %2356 = vmatprep.mubr.bf16.mxu0 0
        %2357 = vmatmul.mubr.bf16.gmra.mxu0 %v2319
        %v2358 = vpop.f32.mrf.mxu0
        %v2359 = vadd.f32 0.0, %v2358
        %v2360 = vpop.f32.mrf.mxu0
        %v2361 = vpop.f32.mrf.mxu0
        %v2362 = vadd.f32 0.0, %v2361
        %v2363 = vpop.f32.mrf.mxu0
        %2364 = vmatprep.mubr.bf16.mxu0 0
        %2365 = vmatmul.mubr.bf16.gmra.mxu0 %v2322
        %v2366 = vpop.f32.mrf.mxu0
        %v2367 = vadd.f32 0.0, %v2366
        %v2368 = vpop.f32.mrf.mxu0
        %v2369 = vpop.f32.mrf.mxu0
        %v2370 = vadd.f32 0.0, %v2369
        %v2371 = vpop.f32.mrf.mxu0
        %2372 = vdwg.mxu0
        %v2373 = vadd.f32 %v2310, %v2359
        %v2374 = vadd.f32 %v2311, %v2362
        %v2375 = vadd.f32 %v2312, %v2367
        %v2376 = vadd.f32 %v2313, %v2370
        %v2377 = vpack.c.bf16 %v1980, %v1977
        %v2378 = vpack.c.bf16 %v1988, %v1985
        %v2379 = vpack.c.bf16 %v1658, %v1655
        %v2380 = vpack.c.bf16 %v1666, %v1663
        %v2382 = vsel %vm1475, %v2377, 0
        %v2385 = vsel %vm1475, %v2378, 0
        %2387 = vmatprep.subr.bf16.mxu0 0
        %2388 = vmatpush1.bf16.msra.mxu0 0
        %2389 = vmatprep.subr.bf16.mxu0 0
        %2390 = vmatpush1.bf16.msra.mxu0 0
        %2391 = vmatprep.subr.bf16.mxu0 0
        %2392 = vmatpush1.bf16.msra.mxu0 0
        %2393 = vmatprep.subr.bf16.mxu0 0
        %2394 = vmatpush1.bf16.msra.mxu0 0
        %2395 = vmatprep.subr.bf16.mxu0 0
        %2396 = vmatpush1.bf16.msra.mxu0 0
        %2397 = vmatprep.subr.bf16.mxu0 0
        %2398 = vmatpush1.bf16.msra.mxu0 0
        %2399 = vmatprep.subr.bf16.mxu0 0
        %2400 = vmatpush1.bf16.msra.mxu0 %v2380
        %2401 = vmatprep.subr.bf16.mxu0 0
        %2402 = vmatpush1.bf16.msra.mxu0 %v2379
        %2403 = vmatprep.subr.bf16.mxu0 0
        %2404 = vmatpush2.bf16.msra.mxu0 0
        %2405 = vmatprep.subr.bf16.mxu0 0
        %2406 = vmatpush2.bf16.msra.mxu0 0
        %2407 = vmatprep.subr.bf16.mxu0 0
        %2408 = vmatpush2.bf16.msra.mxu0 0
        %2409 = vmatprep.subr.bf16.mxu0 0
        %2410 = vmatpush2.bf16.msra.mxu0 0
        %2411 = vmatprep.subr.bf16.mxu0 0
        %2412 = vmatpush2.bf16.msra.mxu0 0
        %2413 = vmatprep.subr.bf16.mxu0 0
        %2414 = vmatpush2.bf16.msra.mxu0 0
        %2415 = vmatprep.subr.bf16.mxu0 0
        %2416 = vmatpush2.bf16.msra.mxu0 0
        %2417 = vmatprep.subr.bf16.mxu0 0
        %2418 = vmatpush2.bf16.msra.mxu0 0
        %2419 = vmatprep.mubr.bf16.mxu0 0
        %2420 = vmatmul.mubr.bf16.gmra.mxu0 %v2382
        %v2421 = vpop.f32.mrf.mxu0
        %v2422 = vadd.f32 0.0, %v2421
        %v2423 = vpop.f32.mrf.mxu0
        %v2424 = vpop.f32.mrf.mxu0
        %v2425 = vadd.f32 0.0, %v2424
        %v2426 = vpop.f32.mrf.mxu0
        %2427 = vmatprep.mubr.bf16.mxu0 0
        %2428 = vmatmul.mubr.bf16.gmra.mxu0 %v2385
        %v2429 = vpop.f32.mrf.mxu0
        %v2430 = vadd.f32 0.0, %v2429
        %v2431 = vpop.f32.mrf.mxu0
        %v2432 = vpop.f32.mrf.mxu0
        %v2433 = vadd.f32 0.0, %v2432
        %v2434 = vpop.f32.mrf.mxu0
        %2435 = vdwg.mxu0
        %v2436 = vadd.f32 %v2373, %v2422
        %v2437 = vadd.f32 %v2374, %v2425
        %v2438 = vadd.f32 %v2375, %v2430
        %v2439 = vadd.f32 %v2376, %v2433
        %v2440 = vpack.c.bf16 %v1996, %v1993
        %v2441 = vpack.c.bf16 %v2004, %v2001
        %v2442 = vpack.c.bf16 %v1674, %v1671
        %v2443 = vpack.c.bf16 %v1682, %v1679
        %v2445 = vsel %vm1475, %v2440, 0
        %v2448 = vsel %vm1475, %v2441, 0
        %2450 = vmatprep.subr.bf16.mxu0 0
        %2451 = vmatpush1.bf16.msra.mxu0 0
        %2452 = vmatprep.subr.bf16.mxu0 0
        %2453 = vmatpush1.bf16.msra.mxu0 0
        %2454 = vmatprep.subr.bf16.mxu0 0
        %2455 = vmatpush1.bf16.msra.mxu0 0
        %2456 = vmatprep.subr.bf16.mxu0 0
        %2457 = vmatpush1.bf16.msra.mxu0 0
        %2458 = vmatprep.subr.bf16.mxu0 0
        %2459 = vmatpush1.bf16.msra.mxu0 0
        %2460 = vmatprep.subr.bf16.mxu0 0
        %2461 = vmatpush1.bf16.msra.mxu0 0
        %2462 = vmatprep.subr.bf16.mxu0 0
        %2463 = vmatpush1.bf16.msra.mxu0 %v2443
        %2464 = vmatprep.subr.bf16.mxu0 0
        %2465 = vmatpush1.bf16.msra.mxu0 %v2442
        %2466 = vmatprep.subr.bf16.mxu0 0
        %2467 = vmatpush2.bf16.msra.mxu0 0
        %2468 = vmatprep.subr.bf16.mxu0 0
        %2469 = vmatpush2.bf16.msra.mxu0 0
        %2470 = vmatprep.subr.bf16.mxu0 0
        %2471 = vmatpush2.bf16.msra.mxu0 0
        %2472 = vmatprep.subr.bf16.mxu0 0
        %2473 = vmatpush2.bf16.msra.mxu0 0
        %2474 = vmatprep.subr.bf16.mxu0 0
        %2475 = vmatpush2.bf16.msra.mxu0 0
        %2476 = vmatprep.subr.bf16.mxu0 0
        %2477 = vmatpush2.bf16.msra.mxu0 0
        %2478 = vmatprep.subr.bf16.mxu0 0
        %2479 = vmatpush2.bf16.msra.mxu0 0
        %2480 = vmatprep.subr.bf16.mxu0 0
        %2481 = vmatpush2.bf16.msra.mxu0 0
        %2482 = vmatprep.mubr.bf16.mxu0 0
        %2483 = vmatmul.mubr.bf16.gmra.mxu0 %v2445
        %v2484 = vpop.f32.mrf.mxu0
        %v2485 = vadd.f32 0.0, %v2484
        %v2486 = vpop.f32.mrf.mxu0
        %v2487 = vpop.f32.mrf.mxu0
        %v2488 = vadd.f32 0.0, %v2487
        %v2489 = vpop.f32.mrf.mxu0
        %2490 = vmatprep.mubr.bf16.mxu0 0
        %2491 = vmatmul.mubr.bf16.gmra.mxu0 %v2448
        %v2492 = vpop.f32.mrf.mxu0
        %v2493 = vadd.f32 0.0, %v2492
        %v2494 = vpop.f32.mrf.mxu0
        %v2495 = vpop.f32.mrf.mxu0
        %v2496 = vadd.f32 0.0, %v2495
        %v2497 = vpop.f32.mrf.mxu0
        %2498 = vdwg.mxu0
        %v2499 = vadd.f32 %v2436, %v2485
        %v2500 = vadd.f32 %v2437, %v2488
        %v2501 = vadd.f32 %v2438, %v2493
        %v2502 = vadd.f32 %v2439, %v2496
        %v2503 = vld [vmem:[%s10] sm:$0xff]
        %v2504 = vld [vmem:[%s10 + $0x8] sm:$0xff]
        %v2505 = vld [vmem:[%s10 + $0x10] sm:$0xff]
        %v2506 = vld [vmem:[%s10 + $0x18] sm:$0xff]
        %2508 = vset.pattern.permute.xlu0 0
        %2509 = vperm.xlu0 %2508, %v2503
        %v2510 = vpop.permute.xlu0 %2509
        %2513 = vset.pattern.permute.xlu0 0
        %2514 = vperm.xlu0 %2513, %v2504
        %v2515 = vpop.permute.xlu0 %2514
        %2518 = vset.pattern.permute.xlu0 0
        %2519 = vperm.xlu0 %2518, %v2505
        %v2520 = vpop.permute.xlu0 %2519
        %2523 = vset.pattern.permute.xlu0 0
        %2524 = vperm.xlu0 %2523, %v2506
        %v2525 = vpop.permute.xlu0 %2524
        %v2527 = vadd.f32 %v2499, %v2510
        %v2528 = vadd.f32 %v2500, %v2515
        %v2529 = vadd.f32 %v2501, %v2520
        %v2530 = vadd.f32 %v2502, %v2525
        %v2531 = vld [vmem:[%s9] sm:$0xf]
        %v2532 = vld [vmem:[%s9 + $0x4] sm:$0x1]
        %v2533 = vpack.c.bf16 %v2528, %v2527
        %v2534 = vpack.c.bf16 %v2530, %v2529
        %v2535 = vld [vmem:[%s11] sm:$0xff]
        %v2536 = vld [vmem:[%s11 + $0x8] sm:$0x3]
        %2538 = vset.pattern.permute.xlu0 1
        %2539 = vperm.xlu0 %2538, %v2535
        %v2540 = vpop.permute.xlu0 %2539
        %2543 = vset.pattern.permute.xlu0 1
        %2544 = vperm.xlu0 %2543, %v2536
        %v2545 = vpop.permute.xlu0 %2544
        %v2549 = vunpack.c.l.b16 %v2531
        %v2550 = vunpack.c.l.b16 %v2532
        %v2551 = vpack.c.b16 %v2550, %v2549
        %v2553 = vsel %vm1475, %v2551, 0
        %2555 = vmatprep.subr.bf16.mxu0 0
        %2556 = vmatpush1.bf16.msra.mxu0 0
        %2557 = vmatprep.subr.bf16.mxu0 0
        %2558 = vmatpush1.bf16.msra.mxu0 0
        %2559 = vmatprep.subr.bf16.mxu0 0
        %2560 = vmatpush1.bf16.msra.mxu0 0
        %2561 = vmatprep.subr.bf16.mxu0 0
        %2562 = vmatpush1.bf16.msra.mxu0 0
        %2563 = vmatprep.subr.bf16.mxu0 0
        %2564 = vmatpush1.bf16.msra.mxu0 0
        %2565 = vmatprep.subr.bf16.mxu0 0
        %2566 = vmatpush1.bf16.msra.mxu0 0
        %2567 = vmatprep.subr.bf16.mxu0 0
        %2568 = vmatpush1.bf16.msra.mxu0 %v2534
        %2569 = vmatprep.subr.bf16.mxu0 0
        %2570 = vmatpush1.bf16.msra.mxu0 %v2533
        %2571 = vmatprep.subr.bf16.mxu0 0
        %2572 = vmatpush2.bf16.msra.mxu0 0
        %2573 = vmatprep.subr.bf16.mxu0 0
        %2574 = vmatpush2.bf16.msra.mxu0 0
        %2575 = vmatprep.subr.bf16.mxu0 0
        %2576 = vmatpush2.bf16.msra.mxu0 0
        %2577 = vmatprep.subr.bf16.mxu0 0
        %2578 = vmatpush2.bf16.msra.mxu0 0
        %2579 = vmatprep.subr.bf16.mxu0 0
        %2580 = vmatpush2.bf16.msra.mxu0 0
        %2581 = vmatprep.subr.bf16.mxu0 0
        %2582 = vmatpush2.bf16.msra.mxu0 0
        %2583 = vmatprep.subr.bf16.mxu0 0
        %2584 = vmatpush2.bf16.msra.mxu0 0
        %2585 = vmatprep.subr.bf16.mxu0 0
        %2586 = vmatpush2.bf16.msra.mxu0 0
        %2587 = vmatprep.mubr.bf16.mxu0 0
        %2588 = vmatmul.mubr.bf16.gmra.mxu0 %v2553
        %v2589 = vpop.f32.mrf.mxu0
        %v2590 = vadd.f32 %v2540, %v2589
        %v2591 = vpop.f32.mrf.mxu0
        %v2592 = vpop.f32.mrf.mxu0
        %v2593 = vadd.f32 %v2545, %v2592
        %v2594 = vpop.f32.mrf.mxu0
        %2595 = vdwg.mxu0
        %2596 = vset.pattern.permute.xlu0 0
        %2597 = vperm.xlu0 %2596, %v2535
        %v2598 = vpop.permute.xlu0 %2597
        %2600 = vset.pattern.permute.xlu0 0
        %2601 = vperm.xlu0 %2600, %v2536
        %v2602 = vpop.permute.xlu0 %2601
        %v2604 = vmul.f32 %v2590, %v2598
        %v2605 = vmul.f32 %v2593, %v2602
        %v2606 = vsel %vm1224, %v2604, 0.0
        %vm2607 = vcmask 123904
        %v2608 = vsel %vm2607, %v2605, 0.0
        %v2609 = vadd.f32 %v2606, %v2608
        %v2610 = vrot.slane %v2609, 4
        %v2611 = vadd.f32 %v2609, %v2610
        %v2612 = vrot.slane %v2611, 2
        %v2613 = vadd.f32 %v2611, %v2612
        %v2614 = vrot.slane %v2613, 1
        %v2615 = vadd.f32 %v2613, %v2614
        %v2616 = vld [vmem:[%s12] sm:$0x1]
        %2618 = vset.pattern.permute.xlu0 0
        %2619 = vperm.xlu0 %2618, %v2616
        %v2620 = vpop.permute.xlu0 %2619
        %v2622 = vlaneseq
        %v2623 = vshrl.u32 %v2622, 7
        %v2624 = vsub.s32 0, %v2623
        %v2625 = vrot.slane %v2620, %v2624
        %v2626 = vadd.f32 %v2615, %v2625
        %2627 = vset.pattern.permute.xlu0 1
        %2628 = vperm.xlu0 %2627, %v2616
        %v2629 = vpop.permute.xlu0 %2628
        %v2631 = vlaneseq
        %v2632 = vshrl.u32 %v2631, 7
        %v2633 = vsub.s32 0, %v2632
        %v2634 = vrot.slane %v2629, %v2633
        %v2635 = vmul.f32 %v576, %v2634
        %v2636 = vadd.f32 %v2626, %v2635
        %2637 = vset.pattern.permute.xlu0 8
        %2638 = vperm.xlu0 %2637, %v2503
        %v2639 = vpop.permute.xlu0 %2638
        %2641 = vset.pattern.permute.xlu0 8
        %2642 = vperm.xlu0 %2641, %v2504
        %v2643 = vpop.permute.xlu0 %2642
        %2645 = vset.pattern.permute.xlu0 8
        %2646 = vperm.xlu0 %2645, %v2505
        %v2647 = vpop.permute.xlu0 %2646
        %2649 = vset.pattern.permute.xlu0 8
        %2650 = vperm.xlu0 %2649, %v2506
        %v2651 = vpop.permute.xlu0 %2650
        %v2653 = vmul.f32 %v507, %v2639
        %v2654 = vmul.f32 %v508, %v2643
        %v2655 = vmul.f32 %v509, %v2647
        %v2656 = vmul.f32 %v510, %v2651
        %v2657 = vsel %vm1224, %v2653, 0.0
        %v2658 = vsel %vm1224, %v2654, 0.0
        %v2659 = vadd.f32 %v2657, %v2658
        %v2660 = vsel %vm1224, %v2655, 0.0
        %v2661 = vadd.f32 %v2659, %v2660
        %v2662 = vsel %vm1224, %v2656, 0.0
        %v2663 = vadd.f32 %v2661, %v2662
        %v2664 = vrot.slane %v2663, 4
        %v2665 = vadd.f32 %v2663, %v2664
        %v2666 = vrot.slane %v2665, 2
        %v2667 = vadd.f32 %v2665, %v2666
        %v2668 = vrot.slane %v2667, 1
        %v2669 = vadd.f32 %v2667, %v2668
        %2670 = vset.pattern.permute.xlu0 2
        %2671 = vperm.xlu0 %2670, %v2616
        %v2672 = vpop.permute.xlu0 %2671
        %v2674 = vlaneseq
        %v2675 = vshrl.u32 %v2674, 7
        %v2676 = vsub.s32 0, %v2675
        %v2677 = vrot.slane %v2672, %v2676
        %v2678 = vadd.f32 %v2669, %v2677
        %v2679 = vadd.f32 %v2636, %v2678
        %2680 = vset.pattern.permute.xlu0 1
        %2681 = vperm.xlu0 %2680, %v2503
        %v2682 = vpop.permute.xlu0 %2681
        %2684 = vset.pattern.permute.xlu0 1
        %2685 = vperm.xlu0 %2684, %v2504
        %v2686 = vpop.permute.xlu0 %2685
        %2688 = vset.pattern.permute.xlu0 1
        %2689 = vperm.xlu0 %2688, %v2505
        %v2690 = vpop.permute.xlu0 %2689
        %2692 = vset.pattern.permute.xlu0 1
        %2693 = vperm.xlu0 %2692, %v2506
        %v2694 = vpop.permute.xlu0 %2693
        %v2696 = vlaneseq
        %v2697 = vshrl.u32 %v2696, 7
        %v2698 = vsub.s32 0, %v2697
        %v2699 = vrot.slane %v2679, %v2698
        %v2700 = vmul.f32 %v2682, %v2699
        %v2701 = vmul.f32 %v2686, %v2699
        %v2702 = vmul.f32 %v2690, %v2699
        %v2703 = vmul.f32 %v2694, %v2699
        %2704 = vset.pattern.permute.xlu0 2
        %2705 = vperm.xlu0 %2704, %v2503
        %v2706 = vpop.permute.xlu0 %2705
        %2708 = vset.pattern.permute.xlu0 2
        %2709 = vperm.xlu0 %2708, %v2504
        %v2710 = vpop.permute.xlu0 %2709
        %2712 = vset.pattern.permute.xlu0 2
        %2713 = vperm.xlu0 %2712, %v2505
        %v2714 = vpop.permute.xlu0 %2713
        %2716 = vset.pattern.permute.xlu0 2
        %2717 = vperm.xlu0 %2716, %v2506
        %v2718 = vpop.permute.xlu0 %2717
        %v2720 = vadd.f32 %v2700, %v2706
        %v2721 = vadd.f32 %v2701, %v2710
        %v2722 = vadd.f32 %v2702, %v2714
        %v2723 = vadd.f32 %v2703, %v2718
        %v2724 = vld [vmem:[%s8] sm:$0xf]
        %v2725 = vld [vmem:[%s8 + $0x4] sm:$0xf]
        %v2726 = vld [vmem:[%s8 + $0x8] sm:$0xf]
        %v2727 = vld [vmem:[%s8 + $0xc] sm:$0xf]
        %v2728 = vpack.c.bf16 %v2721, %v2720
        %v2729 = vpack.c.bf16 %v2723, %v2722
        %2730 = vset.pattern.permute.xlu0 3
        %2731 = vperm.xlu0 %2730, %v2503
        %v2732 = vpop.permute.xlu0 %2731
        %2734 = vset.pattern.permute.xlu0 3
        %2735 = vperm.xlu0 %2734, %v2504
        %v2736 = vpop.permute.xlu0 %2735
        %2738 = vset.pattern.permute.xlu0 3
        %2739 = vperm.xlu0 %2738, %v2505
        %v2740 = vpop.permute.xlu0 %2739
        %2742 = vset.pattern.permute.xlu0 3
        %2743 = vperm.xlu0 %2742, %v2506
        %v2744 = vpop.permute.xlu0 %2743
        %v2750 = vunpack.c.l.b16 %v2724
        %v2751 = vunpack.c.l.b16 %v2725
        %v2752 = vunpack.c.l.b16 %v2726
        %v2753 = vunpack.c.l.b16 %v2727
        %v2754 = vpack.c.b16 %v2751, %v2750
        %v2755 = vpack.c.b16 %v2753, %v2752
        %v2757 = vsel %vm1475, %v2754, 0
        %v2760 = vsel %vm1475, %v2755, 0
        %2762 = vmatprep.subr.bf16.mxu0 0
        %2763 = vmatpush1.bf16.msra.mxu0 0
        %2764 = vmatprep.subr.bf16.mxu0 0
        %2765 = vmatpush1.bf16.msra.mxu0 0
        %2766 = vmatprep.subr.bf16.mxu0 0
        %2767 = vmatpush1.bf16.msra.mxu0 0
        %2768 = vmatprep.subr.bf16.mxu0 0
        %2769 = vmatpush1.bf16.msra.mxu0 0
        %2770 = vmatprep.subr.bf16.mxu0 0
        %2771 = vmatpush1.bf16.msra.mxu0 0
        %2772 = vmatprep.subr.bf16.mxu0 0
        %2773 = vmatpush1.bf16.msra.mxu0 0
        %2774 = vmatprep.subr.bf16.mxu0 0
        %2775 = vmatpush1.bf16.msra.mxu0 %v2729
        %2776 = vmatprep.subr.bf16.mxu0 0
        %2777 = vmatpush1.bf16.msra.mxu0 %v2728
        %2778 = vmatprep.subr.bf16.mxu0 0
        %2779 = vmatpush2.bf16.msra.mxu0 0
        %2780 = vmatprep.subr.bf16.mxu0 0
        %2781 = vmatpush2.bf16.msra.mxu0 0
        %2782 = vmatprep.subr.bf16.mxu0 0
        %2783 = vmatpush2.bf16.msra.mxu0 0
        %2784 = vmatprep.subr.bf16.mxu0 0
        %2785 = vmatpush2.bf16.msra.mxu0 0
        %2786 = vmatprep.subr.bf16.mxu0 0
        %2787 = vmatpush2.bf16.msra.mxu0 0
        %2788 = vmatprep.subr.bf16.mxu0 0
        %2789 = vmatpush2.bf16.msra.mxu0 0
        %2790 = vmatprep.subr.bf16.mxu0 0
        %2791 = vmatpush2.bf16.msra.mxu0 0
        %2792 = vmatprep.subr.bf16.mxu0 0
        %2793 = vmatpush2.bf16.msra.mxu0 0
        %2794 = vmatprep.mubr.bf16.mxu0 0
        %2795 = vmatmul.mubr.bf16.gmra.mxu0 %v2757
        %v2796 = vpop.f32.mrf.mxu0
        %v2797 = vadd.f32 %v2732, %v2796
        %v2798 = vpop.f32.mrf.mxu0
        %v2799 = vpop.f32.mrf.mxu0
        %v2800 = vadd.f32 %v2736, %v2799
        %v2801 = vpop.f32.mrf.mxu0
        %2802 = vmatprep.mubr.bf16.mxu0 0
        %2803 = vmatmul.mubr.bf16.gmra.mxu0 %v2760
        %v2804 = vpop.f32.mrf.mxu0
        %v2805 = vadd.f32 %v2740, %v2804
        %v2806 = vpop.f32.mrf.mxu0
        %v2807 = vpop.f32.mrf.mxu0
        %v2808 = vadd.f32 %v2744, %v2807
        %v2809 = vpop.f32.mrf.mxu0
        %2810 = vdwg.mxu0
        %v2811 = vxor.u32 %v2797, 2147483648
        %v2812 = vxor.u32 %v2800, 2147483648
        %v2813 = vxor.u32 %v2805, 2147483648
        %v2814 = vxor.u32 %v2808, 2147483648
        %v2815 = vmul.f32 %v2811, 1.442695
        %v2816 = vpow.pop %v2815
        %v2817 = vmul.f32 %v2812, 1.442695
        %v2818 = vpow.pop %v2817
        %v2819 = vmul.f32 %v2813, 1.442695
        %v2820 = vpow.pop %v2819
        %v2821 = vmul.f32 %v2814, 1.442695
        %v2822 = vpow.pop %v2821
        %v2823 = vadd.f32 %v2816, 1.0
        %v2824 = vadd.f32 %v2818, 1.0
        %v2825 = vadd.f32 %v2820, 1.0
        %v2826 = vadd.f32 %v2822, 1.0
        %v2827 = vrcp.pop %v2823
        %v2828 = vmul.f32 1.0, %v2827
        %v2829 = vrcp.pop %v2824
        %v2830 = vmul.f32 1.0, %v2829
        %v2831 = vrcp.pop %v2825
        %v2832 = vmul.f32 1.0, %v2831
        %v2833 = vrcp.pop %v2826
        %v2834 = vmul.f32 1.0, %v2833
        %v2835 = vmul.f32 %v2797, %v2828
        %v2836 = vmul.f32 %v2800, %v2830
        %v2837 = vmul.f32 %v2805, %v2832
        %v2838 = vmul.f32 %v2808, %v2834
        %s2839 = scalar_lea.vmem %s8, 16
        %v2840 = vld [vmem:[%s2839] sm:$0xf]
        %v2841 = vld [vmem:[%s2839 + $0x4] sm:$0xf]
        %v2842 = vld [vmem:[%s2839 + $0x8] sm:$0xf]
        %v2843 = vld [vmem:[%s2839 + $0xc] sm:$0xf]
        %v2844 = vpack.c.bf16 %v2836, %v2835
        %v2845 = vpack.c.bf16 %v2838, %v2837
        %v2850 = vunpack.c.l.b16 %v2840
        %v2851 = vunpack.c.l.b16 %v2841
        %v2852 = vunpack.c.l.b16 %v2842
        %v2853 = vunpack.c.l.b16 %v2843
        %v2854 = vpack.c.b16 %v2851, %v2850
        %v2855 = vpack.c.b16 %v2853, %v2852
        %v2857 = vsel %vm1475, %v2854, 0
        %v2860 = vsel %vm1475, %v2855, 0
        %2862 = vmatprep.subr.bf16.mxu0 0
        %2863 = vmatpush1.bf16.msra.mxu0 0
        %2864 = vmatprep.subr.bf16.mxu0 0
        %2865 = vmatpush1.bf16.msra.mxu0 0
        %2866 = vmatprep.subr.bf16.mxu0 0
        %2867 = vmatpush1.bf16.msra.mxu0 0
        %2868 = vmatprep.subr.bf16.mxu0 0
        %2869 = vmatpush1.bf16.msra.mxu0 0
        %2870 = vmatprep.subr.bf16.mxu0 0
        %2871 = vmatpush1.bf16.msra.mxu0 0
        %2872 = vmatprep.subr.bf16.mxu0 0
        %2873 = vmatpush1.bf16.msra.mxu0 0
        %2874 = vmatprep.subr.bf16.mxu0 0
        %2875 = vmatpush1.bf16.msra.mxu0 %v2845
        %2876 = vmatprep.subr.bf16.mxu0 0
        %2877 = vmatpush1.bf16.msra.mxu0 %v2844
        %2878 = vmatprep.subr.bf16.mxu0 0
        %2879 = vmatpush2.bf16.msra.mxu0 0
        %2880 = vmatprep.subr.bf16.mxu0 0
        %2881 = vmatpush2.bf16.msra.mxu0 0
        %2882 = vmatprep.subr.bf16.mxu0 0
        %2883 = vmatpush2.bf16.msra.mxu0 0
        %2884 = vmatprep.subr.bf16.mxu0 0
        %2885 = vmatpush2.bf16.msra.mxu0 0
        %2886 = vmatprep.subr.bf16.mxu0 0
        %2887 = vmatpush2.bf16.msra.mxu0 0
        %2888 = vmatprep.subr.bf16.mxu0 0
        %2889 = vmatpush2.bf16.msra.mxu0 0
        %2890 = vmatprep.subr.bf16.mxu0 0
        %2891 = vmatpush2.bf16.msra.mxu0 0
        %2892 = vmatprep.subr.bf16.mxu0 0
        %2893 = vmatpush2.bf16.msra.mxu0 0
        %2894 = vmatprep.mubr.bf16.mxu0 0
        %2895 = vmatmul.mubr.bf16.gmra.mxu0 %v2857
        %v2896 = vpop.f32.mrf.mxu0
        %v2897 = vadd.f32 0.0, %v2896
        %v2898 = vpop.f32.mrf.mxu0
        %v2899 = vpop.f32.mrf.mxu0
        %v2900 = vadd.f32 0.0, %v2899
        %v2901 = vpop.f32.mrf.mxu0
        %2902 = vmatprep.mubr.bf16.mxu0 0
        %2903 = vmatmul.mubr.bf16.gmra.mxu0 %v2860
        %v2904 = vpop.f32.mrf.mxu0
        %v2905 = vadd.f32 0.0, %v2904
        %v2906 = vpop.f32.mrf.mxu0
        %v2907 = vpop.f32.mrf.mxu0
        %v2908 = vadd.f32 0.0, %v2907
        %v2909 = vpop.f32.mrf.mxu0
        %2910 = vdwg.mxu0
        %v2911 = vadd.f32 %v2720, %v2897
        %v2912 = vadd.f32 %v2721, %v2900
        %v2913 = vadd.f32 %v2722, %v2905
        %v2914 = vadd.f32 %v2723, %v2908
        %2915 = vset.pattern.permute.xlu0 4
        %2916 = vperm.xlu0 %2915, %v2503
        %v2917 = vpop.permute.xlu0 %2916
        %2919 = vset.pattern.permute.xlu0 4
        %2920 = vperm.xlu0 %2919, %v2504
        %v2921 = vpop.permute.xlu0 %2920
        %2923 = vset.pattern.permute.xlu0 4
        %2924 = vperm.xlu0 %2923, %v2505
        %v2925 = vpop.permute.xlu0 %2924
        %2927 = vset.pattern.permute.xlu0 4
        %2928 = vperm.xlu0 %2927, %v2506
        %v2929 = vpop.permute.xlu0 %2928
        %v2931 = vadd.f32 %v2911, %v2917
        %v2932 = vadd.f32 %v2912, %v2921
        %v2933 = vadd.f32 %v2913, %v2925
        %v2934 = vadd.f32 %v2914, %v2929
        %s2935 = scalar_lea.vmem %s8, 32
        %v2936 = vld [vmem:[%s2935] sm:$0xf]
        %v2937 = vld [vmem:[%s2935 + $0x4] sm:$0xf]
        %v2938 = vld [vmem:[%s2935 + $0x8] sm:$0xf]
        %v2939 = vld [vmem:[%s2935 + $0xc] sm:$0xf]
        %v2940 = vpack.c.bf16 %v2932, %v2931
        %v2941 = vpack.c.bf16 %v2934, %v2933
        %2942 = vset.pattern.permute.xlu0 5
        %2943 = vperm.xlu0 %2942, %v2503
        %v2944 = vpop.permute.xlu0 %2943
        %2946 = vset.pattern.permute.xlu0 5
        %2947 = vperm.xlu0 %2946, %v2504
        %v2948 = vpop.permute.xlu0 %2947
        %2950 = vset.pattern.permute.xlu0 5
        %2951 = vperm.xlu0 %2950, %v2505
        %v2952 = vpop.permute.xlu0 %2951
        %2954 = vset.pattern.permute.xlu0 5
        %2955 = vperm.xlu0 %2954, %v2506
        %v2956 = vpop.permute.xlu0 %2955
        %v2962 = vunpack.c.l.b16 %v2936
        %v2963 = vunpack.c.l.b16 %v2937
        %v2964 = vunpack.c.l.b16 %v2938
        %v2965 = vunpack.c.l.b16 %v2939
        %v2966 = vpack.c.b16 %v2963, %v2962
        %v2967 = vpack.c.b16 %v2965, %v2964
        %v2969 = vsel %vm1475, %v2966, 0
        %v2972 = vsel %vm1475, %v2967, 0
        %2974 = vmatprep.subr.bf16.mxu0 0
        %2975 = vmatpush1.bf16.msra.mxu0 0
        %2976 = vmatprep.subr.bf16.mxu0 0
        %2977 = vmatpush1.bf16.msra.mxu0 0
        %2978 = vmatprep.subr.bf16.mxu0 0
        %2979 = vmatpush1.bf16.msra.mxu0 0
        %2980 = vmatprep.subr.bf16.mxu0 0
        %2981 = vmatpush1.bf16.msra.mxu0 0
        %2982 = vmatprep.subr.bf16.mxu0 0
        %2983 = vmatpush1.bf16.msra.mxu0 0
        %2984 = vmatprep.subr.bf16.mxu0 0
        %2985 = vmatpush1.bf16.msra.mxu0 0
        %2986 = vmatprep.subr.bf16.mxu0 0
        %2987 = vmatpush1.bf16.msra.mxu0 %v2941
        %2988 = vmatprep.subr.bf16.mxu0 0
        %2989 = vmatpush1.bf16.msra.mxu0 %v2940
        %2990 = vmatprep.subr.bf16.mxu0 0
        %2991 = vmatpush2.bf16.msra.mxu0 0
        %2992 = vmatprep.subr.bf16.mxu0 0
        %2993 = vmatpush2.bf16.msra.mxu0 0
        %2994 = vmatprep.subr.bf16.mxu0 0
        %2995 = vmatpush2.bf16.msra.mxu0 0
        %2996 = vmatprep.subr.bf16.mxu0 0
        %2997 = vmatpush2.bf16.msra.mxu0 0
        %2998 = vmatprep.subr.bf16.mxu0 0
        %2999 = vmatpush2.bf16.msra.mxu0 0
        %3000 = vmatprep.subr.bf16.mxu0 0
        %3001 = vmatpush2.bf16.msra.mxu0 0
        %3002 = vmatprep.subr.bf16.mxu0 0
        %3003 = vmatpush2.bf16.msra.mxu0 0
        %3004 = vmatprep.subr.bf16.mxu0 0
        %3005 = vmatpush2.bf16.msra.mxu0 0
        %3006 = vmatprep.mubr.bf16.mxu0 0
        %3007 = vmatmul.mubr.bf16.gmra.mxu0 %v2969
        %v3008 = vpop.f32.mrf.mxu0
        %v3009 = vadd.f32 %v2944, %v3008
        %v3010 = vpop.f32.mrf.mxu0
        %v3011 = vpop.f32.mrf.mxu0
        %v3012 = vadd.f32 %v2948, %v3011
        %v3013 = vpop.f32.mrf.mxu0
        %3014 = vmatprep.mubr.bf16.mxu0 0
        %3015 = vmatmul.mubr.bf16.gmra.mxu0 %v2972
        %v3016 = vpop.f32.mrf.mxu0
        %v3017 = vadd.f32 %v2952, %v3016
        %v3018 = vpop.f32.mrf.mxu0
        %v3019 = vpop.f32.mrf.mxu0
        %v3020 = vadd.f32 %v2956, %v3019
        %v3021 = vpop.f32.mrf.mxu0
        %3022 = vdwg.mxu0
        %v3023 = vmul.f32 %v3009, %v3009
        %v3024 = vmul.f32 %v3012, %v3012
        %v3025 = vmul.f32 %v3017, %v3017
        %v3026 = vmul.f32 %v3020, %v3020
        %v3027 = vmul.f32 %v3009, %v3023
        %v3028 = vmul.f32 %v3012, %v3024
        %v3029 = vmul.f32 %v3017, %v3025
        %v3030 = vmul.f32 %v3020, %v3026
        %v3031 = vmul.f32 %v3027, 0.044715
        %v3032 = vmul.f32 %v3028, 0.044715
        %v3033 = vmul.f32 %v3029, 0.044715
        %v3034 = vmul.f32 %v3030, 0.044715
        %v3035 = vadd.f32 %v3009, %v3031
        %v3036 = vadd.f32 %v3012, %v3032
        %v3037 = vadd.f32 %v3017, %v3033
        %v3038 = vadd.f32 %v3020, %v3034
        %v3039 = vmul.f32 %v3035, 0.7978846
        %v3040 = vmul.f32 %v3036, 0.7978846
        %v3041 = vmul.f32 %v3037, 0.7978846
        %v3042 = vmul.f32 %v3038, 0.7978846
        %v3043 = vtanh.pop %v3039
        %v3044 = vtanh.pop %v3040
        %v3045 = vtanh.pop %v3041
        %v3046 = vtanh.pop %v3042
        %v3047 = vadd.f32 %v3043, 1.0
        %v3048 = vadd.f32 %v3044, 1.0
        %v3049 = vadd.f32 %v3045, 1.0
        %v3050 = vadd.f32 %v3046, 1.0
        %v3051 = vmul.f32 %v3047, 0.5
        %v3052 = vmul.f32 %v3048, 0.5
        %v3053 = vmul.f32 %v3049, 0.5
        %v3054 = vmul.f32 %v3050, 0.5
        %v3055 = vmul.f32 %v3009, %v3051
        %v3056 = vmul.f32 %v3012, %v3052
        %v3057 = vmul.f32 %v3017, %v3053
        %v3058 = vmul.f32 %v3020, %v3054
        %s3059 = scalar_lea.vmem %s8, 48
        %v3060 = vld [vmem:[%s3059] sm:$0xf]
        %v3061 = vld [vmem:[%s3059 + $0x4] sm:$0xf]
        %v3062 = vld [vmem:[%s3059 + $0x8] sm:$0xf]
        %v3063 = vld [vmem:[%s3059 + $0xc] sm:$0xf]
        %v3064 = vpack.c.bf16 %v3056, %v3055
        %v3065 = vpack.c.bf16 %v3058, %v3057
        %3066 = vset.pattern.permute.xlu0 6
        %3067 = vperm.xlu0 %3066, %v2503
        %v3068 = vpop.permute.xlu0 %3067
        %3070 = vset.pattern.permute.xlu0 6
        %3071 = vperm.xlu0 %3070, %v2504
        %v3072 = vpop.permute.xlu0 %3071
        %3074 = vset.pattern.permute.xlu0 6
        %3075 = vperm.xlu0 %3074, %v2505
        %v3076 = vpop.permute.xlu0 %3075
        %3078 = vset.pattern.permute.xlu0 6
        %3079 = vperm.xlu0 %3078, %v2506
        %v3080 = vpop.permute.xlu0 %3079
        %v3086 = vunpack.c.l.b16 %v3060
        %v3087 = vunpack.c.l.b16 %v3061
        %v3088 = vunpack.c.l.b16 %v3062
        %v3089 = vunpack.c.l.b16 %v3063
        %v3090 = vpack.c.b16 %v3087, %v3086
        %v3091 = vpack.c.b16 %v3089, %v3088
        %v3093 = vsel %vm1475, %v3090, 0
        %v3096 = vsel %vm1475, %v3091, 0
        %3098 = vmatprep.subr.bf16.mxu0 0
        %3099 = vmatpush1.bf16.msra.mxu0 0
        %3100 = vmatprep.subr.bf16.mxu0 0
        %3101 = vmatpush1.bf16.msra.mxu0 0
        %3102 = vmatprep.subr.bf16.mxu0 0
        %3103 = vmatpush1.bf16.msra.mxu0 0
        %3104 = vmatprep.subr.bf16.mxu0 0
        %3105 = vmatpush1.bf16.msra.mxu0 0
        %3106 = vmatprep.subr.bf16.mxu0 0
        %3107 = vmatpush1.bf16.msra.mxu0 0
        %3108 = vmatprep.subr.bf16.mxu0 0
        %3109 = vmatpush1.bf16.msra.mxu0 0
        %3110 = vmatprep.subr.bf16.mxu0 0
        %3111 = vmatpush1.bf16.msra.mxu0 %v3065
        %3112 = vmatprep.subr.bf16.mxu0 0
        %3113 = vmatpush1.bf16.msra.mxu0 %v3064
        %3114 = vmatprep.subr.bf16.mxu0 0
        %3115 = vmatpush2.bf16.msra.mxu0 0
        %3116 = vmatprep.subr.bf16.mxu0 0
        %3117 = vmatpush2.bf16.msra.mxu0 0
        %3118 = vmatprep.subr.bf16.mxu0 0
        %3119 = vmatpush2.bf16.msra.mxu0 0
        %3120 = vmatprep.subr.bf16.mxu0 0
        %3121 = vmatpush2.bf16.msra.mxu0 0
        %3122 = vmatprep.subr.bf16.mxu0 0
        %3123 = vmatpush2.bf16.msra.mxu0 0
        %3124 = vmatprep.subr.bf16.mxu0 0
        %3125 = vmatpush2.bf16.msra.mxu0 0
        %3126 = vmatprep.subr.bf16.mxu0 0
        %3127 = vmatpush2.bf16.msra.mxu0 0
        %3128 = vmatprep.subr.bf16.mxu0 0
        %3129 = vmatpush2.bf16.msra.mxu0 0
        %3130 = vmatprep.mubr.bf16.mxu0 0
        %3131 = vmatmul.mubr.bf16.gmra.mxu0 %v3093
        %v3132 = vpop.f32.mrf.mxu0
        %v3133 = vadd.f32 %v3068, %v3132
        %v3134 = vpop.f32.mrf.mxu0
        %v3135 = vpop.f32.mrf.mxu0
        %v3136 = vadd.f32 %v3072, %v3135
        %v3137 = vpop.f32.mrf.mxu0
        %3138 = vmatprep.mubr.bf16.mxu0 0
        %3139 = vmatmul.mubr.bf16.gmra.mxu0 %v3096
        %v3140 = vpop.f32.mrf.mxu0
        %v3141 = vadd.f32 %v3076, %v3140
        %v3142 = vpop.f32.mrf.mxu0
        %v3143 = vpop.f32.mrf.mxu0
        %v3144 = vadd.f32 %v3080, %v3143
        %v3145 = vpop.f32.mrf.mxu0
        %3146 = vdwg.mxu0
        %v3147 = vmul.f32 %v3133, %v3133
        %v3148 = vmul.f32 %v3136, %v3136
        %v3149 = vmul.f32 %v3141, %v3141
        %v3150 = vmul.f32 %v3144, %v3144
        %v3151 = vmul.f32 %v3133, %v3147
        %v3152 = vmul.f32 %v3136, %v3148
        %v3153 = vmul.f32 %v3141, %v3149
        %v3154 = vmul.f32 %v3144, %v3150
        %v3155 = vmul.f32 %v3151, 0.044715
        %v3156 = vmul.f32 %v3152, 0.044715
        %v3157 = vmul.f32 %v3153, 0.044715
        %v3158 = vmul.f32 %v3154, 0.044715
        %v3159 = vadd.f32 %v3133, %v3155
        %v3160 = vadd.f32 %v3136, %v3156
        %v3161 = vadd.f32 %v3141, %v3157
        %v3162 = vadd.f32 %v3144, %v3158
        %v3163 = vmul.f32 %v3159, 0.7978846
        %v3164 = vmul.f32 %v3160, 0.7978846
        %v3165 = vmul.f32 %v3161, 0.7978846
        %v3166 = vmul.f32 %v3162, 0.7978846
        %v3167 = vtanh.pop %v3163
        %v3168 = vtanh.pop %v3164
        %v3169 = vtanh.pop %v3165
        %v3170 = vtanh.pop %v3166
        %v3171 = vadd.f32 %v3167, 1.0
        %v3172 = vadd.f32 %v3168, 1.0
        %v3173 = vadd.f32 %v3169, 1.0
        %v3174 = vadd.f32 %v3170, 1.0
        %v3175 = vmul.f32 %v3171, 0.5
        %v3176 = vmul.f32 %v3172, 0.5
        %v3177 = vmul.f32 %v3173, 0.5
        %v3178 = vmul.f32 %v3174, 0.5
        %v3179 = vmul.f32 %v3133, %v3175
        %v3180 = vmul.f32 %v3136, %v3176
        %v3181 = vmul.f32 %v3141, %v3177
        %v3182 = vmul.f32 %v3144, %v3178
        %3183 = vset.pattern.permute.xlu0 7
        %3184 = vperm.xlu0 %3183, %v2503
        %v3185 = vpop.permute.xlu0 %3184
        %3187 = vset.pattern.permute.xlu0 7
        %3188 = vperm.xlu0 %3187, %v2504
        %v3189 = vpop.permute.xlu0 %3188
        %3191 = vset.pattern.permute.xlu0 7
        %3192 = vperm.xlu0 %3191, %v2505
        %v3193 = vpop.permute.xlu0 %3192
        %3195 = vset.pattern.permute.xlu0 7
        %3196 = vperm.xlu0 %3195, %v2506
        %v3197 = vpop.permute.xlu0 %3196
        %v3199 = vmul.f32 %v3179, %v3185
        %v3200 = vmul.f32 %v3180, %v3189
        %v3201 = vmul.f32 %v3181, %v3193
        %v3202 = vmul.f32 %v3182, %v3197
        %v3203 = vsel %vm1224, %v3199, 0.0
        %v3204 = vsel %vm1224, %v3200, 0.0
        %v3205 = vadd.f32 %v3203, %v3204
        %v3206 = vsel %vm1224, %v3201, 0.0
        %v3207 = vadd.f32 %v3205, %v3206
        %v3208 = vsel %vm1224, %v3202, 0.0
        %v3209 = vadd.f32 %v3207, %v3208
        %v3210 = vrot.slane %v3209, 4
        %v3211 = vadd.f32 %v3209, %v3210
        %v3212 = vrot.slane %v3211, 2
        %v3213 = vadd.f32 %v3211, %v3212
        %v3214 = vrot.slane %v3213, 1
        %v3215 = vadd.f32 %v3213, %v3214
        %3216 = vset.pattern.permute.xlu0 3
        %3217 = vperm.xlu0 %3216, %v2616
        %v3218 = vpop.permute.xlu0 %3217
        %v3220 = vlaneseq
        %v3221 = vshrl.u32 %v3220, 7
        %v3222 = vsub.s32 0, %v3221
        %v3223 = vrot.slane %v3218, %v3222
        %v3224 = vadd.f32 %v3215, %v3223
        %v3225 = vadd.f32 %v2636, %v3224
        %v3226 = vadd.f32 %v3225, %v577
        %vm3227 = vcmask 122880
        %3228 = vst.msk [vmem:[%s484] sm:$0x1] %vm3227, %v3226
        %s3229 = sand.u32 %s333, 1
        %s3230 = scalar_lea.sflag [#allocation3], %s3229
        %s3231 = sand.u32 %s333, 1
        %s3232 = scalar_lea.vmem [#allocation2], %s3231
        // Predicated region
        $region73: #{mano1d_forward.3} parent=71 // pred_check
          %p3233 = pneg %p343
        $region74: #{mano1d_forward.3} parent=71 // pred_check_branch
          %3235 = sbr.rel (%p3233) target = $region76
        $region75: #{mano1d_forward.3} parent=71 // pred_region
          %s3237 = ssub.s32 16, 16
          %3238 = vsyncadd %s3230, %s3237
          %s3239 = smul.addr %s27, 16
          %s3240 = scalar_lea.hbm %s13, %s3239
          %s3242 = sshll.u32 %s3232, 4
          %s3243 = int_to_ptr.vmem [resolvable:$true] %s3242
          %3245 = dma.vmem_to_hbm [thread:$0]  %s3243, 16, %s3240, %s3230
        $region76: #{mano1d_forward.3} parent=71 // pred_fallthru
          _
      $region72: #{mano1d_forward.3} parent=5 // pred_fallthru
        _
      %p3246 = scmp.le.s32.totalorder 2, %s22
      // Predicated region
      $region77: #{mano1d_forward.3} parent=5 // pred_check
        %p3247 = pneg %p3246
      $region78: #{mano1d_forward.3} parent=5 // pred_check_branch
        %3249 = sbr.rel (%p3247) target = $region80
      $region79: #{mano1d_forward.3} parent=5 // pred_region
        %s3250 = ssub.s32 %s22, 2
        // Predicated region
        $region81: #{mano1d_forward.3} parent=79 // pred_check
          %p3251 = pneg %p349
        $region82: #{mano1d_forward.3} parent=79 // pred_check_branch
          %3253 = sbr.rel (%p3251) target = $region84
        $region83: #{mano1d_forward.3} parent=79 // pred_region
          %s3254 = sand.u32 %s334, 1
          %s3255 = scalar_lea.sflag [#allocation3], %s3254
          %s3256 = sand.u32 %s334, 1
          %s3257 = scalar_lea.vmem [#allocation2], %s3256
          %3258 = dma.done %s3255, 16
        $region84: #{mano1d_forward.3} parent=79 // pred_fallthru
          _
      $region80: #{mano1d_forward.3} parent=5 // pred_fallthru
        _
    $region6: #{mano1d_forward.3} parent=1 // loop_footer
      %s26 = sadd.s32 1, %s22
    $region7: #{mano1d_forward.3} parent=1 // loop_footer_branch
      %21 = sbr.rel target = $region3
    $region8: #{mano1d_forward.3} parent=1 // loop_exit
      _
    %3259 = vsyncpa [#allocation3], 1
    %s3260 = scalar_lea.sflag [#allocation3], 1
    %3261 = vsyncpa %s3260, 1

</llo_original>
